<compile_context>
chip_gen: v7x
topology: tpu7x:2x2x1
jax: 0.10.0
libtpu: 0.0.40
codegen_flags: <defaults>
</compile_context>

<pallas_src>
import functools

import jax
import jax.numpy as jnp
from jax.experimental import pallas as pl
from jax.experimental.pallas import tpu as pltpu


# ----------------------------- tiling helpers -----------------------------

def _round_up(x, m):
    return (x + m - 1) // m * m


@functools.lru_cache(maxsize=None)
def _vmem_limit_bytes():
    """Chip-aware scoped-VMEM limit (v5e/v6e: 128 MiB phys, v7x: 64 MiB)."""
    try:
        cap = int(pltpu.get_tpu_info().vmem_capacity_bytes)
    except Exception:
        cap = 64 << 20          # assume the smallest (v7x per-TensorCore VMEM)
    return int(min(cap * 3 // 4, 96 << 20))


def _row_tile(M, target=1024):
    """Token-axis tile: multiple of 8 (layout-safe), capped at `target`,
    and aiming for >= 2 grid steps so both v7x TensorCores get work."""
    if M <= 16 or M % 8 != 0:
        return M
    half = -(-M // 2)
    return min(M, min(target, _round_up(half, 8)))


def _divisor_tile(S, target):
    """Largest divisor of S that is <= target and (multiple of 8 or == S)."""
    for d in range(min(target, S), 0, -1):
        if S % d == 0 and (d % 8 == 0 or d == S):
            return d
    return S


# ----------------------------- Pallas kernels -----------------------------

def _linear_kernel(x_ref, w_ref, b_ref, o_ref):
    # x: (tm, K) bf16, w: (K, N) bf16, b: (1, N) f32 -> bf16 out, f32 accumulation.
    o_ref[...] = (jnp.dot(x_ref[...], w_ref[...],
                          preferred_element_type=jnp.float32) + b_ref[...]
                  ).astype(o_ref.dtype)


def _prenorm_attn_kernel(x_ref, g_ref, b_ref, wq_ref, wk_ref, wv_ref, o_ref, *,
                         heads, dim_head, time_mode):
    # x_ref: (1, Tb, Nb, D) tile of the (b, t, n, D) residual stream (bf16).
    x = x_ref[0].astype(jnp.float32)                               # (Tb, Nb, D)
    # PreNorm (torch LayerNorm, eps=1e-5) -- f32 VPU math.
    mu = jnp.mean(x, axis=-1, keepdims=True)
    var = jnp.mean(jnp.square(x - mu), axis=-1, keepdims=True)
    y = (x - mu) * jax.lax.rsqrt(var + 1e-5) * g_ref[...] + b_ref[...]

    if time_mode:
        # attend along t, batched over the n positions of this tile: swap (t, n)
        # on the VMEM tile only (no XLA/HBM transpose).
        y = jnp.swapaxes(y, 0, 1)                                  # (Nb, Tb, D)
    S, L, D = y.shape
    yb = y.reshape(S * L, D).astype(jnp.bfloat16)                  # MXU bf16 input

    for h in range(heads):     # static & small; each head's temporaries retire here
        # scale (dim_head**-0.5) is folded into wq at init time.
        q = jnp.dot(yb, wq_ref[h], preferred_element_type=jnp.float32)
        k = jnp.dot(yb, wk_ref[h], preferred_element_type=jnp.float32)
        v = jnp.dot(yb, wv_ref[h], preferred_element_type=jnp.float32)
        q = q.reshape(S, L, dim_head).astype(jnp.bfloat16)
        k = k.reshape(S, L, dim_head).astype(jnp.bfloat16)
        v = v.reshape(S, L, dim_head).astype(jnp.bfloat16)

        dots = jnp.einsum('sid,sjd->sij', q, k,
                          preferred_element_type=jnp.float32)      # (S, L, L) f32
        dots = dots - jnp.max(dots, axis=-1, keepdims=True)
        e = jnp.exp(dots)
        # deliberate: approx reciprocal (EUP slot) for the softmax denominator.
        attn = e * pl.reciprocal(jnp.sum(e, axis=-1, keepdims=True), approx=True)
        out_h = jnp.einsum('sij,sjd->sid', attn.astype(jnp.bfloat16), v,
                           preferred_element_type=jnp.float32)     # (S, L, dh)
        if time_mode:
            out_h = jnp.swapaxes(out_h, 0, 1)                      # back to (t, n, dh)
        # write straight into the output lane slice -> no concatenate, no extra scratch.
        o_ref[0, :, :, h * dim_head:(h + 1) * dim_head] = out_h.astype(o_ref.dtype)


def _tail_kernel(xs_ref, xt_ref, x_ref, wa_ref, wb_ref, lb_ref,
                 g_ref, b_ref, w1_ref, b1_ref, w2_ref, b2_ref, o_ref):
    # Fused: out_att = [xs|xt] @ lin_w + lin_b + x ; out = MLP(LN(out_att)) + out_att
    att = (jnp.dot(xs_ref[...], wa_ref[...], preferred_element_type=jnp.float32)
           + jnp.dot(xt_ref[...], wb_ref[...], preferred_element_type=jnp.float32)
           + lb_ref[...] + x_ref[...].astype(jnp.float32))         # (tm, D) f32

    mu = jnp.mean(att, axis=-1, keepdims=True)
    var = jnp.mean(jnp.square(att - mu), axis=-1, keepdims=True)
    y = (att - mu) * jax.lax.rsqrt(var + 1e-5) * g_ref[...] + b_ref[...]

    hdn = jnp.dot(y.astype(jnp.bfloat16), w1_ref[...],
                  preferred_element_type=jnp.float32) + b1_ref[...]
    # exact (erf) GELU, matching torch.nn.GELU() default
    hdn = 0.5 * hdn * (1.0 + jax.lax.erf(hdn * 0.7071067811865476))
    out = (jnp.dot(hdn.astype(jnp.bfloat16), w2_ref[...],
                   preferred_element_type=jnp.float32) + b2_ref[...] + att)
    o_ref[...] = out.astype(o_ref.dtype)


def _head_kernel(x_ref, g_ref, beta_ref, w_ref, b_ref, o_ref, acc_ref, *, n_tokens):
    # Tiled token-mean accumulation + (on last step) LayerNorm + Linear + Softmax.
    j = pl.program_id(0)

    @pl.when(j == 0)
    def _():
        acc_ref[...] = jnp.zeros_like(acc_ref)

    acc_ref[...] += jnp.sum(x_ref[...].astype(jnp.float32), axis=1)   # (B, D)

    @pl.when(j == pl.num_programs(0) - 1)
    def _():
        pooled = acc_ref[...] * (1.0 / n_tokens)
        mu = jnp.mean(pooled, axis=-1, keepdims=True)
        var = jnp.mean(jnp.square(pooled - mu), axis=-1, keepdims=True)
        y = (pooled - mu) * jax.lax.rsqrt(var + 1e-5) * g_ref[...] + beta_ref[...]
        logits = jnp.dot(y.astype(jnp.bfloat16), w_ref[...],
                         preferred_element_type=jnp.float32) + b_ref[...]
        o_ref[...] = jax.nn.softmax(logits, axis=-1).astype(o_ref.dtype)


# ----------------------------- Pallas wrappers -----------------------------

def pallas_linear(x2, w, b):
    M, K = x2.shape
    N = w.shape[1]
    tm = _row_tile(M)
    grid = (pl.cdiv(M, tm),)
    return pl.pallas_call(
        _linear_kernel,
        out_shape=jax.ShapeDtypeStruct((M, N), jnp.bfloat16),
        grid=grid,
        in_specs=[pl.BlockSpec((tm, K), lambda i: (i, 0)),
                  pl.BlockSpec((K, N), lambda i: (0, 0)),
                  pl.BlockSpec((1, N), lambda i: (0, 0))],
        out_specs=pl.BlockSpec((tm, N), lambda i: (i, 0)),
        compiler_params=pltpu.CompilerParams(
            dimension_semantics=("parallel",),
            vmem_limit_bytes=_vmem_limit_bytes()),
    )(x2, w, b.reshape(1, N))


def pallas_prenorm_attention(x4, g, b, wq, wk, wv, heads, dim_head, *, time_mode):
    """Fused PreNorm + QKV + attention over one factorized axis.

    x4: (b, t, n, D) bf16.  space: attend over n (batched over t);  time: attend over t
    (batched over n).  Output is always written back in (b, t, n, inner) layout so no
    XLA transposes are needed around the time branch.
    """
    B, T, N, D = x4.shape
    inner = heads * dim_head
    L = T if time_mode else N          # attended sequence length
    S_total = N if time_mode else T    # independent sequences tiled across the grid

    # Working-set-aware blocking (input + output double-buffered, q/k/v, live probs).
    f32b, bf16b = 4, 2
    per_seq = (L * D * (2 * bf16b + 2 * f32b)
               + L * inner * (2 * bf16b + f32b)
               + L * dim_head * 3 * (f32b + bf16b)
               + 2 * L * L * f32b)
    budget = max(_vmem_limit_bytes() // 3, 1 << 20)
    sblk = max(1, min(S_total, budget // max(per_seq, 1)))
    if time_mode and sblk < S_total:
        # sliced n is the block's second-to-last dim -> multiple of 8 (or full extent)
        sblk = S_total if S_total <= 8 else max(8, (sblk // 8) * 8)
    sblk = min(sblk, S_total)
    grid = (B, pl.cdiv(S_total, sblk))

    if time_mode:
        blk_in, blk_out = (1, T, sblk, D), (1, T, sblk, inner)
        imap = lambda i, j: (i, 0, j, 0)
    else:
        blk_in, blk_out = (1, sblk, N, D), (1, sblk, N, inner)
        imap = lambda i, j: (i, j, 0, 0)

    kern = functools.partial(_prenorm_attn_kernel, heads=heads,
                             dim_head=dim_head, time_mode=time_mode)
    return pl.pallas_call(
        kern,
        out_shape=jax.ShapeDtypeStruct((B, T, N, inner), jnp.bfloat16),
        grid=grid,
        in_specs=[pl.BlockSpec(blk_in, imap),
                  pl.BlockSpec((1, D), lambda i, j: (0, 0)),
                  pl.BlockSpec((1, D), lambda i, j: (0, 0)),
                  pl.BlockSpec((heads, D, dim_head), lambda i, j: (0, 0, 0)),
                  pl.BlockSpec((heads, D, dim_head), lambda i, j: (0, 0, 0)),
                  pl.BlockSpec((heads, D, dim_head), lambda i, j: (0, 0, 0))],
        out_specs=pl.BlockSpec(blk_out, imap),
        compiler_params=pltpu.CompilerParams(
            dimension_semantics=("parallel", "parallel"),
            vmem_limit_bytes=_vmem_limit_bytes()),
    )(x4, g.reshape(1, D), b.reshape(1, D), wq, wk, wv)


def pallas_transformer_tail(xs2, xt2, x2, wa, wb, lb, g, b, w1, b1, w2, b2):
    M, D = x2.shape
    inner = xs2.shape[1]
    H = w1.shape[1]
    tm = _row_tile(M)
    grid = (pl.cdiv(M, tm),)
    return pl.pallas_call(
        _tail_kernel,
        out_shape=jax.ShapeDtypeStruct((M, D), jnp.bfloat16),
        grid=grid,
        in_specs=[pl.BlockSpec((tm, inner), lambda i: (i, 0)),
                  pl.BlockSpec((tm, inner), lambda i: (i, 0)),
                  pl.BlockSpec((tm, D), lambda i: (i, 0)),
                  pl.BlockSpec((inner, D), lambda i: (0, 0)),
                  pl.BlockSpec((inner, D), lambda i: (0, 0)),
                  pl.BlockSpec((1, D), lambda i: (0, 0)),
                  pl.BlockSpec((1, D), lambda i: (0, 0)),
                  pl.BlockSpec((1, D), lambda i: (0, 0)),
                  pl.BlockSpec((D, H), lambda i: (0, 0)),
                  pl.BlockSpec((1, H), lambda i: (0, 0)),
                  pl.BlockSpec((H, D), lambda i: (0, 0)),
                  pl.BlockSpec((1, D), lambda i: (0, 0))],
        out_specs=pl.BlockSpec((tm, D), lambda i: (i, 0)),
        compiler_params=pltpu.CompilerParams(
            dimension_semantics=("parallel",),
            vmem_limit_bytes=_vmem_limit_bytes()),
    )(xs2, xt2, x2, wa, wb, lb.reshape(1, D), g.reshape(1, D), b.reshape(1, D),
      w1, b1.reshape(1, H), w2, b2.reshape(1, D))


def pallas_head(x, g, beta, w, b, *, token_tile=2048):
    B, S, D = x.shape
    C = w.shape[1]
    sblk = _divisor_tile(S, token_tile)   # divisor -> no padded-garbage rows in the mean
    grid = (S // sblk,)
    kern = functools.partial(_head_kernel, n_tokens=float(S))
    return pl.pallas_call(
        kern,
        out_shape=jax.ShapeDtypeStruct((B, C), jnp.float32),
        grid=grid,
        in_specs=[pl.BlockSpec((B, sblk, D), lambda j: (0, j, 0)),
                  pl.BlockSpec((1, D), lambda j: (0, 0)),
                  pl.BlockSpec((1, D), lambda j: (0, 0)),
                  pl.BlockSpec((D, C), lambda j: (0, 0)),
                  pl.BlockSpec((1, C), lambda j: (0, 0))],
        out_specs=pl.BlockSpec((B, C), lambda j: (0, 0)),
        scratch_shapes=[pltpu.VMEM((B, D), jnp.float32)],
        compiler_params=pltpu.CompilerParams(
            dimension_semantics=("arbitrary",),
            vmem_limit_bytes=_vmem_limit_bytes()),
    )(x, g.reshape(1, D), beta.reshape(1, D), w, b.reshape(1, C))


# ----------------------------- ViViT forward -----------------------------

def vivit_forward(x, params, cfg):
    b, c, t, h, w = x.shape
    p, dim = cfg["patch_size"], cfg["dim"]
    hp, wp = h // p, w // p
    n = hp * wp                                    # num_patches_space
    heads_half = cfg["heads"] // 2
    dh = cfg["dim_head"]
    inner = heads_half * dh

    # Patch rearrange 'b c (h p1) (w p2) -> (b t) (h w) (p1 p2 c)' as ONE transpose+reshape.
    # TODO(synk): fold this gather into pallas_linear's in_spec (Element index_map) to
    # remove the XLA copy before the first kernel entirely.
    xb = x.astype(jnp.bfloat16)
    xe = xb.reshape(b, c, t, hp, p, wp, p)
    xe = jnp.transpose(xe, (0, 2, 3, 5, 4, 6, 1))          # (b, t, hp, wp, p1, p2, c)
    xe = xe.reshape(b * t * n, p * p * c)

    xe = pallas_linear(xe, params["patch_w"], params["patch_b"])       # (b*t*n, dim) bf16
    xcur = (xe.reshape(b, t * n, dim).astype(jnp.float32)
            + params["pos_emb"]).astype(jnp.bfloat16)                  # bf16 residual stream

    for lp in params["layers"]:
        x4 = xcur.reshape(b, t, n, dim)

        # space branch: attend over n, batched over t
        xs = pallas_prenorm_attention(x4, lp["ln_s_g"], lp["ln_s_b"],
                                      lp["wq_s"], lp["wk_s"], lp["wv_s"],
                                      heads_half, dh, time_mode=False)  # (b,t,n,inner)
        # time branch: attend over t, batched over n -- no XLA transposes
        xt = pallas_prenorm_attention(x4, lp["ln_t_g"], lp["ln_t_b"],
                                      lp["wq_t"], lp["wk_t"], lp["wv_t"],
                                      heads_half, dh, time_mode=True)   # (b,t,n,inner)

        # fused: split-concat projection + residual + PreNorm + GELU MLP + residual
        x2 = pallas_transformer_tail(
            xs.reshape(b * t * n, inner), xt.reshape(b * t * n, inner),
            xcur.reshape(b * t * n, dim),
            lp["lin_wa"], lp["lin_wb"], lp["lin_b"],
            lp["ln_m_g"], lp["ln_m_b"],
            lp["w1"], lp["b1"], lp["w2"], lp["b2"])
        xcur = x2.reshape(b, t * n, dim)

    return pallas_head(xcur, params["head_ln_g"], params["head_ln_b"],
                       params["head_w"], params["head_b"])


# ----------------------------- parameter init -----------------------------

def init_params(key, cfg):
    dim, p, c = cfg["dim"], cfg["patch_size"], cfg["channels"]
    patch_dim = c * p * p
    hh, dh = cfg["heads"] // 2, cfg["dim_head"]
    inner = hh * dh
    nps = (cfg["image_size"] // p) ** 2
    num_patches = nps * cfg["clip_size"]
    scale = float(dh) ** -0.5

    keys = jax.random.split(key, 3 + cfg["depth"])

    def w_init(k, shape, gain=1.0, dtype=jnp.bfloat16):
        return (jax.random.normal(k, shape, jnp.float32) * 0.02 * gain).astype(dtype)

    def head_w(k, gain=1.0):
        # per-head q/k/v weights: (H, D, dh); gain != 1 folds the attention scale into Wq
        return w_init(k, (hh, dim, dh), gain=gain)

    params = {
        "patch_w": w_init(keys[0], (patch_dim, dim)),
        "patch_b": jnp.zeros((dim,), jnp.float32),
        "pos_emb": w_init(keys[1], (1, num_patches, dim), dtype=jnp.float32),
        "head_ln_g": jnp.ones((dim,), jnp.float32),
        "head_ln_b": jnp.zeros((dim,), jnp.float32),
        "head_w": w_init(keys[2], (dim, cfg["num_classes"])),
        "head_b": jnp.zeros((cfg["num_classes"],), jnp.float32),
        "layers": [],
    }
    for li in range(cfg["depth"]):
        lk = jax.random.split(keys[3 + li], 10)
        params["layers"].append({
            "ln_s_g": jnp.ones((dim,), jnp.float32),
            "ln_s_b": jnp.zeros((dim,), jnp.float32),
            "wq_s": head_w(lk[0], gain=scale),     # scale folded into Wq
            "wk_s": head_w(lk[1]),
            "wv_s": head_w(lk[2]),
            "ln_t_g": jnp.ones((dim,), jnp.float32),
            "ln_t_b": jnp.zeros((dim,), jnp.float32),
            "wq_t": head_w(lk[3], gain=scale),
            "wk_t": head_w(lk[4]),
            "wv_t": head_w(lk[5]),
            # concat([xs, xt]) @ lin_w  ==  xs @ lin_wa + xt @ lin_wb
            "lin_wa": w_init(lk[6], (inner, dim)),
            "lin_wb": w_init(lk[7], (inner, dim)),
            "lin_b": jnp.zeros((dim,), jnp.float32),
            "ln_m_g": jnp.ones((dim,), jnp.float32),
            "ln_m_b": jnp.zeros((dim,), jnp.float32),
            "w1": w_init(lk[8], (dim, cfg["mlp_dim"])),
            "b1": jnp.zeros((cfg["mlp_dim"],), jnp.float32),
            "w2": w_init(lk[9], (cfg["mlp_dim"], dim)),
            "b2": jnp.zeros((dim,), jnp.float32),
        })
    return params


# ----------------------------- main -----------------------------

if __name__ == "__main__":
    # Small but structure-preserving config (the torch module hardcodes 256/28/16-head
    # sizes; here everything is shrunk while keeping the exact forward semantics).
    # Production configs should keep dim / inner / mlp_dim on 128-lane multiples.
    cfg = dict(image_size=32, patch_size=8, channels=3, dim=32, depth=2,
               heads=4, dim_head=16, mlp_dim=64, num_classes=2, clip_size=4)

    key = jax.random.PRNGKey(0)
    pkey, xkey = jax.random.split(key)
    params = init_params(pkey, cfg)

    batch = 2
    x = jax.random.normal(
        xkey,
        (batch, cfg["channels"], cfg["clip_size"], cfg["image_size"], cfg["image_size"]),
        jnp.float32)

    fwd = jax.jit(functools.partial(vivit_forward, cfg=cfg))
    out = fwd(x, params)
    out = jax.block_until_ready(out)
    assert out.shape == (batch, cfg["num_classes"])
    assert bool(jnp.all(jnp.isfinite(out)))
    print("KERNEL_OK")
</pallas_src>

<mosaic_0001>
module attributes {stable_mosaic.version = 11 : i64} {
  func.func @_linear_kernel(%arg0: i32, %arg1: memref<64x192xbf16, #tpu.memory_space<vmem>>, %arg2: memref<192x32xbf16, #tpu.memory_space<vmem>>, %arg3: memref<1x32xf32, #tpu.memory_space<vmem>>, %arg4: memref<64x32xbf16, #tpu.memory_space<vmem>>) attributes {dimension_semantics = [#tpu.dimension_semantics<parallel>], iteration_bounds = array<i64: 2>, scalar_prefetch = 0 : i64, scratch_operands = 0 : i64, tpu.core_type = #tpu.core_type<tc>, window_params = [{transform_indices = @transform_0, window_bounds = array<i64: 64, 192>}, {pipeline_mode = #tpu.pipeline_mode<synchronous>, transform_indices = @transform_1, window_bounds = array<i64: 192, 32>}, {pipeline_mode = #tpu.pipeline_mode<synchronous>, transform_indices = @transform_2, window_bounds = array<i64: 1, 32>}, {transform_indices = @transform_3, window_bounds = array<i64: 64, 32>}]} {
    %c0 = arith.constant 0 : index
    %c0_0 = arith.constant 0 : index
    %0 = vector.load %arg1[%c0, %c0_0] : memref<64x192xbf16, #tpu.memory_space<vmem>>, vector<64x192xbf16>
    %c0_1 = arith.constant 0 : index
    %c0_2 = arith.constant 0 : index
    %1 = vector.load %arg2[%c0_1, %c0_2] : memref<192x32xbf16, #tpu.memory_space<vmem>>, vector<192x32xbf16>
    %cst = arith.constant dense<0.000000e+00> : vector<64x32xf32>
    %2 = tpu.matmul %0, %1, %cst {dimension_numbers = #tpu.dot_dimension_numbers<[1], [0], [0], [1], [0, 0, 1, 1], [], []>} : vector<64x192xbf16>, vector<192x32xbf16>, vector<64x32xf32> -> vector<64x32xf32>
    %c0_3 = arith.constant 0 : index
    %c0_4 = arith.constant 0 : index
    %3 = vector.load %arg3[%c0_3, %c0_4] : memref<1x32xf32, #tpu.memory_space<vmem>>, vector<1x32xf32>
    %4 = vector.broadcast %3 : vector<1x32xf32> to vector<64x32xf32>
    %5 = arith.addf %2, %4 : vector<64x32xf32>
    %6 = arith.truncf %5 : vector<64x32xf32> to vector<64x32xbf16>
    %c0_5 = arith.constant 0 : index
    %c0_6 = arith.constant 0 : index
    %7 = vector.load %arg4[%c0_5, %c0_6] : memref<64x32xbf16, #tpu.memory_space<vmem>>, vector<64x32xbf16>
    tpu.vector_store %arg4[%c0_5, %c0_6], %6 {strides = array<i32>} : memref<64x32xbf16, #tpu.memory_space<vmem>>, vector<64x32xbf16>,
    return
  }
  func.func @transform_0(%arg0: i32) -> (i32, i32) {
    %c0_i32 = arith.constant 0 : i32
    %c0_i32_0 = arith.constant 0 : i32
    return %arg0, %c0_i32 : i32, i32
  }
  func.func @transform_1(%arg0: i32) -> (i32, i32) {
    %c0_i32 = arith.constant 0 : i32
    %c0_i32_0 = arith.constant 0 : i32
    %c0_i32_1 = arith.constant 0 : i32
    return %c0_i32, %c0_i32_0 : i32, i32
  }
  func.func @transform_2(%arg0: i32) -> (i32, i32) {
    %c0_i32 = arith.constant 0 : i32
    %c0_i32_0 = arith.constant 0 : i32
    %c0_i32_1 = arith.constant 0 : i32
    return %c0_i32, %c0_i32_0 : i32, i32
  }
  func.func @transform_3(%arg0: i32) -> (i32, i32) {
    %c0_i32 = arith.constant 0 : i32
    %c0_i32_0 = arith.constant 0 : i32
    return %arg0, %c0_i32 : i32, i32
  }
}

module attributes {stable_mosaic.version = 11 : i64} {
  func.func @_prenorm_attn_kernel(%arg0: i32, %arg1: i32, %arg2: memref<1x4x16x32xbf16, #tpu.memory_space<vmem>>, %arg3: memref<1x32xf32, #tpu.memory_space<vmem>>, %arg4: memref<1x32xf32, #tpu.memory_space<vmem>>, %arg5: memref<2x32x16xbf16, #tpu.memory_space<vmem>>, %arg6: memref<2x32x16xbf16, #tpu.memory_space<vmem>>, %arg7: memref<2x32x16xbf16, #tpu.memory_space<vmem>>, %arg8: memref<1x4x16x32xbf16, #tpu.memory_space<vmem>>) attributes {dimension_semantics = [#tpu.dimension_semantics<parallel>, #tpu.dimension_semantics<parallel>], iteration_bounds = array<i64: 2, 1>, scalar_prefetch = 0 : i64, scratch_operands = 0 : i64, tpu.core_type = #tpu.core_type<tc>, window_params = [{transform_indices = @transform_0, window_bounds = array<i64: 1, 4, 16, 32>}, {pipeline_mode = #tpu.pipeline_mode<synchronous>, transform_indices = @transform_1, window_bounds = array<i64: 1, 32>}, {pipeline_mode = #tpu.pipeline_mode<synchronous>, transform_indices = @transform_2, window_bounds = array<i64: 1, 32>}, {pipeline_mode = #tpu.pipeline_mode<synchronous>, transform_indices = @transform_3, window_bounds = array<i64: 2, 32, 16>}, {pipeline_mode = #tpu.pipeline_mode<synchronous>, transform_indices = @transform_4, window_bounds = array<i64: 2, 32, 16>}, {pipeline_mode = #tpu.pipeline_mode<synchronous>, transform_indices = @transform_5, window_bounds = array<i64: 2, 32, 16>}, {transform_indices = @transform_6, window_bounds = array<i64: 1, 4, 16, 32>}]} {
    %c0 = arith.constant 0 : index
    %c0_0 = arith.constant 0 : index
    %c0_1 = arith.constant 0 : index
    %c0_2 = arith.constant 0 : index
    %0 = vector.load %arg2[%c0, %c0_0, %c0_1, %c0_2] : memref<1x4x16x32xbf16, #tpu.memory_space<vmem>>, vector<1x4x16x32xbf16>
    %1 = vector.shape_cast %0 : vector<1x4x16x32xbf16> to vector<4x16x32xbf16>
    %2 = arith.extf %1 : vector<4x16x32xbf16> to vector<4x16x32xf32>
    %cst = arith.constant dense<0.000000e+00> : vector<4x16xf32>
    %3 = vector.multi_reduction <add>, %2, %cst [2] : vector<4x16x32xf32> to vector<4x16xf32>
    %4 = vector.shape_cast %3 : vector<4x16xf32> to vector<4x16x1xf32>
    %cst_3 = arith.constant 3.200000e+01 : f32
    %5 = vector.broadcast %cst_3 : f32 to vector<4x16x1xf32>
    %6 = arith.divf %4, %5 : vector<4x16x1xf32>
    %7 = vector.broadcast %6 : vector<4x16x1xf32> to vector<4x16x32xf32>
    %8 = arith.subf %2, %7 : vector<4x16x32xf32>
    %9 = arith.mulf %8, %8 : vector<4x16x32xf32>
    %cst_4 = arith.constant dense<0.000000e+00> : vector<4x16xf32>
    %10 = vector.multi_reduction <add>, %9, %cst_4 [2] : vector<4x16x32xf32> to vector<4x16xf32>
    %11 = vector.shape_cast %10 : vector<4x16xf32> to vector<4x16x1xf32>
    %cst_5 = arith.constant 3.200000e+01 : f32
    %12 = vector.broadcast %cst_5 : f32 to vector<4x16x1xf32>
    %13 = arith.divf %11, %12 : vector<4x16x1xf32>
    %14 = vector.broadcast %6 : vector<4x16x1xf32> to vector<4x16x32xf32>
    %15 = arith.subf %2, %14 : vector<4x16x32xf32>
    %cst_6 = arith.constant 9.99999974E-6 : f32
    %16 = vector.broadcast %cst_6 : f32 to vector<4x16x1xf32>
    %17 = arith.addf %13, %16 : vector<4x16x1xf32>
    %18 = math.rsqrt %17 : vector<4x16x1xf32>
    %19 = vector.broadcast %18 : vector<4x16x1xf32> to vector<4x16x32xf32>
    %20 = arith.mulf %15, %19 : vector<4x16x32xf32>
    %c0_7 = arith.constant 0 : index
    %c0_8 = arith.constant 0 : index
    %21 = vector.load %arg3[%c0_7, %c0_8] : memref<1x32xf32, #tpu.memory_space<vmem>>, vector<1x32xf32>
    %22 = vector.shape_cast %21 : vector<1x32xf32> to vector<1x1x32xf32>
    %23 = vector.broadcast %22 : vector<1x1x32xf32> to vector<4x16x32xf32>
    %24 = arith.mulf %20, %23 : vector<4x16x32xf32>
    %c0_9 = arith.constant 0 : index
    %c0_10 = arith.constant 0 : index
    %25 = vector.load %arg4[%c0_9, %c0_10] : memref<1x32xf32, #tpu.memory_space<vmem>>, vector<1x32xf32>
    %26 = vector.shape_cast %25 : vector<1x32xf32> to vector<1x1x32xf32>
    %27 = vector.broadcast %26 : vector<1x1x32xf32> to vector<4x16x32xf32>
    %28 = arith.addf %24, %27 : vector<4x16x32xf32>
    %29 = vector.shape_cast %28 : vector<4x16x32xf32> to vector<64x32xf32>
    %30 = arith.truncf %29 : vector<64x32xf32> to vector<64x32xbf16>
    %c0_11 = arith.constant 0 : index
    %c0_12 = arith.constant 0 : index
    %c0_13 = arith.constant 0 : index
    %31 = vector.load %arg5[%c0_11, %c0_12, %c0_13] : memref<2x32x16xbf16, #tpu.memory_space<vmem>>, vector<1x32x16xbf16>
    %32 = vector.shape_cast %31 : vector<1x32x16xbf16> to vector<32x16xbf16>
    %cst_14 = arith.constant dense<0.000000e+00> : vector<64x16xf32>
    %33 = tpu.matmul %30, %32, %cst_14 {dimension_numbers = #tpu.dot_dimension_numbers<[1], [0], [0], [1], [0, 0, 1, 1], [], []>} : vector<64x32xbf16>, vector<32x16xbf16>, vector<64x16xf32> -> vector<64x16xf32>
    %c0_15 = arith.constant 0 : index
    %c0_16 = arith.constant 0 : index
    %c0_17 = arith.constant 0 : index
    %34 = vector.load %arg6[%c0_15, %c0_16, %c0_17] : memref<2x32x16xbf16, #tpu.memory_space<vmem>>, vector<1x32x16xbf16>
    %35 = vector.shape_cast %34 : vector<1x32x16xbf16> to vector<32x16xbf16>
    %cst_18 = arith.constant dense<0.000000e+00> : vector<64x16xf32>
    %36 = tpu.matmul %30, %35, %cst_18 {dimension_numbers = #tpu.dot_dimension_numbers<[1], [0], [0], [1], [0, 0, 1, 1], [], []>} : vector<64x32xbf16>, vector<32x16xbf16>, vector<64x16xf32> -> vector<64x16xf32>
    %c0_19 = arith.constant 0 : index
    %c0_20 = arith.constant 0 : index
    %c0_21 = arith.constant 0 : index
    %37 = vector.load %arg7[%c0_19, %c0_20, %c0_21] : memref<2x32x16xbf16, #tpu.memory_space<vmem>>, vector<1x32x16xbf16>
    %38 = vector.shape_cast %37 : vector<1x32x16xbf16> to vector<32x16xbf16>
    %cst_22 = arith.constant dense<0.000000e+00> : vector<64x16xf32>
    %39 = tpu.matmul %30, %38, %cst_22 {dimension_numbers = #tpu.dot_dimension_numbers<[1], [0], [0], [1], [0, 0, 1, 1], [], []>} : vector<64x32xbf16>, vector<32x16xbf16>, vector<64x16xf32> -> vector<64x16xf32>
    %40 = vector.shape_cast %33 : vector<64x16xf32> to vector<4x16x16xf32>
    %41 = arith.truncf %40 : vector<4x16x16xf32> to vector<4x16x16xbf16>
    %42 = vector.shape_cast %36 : vector<64x16xf32> to vector<4x16x16xf32>
    %43 = arith.truncf %42 : vector<4x16x16xf32> to vector<4x16x16xbf16>
    %44 = vector.shape_cast %39 : vector<64x16xf32> to vector<4x16x16xf32>
    %45 = arith.truncf %44 : vector<4x16x16xf32> to vector<4x16x16xbf16>
    "tpu.trace_start"() <{level = 10 : i32, message = "sid,sjd->sij"}> : () -> ()
    %cst_23 = arith.constant dense<0.000000e+00> : vector<4x16x16xf32>
    %46 = tpu.matmul %41, %43, %cst_23 {dimension_numbers = #tpu.dot_dimension_numbers<[2], [2], [1], [1], [0, 0, 0, 1, 1, 1], [0], [0]>} : vector<4x16x16xbf16>, vector<4x16x16xbf16>, vector<4x16x16xf32> -> vector<4x16x16xf32>
    "tpu.trace_stop"() : () -> ()
    %cst_24 = arith.constant dense<0xFF800000> : vector<4x16xf32>
    %47 = vector.multi_reduction <maximumf>, %46, %cst_24 [2] : vector<4x16x16xf32> to vector<4x16xf32>
    %48 = vector.shape_cast %47 : vector<4x16xf32> to vector<4x16x1xf32>
    %49 = vector.broadcast %48 : vector<4x16x1xf32> to vector<4x16x16xf32>
    %50 = arith.subf %46, %49 : vector<4x16x16xf32>
    %51 = math.exp %50 : vector<4x16x16xf32>
    %cst_25 = arith.constant dense<0.000000e+00> : vector<4x16xf32>
    %52 = vector.multi_reduction <add>, %51, %cst_25 [2] : vector<4x16x16xf32> to vector<4x16xf32>
    %53 = vector.shape_cast %52 : vector<4x16xf32> to vector<4x16x1xf32>
    %54 = tpu.reciprocal %53 {approx = true} : vector<4x16x1xf32> -> vector<4x16x1xf32>
    %55 = vector.broadcast %54 : vector<4x16x1xf32> to vector<4x16x16xf32>
    %56 = arith.mulf %51, %55 : vector<4x16x16xf32>
    %57 = arith.truncf %56 : vector<4x16x16xf32> to vector<4x16x16xbf16>
    "tpu.trace_start"() <{level = 10 : i32, message = "sij,sjd->sid"}> : () -> ()
    %cst_26 = arith.constant dense<0.000000e+00> : vector<4x16x16xf32>
    %58 = tpu.matmul %57, %45, %cst_26 {dimension_numbers = #tpu.dot_dimension_numbers<[2], [1], [1], [2], [0, 0, 0, 1, 1, 2], [0], [0]>} : vector<4x16x16xbf16>, vector<4x16x16xbf16>, vector<4x16x16xf32> -> vector<4x16x16xf32>
    "tpu.trace_stop"() : () -> ()
    %59 = arith.truncf %58 : vector<4x16x16xf32> to vector<4x16x16xbf16>
    %c0_27 = arith.constant 0 : index
    %c0_28 = arith.constant 0 : index
    %c0_29 = arith.constant 0 : index
    %c0_30 = arith.constant 0 : index
    %60 = vector.load %arg8[%c0_27, %c0_28, %c0_29, %c0_30] : memref<1x4x16x32xbf16, #tpu.memory_space<vmem>>, vector<1x4x16x16xbf16>
    %61 = vector.shape_cast %60 : vector<1x4x16x16xbf16> to vector<4x16x16xbf16>
    %62 = vector.shape_cast %59 : vector<4x16x16xbf16> to vector<1x4x16x16xbf16>
    tpu.vector_store %arg8[%c0_27, %c0_28, %c0_29, %c0_30], %62 {strides = array<i32>} : memref<1x4x16x32xbf16, #tpu.memory_space<vmem>>, vector<1x4x16x16xbf16>,
    %c1 = arith.constant 1 : index
    %c0_31 = arith.constant 0 : index
    %c0_32 = arith.constant 0 : index
    %63 = vector.load %arg5[%c1, %c0_31, %c0_32] : memref<2x32x16xbf16, #tpu.memory_space<vmem>>, vector<1x32x16xbf16>
    %64 = vector.shape_cast %63 : vector<1x32x16xbf16> to vector<32x16xbf16>
    %cst_33 = arith.constant dense<0.000000e+00> : vector<64x16xf32>
    %65 = tpu.matmul %30, %64, %cst_33 {dimension_numbers = #tpu.dot_dimension_numbers<[1], [0], [0], [1], [0, 0, 1, 1], [], []>} : vector<64x32xbf16>, vector<32x16xbf16>, vector<64x16xf32> -> vector<64x16xf32>
    %c1_34 = arith.constant 1 : index
    %c0_35 = arith.constant 0 : index
    %c0_36 = arith.constant 0 : index
    %66 = vector.load %arg6[%c1_34, %c0_35, %c0_36] : memref<2x32x16xbf16, #tpu.memory_space<vmem>>, vector<1x32x16xbf16>
    %67 = vector.shape_cast %66 : vector<1x32x16xbf16> to vector<32x16xbf16>
    %cst_37 = arith.constant dense<0.000000e+00> : vector<64x16xf32>
    %68 = tpu.matmul %30, %67, %cst_37 {dimension_numbers = #tpu.dot_dimension_numbers<[1], [0], [0], [1], [0, 0, 1, 1], [], []>} : vector<64x32xbf16>, vector<32x16xbf16>, vector<64x16xf32> -> vector<64x16xf32>
    %c1_38 = arith.constant 1 : index
    %c0_39 = arith.constant 0 : index
    %c0_40 = arith.constant 0 : index
    %69 = vector.load %arg7[%c1_38, %c0_39, %c0_40] : memref<2x32x16xbf16, #tpu.memory_space<vmem>>, vector<1x32x16xbf16>
    %70 = vector.shape_cast %69 : vector<1x32x16xbf16> to vector<32x16xbf16>
    %cst_41 = arith.constant dense<0.000000e+00> : vector<64x16xf32>
    %71 = tpu.matmul %30, %70, %cst_41 {dimension_numbers = #tpu.dot_dimension_numbers<[1], [0], [0], [1], [0, 0, 1, 1], [], []>} : vector<64x32xbf16>, vector<32x16xbf16>, vector<64x16xf32> -> vector<64x16xf32>
    %72 = vector.shape_cast %65 : vector<64x16xf32> to vector<4x16x16xf32>
    %73 = arith.truncf %72 : vector<4x16x16xf32> to vector<4x16x16xbf16>
    %74 = vector.shape_cast %68 : vector<64x16xf32> to vector<4x16x16xf32>
    %75 = arith.truncf %74 : vector<4x16x16xf32> to vector<4x16x16xbf16>
    %76 = vector.shape_cast %71 : vector<64x16xf32> to vector<4x16x16xf32>
    %77 = arith.truncf %76 : vector<4x16x16xf32> to vector<4x16x16xbf16>
    "tpu.trace_start"() <{level = 10 : i32, message = "sid,sjd->sij"}> : () -> ()
    %cst_42 = arith.constant dense<0.000000e+00> : vector<4x16x16xf32>
    %78 = tpu.matmul %73, %75, %cst_42 {dimension_numbers = #tpu.dot_dimension_numbers<[2], [2], [1], [1], [0, 0, 0, 1, 1, 1], [0], [0]>} : vector<4x16x16xbf16>, vector<4x16x16xbf16>, vector<4x16x16xf32> -> vector<4x16x16xf32>
    "tpu.trace_stop"() : () -> ()
    %cst_43 = arith.constant dense<0xFF800000> : vector<4x16xf32>
    %79 = vector.multi_reduction <maximumf>, %78, %cst_43 [2] : vector<4x16x16xf32> to vector<4x16xf32>
    %80 = vector.shape_cast %79 : vector<4x16xf32> to vector<4x16x1xf32>
    %81 = vector.broadcast %80 : vector<4x16x1xf32> to vector<4x16x16xf32>
    %82 = arith.subf %78, %81 : vector<4x16x16xf32>
    %83 = math.exp %82 : vector<4x16x16xf32>
    %cst_44 = arith.constant dense<0.000000e+00> : vector<4x16xf32>
    %84 = vector.multi_reduction <add>, %83, %cst_44 [2] : vector<4x16x16xf32> to vector<4x16xf32>
    %85 = vector.shape_cast %84 : vector<4x16xf32> to vector<4x16x1xf32>
    %86 = tpu.reciprocal %85 {approx = true} : vector<4x16x1xf32> -> vector<4x16x1xf32>
    %87 = vector.broadcast %86 : vector<4x16x1xf32> to vector<4x16x16xf32>
    %88 = arith.mulf %83, %87 : vector<4x16x16xf32>
    %89 = arith.truncf %88 : vector<4x16x16xf32> to vector<4x16x16xbf16>
    "tpu.trace_start"() <{level = 10 : i32, message = "sij,sjd->sid"}> : () -> ()
    %cst_45 = arith.constant dense<0.000000e+00> : vector<4x16x16xf32>
    %90 = tpu.matmul %89, %77, %cst_45 {dimension_numbers = #tpu.dot_dimension_numbers<[2], [1], [1], [2], [0, 0, 0, 1, 1, 2], [0], [0]>} : vector<4x16x16xbf16>, vector<4x16x16xbf16>, vector<4x16x16xf32> -> vector<4x16x16xf32>
    "tpu.trace_stop"() : () -> ()
    %91 = arith.truncf %90 : vector<4x16x16xf32> to vector<4x16x16xbf16>
    %c0_46 = arith.constant 0 : index
    %c0_47 = arith.constant 0 : index
    %c0_48 = arith.constant 0 : index
    %c16 = arith.constant 16 : index
    %92 = vector.load %arg8[%c0_46, %c0_47, %c0_48, %c16] : memref<1x4x16x32xbf16, #tpu.memory_space<vmem>>, vector<1x4x16x16xbf16>
    %93 = vector.shape_cast %92 : vector<1x4x16x16xbf16> to vector<4x16x16xbf16>
    %94 = vector.shape_cast %91 : vector<4x16x16xbf16> to vector<1x4x16x16xbf16>
    tpu.vector_store %arg8[%c0_46, %c0_47, %c0_48, %c16], %94 {strides = array<i32>} : memref<1x4x16x32xbf16, #tpu.memory_space<vmem>>, vector<1x4x16x16xbf16>,
    return
  }
  func.func @transform_0(%arg0: i32, %arg1: i32) -> (i32, i32, i32, i32) {
    %c0_i32 = arith.constant 0 : i32
    %c0_i32_0 = arith.constant 0 : i32
    %c0_i32_1 = arith.constant 0 : i32
    return %arg0, %arg1, %c0_i32, %c0_i32_0 : i32, i32, i32, i32
  }
  func.func @transform_1(%arg0: i32, %arg1: i32) -> (i32, i32) {
    %c0_i32 = arith.constant 0 : i32
    %c0_i32_0 = arith.constant 0 : i32
    %c0_i32_1 = arith.constant 0 : i32
    return %c0_i32, %c0_i32_0 : i32, i32
  }
  func.func @transform_2(%arg0: i32, %arg1: i32) -> (i32, i32) {
    %c0_i32 = arith.constant 0 : i32
    %c0_i32_0 = arith.constant 0 : i32
    %c0_i32_1 = arith.constant 0 : i32
    return %c0_i32, %c0_i32_0 : i32, i32
  }
  func.func @transform_3(%arg0: i32, %arg1: i32) -> (i32, i32, i32) {
    %c0_i32 = arith.constant 0 : i32
    %c0_i32_0 = arith.constant 0 : i32
    %c0_i32_1 = arith.constant 0 : i32
    %c0_i32_2 = arith.constant 0 : i32
    return %c0_i32, %c0_i32_0, %c0_i32_1 : i32, i32, i32
  }
  func.func @transform_4(%arg0: i32, %arg1: i32) -> (i32, i32, i32) {
    %c0_i32 = arith.constant 0 : i32
    %c0_i32_0 = arith.constant 0 : i32
    %c0_i32_1 = arith.constant 0 : i32
    %c0_i32_2 = arith.constant 0 : i32
    return %c0_i32, %c0_i32_0, %c0_i32_1 : i32, i32, i32
  }
  func.func @transform_5(%arg0: i32, %arg1: i32) -> (i32, i32, i32) {
    %c0_i32 = arith.constant 0 : i32
    %c0_i32_0 = arith.constant 0 : i32
    %c0_i32_1 = arith.constant 0 : i32
    %c0_i32_2 = arith.constant 0 : i32
    return %c0_i32, %c0_i32_0, %c0_i32_1 : i32, i32, i32
  }
  func.func @transform_6(%arg0: i32, %arg1: i32) -> (i32, i32, i32, i32) {
    %c0_i32 = arith.constant 0 : i32
    %c0_i32_0 = arith.constant 0 : i32
    %c0_i32_1 = arith.constant 0 : i32
    return %arg0, %arg1, %c0_i32, %c0_i32_0 : i32, i32, i32, i32
  }
}

module attributes {stable_mosaic.version = 11 : i64} {
  func.func @_prenorm_attn_kernel(%arg0: i32, %arg1: i32, %arg2: memref<1x4x16x32xbf16, #tpu.memory_space<vmem>>, %arg3: memref<1x32xf32, #tpu.memory_space<vmem>>, %arg4: memref<1x32xf32, #tpu.memory_space<vmem>>, %arg5: memref<2x32x16xbf16, #tpu.memory_space<vmem>>, %arg6: memref<2x32x16xbf16, #tpu.memory_space<vmem>>, %arg7: memref<2x32x16xbf16, #tpu.memory_space<vmem>>, %arg8: memref<1x4x16x32xbf16, #tpu.memory_space<vmem>>) attributes {dimension_semantics = [#tpu.dimension_semantics<parallel>, #tpu.dimension_semantics<parallel>], iteration_bounds = array<i64: 2, 1>, scalar_prefetch = 0 : i64, scratch_operands = 0 : i64, tpu.core_type = #tpu.core_type<tc>, window_params = [{transform_indices = @transform_0, window_bounds = array<i64: 1, 4, 16, 32>}, {pipeline_mode = #tpu.pipeline_mode<synchronous>, transform_indices = @transform_1, window_bounds = array<i64: 1, 32>}, {pipeline_mode = #tpu.pipeline_mode<synchronous>, transform_indices = @transform_2, window_bounds = array<i64: 1, 32>}, {pipeline_mode = #tpu.pipeline_mode<synchronous>, transform_indices = @transform_3, window_bounds = array<i64: 2, 32, 16>}, {pipeline_mode = #tpu.pipeline_mode<synchronous>, transform_indices = @transform_4, window_bounds = array<i64: 2, 32, 16>}, {pipeline_mode = #tpu.pipeline_mode<synchronous>, transform_indices = @transform_5, window_bounds = array<i64: 2, 32, 16>}, {transform_indices = @transform_6, window_bounds = array<i64: 1, 4, 16, 32>}]} {
    %c0 = arith.constant 0 : index
    %c0_0 = arith.constant 0 : index
    %c0_1 = arith.constant 0 : index
    %c0_2 = arith.constant 0 : index
    %0 = vector.load %arg2[%c0, %c0_0, %c0_1, %c0_2] : memref<1x4x16x32xbf16, #tpu.memory_space<vmem>>, vector<1x4x16x32xbf16>
    %1 = vector.shape_cast %0 : vector<1x4x16x32xbf16> to vector<4x16x32xbf16>
    %2 = arith.extf %1 : vector<4x16x32xbf16> to vector<4x16x32xf32>
    %cst = arith.constant dense<0.000000e+00> : vector<4x16xf32>
    %3 = vector.multi_reduction <add>, %2, %cst [2] : vector<4x16x32xf32> to vector<4x16xf32>
    %4 = vector.shape_cast %3 : vector<4x16xf32> to vector<4x16x1xf32>
    %cst_3 = arith.constant 3.200000e+01 : f32
    %5 = vector.broadcast %cst_3 : f32 to vector<4x16x1xf32>
    %6 = arith.divf %4, %5 : vector<4x16x1xf32>
    %7 = vector.broadcast %6 : vector<4x16x1xf32> to vector<4x16x32xf32>
    %8 = arith.subf %2, %7 : vector<4x16x32xf32>
    %9 = arith.mulf %8, %8 : vector<4x16x32xf32>
    %cst_4 = arith.constant dense<0.000000e+00> : vector<4x16xf32>
    %10 = vector.multi_reduction <add>, %9, %cst_4 [2] : vector<4x16x32xf32> to vector<4x16xf32>
    %11 = vector.shape_cast %10 : vector<4x16xf32> to vector<4x16x1xf32>
    %cst_5 = arith.constant 3.200000e+01 : f32
    %12 = vector.broadcast %cst_5 : f32 to vector<4x16x1xf32>
    %13 = arith.divf %11, %12 : vector<4x16x1xf32>
    %14 = vector.broadcast %6 : vector<4x16x1xf32> to vector<4x16x32xf32>
    %15 = arith.subf %2, %14 : vector<4x16x32xf32>
    %cst_6 = arith.constant 9.99999974E-6 : f32
    %16 = vector.broadcast %cst_6 : f32 to vector<4x16x1xf32>
    %17 = arith.addf %13, %16 : vector<4x16x1xf32>
    %18 = math.rsqrt %17 : vector<4x16x1xf32>
    %19 = vector.broadcast %18 : vector<4x16x1xf32> to vector<4x16x32xf32>
    %20 = arith.mulf %15, %19 : vector<4x16x32xf32>
    %c0_7 = arith.constant 0 : index
    %c0_8 = arith.constant 0 : index
    %21 = vector.load %arg3[%c0_7, %c0_8] : memref<1x32xf32, #tpu.memory_space<vmem>>, vector<1x32xf32>
    %22 = vector.shape_cast %21 : vector<1x32xf32> to vector<1x1x32xf32>
    %23 = vector.broadcast %22 : vector<1x1x32xf32> to vector<4x16x32xf32>
    %24 = arith.mulf %20, %23 : vector<4x16x32xf32>
    %c0_9 = arith.constant 0 : index
    %c0_10 = arith.constant 0 : index
    %25 = vector.load %arg4[%c0_9, %c0_10] : memref<1x32xf32, #tpu.memory_space<vmem>>, vector<1x32xf32>
    %26 = vector.shape_cast %25 : vector<1x32xf32> to vector<1x1x32xf32>
    %27 = vector.broadcast %26 : vector<1x1x32xf32> to vector<4x16x32xf32>
    %28 = arith.addf %24, %27 : vector<4x16x32xf32>
    %29 = tpu.transpose %28, [1, 0, 2] : vector<4x16x32xf32> -> vector<16x4x32xf32>
    %30 = vector.shape_cast %29 : vector<16x4x32xf32> to vector<64x32xf32>
    %31 = arith.truncf %30 : vector<64x32xf32> to vector<64x32xbf16>
    %c0_11 = arith.constant 0 : index
    %c0_12 = arith.constant 0 : index
    %c0_13 = arith.constant 0 : index
    %32 = vector.load %arg5[%c0_11, %c0_12, %c0_13] : memref<2x32x16xbf16, #tpu.memory_space<vmem>>, vector<1x32x16xbf16>
    %33 = vector.shape_cast %32 : vector<1x32x16xbf16> to vector<32x16xbf16>
    %cst_14 = arith.constant dense<0.000000e+00> : vector<64x16xf32>
    %34 = tpu.matmul %31, %33, %cst_14 {dimension_numbers = #tpu.dot_dimension_numbers<[1], [0], [0], [1], [0, 0, 1, 1], [], []>} : vector<64x32xbf16>, vector<32x16xbf16>, vector<64x16xf32> -> vector<64x16xf32>
    %c0_15 = arith.constant 0 : index
    %c0_16 = arith.constant 0 : index
    %c0_17 = arith.constant 0 : index
    %35 = vector.load %arg6[%c0_15, %c0_16, %c0_17] : memref<2x32x16xbf16, #tpu.memory_space<vmem>>, vector<1x32x16xbf16>
    %36 = vector.shape_cast %35 : vector<1x32x16xbf16> to vector<32x16xbf16>
    %cst_18 = arith.constant dense<0.000000e+00> : vector<64x16xf32>
    %37 = tpu.matmul %31, %36, %cst_18 {dimension_numbers = #tpu.dot_dimension_numbers<[1], [0], [0], [1], [0, 0, 1, 1], [], []>} : vector<64x32xbf16>, vector<32x16xbf16>, vector<64x16xf32> -> vector<64x16xf32>
    %c0_19 = arith.constant 0 : index
    %c0_20 = arith.constant 0 : index
    %c0_21 = arith.constant 0 : index
    %38 = vector.load %arg7[%c0_19, %c0_20, %c0_21] : memref<2x32x16xbf16, #tpu.memory_space<vmem>>, vector<1x32x16xbf16>
    %39 = vector.shape_cast %38 : vector<1x32x16xbf16> to vector<32x16xbf16>
    %cst_22 = arith.constant dense<0.000000e+00> : vector<64x16xf32>
    %40 = tpu.matmul %31, %39, %cst_22 {dimension_numbers = #tpu.dot_dimension_numbers<[1], [0], [0], [1], [0, 0, 1, 1], [], []>} : vector<64x32xbf16>, vector<32x16xbf16>, vector<64x16xf32> -> vector<64x16xf32>
    %41 = vector.shape_cast %34 : vector<64x16xf32> to vector<16x4x16xf32>
    %42 = arith.truncf %41 : vector<16x4x16xf32> to vector<16x4x16xbf16>
    %43 = vector.shape_cast %37 : vector<64x16xf32> to vector<16x4x16xf32>
    %44 = arith.truncf %43 : vector<16x4x16xf32> to vector<16x4x16xbf16>
    %45 = vector.shape_cast %40 : vector<64x16xf32> to vector<16x4x16xf32>
    %46 = arith.truncf %45 : vector<16x4x16xf32> to vector<16x4x16xbf16>
    "tpu.trace_start"() <{level = 10 : i32, message = "sid,sjd->sij"}> : () -> ()
    %cst_23 = arith.constant dense<0.000000e+00> : vector<16x4x4xf32>
    %47 = tpu.matmul %42, %44, %cst_23 {dimension_numbers = #tpu.dot_dimension_numbers<[2], [2], [1], [1], [0, 0, 0, 1, 1, 1], [0], [0]>} : vector<16x4x16xbf16>, vector<16x4x16xbf16>, vector<16x4x4xf32> -> vector<16x4x4xf32>
    "tpu.trace_stop"() : () -> ()
    %cst_24 = arith.constant dense<0xFF800000> : vector<16x4xf32>
    %48 = vector.multi_reduction <maximumf>, %47, %cst_24 [2] : vector<16x4x4xf32> to vector<16x4xf32>
    %49 = vector.shape_cast %48 : vector<16x4xf32> to vector<16x4x1xf32>
    %50 = vector.broadcast %49 : vector<16x4x1xf32> to vector<16x4x4xf32>
    %51 = arith.subf %47, %50 : vector<16x4x4xf32>
    %52 = math.exp %51 : vector<16x4x4xf32>
    %cst_25 = arith.constant dense<0.000000e+00> : vector<16x4xf32>
    %53 = vector.multi_reduction <add>, %52, %cst_25 [2] : vector<16x4x4xf32> to vector<16x4xf32>
    %54 = vector.shape_cast %53 : vector<16x4xf32> to vector<16x4x1xf32>
    %55 = tpu.reciprocal %54 {approx = true} : vector<16x4x1xf32> -> vector<16x4x1xf32>
    %56 = vector.broadcast %55 : vector<16x4x1xf32> to vector<16x4x4xf32>
    %57 = arith.mulf %52, %56 : vector<16x4x4xf32>
    %58 = arith.truncf %57 : vector<16x4x4xf32> to vector<16x4x4xbf16>
    "tpu.trace_start"() <{level = 10 : i32, message = "sij,sjd->sid"}> : () -> ()
    %cst_26 = arith.constant dense<0.000000e+00> : vector<16x4x16xf32>
    %59 = tpu.matmul %58, %46, %cst_26 {dimension_numbers = #tpu.dot_dimension_numbers<[2], [1], [1], [2], [0, 0, 0, 1, 1, 2], [0], [0]>} : vector<16x4x4xbf16>, vector<16x4x16xbf16>, vector<16x4x16xf32> -> vector<16x4x16xf32>
    "tpu.trace_stop"() : () -> ()
    %60 = tpu.transpose %59, [1, 0, 2] : vector<16x4x16xf32> -> vector<4x16x16xf32>
    %61 = arith.truncf %60 : vector<4x16x16xf32> to vector<4x16x16xbf16>
    %c0_27 = arith.constant 0 : index
    %c0_28 = arith.constant 0 : index
    %c0_29 = arith.constant 0 : index
    %c0_30 = arith.constant 0 : index
    %62 = vector.load %arg8[%c0_27, %c0_28, %c0_29, %c0_30] : memref<1x4x16x32xbf16, #tpu.memory_space<vmem>>, vector<1x4x16x16xbf16>
    %63 = vector.shape_cast %62 : vector<1x4x16x16xbf16> to vector<4x16x16xbf16>
    %64 = vector.shape_cast %61 : vector<4x16x16xbf16> to vector<1x4x16x16xbf16>
    tpu.vector_store %arg8[%c0_27, %c0_28, %c0_29, %c0_30], %64 {strides = array<i32>} : memref<1x4x16x32xbf16, #tpu.memory_space<vmem>>, vector<1x4x16x16xbf16>,
    %c1 = arith.constant 1 : index
    %c0_31 = arith.constant 0 : index
    %c0_32 = arith.constant 0 : index
    %65 = vector.load %arg5[%c1, %c0_31, %c0_32] : memref<2x32x16xbf16, #tpu.memory_space<vmem>>, vector<1x32x16xbf16>
    %66 = vector.shape_cast %65 : vector<1x32x16xbf16> to vector<32x16xbf16>
    %cst_33 = arith.constant dense<0.000000e+00> : vector<64x16xf32>
    %67 = tpu.matmul %31, %66, %cst_33 {dimension_numbers = #tpu.dot_dimension_numbers<[1], [0], [0], [1], [0, 0, 1, 1], [], []>} : vector<64x32xbf16>, vector<32x16xbf16>, vector<64x16xf32> -> vector<64x16xf32>
    %c1_34 = arith.constant 1 : index
    %c0_35 = arith.constant 0 : index
    %c0_36 = arith.constant 0 : index
    %68 = vector.load %arg6[%c1_34, %c0_35, %c0_36] : memref<2x32x16xbf16, #tpu.memory_space<vmem>>, vector<1x32x16xbf16>
    %69 = vector.shape_cast %68 : vector<1x32x16xbf16> to vector<32x16xbf16>
    %cst_37 = arith.constant dense<0.000000e+00> : vector<64x16xf32>
    %70 = tpu.matmul %31, %69, %cst_37 {dimension_numbers = #tpu.dot_dimension_numbers<[1], [0], [0], [1], [0, 0, 1, 1], [], []>} : vector<64x32xbf16>, vector<32x16xbf16>, vector<64x16xf32> -> vector<64x16xf32>
    %c1_38 = arith.constant 1 : index
    %c0_39 = arith.constant 0 : index
    %c0_40 = arith.constant 0 : index
    %71 = vector.load %arg7[%c1_38, %c0_39, %c0_40] : memref<2x32x16xbf16, #tpu.memory_space<vmem>>, vector<1x32x16xbf16>
    %72 = vector.shape_cast %71 : vector<1x32x16xbf16> to vector<32x16xbf16>
    %cst_41 = arith.constant dense<0.000000e+00> : vector<64x16xf32>
    %73 = tpu.matmul %31, %72, %cst_41 {dimension_numbers = #tpu.dot_dimension_numbers<[1], [0], [0], [1], [0, 0, 1, 1], [], []>} : vector<64x32xbf16>, vector<32x16xbf16>, vector<64x16xf32> -> vector<64x16xf32>
    %74 = vector.shape_cast %67 : vector<64x16xf32> to vector<16x4x16xf32>
    %75 = arith.truncf %74 : vector<16x4x16xf32> to vector<16x4x16xbf16>
    %76 = vector.shape_cast %70 : vector<64x16xf32> to vector<16x4x16xf32>
    %77 = arith.truncf %76 : vector<16x4x16xf32> to vector<16x4x16xbf16>
    %78 = vector.shape_cast %73 : vector<64x16xf32> to vector<16x4x16xf32>
    %79 = arith.truncf %78 : vector<16x4x16xf32> to vector<16x4x16xbf16>
    "tpu.trace_start"() <{level = 10 : i32, message = "sid,sjd->sij"}> : () -> ()
    %cst_42 = arith.constant dense<0.000000e+00> : vector<16x4x4xf32>
    %80 = tpu.matmul %75, %77, %cst_42 {dimension_numbers = #tpu.dot_dimension_numbers<[2], [2], [1], [1], [0, 0, 0, 1, 1, 1], [0], [0]>} : vector<16x4x16xbf16>, vector<16x4x16xbf16>, vector<16x4x4xf32> -> vector<16x4x4xf32>
    "tpu.trace_stop"() : () -> ()
    %cst_43 = arith.constant dense<0xFF800000> : vector<16x4xf32>
    %81 = vector.multi_reduction <maximumf>, %80, %cst_43 [2] : vector<16x4x4xf32> to vector<16x4xf32>
    %82 = vector.shape_cast %81 : vector<16x4xf32> to vector<16x4x1xf32>
    %83 = vector.broadcast %82 : vector<16x4x1xf32> to vector<16x4x4xf32>
    %84 = arith.subf %80, %83 : vector<16x4x4xf32>
    %85 = math.exp %84 : vector<16x4x4xf32>
    %cst_44 = arith.constant dense<0.000000e+00> : vector<16x4xf32>
    %86 = vector.multi_reduction <add>, %85, %cst_44 [2] : vector<16x4x4xf32> to vector<16x4xf32>
    %87 = vector.shape_cast %86 : vector<16x4xf32> to vector<16x4x1xf32>
    %88 = tpu.reciprocal %87 {approx = true} : vector<16x4x1xf32> -> vector<16x4x1xf32>
    %89 = vector.broadcast %88 : vector<16x4x1xf32> to vector<16x4x4xf32>
    %90 = arith.mulf %85, %89 : vector<16x4x4xf32>
    %91 = arith.truncf %90 : vector<16x4x4xf32> to vector<16x4x4xbf16>
    "tpu.trace_start"() <{level = 10 : i32, message = "sij,sjd->sid"}> : () -> ()
    %cst_45 = arith.constant dense<0.000000e+00> : vector<16x4x16xf32>
    %92 = tpu.matmul %91, %79, %cst_45 {dimension_numbers = #tpu.dot_dimension_numbers<[2], [1], [1], [2], [0, 0, 0, 1, 1, 2], [0], [0]>} : vector<16x4x4xbf16>, vector<16x4x16xbf16>, vector<16x4x16xf32> -> vector<16x4x16xf32>
    "tpu.trace_stop"() : () -> ()
    %93 = tpu.transpose %92, [1, 0, 2] : vector<16x4x16xf32> -> vector<4x16x16xf32>
    %94 = arith.truncf %93 : vector<4x16x16xf32> to vector<4x16x16xbf16>
    %c0_46 = arith.constant 0 : index
    %c0_47 = arith.constant 0 : index
    %c0_48 = arith.constant 0 : index
    %c16 = arith.constant 16 : index
    %95 = vector.load %arg8[%c0_46, %c0_47, %c0_48, %c16] : memref<1x4x16x32xbf16, #tpu.memory_space<vmem>>, vector<1x4x16x16xbf16>
    %96 = vector.shape_cast %95 : vector<1x4x16x16xbf16> to vector<4x16x16xbf16>
    %97 = vector.shape_cast %94 : vector<4x16x16xbf16> to vector<1x4x16x16xbf16>
    tpu.vector_store %arg8[%c0_46, %c0_47, %c0_48, %c16], %97 {strides = array<i32>} : memref<1x4x16x32xbf16, #tpu.memory_space<vmem>>, vector<1x4x16x16xbf16>,
    return
  }
  func.func @transform_0(%arg0: i32, %arg1: i32) -> (i32, i32, i32, i32) {
    %c0_i32 = arith.constant 0 : i32
    %c0_i32_0 = arith.constant 0 : i32
    %c0_i32_1 = arith.constant 0 : i32
    return %arg0, %c0_i32, %arg1, %c0_i32_0 : i32, i32, i32, i32
  }
  func.func @transform_1(%arg0: i32, %arg1: i32) -> (i32, i32) {
    %c0_i32 = arith.constant 0 : i32
    %c0_i32_0 = arith.constant 0 : i32
    %c0_i32_1 = arith.constant 0 : i32
    return %c0_i32, %c0_i32_0 : i32, i32
  }
  func.func @transform_2(%arg0: i32, %arg1: i32) -> (i32, i32) {
    %c0_i32 = arith.constant 0 : i32
    %c0_i32_0 = arith.constant 0 : i32
    %c0_i32_1 = arith.constant 0 : i32
    return %c0_i32, %c0_i32_0 : i32, i32
  }
  func.func @transform_3(%arg0: i32, %arg1: i32) -> (i32, i32, i32) {
    %c0_i32 = arith.constant 0 : i32
    %c0_i32_0 = arith.constant 0 : i32
    %c0_i32_1 = arith.constant 0 : i32
    %c0_i32_2 = arith.constant 0 : i32
    return %c0_i32, %c0_i32_0, %c0_i32_1 : i32, i32, i32
  }
  func.func @transform_4(%arg0: i32, %arg1: i32) -> (i32, i32, i32) {
    %c0_i32 = arith.constant 0 : i32
    %c0_i32_0 = arith.constant 0 : i32
    %c0_i32_1 = arith.constant 0 : i32
    %c0_i32_2 = arith.constant 0 : i32
    return %c0_i32, %c0_i32_0, %c0_i32_1 : i32, i32, i32
  }
  func.func @transform_5(%arg0: i32, %arg1: i32) -> (i32, i32, i32) {
    %c0_i32 = arith.constant 0 : i32
    %c0_i32_0 = arith.constant 0 : i32
    %c0_i32_1 = arith.constant 0 : i32
    %c0_i32_2 = arith.constant 0 : i32
    return %c0_i32, %c0_i32_0, %c0_i32_1 : i32, i32, i32
  }
  func.func @transform_6(%arg0: i32, %arg1: i32) -> (i32, i32, i32, i32) {
    %c0_i32 = arith.constant 0 : i32
    %c0_i32_0 = arith.constant 0 : i32
    %c0_i32_1 = arith.constant 0 : i32
    return %arg0, %c0_i32, %arg1, %c0_i32_0 : i32, i32, i32, i32
  }
}

module attributes {stable_mosaic.version = 11 : i64} {
  func.func @_tail_kernel(%arg0: i32, %arg1: memref<64x32xbf16, #tpu.memory_space<vmem>>, %arg2: memref<64x32xbf16, #tpu.memory_space<vmem>>, %arg3: memref<64x32xbf16, #tpu.memory_space<vmem>>, %arg4: memref<32x32xbf16, #tpu.memory_space<vmem>>, %arg5: memref<32x32xbf16, #tpu.memory_space<vmem>>, %arg6: memref<1x32xf32, #tpu.memory_space<vmem>>, %arg7: memref<1x32xf32, #tpu.memory_space<vmem>>, %arg8: memref<1x32xf32, #tpu.memory_space<vmem>>, %arg9: memref<32x64xbf16, #tpu.memory_space<vmem>>, %arg10: memref<1x64xf32, #tpu.memory_space<vmem>>, %arg11: memref<64x32xbf16, #tpu.memory_space<vmem>>, %arg12: memref<1x32xf32, #tpu.memory_space<vmem>>, %arg13: memref<64x32xbf16, #tpu.memory_space<vmem>>) attributes {dimension_semantics = [#tpu.dimension_semantics<parallel>], iteration_bounds = array<i64: 2>, scalar_prefetch = 0 : i64, scratch_operands = 0 : i64, tpu.core_type = #tpu.core_type<tc>, window_params = [{transform_indices = @transform_0, window_bounds = array<i64: 64, 32>}, {transform_indices = @transform_1, window_bounds = array<i64: 64, 32>}, {transform_indices = @transform_2, window_bounds = array<i64: 64, 32>}, {pipeline_mode = #tpu.pipeline_mode<synchronous>, transform_indices = @transform_3, window_bounds = array<i64: 32, 32>}, {pipeline_mode = #tpu.pipeline_mode<synchronous>, transform_indices = @transform_4, window_bounds = array<i64: 32, 32>}, {pipeline_mode = #tpu.pipeline_mode<synchronous>, transform_indices = @transform_5, window_bounds = array<i64: 1, 32>}, {pipeline_mode = #tpu.pipeline_mode<synchronous>, transform_indices = @transform_6, window_bounds = array<i64: 1, 32>}, {pipeline_mode = #tpu.pipeline_mode<synchronous>, transform_indices = @transform_7, window_bounds = array<i64: 1, 32>}, {pipeline_mode = #tpu.pipeline_mode<synchronous>, transform_indices = @transform_8, window_bounds = array<i64: 32, 64>}, {pipeline_mode = #tpu.pipeline_mode<synchronous>, transform_indices = @transform_9, window_bounds = array<i64: 1, 64>}, {pipeline_mode = #tpu.pipeline_mode<synchronous>, transform_indices = @transform_10, window_bounds = array<i64: 64, 32>}, {pipeline_mode = #tpu.pipeline_mode<synchronous>, transform_indices = @transform_11, window_bounds = array<i64: 1, 32>}, {transform_indices = @transform_12, window_bounds = array<i64: 64, 32>}]} {
    %c0 = arith.constant 0 : index
    %c0_0 = arith.constant 0 : index
    %0 = vector.load %arg1[%c0, %c0_0] : memref<64x32xbf16, #tpu.memory_space<vmem>>, vector<64x32xbf16>
    %c0_1 = arith.constant 0 : index
    %c0_2 = arith.constant 0 : index
    %1 = vector.load %arg4[%c0_1, %c0_2] : memref<32x32xbf16, #tpu.memory_space<vmem>>, vector<32x32xbf16>
    %cst = arith.constant dense<0.000000e+00> : vector<64x32xf32>
    %2 = tpu.matmul %0, %1, %cst {dimension_numbers = #tpu.dot_dimension_numbers<[1], [0], [0], [1], [0, 0, 1, 1], [], []>} : vector<64x32xbf16>, vector<32x32xbf16>, vector<64x32xf32> -> vector<64x32xf32>
    %c0_3 = arith.constant 0 : index
    %c0_4 = arith.constant 0 : index
    %3 = vector.load %arg2[%c0_3, %c0_4] : memref<64x32xbf16, #tpu.memory_space<vmem>>, vector<64x32xbf16>
    %c0_5 = arith.constant 0 : index
    %c0_6 = arith.constant 0 : index
    %4 = vector.load %arg5[%c0_5, %c0_6] : memref<32x32xbf16, #tpu.memory_space<vmem>>, vector<32x32xbf16>
    %cst_7 = arith.constant dense<0.000000e+00> : vector<64x32xf32>
    %5 = tpu.matmul %3, %4, %cst_7 {dimension_numbers = #tpu.dot_dimension_numbers<[1], [0], [0], [1], [0, 0, 1, 1], [], []>} : vector<64x32xbf16>, vector<32x32xbf16>, vector<64x32xf32> -> vector<64x32xf32>
    %6 = arith.addf %2, %5 : vector<64x32xf32>
    %c0_8 = arith.constant 0 : index
    %c0_9 = arith.constant 0 : index
    %7 = vector.load %arg6[%c0_8, %c0_9] : memref<1x32xf32, #tpu.memory_space<vmem>>, vector<1x32xf32>
    %8 = vector.broadcast %7 : vector<1x32xf32> to vector<64x32xf32>
    %9 = arith.addf %6, %8 : vector<64x32xf32>
    %c0_10 = arith.constant 0 : index
    %c0_11 = arith.constant 0 : index
    %10 = vector.load %arg3[%c0_10, %c0_11] : memref<64x32xbf16, #tpu.memory_space<vmem>>, vector<64x32xbf16>
    %11 = arith.extf %10 : vector<64x32xbf16> to vector<64x32xf32>
    %12 = arith.addf %9, %11 : vector<64x32xf32>
    %cst_12 = arith.constant dense<0.000000e+00> : vector<64xf32>
    %13 = vector.multi_reduction <add>, %12, %cst_12 [1] : vector<64x32xf32> to vector<64xf32>
    %14 = vector.shape_cast %13 : vector<64xf32> to vector<64x1xf32>
    %cst_13 = arith.constant 3.200000e+01 : f32
    %15 = vector.broadcast %cst_13 : f32 to vector<64x1xf32>
    %16 = arith.divf %14, %15 : vector<64x1xf32>
    %17 = vector.broadcast %16 : vector<64x1xf32> to vector<64x32xf32>
    %18 = arith.subf %12, %17 : vector<64x32xf32>
    %19 = arith.mulf %18, %18 : vector<64x32xf32>
    %cst_14 = arith.constant dense<0.000000e+00> : vector<64xf32>
    %20 = vector.multi_reduction <add>, %19, %cst_14 [1] : vector<64x32xf32> to vector<64xf32>
    %21 = vector.shape_cast %20 : vector<64xf32> to vector<64x1xf32>
    %cst_15 = arith.constant 3.200000e+01 : f32
    %22 = vector.broadcast %cst_15 : f32 to vector<64x1xf32>
    %23 = arith.divf %21, %22 : vector<64x1xf32>
    %24 = vector.broadcast %16 : vector<64x1xf32> to vector<64x32xf32>
    %25 = arith.subf %12, %24 : vector<64x32xf32>
    %cst_16 = arith.constant 9.99999974E-6 : f32
    %26 = vector.broadcast %cst_16 : f32 to vector<64x1xf32>
    %27 = arith.addf %23, %26 : vector<64x1xf32>
    %28 = math.rsqrt %27 : vector<64x1xf32>
    %29 = vector.broadcast %28 : vector<64x1xf32> to vector<64x32xf32>
    %30 = arith.mulf %25, %29 : vector<64x32xf32>
    %c0_17 = arith.constant 0 : index
    %c0_18 = arith.constant 0 : index
    %31 = vector.load %arg7[%c0_17, %c0_18] : memref<1x32xf32, #tpu.memory_space<vmem>>, vector<1x32xf32>
    %32 = vector.broadcast %31 : vector<1x32xf32> to vector<64x32xf32>
    %33 = arith.mulf %30, %32 : vector<64x32xf32>
    %c0_19 = arith.constant 0 : index
    %c0_20 = arith.constant 0 : index
    %34 = vector.load %arg8[%c0_19, %c0_20] : memref<1x32xf32, #tpu.memory_space<vmem>>, vector<1x32xf32>
    %35 = vector.broadcast %34 : vector<1x32xf32> to vector<64x32xf32>
    %36 = arith.addf %33, %35 : vector<64x32xf32>
    %37 = arith.truncf %36 : vector<64x32xf32> to vector<64x32xbf16>
    %c0_21 = arith.constant 0 : index
    %c0_22 = arith.constant 0 : index
    %38 = vector.load %arg9[%c0_21, %c0_22] : memref<32x64xbf16, #tpu.memory_space<vmem>>, vector<32x64xbf16>
    %cst_23 = arith.constant dense<0.000000e+00> : vector<64x64xf32>
    %39 = tpu.matmul %37, %38, %cst_23 {dimension_numbers = #tpu.dot_dimension_numbers<[1], [0], [0], [1], [0, 0, 1, 1], [], []>} : vector<64x32xbf16>, vector<32x64xbf16>, vector<64x64xf32> -> vector<64x64xf32>
    %c0_24 = arith.constant 0 : index
    %c0_25 = arith.constant 0 : index
    %40 = vector.load %arg10[%c0_24, %c0_25] : memref<1x64xf32, #tpu.memory_space<vmem>>, vector<1x64xf32>
    %41 = vector.broadcast %40 : vector<1x64xf32> to vector<64x64xf32>
    %42 = arith.addf %39, %41 : vector<64x64xf32>
    %cst_26 = arith.constant 5.000000e-01 : f32
    %43 = vector.broadcast %cst_26 : f32 to vector<64x64xf32>
    %44 = arith.mulf %43, %42 : vector<64x64xf32>
    %cst_27 = arith.constant 0.707106769 : f32
    %45 = vector.broadcast %cst_27 : f32 to vector<64x64xf32>
    %46 = arith.mulf %42, %45 : vector<64x64xf32>
    %47 = math.erf %46 : vector<64x64xf32>
    %cst_28 = arith.constant 1.000000e+00 : f32
    %48 = vector.broadcast %cst_28 : f32 to vector<64x64xf32>
    %49 = arith.addf %48, %47 : vector<64x64xf32>
    %50 = arith.mulf %44, %49 : vector<64x64xf32>
    %51 = arith.truncf %50 : vector<64x64xf32> to vector<64x64xbf16>
    %c0_29 = arith.constant 0 : index
    %c0_30 = arith.constant 0 : index
    %52 = vector.load %arg11[%c0_29, %c0_30] : memref<64x32xbf16, #tpu.memory_space<vmem>>, vector<64x32xbf16>
    %cst_31 = arith.constant dense<0.000000e+00> : vector<64x32xf32>
    %53 = tpu.matmul %51, %52, %cst_31 {dimension_numbers = #tpu.dot_dimension_numbers<[1], [0], [0], [1], [0, 0, 1, 1], [], []>} : vector<64x64xbf16>, vector<64x32xbf16>, vector<64x32xf32> -> vector<64x32xf32>
    %c0_32 = arith.constant 0 : index
    %c0_33 = arith.constant 0 : index
    %54 = vector.load %arg12[%c0_32, %c0_33] : memref<1x32xf32, #tpu.memory_space<vmem>>, vector<1x32xf32>
    %55 = vector.broadcast %54 : vector<1x32xf32> to vector<64x32xf32>
    %56 = arith.addf %53, %55 : vector<64x32xf32>
    %57 = arith.addf %56, %12 : vector<64x32xf32>
    %58 = arith.truncf %57 : vector<64x32xf32> to vector<64x32xbf16>
    %c0_34 = arith.constant 0 : index
    %c0_35 = arith.constant 0 : index
    %59 = vector.load %arg13[%c0_34, %c0_35] : memref<64x32xbf16, #tpu.memory_space<vmem>>, vector<64x32xbf16>
    tpu.vector_store %arg13[%c0_34, %c0_35], %58 {strides = array<i32>} : memref<64x32xbf16, #tpu.memory_space<vmem>>, vector<64x32xbf16>,
    return
  }
  func.func @transform_0(%arg0: i32) -> (i32, i32) {
    %c0_i32 = arith.constant 0 : i32
    %c0_i32_0 = arith.constant 0 : i32
    return %arg0, %c0_i32 : i32, i32
  }
  func.func @transform_1(%arg0: i32) -> (i32, i32) {
    %c0_i32 = arith.constant 0 : i32
    %c0_i32_0 = arith.constant 0 : i32
    return %arg0, %c0_i32 : i32, i32
  }
  func.func @transform_2(%arg0: i32) -> (i32, i32) {
    %c0_i32 = arith.constant 0 : i32
    %c0_i32_0 = arith.constant 0 : i32
    return %arg0, %c0_i32 : i32, i32
  }
  func.func @transform_3(%arg0: i32) -> (i32, i32) {
    %c0_i32 = arith.constant 0 : i32
    %c0_i32_0 = arith.constant 0 : i32
    %c0_i32_1 = arith.constant 0 : i32
    return %c0_i32, %c0_i32_0 : i32, i32
  }
  func.func @transform_4(%arg0: i32) -> (i32, i32) {
    %c0_i32 = arith.constant 0 : i32
    %c0_i32_0 = arith.constant 0 : i32
    %c0_i32_1 = arith.constant 0 : i32
    return %c0_i32, %c0_i32_0 : i32, i32
  }
  func.func @transform_5(%arg0: i32) -> (i32, i32) {
    %c0_i32 = arith.constant 0 : i32
    %c0_i32_0 = arith.constant 0 : i32
    %c0_i32_1 = arith.constant 0 : i32
    return %c0_i32, %c0_i32_0 : i32, i32
  }
  func.func @transform_6(%arg0: i32) -> (i32, i32) {
    %c0_i32 = arith.constant 0 : i32
    %c0_i32_0 = arith.constant 0 : i32
    %c0_i32_1 = arith.constant 0 : i32
    return %c0_i32, %c0_i32_0 : i32, i32
  }
  func.func @transform_7(%arg0: i32) -> (i32, i32) {
    %c0_i32 = arith.constant 0 : i32
    %c0_i32_0 = arith.constant 0 : i32
    %c0_i32_1 = arith.constant 0 : i32
    return %c0_i32, %c0_i32_0 : i32, i32
  }
  func.func @transform_8(%arg0: i32) -> (i32, i32) {
    %c0_i32 = arith.constant 0 : i32
    %c0_i32_0 = arith.constant 0 : i32
    %c0_i32_1 = arith.constant 0 : i32
    return %c0_i32, %c0_i32_0 : i32, i32
  }
  func.func @transform_9(%arg0: i32) -> (i32, i32) {
    %c0_i32 = arith.constant 0 : i32
    %c0_i32_0 = arith.constant 0 : i32
    %c0_i32_1 = arith.constant 0 : i32
    return %c0_i32, %c0_i32_0 : i32, i32
  }
  func.func @transform_10(%arg0: i32) -> (i32, i32) {
    %c0_i32 = arith.constant 0 : i32
    %c0_i32_0 = arith.constant 0 : i32
    %c0_i32_1 = arith.constant 0 : i32
    return %c0_i32, %c0_i32_0 : i32, i32
  }
  func.func @transform_11(%arg0: i32) -> (i32, i32) {
    %c0_i32 = arith.constant 0 : i32
    %c0_i32_0 = arith.constant 0 : i32
    %c0_i32_1 = arith.constant 0 : i32
    return %c0_i32, %c0_i32_0 : i32, i32
  }
  func.func @transform_12(%arg0: i32) -> (i32, i32) {
    %c0_i32 = arith.constant 0 : i32
    %c0_i32_0 = arith.constant 0 : i32
    return %arg0, %c0_i32 : i32, i32
  }
}

module attributes {stable_mosaic.version = 11 : i64} {
  func.func @_head_kernel(%arg0: i32, %arg1: memref<2x64x32xbf16, #tpu.memory_space<vmem>>, %arg2: memref<1x32xf32, #tpu.memory_space<vmem>>, %arg3: memref<1x32xf32, #tpu.memory_space<vmem>>, %arg4: memref<32x2xbf16, #tpu.memory_space<vmem>>, %arg5: memref<1x2xf32, #tpu.memory_space<vmem>>, %arg6: memref<2x2xf32, #tpu.memory_space<vmem>>, %arg7: memref<2x32xf32, #tpu.memory_space<vmem>>) attributes {dimension_semantics = [#tpu.dimension_semantics<arbitrary>], iteration_bounds = array<i64: 1>, scalar_prefetch = 0 : i64, scratch_operands = 1 : i64, tpu.core_type = #tpu.core_type<tc>, window_params = [{transform_indices = @transform_0, window_bounds = array<i64: 2, 64, 32>}, {pipeline_mode = #tpu.pipeline_mode<synchronous>, transform_indices = @transform_1, window_bounds = array<i64: 1, 32>}, {pipeline_mode = #tpu.pipeline_mode<synchronous>, transform_indices = @transform_2, window_bounds = array<i64: 1, 32>}, {pipeline_mode = #tpu.pipeline_mode<synchronous>, transform_indices = @transform_3, window_bounds = array<i64: 32, 2>}, {pipeline_mode = #tpu.pipeline_mode<synchronous>, transform_indices = @transform_4, window_bounds = array<i64: 1, 2>}, {pipeline_mode = #tpu.pipeline_mode<synchronous>, transform_indices = @transform_5, window_bounds = array<i64: 2, 2>}]} {
    %c0_i32 = arith.constant 0 : i32
    %0 = arith.cmpi eq, %arg0, %c0_i32 : i32
    %1 = arith.extui %0 : i1 to i32
    %c0_i32_0 = arith.constant 0 : i32
    %2 = arith.cmpi ne, %1, %c0_i32_0 : i32
    scf.if %2 {
      %cst_9 = arith.constant 0.000000e+00 : f32
      %12 = vector.broadcast %cst_9 : f32 to vector<2x32xf32>
      %c0_10 = arith.constant 0 : index
      %c0_11 = arith.constant 0 : index
      %13 = vector.load %arg7[%c0_10, %c0_11] : memref<2x32xf32, #tpu.memory_space<vmem>>, vector<2x32xf32>
      tpu.vector_store %arg7[%c0_10, %c0_11], %12 {strides = array<i32>} : memref<2x32xf32, #tpu.memory_space<vmem>>, vector<2x32xf32>,
    } else {
    }
    %c0 = arith.constant 0 : index
    %c0_1 = arith.constant 0 : index
    %3 = vector.load %arg7[%c0, %c0_1] : memref<2x32xf32, #tpu.memory_space<vmem>>, vector<2x32xf32>
    %c0_2 = arith.constant 0 : index
    %c0_3 = arith.constant 0 : index
    %c0_4 = arith.constant 0 : index
    %4 = vector.load %arg1[%c0_2, %c0_3, %c0_4] : memref<2x64x32xbf16, #tpu.memory_space<vmem>>, vector<2x64x32xbf16>
    %5 = arith.extf %4 : vector<2x64x32xbf16> to vector<2x64x32xf32>
    %cst = arith.constant dense<0.000000e+00> : vector<2x32xf32>
    %6 = vector.multi_reduction <add>, %5, %cst [1] : vector<2x64x32xf32> to vector<2x32xf32>
    %7 = arith.addf %3, %6 : vector<2x32xf32>
    %c0_5 = arith.constant 0 : index
    %c0_6 = arith.constant 0 : index
    %8 = vector.load %arg7[%c0_5, %c0_6] : memref<2x32xf32, #tpu.memory_space<vmem>>, vector<2x32xf32>
    tpu.vector_store %arg7[%c0_5, %c0_6], %7 {strides = array<i32>} : memref<2x32xf32, #tpu.memory_space<vmem>>, vector<2x32xf32>,
    %c0_i32_7 = arith.constant 0 : i32
    %9 = arith.cmpi eq, %arg0, %c0_i32_7 : i32
    %10 = arith.extui %9 : i1 to i32
    %c0_i32_8 = arith.constant 0 : i32
    %11 = arith.cmpi ne, %10, %c0_i32_8 : i32
    scf.if %11 {
      %c0_9 = arith.constant 0 : index
      %c0_10 = arith.constant 0 : index
      %12 = vector.load %arg7[%c0_9, %c0_10] : memref<2x32xf32, #tpu.memory_space<vmem>>, vector<2x32xf32>
      %cst_11 = arith.constant 1.562500e-02 : f32
      %13 = vector.broadcast %cst_11 : f32 to vector<2x32xf32>
      %14 = arith.mulf %12, %13 : vector<2x32xf32>
      %cst_12 = arith.constant dense<0.000000e+00> : vector<2xf32>
      %15 = vector.multi_reduction <add>, %14, %cst_12 [1] : vector<2x32xf32> to vector<2xf32>
      %16 = vector.shape_cast %15 : vector<2xf32> to vector<2x1xf32>
      %cst_13 = arith.constant 3.200000e+01 : f32
      %17 = vector.broadcast %cst_13 : f32 to vector<2x1xf32>
      %18 = arith.divf %16, %17 : vector<2x1xf32>
      %19 = vector.broadcast %18 : vector<2x1xf32> to vector<2x32xf32>
      %20 = arith.subf %14, %19 : vector<2x32xf32>
      %21 = arith.mulf %20, %20 : vector<2x32xf32>
      %cst_14 = arith.constant dense<0.000000e+00> : vector<2xf32>
      %22 = vector.multi_reduction <add>, %21, %cst_14 [1] : vector<2x32xf32> to vector<2xf32>
      %23 = vector.shape_cast %22 : vector<2xf32> to vector<2x1xf32>
      %cst_15 = arith.constant 3.200000e+01 : f32
      %24 = vector.broadcast %cst_15 : f32 to vector<2x1xf32>
      %25 = arith.divf %23, %24 : vector<2x1xf32>
      %26 = vector.broadcast %18 : vector<2x1xf32> to vector<2x32xf32>
      %27 = arith.subf %14, %26 : vector<2x32xf32>
      %cst_16 = arith.constant 9.99999974E-6 : f32
      %28 = vector.broadcast %cst_16 : f32 to vector<2x1xf32>
      %29 = arith.addf %25, %28 : vector<2x1xf32>
      %30 = math.rsqrt %29 : vector<2x1xf32>
      %31 = vector.broadcast %30 : vector<2x1xf32> to vector<2x32xf32>
      %32 = arith.mulf %27, %31 : vector<2x32xf32>
      %c0_17 = arith.constant 0 : index
      %c0_18 = arith.constant 0 : index
      %33 = vector.load %arg2[%c0_17, %c0_18] : memref<1x32xf32, #tpu.memory_space<vmem>>, vector<1x32xf32>
      %34 = vector.broadcast %33 : vector<1x32xf32> to vector<2x32xf32>
      %35 = arith.mulf %32, %34 : vector<2x32xf32>
      %c0_19 = arith.constant 0 : index
      %c0_20 = arith.constant 0 : index
      %36 = vector.load %arg3[%c0_19, %c0_20] : memref<1x32xf32, #tpu.memory_space<vmem>>, vector<1x32xf32>
      %37 = vector.broadcast %36 : vector<1x32xf32> to vector<2x32xf32>
      %38 = arith.addf %35, %37 : vector<2x32xf32>
      %39 = arith.truncf %38 : vector<2x32xf32> to vector<2x32xbf16>
      %c0_21 = arith.constant 0 : index
      %c0_22 = arith.constant 0 : index
      %40 = vector.load %arg4[%c0_21, %c0_22] : memref<32x2xbf16, #tpu.memory_space<vmem>>, vector<32x2xbf16>
      %cst_23 = arith.constant dense<0.000000e+00> : vector<2x2xf32>
      %41 = tpu.matmul %39, %40, %cst_23 {dimension_numbers = #tpu.dot_dimension_numbers<[1], [0], [0], [1], [0, 0, 1, 1], [], []>} : vector<2x32xbf16>, vector<32x2xbf16>, vector<2x2xf32> -> vector<2x2xf32>
      %c0_24 = arith.constant 0 : index
      %c0_25 = arith.constant 0 : index
      %42 = vector.load %arg5[%c0_24, %c0_25] : memref<1x2xf32, #tpu.memory_space<vmem>>, vector<1x2xf32>
      %43 = vector.broadcast %42 : vector<1x2xf32> to vector<2x2xf32>
      %44 = arith.addf %41, %43 : vector<2x2xf32>
      %cst_26 = arith.constant dense<0xFF800000> : vector<2xf32>
      %45 = vector.multi_reduction <maximumf>, %44, %cst_26 [1] : vector<2x2xf32> to vector<2xf32>
      %cst_27 = arith.constant 0xFF800000 : f32
      %46 = vector.broadcast %cst_27 : f32 to vector<2xf32>
      %47 = arith.maximumf %46, %45 : vector<2xf32>
      %48 = vector.shape_cast %47 : vector<2xf32> to vector<2x1xf32>
      %49 = vector.broadcast %48 : vector<2x1xf32> to vector<2x2xf32>
      %50 = arith.subf %44, %49 : vector<2x2xf32>
      %51 = math.exp %50 : vector<2x2xf32>
      %cst_28 = arith.constant dense<0.000000e+00> : vector<2xf32>
      %52 = vector.multi_reduction <add>, %51, %cst_28 [1] : vector<2x2xf32> to vector<2xf32>
      %53 = vector.shape_cast %52 : vector<2xf32> to vector<2x1xf32>
      %54 = vector.broadcast %53 : vector<2x1xf32> to vector<2x2xf32>
      %55 = arith.divf %51, %54 : vector<2x2xf32>
      %c0_29 = arith.constant 0 : index
      %c0_30 = arith.constant 0 : index
      %56 = vector.load %arg6[%c0_29, %c0_30] : memref<2x2xf32, #tpu.memory_space<vmem>>, vector<2x2xf32>
      tpu.vector_store %arg6[%c0_29, %c0_30], %55 {strides = array<i32>} : memref<2x2xf32, #tpu.memory_space<vmem>>, vector<2x2xf32>,
    } else {
    }
    return
  }
  func.func @transform_0(%arg0: i32) -> (i32, i32, i32) {
    %c0_i32 = arith.constant 0 : i32
    %c0_i32_0 = arith.constant 0 : i32
    %c0_i32_1 = arith.constant 0 : i32
    return %c0_i32, %arg0, %c0_i32_0 : i32, i32, i32
  }
  func.func @transform_1(%arg0: i32) -> (i32, i32) {
    %c0_i32 = arith.constant 0 : i32
    %c0_i32_0 = arith.constant 0 : i32
    %c0_i32_1 = arith.constant 0 : i32
    return %c0_i32, %c0_i32_0 : i32, i32
  }
  func.func @transform_2(%arg0: i32) -> (i32, i32) {
    %c0_i32 = arith.constant 0 : i32
    %c0_i32_0 = arith.constant 0 : i32
    %c0_i32_1 = arith.constant 0 : i32
    return %c0_i32, %c0_i32_0 : i32, i32
  }
  func.func @transform_3(%arg0: i32) -> (i32, i32) {
    %c0_i32 = arith.constant 0 : i32
    %c0_i32_0 = arith.constant 0 : i32
    %c0_i32_1 = arith.constant 0 : i32
    return %c0_i32, %c0_i32_0 : i32, i32
  }
  func.func @transform_4(%arg0: i32) -> (i32, i32) {
    %c0_i32 = arith.constant 0 : i32
    %c0_i32_0 = arith.constant 0 : i32
    %c0_i32_1 = arith.constant 0 : i32
    return %c0_i32, %c0_i32_0 : i32, i32
  }
  func.func @transform_5(%arg0: i32) -> (i32, i32) {
    %c0_i32 = arith.constant 0 : i32
    %c0_i32_0 = arith.constant 0 : i32
    %c0_i32_1 = arith.constant 0 : i32
    return %c0_i32, %c0_i32_0 : i32, i32
  }
}

</mosaic_0001>

<llo_original>
// kernel: vivit_forward.8
$region0: #{vivit_forward.8}
  #allocation0 [shape = 'u32[]', space=smem, size = 0x4, offset = 0x4, fixed_abs, tag = 'smem constant byte address 0x4 - core index']
  #allocation1 [shape = 'u32[144,128]{1,0:T(1,128)}', space=vmem, size = 0x12000, scoped, tag = 'internal scratch']
  %s0 = inlined_call_operand.vmem [shape: bf16[128,192], index: 0, kind: input, shape index: {}]
  %s1 = inlined_call_operand.vmem [shape: bf16[192,32], index: 1, kind: input, shape index: {}]
  %s2 = inlined_call_operand.vmem [shape: f32[1,32], index: 2, kind: input, shape index: {}]
  %s3 = inlined_call_operand.vmem [shape: bf16[128,32], index: 3, kind: output, shape index: {}]
  %s4 = sld [smem:[#allocation0]]
  $region45: #{vivit_forward.8} parent=0
    _
  %s6 = ssub.s32 1, %s4
  %s7 = scalar_select 0, %s6, %s4
  loop: start=0, step=1, limit=4
  $region2: #{vivit_forward.8} parent=0 // loop_pre_header
    _
  $region3: #{vivit_forward.8} parent=0 // loop_header
    %s9 = sphi 0, %s13
    %p10 = scmp.ge.s32.totalorder %s9, 4
    %s19 = sphi 0, %s21
    %s22 = sphi 0, %s19
    %s23 = sphi 0, %s22
    %s39 = sphi 0, %s23
    %s43 = sphi 0, %s43
    %s45 = sphi 0, %s43
    %s46 = sphi 0, %s45
    %s60 = sphi 0, %s46
    %s64 = sphi 0, %s64
    %s66 = sphi 0, %s64
    %s67 = sphi 0, %s66
    %s81 = sphi 0, %s67
    %s87 = sphi 0, %s89
    %s90 = sphi 0, %s87
    %s91 = sphi 0, %s90
    %s107 = sphi 0, %s91
  $region4: #{vivit_forward.8} parent=0 // loop_header_branch
    %12 = sbr.rel (%p10) target = $region8
  $region5: #{vivit_forward.8} parent=0 // loop_body
    %s14 = ssub.s32 %s9, 1
    %s15 = ssub.s32 %s9, 2
    %s16 = sadd.s32 %s9, 1
    %s17 = ssub.s32 %s9, %s16
    %p18 = scmp.eq.s32.totalorder %s17, 0
    %s20 = sadd.s32 %s19, 1
    %s21 = scalar_select %p18, %s19, %s20
    %p24 = pneg %p18
    %p25 = scmp.eq.s32.totalorder %s9, 1
    %p26 = por %p24, %p25
    %p27 = scmp.ne.s32.totalorder %s19, %s22
    %p28 = scmp.eq.s32.totalorder %s9, 0
    %p29 = por %p27, %p28
    %p30 = scmp.ne.s32.totalorder %s19, %s22
    %p31 = scmp.eq.s32.totalorder %s14, 1
    %p32 = por %p30, %p31
    %p33 = scmp.ne.s32.totalorder %s22, %s23
    %p34 = scmp.eq.s32.totalorder %s14, 0
    %p35 = por %p33, %p34
    %p36 = scmp.ne.s32.totalorder %s22, %s23
    %p37 = scmp.eq.s32.totalorder %s15, 1
    %p38 = por %p36, %p37
    %p40 = scmp.ne.s32.totalorder %s23, %s39
    %p41 = scmp.eq.s32.totalorder %s15, 0
    %p42 = por %p40, %p41
    %s44 = sadd.s32 %s43, 1
    %p47 = scmp.eq.s32.totalorder %s9, 1
    %p48 = scmp.ne.s32.totalorder %s43, %s45
    %p49 = scmp.eq.s32.totalorder %s9, 0
    %p50 = por %p48, %p49
    %p51 = scmp.ne.s32.totalorder %s43, %s45
    %p52 = scmp.eq.s32.totalorder %s14, 1
    %p53 = por %p51, %p52
    %p54 = scmp.ne.s32.totalorder %s45, %s46
    %p55 = scmp.eq.s32.totalorder %s14, 0
    %p56 = por %p54, %p55
    %p57 = scmp.ne.s32.totalorder %s45, %s46
    %p58 = scmp.eq.s32.totalorder %s15, 1
    %p59 = por %p57, %p58
    %p61 = scmp.ne.s32.totalorder %s46, %s60
    %p62 = scmp.eq.s32.totalorder %s15, 0
    %p63 = por %p61, %p62
    %s65 = sadd.s32 %s64, 1
    %p68 = scmp.eq.s32.totalorder %s9, 1
    %p69 = scmp.ne.s32.totalorder %s64, %s66
    %p70 = scmp.eq.s32.totalorder %s9, 0
    %p71 = por %p69, %p70
    %p72 = scmp.ne.s32.totalorder %s64, %s66
    %p73 = scmp.eq.s32.totalorder %s14, 1
    %p74 = por %p72, %p73
    %p75 = scmp.ne.s32.totalorder %s66, %s67
    %p76 = scmp.eq.s32.totalorder %s14, 0
    %p77 = por %p75, %p76
    %p78 = scmp.ne.s32.totalorder %s66, %s67
    %p79 = scmp.eq.s32.totalorder %s15, 1
    %p80 = por %p78, %p79
    %p82 = scmp.ne.s32.totalorder %s67, %s81
    %p83 = scmp.eq.s32.totalorder %s15, 0
    %p84 = por %p82, %p83
    %s85 = ssub.s32 %s9, %s16
    %p86 = scmp.eq.s32.totalorder %s85, 0
    %s88 = sadd.s32 %s87, 1
    %s89 = scalar_select %p86, %s87, %s88
    %p92 = pneg %p86
    %p93 = scmp.eq.s32.totalorder %s9, 1
    %p94 = por %p92, %p93
    %p95 = scmp.ne.s32.totalorder %s87, %s90
    %p96 = scmp.eq.s32.totalorder %s9, 0
    %p97 = por %p95, %p96
    %p98 = scmp.ne.s32.totalorder %s87, %s90
    %p99 = scmp.eq.s32.totalorder %s14, 1
    %p100 = por %p98, %p99
    %p101 = scmp.ne.s32.totalorder %s90, %s91
    %p102 = scmp.eq.s32.totalorder %s14, 0
    %p103 = por %p101, %p102
    %p104 = scmp.ne.s32.totalorder %s90, %s91
    %p105 = scmp.eq.s32.totalorder %s15, 1
    %p106 = por %p104, %p105
    %p108 = scmp.ne.s32.totalorder %s91, %s107
    %p109 = scmp.eq.s32.totalorder %s15, 0
    %p110 = por %p108, %p109
    %p111 = scmp.le.s32.totalorder 1, %s9
    %p112 = scmp.lt.s32.totalorder %s9, 3
    %p113 = pnand %p111, %p112
    %p114 = pneg %p113
    // Predicated region
    $region9: #{vivit_forward.8} parent=5 // pred_check
      _
    $region10: #{vivit_forward.8} parent=5 // pred_check_branch
      %116 = sbr.rel (%p113) target = $region12
    $region11: #{vivit_forward.8} parent=5 // pred_region
      %s117 = ssub.s32 %s9, 1
      // Predicated region
      $region13: #{vivit_forward.8} parent=11 // pred_check
        %p118 = pneg %p56
      $region14: #{vivit_forward.8} parent=11 // pred_check_branch
        %120 = sbr.rel (%p118) target = $region16
      $region15: #{vivit_forward.8} parent=11 // pred_region
        _
      $region16: #{vivit_forward.8} parent=11 // pred_fallthru
        _
      // Predicated region
      $region17: #{vivit_forward.8} parent=11 // pred_check
        %p121 = pneg %p77
      $region18: #{vivit_forward.8} parent=11 // pred_check_branch
        %123 = sbr.rel (%p121) target = $region20
      $region19: #{vivit_forward.8} parent=11 // pred_region
        _
      $region20: #{vivit_forward.8} parent=11 // pred_fallthru
        _
    $region12: #{vivit_forward.8} parent=5 // pred_fallthru
      _
    %p124 = scmp.lt.s32.totalorder %s9, 2
    // Predicated region
    $region21: #{vivit_forward.8} parent=5 // pred_check
      %p125 = pneg %p124
    $region22: #{vivit_forward.8} parent=5 // pred_check_branch
      %127 = sbr.rel (%p125) target = $region24
    $region23: #{vivit_forward.8} parent=5 // pred_region
      // Predicated region
      $region25: #{vivit_forward.8} parent=23 // pred_check
        %p128 = pneg %p29
      $region26: #{vivit_forward.8} parent=23 // pred_check_branch
        %130 = sbr.rel (%p128) target = $region28
      $region27: #{vivit_forward.8} parent=23 // pred_region
        %s131 = smul.u32 8, %s9
        %p132 = scmp.lt.s32.totalorder %s131, 15
        %s133 = scalar_select %p132, %s131, 15
        %s134 = smul.addr %s133, 2
        %s135 = smul.addr %s134, 4
        %s136 = scalar_lea.vmem %s0, %s135
        %s137 = smul.u32 8, %s9
      $region28: #{vivit_forward.8} parent=23 // pred_fallthru
        _
    $region24: #{vivit_forward.8} parent=5 // pred_fallthru
      _
    %p138 = scmp.le.s32.totalorder 1, %s9
    %p139 = scmp.lt.s32.totalorder %s9, 3
    %p140 = pnand %p138, %p139
    %p141 = pneg %p140
    // Predicated region
    $region29: #{vivit_forward.8} parent=5 // pred_check
      _
    $region30: #{vivit_forward.8} parent=5 // pred_check_branch
      %143 = sbr.rel (%p140) target = $region32
    $region31: #{vivit_forward.8} parent=5 // pred_region
      %s144 = ssub.s32 %s9, 1
      %s145 = smul.u32 8, %s14
      %p146 = scmp.lt.s32.totalorder %s145, 15
      %s147 = scalar_select %p146, %s145, 15
      %s148 = smul.addr %s147, 2
      %s149 = smul.addr %s148, 4
      %s150 = scalar_lea.vmem %s0, %s149
      %p151 = pneg %p35
      %p152 = pneg %p32
      %p153 = pneg %p56
      %p154 = pneg %p53
      %p155 = pneg %p77
      %p156 = pneg %p74
      %p157 = pneg %p103
      %p158 = pneg %p100
      %s159 = smul.u32 8, %s14
      %p160 = scmp.lt.s32.totalorder %s159, 15
      %s161 = scalar_select %p160, %s159, 15
      %s162 = smul.addr %s161, 4
      %s163 = scalar_lea.vmem %s3, %s162
      %s164 = smul.u32 8, %s14
      %p165 = scmp.lt.s32.totalorder %s164, 15
      %s166 = scalar_select %p165, %s164, 15
      %s167 = smul.addr %s166, 2
      %s168 = smul.addr %s167, 4
      %s169 = scalar_lea.vmem %s0, %s168
      %s170 = smul.u32 8, %s14
      %s171 = smul.u32 8, %s14
      %p172 = scmp.lt.s32.totalorder %s171, 15
      %s173 = scalar_select %p172, %s171, 15
      %s174 = smul.addr %s173, 4
      %s175 = scalar_lea.vmem %s3, %s174
      %s176 = smul.u32 8, %s14
      %v178 = vld [vmem:[%s169] sm:$0xff]
      %v179 = vld [vmem:[%s169 + $0x8] sm:$0xff]
      %v180 = vld [vmem:[%s169 + $0x10] sm:$0xff]
      %v181 = vld [vmem:[%s169 + $0x18] sm:$0xff]
      %v182 = vld [vmem:[%s169 + $0x20] sm:$0xff]
      %v183 = vld [vmem:[%s169 + $0x28] sm:$0xff]
      %v184 = vld [vmem:[%s169 + $0x30] sm:$0xff]
      %v185 = vld [vmem:[%s169 + $0x38] sm:$0xff]
      %v186 = vld [vmem:[%s1] sm:$0xf]
      %v187 = vld [vmem:[%s1 + $0x4] sm:$0xf]
      %v188 = vld [vmem:[%s1 + $0x8] sm:$0xf]
      %v189 = vld [vmem:[%s1 + $0xc] sm:$0xf]
      %v190 = vld [vmem:[%s1 + $0x10] sm:$0xf]
      %v191 = vld [vmem:[%s1 + $0x14] sm:$0xf]
      %v192 = vld [vmem:[%s1 + $0x18] sm:$0xf]
      %v193 = vld [vmem:[%s1 + $0x1c] sm:$0xf]
      %v194 = vld [vmem:[%s1 + $0x20] sm:$0xf]
      %v195 = vld [vmem:[%s1 + $0x24] sm:$0xf]
      %v196 = vld [vmem:[%s1 + $0x28] sm:$0xf]
      %v197 = vld [vmem:[%s1 + $0x2c] sm:$0xf]
      %v198 = vld [vmem:[%s1 + $0x30] sm:$0xf]
      %v199 = vld [vmem:[%s1 + $0x34] sm:$0xf]
      %v200 = vld [vmem:[%s1 + $0x38] sm:$0xf]
      %v201 = vld [vmem:[%s1 + $0x3c] sm:$0xf]
      %v202 = vld [vmem:[%s1 + $0x40] sm:$0xf]
      %v203 = vld [vmem:[%s1 + $0x44] sm:$0xf]
      %v204 = vld [vmem:[%s1 + $0x48] sm:$0xf]
      %v205 = vld [vmem:[%s1 + $0x4c] sm:$0xf]
      %v206 = vld [vmem:[%s1 + $0x50] sm:$0xf]
      %v207 = vld [vmem:[%s1 + $0x54] sm:$0xf]
      %v208 = vld [vmem:[%s1 + $0x58] sm:$0xf]
      %v209 = vld [vmem:[%s1 + $0x5c] sm:$0xf]
      %v210 = vld [vmem:[%s2] sm:$0x1]
      %v212 = vlaneseq
      %v213 = vshrl.u32 %v212, 7
      %v214 = vsub.s32 0, %v213
      %v215 = vrot.slane %v210, %v214
      %v225 = vunpack.c.l.b16 %v178
      %v226 = vunpack.c.h.b16 %v178
      %v227 = vunpack.c.l.b16 %v179
      %v228 = vunpack.c.h.b16 %v179
      %v229 = vunpack.c.l.b16 %v180
      %v230 = vunpack.c.h.b16 %v180
      %v231 = vunpack.c.l.b16 %v181
      %v232 = vunpack.c.h.b16 %v181
      %v233 = vunpack.c.l.b16 %v182
      %v234 = vunpack.c.h.b16 %v182
      %v235 = vunpack.c.l.b16 %v183
      %v236 = vunpack.c.h.b16 %v183
      %v237 = vunpack.c.l.b16 %v184
      %v238 = vunpack.c.h.b16 %v184
      %v239 = vunpack.c.l.b16 %v185
      %v240 = vunpack.c.h.b16 %v185
      %v241 = vpack.c.b16 %v227, %v225
      %v242 = vpack.c.b16 %v228, %v226
      %v243 = vpack.c.b16 %v231, %v229
      %v244 = vpack.c.b16 %v232, %v230
      %v245 = vpack.c.b16 %v235, %v233
      %v246 = vpack.c.b16 %v236, %v234
      %v247 = vpack.c.b16 %v239, %v237
      %v248 = vpack.c.b16 %v240, %v238
      %v277 = vunpack.c.l.b16 %v186
      %v278 = vunpack.c.l.b16 %v187
      %v279 = vunpack.c.l.b16 %v188
      %v280 = vunpack.c.l.b16 %v189
      %v281 = vunpack.c.l.b16 %v190
      %v282 = vunpack.c.l.b16 %v191
      %v283 = vunpack.c.l.b16 %v192
      %v284 = vunpack.c.l.b16 %v193
      %v285 = vunpack.c.l.b16 %v194
      %v286 = vunpack.c.l.b16 %v195
      %v287 = vunpack.c.l.b16 %v196
      %v288 = vunpack.c.l.b16 %v197
      %v289 = vunpack.c.l.b16 %v198
      %v290 = vunpack.c.l.b16 %v199
      %v291 = vunpack.c.l.b16 %v200
      %v292 = vunpack.c.l.b16 %v201
      %v293 = vunpack.c.l.b16 %v202
      %v294 = vunpack.c.l.b16 %v203
      %v295 = vunpack.c.l.b16 %v204
      %v296 = vunpack.c.l.b16 %v205
      %v297 = vunpack.c.l.b16 %v206
      %v298 = vunpack.c.l.b16 %v207
      %v299 = vunpack.c.l.b16 %v208
      %v300 = vunpack.c.l.b16 %v209
      %v301 = vpack.c.b16 %v278, %v277
      %v302 = vpack.c.b16 %v280, %v279
      %v303 = vpack.c.b16 %v282, %v281
      %v304 = vpack.c.b16 %v284, %v283
      %v305 = vpack.c.b16 %v286, %v285
      %v306 = vpack.c.b16 %v288, %v287
      %v307 = vpack.c.b16 %v290, %v289
      %v308 = vpack.c.b16 %v292, %v291
      %v309 = vpack.c.b16 %v294, %v293
      %v310 = vpack.c.b16 %v296, %v295
      %v311 = vpack.c.b16 %v298, %v297
      %v312 = vpack.c.b16 %v300, %v299
      %vm325 = vcmask 523264
      %v327 = vsel %vm325, %v242, 0
      %v330 = vsel %vm325, %v244, 0
      %v333 = vsel %vm325, %v246, 0
      %v336 = vsel %vm325, %v248, 0
      %338 = vmatprep.subr.bf16.mxu0 0
      %339 = vmatpush1.bf16.msra.mxu0 %v301
      %340 = vmatprep.subr.bf16.mxu0 0
      %341 = vmatpush1.bf16.msra.mxu0 %v302
      %342 = vmatprep.subr.bf16.mxu0 0
      %343 = vmatpush1.bf16.msra.mxu0 %v303
      %344 = vmatprep.subr.bf16.mxu0 0
      %345 = vmatpush1.bf16.msra.mxu0 %v304
      %346 = vmatprep.subr.bf16.mxu0 0
      %347 = vmatpush1.bf16.msra.mxu0 %v305
      %348 = vmatprep.subr.bf16.mxu0 0
      %349 = vmatpush1.bf16.msra.mxu0 %v306
      %350 = vmatprep.subr.bf16.mxu0 0
      %351 = vmatpush1.bf16.msra.mxu0 %v307
      %352 = vmatprep.subr.bf16.mxu0 0
      %353 = vmatpush1.bf16.msra.mxu0 %v308
      %354 = vmatprep.subr.bf16.mxu0 0
      %355 = vmatpush1.bf16.msra.mxu0 %v309
      %356 = vmatprep.subr.bf16.mxu0 0
      %357 = vmatpush1.bf16.msra.mxu0 %v310
      %358 = vmatprep.subr.bf16.mxu0 0
      %359 = vmatpush1.bf16.msra.mxu0 %v311
      %360 = vmatprep.subr.bf16.mxu0 0
      %361 = vmatpush1.bf16.msra.mxu0 %v312
      %362 = vmatprep.subr.bf16.mxu0 0
      %363 = vmatpush1.bf16.msra.mxu0 0
      %364 = vmatprep.subr.bf16.mxu0 0
      %365 = vmatpush1.bf16.msra.mxu0 0
      %366 = vmatprep.subr.bf16.mxu0 0
      %367 = vmatpush1.bf16.msra.mxu0 0
      %368 = vmatprep.subr.bf16.mxu0 0
      %369 = vmatpush1.bf16.msra.mxu0 0
      %370 = vmatprep.mubr.bf16.mxu0 %v327
      %371 = vmatmul.mubr.bf16.gmra.mrb[0].mxu0 %v241
      %v372 = vpop.f32.mrb[0].mxu0
      %v373 = vadd.f32 %v215, %v372
      %v374 = vpop.f32.mrb[0].mxu0
      %v375 = vpop.f32.mrb[0].mxu0
      %v376 = vadd.f32 %v215, %v375
      %v377 = vpop.f32.mrb[0].mxu0
      %378 = vmatprep.mubr.bf16.mxu0 %v330
      %379 = vmatmul.mubr.bf16.gmra.mrb[0].mxu0 %v243
      %v380 = vpop.f32.mrb[0].mxu0
      %v381 = vadd.f32 %v215, %v380
      %v382 = vpop.f32.mrb[0].mxu0
      %v383 = vpop.f32.mrb[0].mxu0
      %v384 = vadd.f32 %v215, %v383
      %v385 = vpop.f32.mrb[0].mxu0
      %386 = vmatprep.mubr.bf16.mxu0 %v333
      %387 = vmatmul.mubr.bf16.gmra.mrb[0].mxu0 %v245
      %v388 = vpop.f32.mrb[0].mxu0
      %v389 = vadd.f32 %v215, %v388
      %v390 = vpop.f32.mrb[0].mxu0
      %v391 = vpop.f32.mrb[0].mxu0
      %v392 = vadd.f32 %v215, %v391
      %v393 = vpop.f32.mrb[0].mxu0
      %394 = vmatprep.mubr.bf16.mxu0 %v336
      %395 = vmatmul.mubr.bf16.gmra.mrb[0].mxu0 %v247
      %v396 = vpop.f32.mrb[0].mxu0
      %v397 = vadd.f32 %v215, %v396
      %v398 = vpop.f32.mrb[0].mxu0
      %v399 = vpop.f32.mrb[0].mxu0
      %v400 = vadd.f32 %v215, %v399
      %v401 = vpop.f32.mrb[0].mxu0
      %402 = vdwg.mxu0
      %v403 = vpack.c.bf16 %v376, %v373
      %v404 = vpack.c.bf16 %v384, %v381
      %v405 = vpack.c.bf16 %v392, %v389
      %v406 = vpack.c.bf16 %v400, %v397
      %v411 = vunpack.c.l.b16 %v403
      %v412 = vunpack.c.h.b16 %v403
      %v413 = vunpack.c.l.b16 %v404
      %v414 = vunpack.c.h.b16 %v404
      %v415 = vunpack.c.l.b16 %v405
      %v416 = vunpack.c.h.b16 %v405
      %v417 = vunpack.c.l.b16 %v406
      %v418 = vunpack.c.h.b16 %v406
      %v419 = vpack.c.b16 %v411, %v411
      %v420 = vpack.c.b16 %v412, %v412
      %v421 = vpack.c.b16 %v413, %v413
      %v422 = vpack.c.b16 %v414, %v414
      %v423 = vpack.c.b16 %v415, %v415
      %v424 = vpack.c.b16 %v416, %v416
      %v425 = vpack.c.b16 %v417, %v417
      %v426 = vpack.c.b16 %v418, %v418
      %vm435 = vcmask 257024
      %436 = vst.msk [vmem:[%s175] sm:$0xf] %vm435, %v419
      %437 = vst.msk [vmem:[%s175 + $0x4] sm:$0xf] %vm435, %v420
      %438 = vst.msk [vmem:[%s175 + $0x8] sm:$0xf] %vm435, %v421
      %439 = vst.msk [vmem:[%s175 + $0xc] sm:$0xf] %vm435, %v422
      %440 = vst.msk [vmem:[%s175 + $0x10] sm:$0xf] %vm435, %v423
      %441 = vst.msk [vmem:[%s175 + $0x14] sm:$0xf] %vm435, %v424
      %442 = vst.msk [vmem:[%s175 + $0x18] sm:$0xf] %vm435, %v425
      %443 = vst.msk [vmem:[%s175 + $0x1c] sm:$0xf] %vm435, %v426
      %s444 = smul.u32 8, %s14
      %p445 = scmp.lt.s32.totalorder %s444, 15
      %s446 = scalar_select %p445, %s444, 15
      %s447 = smul.addr %s446, 4
      %s448 = scalar_lea.vmem %s3, %s447
      // Predicated region
      $region33: #{vivit_forward.8} parent=31 // pred_check
        %p449 = pneg %p100
      $region34: #{vivit_forward.8} parent=31 // pred_check_branch
        %451 = sbr.rel (%p449) target = $region36
      $region35: #{vivit_forward.8} parent=31 // pred_region
        %s452 = smul.u32 8, %s14
      $region36: #{vivit_forward.8} parent=31 // pred_fallthru
        _
    $region32: #{vivit_forward.8} parent=5 // pred_fallthru
      _
    %p453 = scmp.le.s32.totalorder 2, %s9
    // Predicated region
    $region37: #{vivit_forward.8} parent=5 // pred_check
      %p454 = pneg %p453
    $region38: #{vivit_forward.8} parent=5 // pred_check_branch
      %456 = sbr.rel (%p454) target = $region40
    $region39: #{vivit_forward.8} parent=5 // pred_region
      %s457 = ssub.s32 %s9, 2
      // Predicated region
      $region41: #{vivit_forward.8} parent=39 // pred_check
        %p458 = pneg %p106
      $region42: #{vivit_forward.8} parent=39 // pred_check_branch
        %460 = sbr.rel (%p458) target = $region44
      $region43: #{vivit_forward.8} parent=39 // pred_region
        %s461 = smul.u32 8, %s15
        %p462 = scmp.lt.s32.totalorder %s461, 15
        %s463 = scalar_select %p462, %s461, 15
        %s464 = smul.addr %s463, 4
        %s465 = scalar_lea.vmem %s3, %s464
      $region44: #{vivit_forward.8} parent=39 // pred_fallthru
        _
    $region40: #{vivit_forward.8} parent=5 // pred_fallthru
      _
  $region6: #{vivit_forward.8} parent=0 // loop_footer
    %s13 = sadd.s32 1, %s9
  $region7: #{vivit_forward.8} parent=0 // loop_footer_branch
    %8 = sbr.rel target = $region3
  $region8: #{vivit_forward.8} parent=0 // loop_exit
    _

// kernel: vivit_forward.9
$region0: #{vivit_forward.9}
  #allocation0 [shape = 'u32[]', space=smem, size = 0x4, offset = 0x4, fixed_abs, tag = 'smem constant byte address 0x4 - core index']
  #allocation1 [shape = 'u32[144,128]{1,0:T(1,128)}', space=vmem, size = 0x12000, scoped, tag = 'internal scratch']
  %s0 = inlined_call_operand.vmem [shape: bf16[2,4,16,32], index: 0, kind: input, shape index: {}]
  %s1 = inlined_call_operand.vmem [shape: f32[1,32], index: 1, kind: input, shape index: {}]
  %s2 = inlined_call_operand.vmem [shape: f32[1,32], index: 2, kind: input, shape index: {}]
  %s3 = inlined_call_operand.vmem [shape: bf16[2,32,16], index: 3, kind: input, shape index: {}]
  %s4 = inlined_call_operand.vmem [shape: bf16[2,32,16], index: 4, kind: input, shape index: {}]
  %s5 = inlined_call_operand.vmem [shape: bf16[2,32,16], index: 5, kind: input, shape index: {}]
  %s6 = inlined_call_operand.vmem [shape: bf16[2,4,16,32], index: 6, kind: output, shape index: {}]
  %s7 = sld [smem:[#allocation0]]
  $region57: #{vivit_forward.9} parent=0
    _
  %s9 = ssub.s32 1, %s7
  %s10 = scalar_select 0, %s9, %s7
  loop: start=0, step=1, limit=4
  $region2: #{vivit_forward.9} parent=0 // loop_pre_header
    _
  $region3: #{vivit_forward.9} parent=0 // loop_header
    %s12 = sphi 0, %s16
    %p13 = scmp.ge.s32.totalorder %s12, 4
    %s19 = sphi 0, %s31
    %s20 = sphi 0, %s27
    %s21 = sphi 0, %s19
    %s22 = sphi 0, %s20
    %s23 = sphi 0, %s21
    %s24 = sphi 0, %s22
    %s36 = sphi 0, %s38
    %s39 = sphi 0, %s36
    %s40 = sphi 0, %s39
    %s56 = sphi 0, %s40
    %s60 = sphi 0, %s60
    %s62 = sphi 0, %s60
    %s63 = sphi 0, %s62
    %s77 = sphi 0, %s63
    %s81 = sphi 0, %s81
    %s83 = sphi 0, %s81
    %s84 = sphi 0, %s83
    %s98 = sphi 0, %s84
    %s102 = sphi 0, %s102
    %s104 = sphi 0, %s102
    %s105 = sphi 0, %s104
    %s119 = sphi 0, %s105
    %s123 = sphi 0, %s123
    %s125 = sphi 0, %s123
    %s126 = sphi 0, %s125
    %s140 = sphi 0, %s126
    %s144 = sphi 0, %s144
    %s146 = sphi 0, %s144
    %s147 = sphi 0, %s146
    %s161 = sphi 0, %s147
    %s169 = sphi 0, %s171
    %s172 = sphi 0, %s169
    %s173 = sphi 0, %s172
    %s189 = sphi 0, %s173
  $region4: #{vivit_forward.9} parent=0 // loop_header_branch
    %15 = sbr.rel (%p13) target = $region8
  $region5: #{vivit_forward.9} parent=0 // loop_body
    %s17 = ssub.s32 %s12, 1
    %s18 = ssub.s32 %s12, 2
    %s25 = sadd.s32 1, %s20
    %p26 = scmp.ge.s32.totalorder %s25, 1
    %s27 = scalar_select %p26, 0, %s25
    %s28 = sadd.s32 1, %s19
    %s29 = scalar_select %p26, %s28, %s19
    %p30 = scmp.ge.s32.totalorder %s29, 2
    %s31 = scalar_select %p30, 0, %s29
    %s32 = ssub.s32 %s19, %s31
    %s33 = ssub.s32 %s20, %s27
    %s34 = sor.u32 %s32, %s33
    %p35 = scmp.eq.s32.totalorder %s34, 0
    %s37 = sadd.s32 %s36, 1
    %s38 = scalar_select %p35, %s36, %s37
    %p41 = pneg %p35
    %p42 = scmp.eq.s32.totalorder %s12, 1
    %p43 = por %p41, %p42
    %p44 = scmp.ne.s32.totalorder %s36, %s39
    %p45 = scmp.eq.s32.totalorder %s12, 0
    %p46 = por %p44, %p45
    %p47 = scmp.ne.s32.totalorder %s36, %s39
    %p48 = scmp.eq.s32.totalorder %s17, 1
    %p49 = por %p47, %p48
    %p50 = scmp.ne.s32.totalorder %s39, %s40
    %p51 = scmp.eq.s32.totalorder %s17, 0
    %p52 = por %p50, %p51
    %p53 = scmp.ne.s32.totalorder %s39, %s40
    %p54 = scmp.eq.s32.totalorder %s18, 1
    %p55 = por %p53, %p54
    %p57 = scmp.ne.s32.totalorder %s40, %s56
    %p58 = scmp.eq.s32.totalorder %s18, 0
    %p59 = por %p57, %p58
    %s61 = sadd.s32 %s60, 1
    %p64 = scmp.eq.s32.totalorder %s12, 1
    %p65 = scmp.ne.s32.totalorder %s60, %s62
    %p66 = scmp.eq.s32.totalorder %s12, 0
    %p67 = por %p65, %p66
    %p68 = scmp.ne.s32.totalorder %s60, %s62
    %p69 = scmp.eq.s32.totalorder %s17, 1
    %p70 = por %p68, %p69
    %p71 = scmp.ne.s32.totalorder %s62, %s63
    %p72 = scmp.eq.s32.totalorder %s17, 0
    %p73 = por %p71, %p72
    %p74 = scmp.ne.s32.totalorder %s62, %s63
    %p75 = scmp.eq.s32.totalorder %s18, 1
    %p76 = por %p74, %p75
    %p78 = scmp.ne.s32.totalorder %s63, %s77
    %p79 = scmp.eq.s32.totalorder %s18, 0
    %p80 = por %p78, %p79
    %s82 = sadd.s32 %s81, 1
    %p85 = scmp.eq.s32.totalorder %s12, 1
    %p86 = scmp.ne.s32.totalorder %s81, %s83
    %p87 = scmp.eq.s32.totalorder %s12, 0
    %p88 = por %p86, %p87
    %p89 = scmp.ne.s32.totalorder %s81, %s83
    %p90 = scmp.eq.s32.totalorder %s17, 1
    %p91 = por %p89, %p90
    %p92 = scmp.ne.s32.totalorder %s83, %s84
    %p93 = scmp.eq.s32.totalorder %s17, 0
    %p94 = por %p92, %p93
    %p95 = scmp.ne.s32.totalorder %s83, %s84
    %p96 = scmp.eq.s32.totalorder %s18, 1
    %p97 = por %p95, %p96
    %p99 = scmp.ne.s32.totalorder %s84, %s98
    %p100 = scmp.eq.s32.totalorder %s18, 0
    %p101 = por %p99, %p100
    %s103 = sadd.s32 %s102, 1
    %p106 = scmp.eq.s32.totalorder %s12, 1
    %p107 = scmp.ne.s32.totalorder %s102, %s104
    %p108 = scmp.eq.s32.totalorder %s12, 0
    %p109 = por %p107, %p108
    %p110 = scmp.ne.s32.totalorder %s102, %s104
    %p111 = scmp.eq.s32.totalorder %s17, 1
    %p112 = por %p110, %p111
    %p113 = scmp.ne.s32.totalorder %s104, %s105
    %p114 = scmp.eq.s32.totalorder %s17, 0
    %p115 = por %p113, %p114
    %p116 = scmp.ne.s32.totalorder %s104, %s105
    %p117 = scmp.eq.s32.totalorder %s18, 1
    %p118 = por %p116, %p117
    %p120 = scmp.ne.s32.totalorder %s105, %s119
    %p121 = scmp.eq.s32.totalorder %s18, 0
    %p122 = por %p120, %p121
    %s124 = sadd.s32 %s123, 1
    %p127 = scmp.eq.s32.totalorder %s12, 1
    %p128 = scmp.ne.s32.totalorder %s123, %s125
    %p129 = scmp.eq.s32.totalorder %s12, 0
    %p130 = por %p128, %p129
    %p131 = scmp.ne.s32.totalorder %s123, %s125
    %p132 = scmp.eq.s32.totalorder %s17, 1
    %p133 = por %p131, %p132
    %p134 = scmp.ne.s32.totalorder %s125, %s126
    %p135 = scmp.eq.s32.totalorder %s17, 0
    %p136 = por %p134, %p135
    %p137 = scmp.ne.s32.totalorder %s125, %s126
    %p138 = scmp.eq.s32.totalorder %s18, 1
    %p139 = por %p137, %p138
    %p141 = scmp.ne.s32.totalorder %s126, %s140
    %p142 = scmp.eq.s32.totalorder %s18, 0
    %p143 = por %p141, %p142
    %s145 = sadd.s32 %s144, 1
    %p148 = scmp.eq.s32.totalorder %s12, 1
    %p149 = scmp.ne.s32.totalorder %s144, %s146
    %p150 = scmp.eq.s32.totalorder %s12, 0
    %p151 = por %p149, %p150
    %p152 = scmp.ne.s32.totalorder %s144, %s146
    %p153 = scmp.eq.s32.totalorder %s17, 1
    %p154 = por %p152, %p153
    %p155 = scmp.ne.s32.totalorder %s146, %s147
    %p156 = scmp.eq.s32.totalorder %s17, 0
    %p157 = por %p155, %p156
    %p158 = scmp.ne.s32.totalorder %s146, %s147
    %p159 = scmp.eq.s32.totalorder %s18, 1
    %p160 = por %p158, %p159
    %p162 = scmp.ne.s32.totalorder %s147, %s161
    %p163 = scmp.eq.s32.totalorder %s18, 0
    %p164 = por %p162, %p163
    %s165 = ssub.s32 %s19, %s31
    %s166 = ssub.s32 %s20, %s27
    %s167 = sor.u32 %s165, %s166
    %p168 = scmp.eq.s32.totalorder %s167, 0
    %s170 = sadd.s32 %s169, 1
    %s171 = scalar_select %p168, %s169, %s170
    %p174 = pneg %p168
    %p175 = scmp.eq.s32.totalorder %s12, 1
    %p176 = por %p174, %p175
    %p177 = scmp.ne.s32.totalorder %s169, %s172
    %p178 = scmp.eq.s32.totalorder %s12, 0
    %p179 = por %p177, %p178
    %p180 = scmp.ne.s32.totalorder %s169, %s172
    %p181 = scmp.eq.s32.totalorder %s17, 1
    %p182 = por %p180, %p181
    %p183 = scmp.ne.s32.totalorder %s172, %s173
    %p184 = scmp.eq.s32.totalorder %s17, 0
    %p185 = por %p183, %p184
    %p186 = scmp.ne.s32.totalorder %s172, %s173
    %p187 = scmp.eq.s32.totalorder %s18, 1
    %p188 = por %p186, %p187
    %p190 = scmp.ne.s32.totalorder %s173, %s189
    %p191 = scmp.eq.s32.totalorder %s18, 0
    %p192 = por %p190, %p191
    %p193 = scmp.le.s32.totalorder 1, %s12
    %p194 = scmp.lt.s32.totalorder %s12, 3
    %p195 = pnand %p193, %p194
    %p196 = pneg %p195
    // Predicated region
    $region9: #{vivit_forward.9} parent=5 // pred_check
      _
    $region10: #{vivit_forward.9} parent=5 // pred_check_branch
      %198 = sbr.rel (%p195) target = $region12
    $region11: #{vivit_forward.9} parent=5 // pred_region
      %s199 = ssub.s32 %s12, 1
      // Predicated region
      $region13: #{vivit_forward.9} parent=11 // pred_check
        %p200 = pneg %p73
      $region14: #{vivit_forward.9} parent=11 // pred_check_branch
        %202 = sbr.rel (%p200) target = $region16
      $region15: #{vivit_forward.9} parent=11 // pred_region
        _
      $region16: #{vivit_forward.9} parent=11 // pred_fallthru
        _
      // Predicated region
      $region17: #{vivit_forward.9} parent=11 // pred_check
        %p203 = pneg %p94
      $region18: #{vivit_forward.9} parent=11 // pred_check_branch
        %205 = sbr.rel (%p203) target = $region20
      $region19: #{vivit_forward.9} parent=11 // pred_region
        _
      $region20: #{vivit_forward.9} parent=11 // pred_fallthru
        _
      // Predicated region
      $region21: #{vivit_forward.9} parent=11 // pred_check
        %p206 = pneg %p115
      $region22: #{vivit_forward.9} parent=11 // pred_check_branch
        %208 = sbr.rel (%p206) target = $region24
      $region23: #{vivit_forward.9} parent=11 // pred_region
        _
      $region24: #{vivit_forward.9} parent=11 // pred_fallthru
        _
      // Predicated region
      $region25: #{vivit_forward.9} parent=11 // pred_check
        %p209 = pneg %p136
      $region26: #{vivit_forward.9} parent=11 // pred_check_branch
        %211 = sbr.rel (%p209) target = $region28
      $region27: #{vivit_forward.9} parent=11 // pred_region
        _
      $region28: #{vivit_forward.9} parent=11 // pred_fallthru
        _
      // Predicated region
      $region29: #{vivit_forward.9} parent=11 // pred_check
        %p212 = pneg %p157
      $region30: #{vivit_forward.9} parent=11 // pred_check_branch
        %214 = sbr.rel (%p212) target = $region32
      $region31: #{vivit_forward.9} parent=11 // pred_region
        _
      $region32: #{vivit_forward.9} parent=11 // pred_fallthru
        _
    $region12: #{vivit_forward.9} parent=5 // pred_fallthru
      _
    %p215 = scmp.lt.s32.totalorder %s12, 2
    // Predicated region
    $region33: #{vivit_forward.9} parent=5 // pred_check
      %p216 = pneg %p215
    $region34: #{vivit_forward.9} parent=5 // pred_check_branch
      %218 = sbr.rel (%p216) target = $region36
    $region35: #{vivit_forward.9} parent=5 // pred_region
      // Predicated region
      $region37: #{vivit_forward.9} parent=35 // pred_check
        %p219 = pneg %p46
      $region38: #{vivit_forward.9} parent=35 // pred_check_branch
        %221 = sbr.rel (%p219) target = $region40
      $region39: #{vivit_forward.9} parent=35 // pred_region
        %s222 = smul.u32 4, %s20
        %p223 = scmp.lt.s32.totalorder %s19, 1
        %s224 = scalar_select %p223, %s19, 1
        %p225 = scmp.lt.s32.totalorder %s222, 3
        %s226 = scalar_select %p225, %s222, 3
        %s227 = smul.addr %s226, 2
        %s228 = smul.addr %s224, 8
        %s229 = sadd.s32 %s227, %s228
        %s230 = smul.addr %s229, 4
        %s231 = scalar_lea.vmem %s0, %s230
        %s232 = smul.u32 4, %s20
      $region40: #{vivit_forward.9} parent=35 // pred_fallthru
        _
    $region36: #{vivit_forward.9} parent=5 // pred_fallthru
      _
    %p233 = scmp.le.s32.totalorder 1, %s12
    %p234 = scmp.lt.s32.totalorder %s12, 3
    %p235 = pnand %p233, %p234
    %p236 = pneg %p235
    // Predicated region
    $region41: #{vivit_forward.9} parent=5 // pred_check
      _
    $region42: #{vivit_forward.9} parent=5 // pred_check_branch
      %238 = sbr.rel (%p235) target = $region44
    $region43: #{vivit_forward.9} parent=5 // pred_region
      %s239 = ssub.s32 %s12, 1
      %s240 = smul.u32 4, %s22
      %p241 = scmp.lt.s32.totalorder %s21, 1
      %s242 = scalar_select %p241, %s21, 1
      %p243 = scmp.lt.s32.totalorder %s240, 3
      %s244 = scalar_select %p243, %s240, 3
      %s245 = smul.addr %s244, 2
      %s246 = smul.addr %s242, 8
      %s247 = sadd.s32 %s245, %s246
      %s248 = smul.addr %s247, 4
      %s249 = scalar_lea.vmem %s0, %s248
      %p250 = pneg %p52
      %p251 = pneg %p49
      %p252 = pneg %p73
      %p253 = pneg %p70
      %p254 = pneg %p94
      %p255 = pneg %p91
      %p256 = pneg %p115
      %p257 = pneg %p112
      %p258 = pneg %p136
      %p259 = pneg %p133
      %p260 = pneg %p157
      %p261 = pneg %p154
      %p262 = pneg %p185
      %p263 = pneg %p182
      %s264 = smul.u32 4, %s22
      %p265 = scmp.lt.s32.totalorder %s21, 1
      %s266 = scalar_select %p265, %s21, 1
      %p267 = scmp.lt.s32.totalorder %s264, 3
      %s268 = scalar_select %p267, %s264, 3
      %s269 = smul.addr %s268, 2
      %s270 = smul.addr %s266, 8
      %s271 = sadd.s32 %s269, %s270
      %s272 = smul.addr %s271, 4
      %s273 = scalar_lea.vmem %s6, %s272
      %s274 = smul.u32 4, %s22
      %p275 = scmp.lt.s32.totalorder %s21, 1
      %s276 = scalar_select %p275, %s21, 1
      %p277 = scmp.lt.s32.totalorder %s274, 3
      %s278 = scalar_select %p277, %s274, 3
      %s279 = smul.addr %s278, 2
      %s280 = smul.addr %s276, 8
      %s281 = sadd.s32 %s279, %s280
      %s282 = smul.addr %s281, 4
      %s283 = scalar_lea.vmem %s0, %s282
      %s284 = smul.u32 4, %s22
      %s285 = smul.u32 4, %s22
      %p286 = scmp.lt.s32.totalorder %s21, 1
      %s287 = scalar_select %p286, %s21, 1
      %p288 = scmp.lt.s32.totalorder %s285, 3
      %s289 = scalar_select %p288, %s285, 3
      %s290 = smul.addr %s289, 2
      %s291 = smul.addr %s287, 8
      %s292 = sadd.s32 %s290, %s291
      %s293 = smul.addr %s292, 4
      %s294 = scalar_lea.vmem %s6, %s293
      %s295 = smul.u32 4, %s22
      %v297 = vld [vmem:[%s283] sm:$0xf]
      %v298 = vld [vmem:[%s283 + $0x4] sm:$0xf]
      %v299 = vld [vmem:[%s283 + $0x8] sm:$0xf]
      %v300 = vld [vmem:[%s283 + $0xc] sm:$0xf]
      %v301 = vld [vmem:[%s283 + $0x10] sm:$0xf]
      %v302 = vld [vmem:[%s283 + $0x14] sm:$0xf]
      %v303 = vld [vmem:[%s283 + $0x18] sm:$0xf]
      %v304 = vld [vmem:[%s283 + $0x1c] sm:$0xf]
      %v305 = vunpack.c.l.bf16 %v297
      %v306 = vunpack.c.l.bf16 %v298
      %v307 = vunpack.c.l.bf16 %v299
      %v308 = vunpack.c.l.bf16 %v300
      %v309 = vunpack.c.l.bf16 %v301
      %v310 = vunpack.c.l.bf16 %v302
      %v311 = vunpack.c.l.bf16 %v303
      %v312 = vunpack.c.l.bf16 %v304
      %vm313 = vcmask 261120
      %v314 = vsel %vm313, %v305, 0.0
      %315 = vadd.xlane.f32.xlu0 %v314
      %v316 = vpop.xlane.xlu0 %315
      %v317 = vsel %vm313, %v306, 0.0
      %318 = vadd.xlane.f32.xlu0 %v317
      %v319 = vpop.xlane.xlu0 %318
      %v320 = vsel %vm313, %v307, 0.0
      %321 = vadd.xlane.f32.xlu0 %v320
      %v322 = vpop.xlane.xlu0 %321
      %v323 = vsel %vm313, %v308, 0.0
      %324 = vadd.xlane.f32.xlu0 %v323
      %v325 = vpop.xlane.xlu0 %324
      %v326 = vsel %vm313, %v309, 0.0
      %327 = vadd.xlane.f32.xlu0 %v326
      %v328 = vpop.xlane.xlu0 %327
      %v329 = vsel %vm313, %v310, 0.0
      %330 = vadd.xlane.f32.xlu0 %v329
      %v331 = vpop.xlane.xlu0 %330
      %v332 = vsel %vm313, %v311, 0.0
      %333 = vadd.xlane.f32.xlu0 %v332
      %v334 = vpop.xlane.xlu0 %333
      %v335 = vsel %vm313, %v312, 0.0
      %336 = vadd.xlane.f32.xlu0 %v335
      %v337 = vpop.xlane.xlu0 %336
      %v338 = vrcp.pop 32.0
      %v339 = vmul.f32 %v316, %v338
      %v340 = vmul.f32 %v319, %v338
      %v341 = vmul.f32 %v322, %v338
      %v342 = vmul.f32 %v325, %v338
      %v343 = vmul.f32 %v328, %v338
      %v344 = vmul.f32 %v331, %v338
      %v345 = vmul.f32 %v334, %v338
      %v346 = vmul.f32 %v337, %v338
      %v347 = vsub.f32 %v305, %v339
      %v348 = vsub.f32 %v306, %v340
      %v349 = vsub.f32 %v307, %v341
      %v350 = vsub.f32 %v308, %v342
      %v351 = vsub.f32 %v309, %v343
      %v352 = vsub.f32 %v310, %v344
      %v353 = vsub.f32 %v311, %v345
      %v354 = vsub.f32 %v312, %v346
      %v355 = vmul.f32 %v347, %v347
      %v356 = vmul.f32 %v348, %v348
      %v357 = vmul.f32 %v349, %v349
      %v358 = vmul.f32 %v350, %v350
      %v359 = vmul.f32 %v351, %v351
      %v360 = vmul.f32 %v352, %v352
      %v361 = vmul.f32 %v353, %v353
      %v362 = vmul.f32 %v354, %v354
      %v363 = vsel %vm313, %v355, 0.0
      %364 = vadd.xlane.f32.xlu0 %v363
      %v365 = vpop.xlane.xlu0 %364
      %v366 = vsel %vm313, %v356, 0.0
      %367 = vadd.xlane.f32.xlu0 %v366
      %v368 = vpop.xlane.xlu0 %367
      %v369 = vsel %vm313, %v357, 0.0
      %370 = vadd.xlane.f32.xlu0 %v369
      %v371 = vpop.xlane.xlu0 %370
      %v372 = vsel %vm313, %v358, 0.0
      %373 = vadd.xlane.f32.xlu0 %v372
      %v374 = vpop.xlane.xlu0 %373
      %v375 = vsel %vm313, %v359, 0.0
      %376 = vadd.xlane.f32.xlu0 %v375
      %v377 = vpop.xlane.xlu0 %376
      %v378 = vsel %vm313, %v360, 0.0
      %379 = vadd.xlane.f32.xlu0 %v378
      %v380 = vpop.xlane.xlu0 %379
      %v381 = vsel %vm313, %v361, 0.0
      %382 = vadd.xlane.f32.xlu0 %v381
      %v383 = vpop.xlane.xlu0 %382
      %v384 = vsel %vm313, %v362, 0.0
      %385 = vadd.xlane.f32.xlu0 %v384
      %v386 = vpop.xlane.xlu0 %385
      %v387 = vmul.f32 %v365, %v338
      %v388 = vmul.f32 %v368, %v338
      %v389 = vmul.f32 %v371, %v338
      %v390 = vmul.f32 %v374, %v338
      %v391 = vmul.f32 %v377, %v338
      %v392 = vmul.f32 %v380, %v338
      %v393 = vmul.f32 %v383, %v338
      %v394 = vmul.f32 %v386, %v338
      %v395 = vadd.f32 %v387, 1e-05
      %v396 = vadd.f32 %v388, 1e-05
      %v397 = vadd.f32 %v389, 1e-05
      %v398 = vadd.f32 %v390, 1e-05
      %v399 = vadd.f32 %v391, 1e-05
      %v400 = vadd.f32 %v392, 1e-05
      %v401 = vadd.f32 %v393, 1e-05
      %v402 = vadd.f32 %v394, 1e-05
      %v403 = vrsqrt.pop %v395
      %v404 = vrsqrt.pop %v396
      %v405 = vrsqrt.pop %v397
      %v406 = vrsqrt.pop %v398
      %v407 = vrsqrt.pop %v399
      %v408 = vrsqrt.pop %v400
      %v409 = vrsqrt.pop %v401
      %v410 = vrsqrt.pop %v402
      %v411 = vmul.f32 %v347, %v403
      %v412 = vmul.f32 %v348, %v404
      %v413 = vmul.f32 %v349, %v405
      %v414 = vmul.f32 %v350, %v406
      %v415 = vmul.f32 %v351, %v407
      %v416 = vmul.f32 %v352, %v408
      %v417 = vmul.f32 %v353, %v409
      %v418 = vmul.f32 %v354, %v410
      %v419 = vld [vmem:[%s1] sm:$0x1]
      %v421 = vlaneseq
      %v422 = vshrl.u32 %v421, 7
      %v423 = vsub.s32 0, %v422
      %v424 = vrot.slane %v419, %v423
      %v426 = vmul.f32 %v411, %v424
      %v427 = vmul.f32 %v412, %v424
      %v428 = vmul.f32 %v413, %v424
      %v429 = vmul.f32 %v414, %v424
      %v430 = vmul.f32 %v415, %v424
      %v431 = vmul.f32 %v416, %v424
      %v432 = vmul.f32 %v417, %v424
      %v433 = vmul.f32 %v418, %v424
      %v434 = vld [vmem:[%s2] sm:$0x1]
      %v436 = vlaneseq
      %v437 = vshrl.u32 %v436, 7
      %v438 = vsub.s32 0, %v437
      %v439 = vrot.slane %v434, %v438
      %v441 = vadd.f32 %v426, %v439
      %v442 = vadd.f32 %v427, %v439
      %v443 = vadd.f32 %v428, %v439
      %v444 = vadd.f32 %v429, %v439
      %v445 = vadd.f32 %v430, %v439
      %v446 = vadd.f32 %v431, %v439
      %v447 = vadd.f32 %v432, %v439
      %v448 = vadd.f32 %v433, %v439
      %v449 = vpack.c.bf16 %v442, %v441
      %v450 = vpack.c.bf16 %v444, %v443
      %v451 = vpack.c.bf16 %v446, %v445
      %v452 = vpack.c.bf16 %v448, %v447
      %v453 = vld [vmem:[%s3] sm:$0xf]
      %v454 = vld [vmem:[%s3 + $0x4] sm:$0xf]
      %v455 = vld [vmem:[%s3 + $0x8] sm:$0xf]
      %v456 = vld [vmem:[%s3 + $0xc] sm:$0xf]
      %v461 = vunpack.c.l.b16 %v453
      %v462 = vunpack.c.l.b16 %v454
      %v463 = vunpack.c.l.b16 %v455
      %v464 = vunpack.c.l.b16 %v456
      %v465 = vpack.c.b16 %v462, %v461
      %v466 = vpack.c.b16 %v464, %v463
      %v470 = vsel %vm313, %v449, 0
      %v473 = vsel %vm313, %v450, 0
      %v476 = vsel %vm313, %v451, 0
      %v479 = vsel %vm313, %v452, 0
      %481 = vmatprep.subr.bf16.mxu0 0
      %482 = vmatpush1.bf16.msra.mxu0 %v465
      %483 = vmatprep.subr.bf16.mxu0 0
      %484 = vmatpush1.bf16.msra.mxu0 %v466
      %485 = vmatprep.subr.bf16.mxu0 0
      %486 = vmatpush1.bf16.msra.mxu0 0
      %487 = vmatprep.subr.bf16.mxu0 0
      %488 = vmatpush1.bf16.msra.mxu0 0
      %489 = vmatprep.subr.bf16.mxu0 0
      %490 = vmatpush1.bf16.msra.mxu0 0
      %491 = vmatprep.subr.bf16.mxu0 0
      %492 = vmatpush1.bf16.msra.mxu0 0
      %493 = vmatprep.subr.bf16.mxu0 0
      %494 = vmatpush1.bf16.msra.mxu0 0
      %495 = vmatprep.subr.bf16.mxu0 0
      %496 = vmatpush1.bf16.msra.mxu0 0
      %497 = vmatprep.subr.bf16.mxu0 0
      %498 = vmatpush1.bf16.msra.mxu0 0
      %499 = vmatprep.subr.bf16.mxu0 0
      %500 = vmatpush1.bf16.msra.mxu0 0
      %501 = vmatprep.subr.bf16.mxu0 0
      %502 = vmatpush1.bf16.msra.mxu0 0
      %503 = vmatprep.subr.bf16.mxu0 0
      %504 = vmatpush1.bf16.msra.mxu0 0
      %505 = vmatprep.subr.bf16.mxu0 0
      %506 = vmatpush1.bf16.msra.mxu0 0
      %507 = vmatprep.subr.bf16.mxu0 0
      %508 = vmatpush1.bf16.msra.mxu0 0
      %509 = vmatprep.subr.bf16.mxu0 0
      %510 = vmatpush1.bf16.msra.mxu0 0
      %511 = vmatprep.subr.bf16.mxu0 0
      %512 = vmatpush1.bf16.msra.mxu0 0
      %513 = vmatprep.mubr.bf16.mxu0 0
      %514 = vmatmul.mubr.bf16.gmra.mrb[0].mxu0 %v470
      %v515 = vpop.f32.mrb[0].mxu0
      %v516 = vadd.f32 0.0, %v515
      %v517 = vpop.f32.mrb[0].mxu0
      %v518 = vpop.f32.mrb[0].mxu0
      %v519 = vadd.f32 0.0, %v518
      %v520 = vpop.f32.mrb[0].mxu0
      %521 = vmatprep.mubr.bf16.mxu0 0
      %522 = vmatmul.mubr.bf16.gmra.mrb[0].mxu0 %v473
      %v523 = vpop.f32.mrb[0].mxu0
      %v524 = vadd.f32 0.0, %v523
      %v525 = vpop.f32.mrb[0].mxu0
      %v526 = vpop.f32.mrb[0].mxu0
      %v527 = vadd.f32 0.0, %v526
      %v528 = vpop.f32.mrb[0].mxu0
      %529 = vmatprep.mubr.bf16.mxu0 0
      %530 = vmatmul.mubr.bf16.gmra.mrb[0].mxu0 %v476
      %v531 = vpop.f32.mrb[0].mxu0
      %v532 = vadd.f32 0.0, %v531
      %v533 = vpop.f32.mrb[0].mxu0
      %v534 = vpop.f32.mrb[0].mxu0
      %v535 = vadd.f32 0.0, %v534
      %v536 = vpop.f32.mrb[0].mxu0
      %537 = vmatprep.mubr.bf16.mxu0 0
      %538 = vmatmul.mubr.bf16.gmra.mrb[0].mxu0 %v479
      %v539 = vpop.f32.mrb[0].mxu0
      %v540 = vadd.f32 0.0, %v539
      %v541 = vpop.f32.mrb[0].mxu0
      %v542 = vpop.f32.mrb[0].mxu0
      %v543 = vadd.f32 0.0, %v542
      %v544 = vpop.f32.mrb[0].mxu0
      %545 = vdwg.mxu0
      %v546 = vld [vmem:[%s4] sm:$0xf]
      %v547 = vld [vmem:[%s4 + $0x4] sm:$0xf]
      %v548 = vld [vmem:[%s4 + $0x8] sm:$0xf]
      %v549 = vld [vmem:[%s4 + $0xc] sm:$0xf]
      %v554 = vunpack.c.l.b16 %v546
      %v555 = vunpack.c.l.b16 %v547
      %v556 = vunpack.c.l.b16 %v548
      %v557 = vunpack.c.l.b16 %v549
      %v558 = vpack.c.b16 %v555, %v554
      %v559 = vpack.c.b16 %v557, %v556
      %562 = vmatprep.subr.bf16.mxu0 0
      %563 = vmatpush1.bf16.msra.mxu0 %v558
      %564 = vmatprep.subr.bf16.mxu0 0
      %565 = vmatpush1.bf16.msra.mxu0 %v559
      %566 = vmatprep.subr.bf16.mxu0 0
      %567 = vmatpush1.bf16.msra.mxu0 0
      %568 = vmatprep.subr.bf16.mxu0 0
      %569 = vmatpush1.bf16.msra.mxu0 0
      %570 = vmatprep.subr.bf16.mxu0 0
      %571 = vmatpush1.bf16.msra.mxu0 0
      %572 = vmatprep.subr.bf16.mxu0 0
      %573 = vmatpush1.bf16.msra.mxu0 0
      %574 = vmatprep.subr.bf16.mxu0 0
      %575 = vmatpush1.bf16.msra.mxu0 0
      %576 = vmatprep.subr.bf16.mxu0 0
      %577 = vmatpush1.bf16.msra.mxu0 0
      %578 = vmatprep.subr.bf16.mxu0 0
      %579 = vmatpush1.bf16.msra.mxu0 0
      %580 = vmatprep.subr.bf16.mxu0 0
      %581 = vmatpush1.bf16.msra.mxu0 0
      %582 = vmatprep.subr.bf16.mxu0 0
      %583 = vmatpush1.bf16.msra.mxu0 0
      %584 = vmatprep.subr.bf16.mxu0 0
      %585 = vmatpush1.bf16.msra.mxu0 0
      %586 = vmatprep.subr.bf16.mxu0 0
      %587 = vmatpush1.bf16.msra.mxu0 0
      %588 = vmatprep.subr.bf16.mxu0 0
      %589 = vmatpush1.bf16.msra.mxu0 0
      %590 = vmatprep.subr.bf16.mxu0 0
      %591 = vmatpush1.bf16.msra.mxu0 0
      %592 = vmatprep.subr.bf16.mxu0 0
      %593 = vmatpush1.bf16.msra.mxu0 0
      %594 = vmatprep.mubr.bf16.mxu0 0
      %595 = vmatmul.mubr.bf16.gmra.mrb[0].mxu0 %v470
      %v596 = vpop.f32.mrb[0].mxu0
      %v597 = vadd.f32 0.0, %v596
      %v598 = vpop.f32.mrb[0].mxu0
      %v599 = vpop.f32.mrb[0].mxu0
      %v600 = vadd.f32 0.0, %v599
      %v601 = vpop.f32.mrb[0].mxu0
      %602 = vmatprep.mubr.bf16.mxu0 0
      %603 = vmatmul.mubr.bf16.gmra.mrb[0].mxu0 %v473
      %v604 = vpop.f32.mrb[0].mxu0
      %v605 = vadd.f32 0.0, %v604
      %v606 = vpop.f32.mrb[0].mxu0
      %v607 = vpop.f32.mrb[0].mxu0
      %v608 = vadd.f32 0.0, %v607
      %v609 = vpop.f32.mrb[0].mxu0
      %610 = vmatprep.mubr.bf16.mxu0 0
      %611 = vmatmul.mubr.bf16.gmra.mrb[0].mxu0 %v476
      %v612 = vpop.f32.mrb[0].mxu0
      %v613 = vadd.f32 0.0, %v612
      %v614 = vpop.f32.mrb[0].mxu0
      %v615 = vpop.f32.mrb[0].mxu0
      %v616 = vadd.f32 0.0, %v615
      %v617 = vpop.f32.mrb[0].mxu0
      %618 = vmatprep.mubr.bf16.mxu0 0
      %619 = vmatmul.mubr.bf16.gmra.mrb[0].mxu0 %v479
      %v620 = vpop.f32.mrb[0].mxu0
      %v621 = vadd.f32 0.0, %v620
      %v622 = vpop.f32.mrb[0].mxu0
      %v623 = vpop.f32.mrb[0].mxu0
      %v624 = vadd.f32 0.0, %v623
      %v625 = vpop.f32.mrb[0].mxu0
      %626 = vdwg.mxu0
      %v627 = vld [vmem:[%s5] sm:$0xf]
      %v628 = vld [vmem:[%s5 + $0x4] sm:$0xf]
      %v629 = vld [vmem:[%s5 + $0x8] sm:$0xf]
      %v630 = vld [vmem:[%s5 + $0xc] sm:$0xf]
      %v635 = vunpack.c.l.b16 %v627
      %v636 = vunpack.c.l.b16 %v628
      %v637 = vunpack.c.l.b16 %v629
      %v638 = vunpack.c.l.b16 %v630
      %v639 = vpack.c.b16 %v636, %v635
      %v640 = vpack.c.b16 %v638, %v637
      %643 = vmatprep.subr.bf16.mxu0 0
      %644 = vmatpush1.bf16.msra.mxu0 %v639
      %645 = vmatprep.subr.bf16.mxu0 0
      %646 = vmatpush1.bf16.msra.mxu0 %v640
      %647 = vmatprep.subr.bf16.mxu0 0
      %648 = vmatpush1.bf16.msra.mxu0 0
      %649 = vmatprep.subr.bf16.mxu0 0
      %650 = vmatpush1.bf16.msra.mxu0 0
      %651 = vmatprep.subr.bf16.mxu0 0
      %652 = vmatpush1.bf16.msra.mxu0 0
      %653 = vmatprep.subr.bf16.mxu0 0
      %654 = vmatpush1.bf16.msra.mxu0 0
      %655 = vmatprep.subr.bf16.mxu0 0
      %656 = vmatpush1.bf16.msra.mxu0 0
      %657 = vmatprep.subr.bf16.mxu0 0
      %658 = vmatpush1.bf16.msra.mxu0 0
      %659 = vmatprep.subr.bf16.mxu0 0
      %660 = vmatpush1.bf16.msra.mxu0 0
      %661 = vmatprep.subr.bf16.mxu0 0
      %662 = vmatpush1.bf16.msra.mxu0 0
      %663 = vmatprep.subr.bf16.mxu0 0
      %664 = vmatpush1.bf16.msra.mxu0 0
      %665 = vmatprep.subr.bf16.mxu0 0
      %666 = vmatpush1.bf16.msra.mxu0 0
      %667 = vmatprep.subr.bf16.mxu0 0
      %668 = vmatpush1.bf16.msra.mxu0 0
      %669 = vmatprep.subr.bf16.mxu0 0
      %670 = vmatpush1.bf16.msra.mxu0 0
      %671 = vmatprep.subr.bf16.mxu0 0
      %672 = vmatpush1.bf16.msra.mxu0 0
      %673 = vmatprep.subr.bf16.mxu0 0
      %674 = vmatpush1.bf16.msra.mxu0 0
      %675 = vmatprep.mubr.bf16.mxu0 0
      %676 = vmatmul.mubr.bf16.gmra.mrb[0].mxu0 %v470
      %v677 = vpop.f32.mrb[0].mxu0
      %v678 = vadd.f32 0.0, %v677
      %v679 = vpop.f32.mrb[0].mxu0
      %v680 = vpop.f32.mrb[0].mxu0
      %v681 = vadd.f32 0.0, %v680
      %v682 = vpop.f32.mrb[0].mxu0
      %683 = vmatprep.mubr.bf16.mxu0 0
      %684 = vmatmul.mubr.bf16.gmra.mrb[0].mxu0 %v473
      %v685 = vpop.f32.mrb[0].mxu0
      %v686 = vadd.f32 0.0, %v685
      %v687 = vpop.f32.mrb[0].mxu0
      %v688 = vpop.f32.mrb[0].mxu0
      %v689 = vadd.f32 0.0, %v688
      %v690 = vpop.f32.mrb[0].mxu0
      %691 = vmatprep.mubr.bf16.mxu0 0
      %692 = vmatmul.mubr.bf16.gmra.mrb[0].mxu0 %v476
      %v693 = vpop.f32.mrb[0].mxu0
      %v694 = vadd.f32 0.0, %v693
      %v695 = vpop.f32.mrb[0].mxu0
      %v696 = vpop.f32.mrb[0].mxu0
      %v697 = vadd.f32 0.0, %v696
      %v698 = vpop.f32.mrb[0].mxu0
      %699 = vmatprep.mubr.bf16.mxu0 0
      %700 = vmatmul.mubr.bf16.gmra.mrb[0].mxu0 %v479
      %v701 = vpop.f32.mrb[0].mxu0
      %v702 = vadd.f32 0.0, %v701
      %v703 = vpop.f32.mrb[0].mxu0
      %v704 = vpop.f32.mrb[0].mxu0
      %v705 = vadd.f32 0.0, %v704
      %v706 = vpop.f32.mrb[0].mxu0
      %707 = vdwg.mxu0
      %v708 = vpack.c.bf16 %v519, %v516
      %v709 = vpack.c.bf16 %v527, %v524
      %v710 = vpack.c.bf16 %v535, %v532
      %v711 = vpack.c.bf16 %v543, %v540
      %v712 = vpack.c.bf16 %v600, %v597
      %v713 = vpack.c.bf16 %v608, %v605
      %v714 = vpack.c.bf16 %v616, %v613
      %v715 = vpack.c.bf16 %v624, %v621
      %v716 = vpack.c.bf16 %v681, %v678
      %v717 = vpack.c.bf16 %v689, %v686
      %v718 = vpack.c.bf16 %v697, %v694
      %v719 = vpack.c.bf16 %v705, %v702
      %vm720 = vcmask 130048
      %v722 = vsel %vm720, %v708, 0
      %v725 = vsel %vm720, %v712, 0
      %727 = vmatprep.subr.bf16.mxu0 0
      %728 = vmatpush1.bf16.xpose.msra.mxu0 %v725
      %729 = vmatprep.subr.bf16.mxu0 0
      %730 = vmatpush1.bf16.xpose.msra.mxu0 0
      %731 = vmatprep.subr.bf16.mxu0 0
      %732 = vmatpush1.bf16.xpose.msra.mxu0 0
      %733 = vmatprep.subr.bf16.mxu0 0
      %734 = vmatpush1.bf16.xpose.msra.mxu0 0
      %735 = vmatprep.subr.bf16.mxu0 0
      %736 = vmatpush1.bf16.xpose.msra.mxu0 0
      %737 = vmatprep.subr.bf16.mxu0 0
      %738 = vmatpush1.bf16.xpose.msra.mxu0 0
      %739 = vmatprep.subr.bf16.mxu0 0
      %740 = vmatpush1.bf16.xpose.msra.mxu0 0
      %741 = vmatprep.subr.bf16.mxu0 0
      %742 = vmatpush1.bf16.xpose.msra.mxu0 0
      %743 = vmatprep.subr.bf16.mxu0 0
      %744 = vmatpush1.bf16.xpose.msra.mxu0 0
      %745 = vmatprep.subr.bf16.mxu0 0
      %746 = vmatpush1.bf16.xpose.msra.mxu0 0
      %747 = vmatprep.subr.bf16.mxu0 0
      %748 = vmatpush1.bf16.xpose.msra.mxu0 0
      %749 = vmatprep.subr.bf16.mxu0 0
      %750 = vmatpush1.bf16.xpose.msra.mxu0 0
      %751 = vmatprep.subr.bf16.mxu0 0
      %752 = vmatpush1.bf16.xpose.msra.mxu0 0
      %753 = vmatprep.subr.bf16.mxu0 0
      %754 = vmatpush1.bf16.xpose.msra.mxu0 0
      %755 = vmatprep.subr.bf16.mxu0 0
      %756 = vmatpush1.bf16.xpose.msra.mxu0 0
      %757 = vmatprep.subr.bf16.mxu0 0
      %758 = vmatpush1.bf16.xpose.msra.mxu0 0
      %759 = vmatprep.mubr.bf16.mxu0 0
      %760 = vmatmul.mubr.bf16.gmra.mrb[0].mxu0 %v722
      %v761 = vpop.f32.mrb[0].mxu0
      %v762 = vadd.f32 0.0, %v761
      %v763 = vpop.f32.mrb[0].mxu0
      %v764 = vpop.f32.mrb[0].mxu0
      %v765 = vadd.f32 0.0, %v764
      %v766 = vpop.f32.mrb[0].mxu0
      %767 = vdwg.mxu0
      %v769 = vsel %vm720, %v709, 0
      %v772 = vsel %vm720, %v713, 0
      %774 = vmatprep.subr.bf16.mxu0 0
      %775 = vmatpush1.bf16.xpose.msra.mxu0 %v772
      %776 = vmatprep.subr.bf16.mxu0 0
      %777 = vmatpush1.bf16.xpose.msra.mxu0 0
      %778 = vmatprep.subr.bf16.mxu0 0
      %779 = vmatpush1.bf16.xpose.msra.mxu0 0
      %780 = vmatprep.subr.bf16.mxu0 0
      %781 = vmatpush1.bf16.xpose.msra.mxu0 0
      %782 = vmatprep.subr.bf16.mxu0 0
      %783 = vmatpush1.bf16.xpose.msra.mxu0 0
      %784 = vmatprep.subr.bf16.mxu0 0
      %785 = vmatpush1.bf16.xpose.msra.mxu0 0
      %786 = vmatprep.subr.bf16.mxu0 0
      %787 = vmatpush1.bf16.xpose.msra.mxu0 0
      %788 = vmatprep.subr.bf16.mxu0 0
      %789 = vmatpush1.bf16.xpose.msra.mxu0 0
      %790 = vmatprep.subr.bf16.mxu0 0
      %791 = vmatpush1.bf16.xpose.msra.mxu0 0
      %792 = vmatprep.subr.bf16.mxu0 0
      %793 = vmatpush1.bf16.xpose.msra.mxu0 0
      %794 = vmatprep.subr.bf16.mxu0 0
      %795 = vmatpush1.bf16.xpose.msra.mxu0 0
      %796 = vmatprep.subr.bf16.mxu0 0
      %797 = vmatpush1.bf16.xpose.msra.mxu0 0
      %798 = vmatprep.subr.bf16.mxu0 0
      %799 = vmatpush1.bf16.xpose.msra.mxu0 0
      %800 = vmatprep.subr.bf16.mxu0 0
      %801 = vmatpush1.bf16.xpose.msra.mxu0 0
      %802 = vmatprep.subr.bf16.mxu0 0
      %803 = vmatpush1.bf16.xpose.msra.mxu0 0
      %804 = vmatprep.subr.bf16.mxu0 0
      %805 = vmatpush1.bf16.xpose.msra.mxu0 0
      %806 = vmatprep.mubr.bf16.mxu0 0
      %807 = vmatmul.mubr.bf16.gmra.mrb[0].mxu0 %v769
      %v808 = vpop.f32.mrb[0].mxu0
      %v809 = vadd.f32 0.0, %v808
      %v810 = vpop.f32.mrb[0].mxu0
      %v811 = vpop.f32.mrb[0].mxu0
      %v812 = vadd.f32 0.0, %v811
      %v813 = vpop.f32.mrb[0].mxu0
      %814 = vdwg.mxu0
      %v816 = vsel %vm720, %v710, 0
      %v819 = vsel %vm720, %v714, 0
      %821 = vmatprep.subr.bf16.mxu0 0
      %822 = vmatpush1.bf16.xpose.msra.mxu0 %v819
      %823 = vmatprep.subr.bf16.mxu0 0
      %824 = vmatpush1.bf16.xpose.msra.mxu0 0
      %825 = vmatprep.subr.bf16.mxu0 0
      %826 = vmatpush1.bf16.xpose.msra.mxu0 0
      %827 = vmatprep.subr.bf16.mxu0 0
      %828 = vmatpush1.bf16.xpose.msra.mxu0 0
      %829 = vmatprep.subr.bf16.mxu0 0
      %830 = vmatpush1.bf16.xpose.msra.mxu0 0
      %831 = vmatprep.subr.bf16.mxu0 0
      %832 = vmatpush1.bf16.xpose.msra.mxu0 0
      %833 = vmatprep.subr.bf16.mxu0 0
      %834 = vmatpush1.bf16.xpose.msra.mxu0 0
      %835 = vmatprep.subr.bf16.mxu0 0
      %836 = vmatpush1.bf16.xpose.msra.mxu0 0
      %837 = vmatprep.subr.bf16.mxu0 0
      %838 = vmatpush1.bf16.xpose.msra.mxu0 0
      %839 = vmatprep.subr.bf16.mxu0 0
      %840 = vmatpush1.bf16.xpose.msra.mxu0 0
      %841 = vmatprep.subr.bf16.mxu0 0
      %842 = vmatpush1.bf16.xpose.msra.mxu0 0
      %843 = vmatprep.subr.bf16.mxu0 0
      %844 = vmatpush1.bf16.xpose.msra.mxu0 0
      %845 = vmatprep.subr.bf16.mxu0 0
      %846 = vmatpush1.bf16.xpose.msra.mxu0 0
      %847 = vmatprep.subr.bf16.mxu0 0
      %848 = vmatpush1.bf16.xpose.msra.mxu0 0
      %849 = vmatprep.subr.bf16.mxu0 0
      %850 = vmatpush1.bf16.xpose.msra.mxu0 0
      %851 = vmatprep.subr.bf16.mxu0 0
      %852 = vmatpush1.bf16.xpose.msra.mxu0 0
      %853 = vmatprep.mubr.bf16.mxu0 0
      %854 = vmatmul.mubr.bf16.gmra.mrb[0].mxu0 %v816
      %v855 = vpop.f32.mrb[0].mxu0
      %v856 = vadd.f32 0.0, %v855
      %v857 = vpop.f32.mrb[0].mxu0
      %v858 = vpop.f32.mrb[0].mxu0
      %v859 = vadd.f32 0.0, %v858
      %v860 = vpop.f32.mrb[0].mxu0
      %861 = vdwg.mxu0
      %v863 = vsel %vm720, %v711, 0
      %v866 = vsel %vm720, %v715, 0
      %868 = vmatprep.subr.bf16.mxu0 0
      %869 = vmatpush1.bf16.xpose.msra.mxu0 %v866
      %870 = vmatprep.subr.bf16.mxu0 0
      %871 = vmatpush1.bf16.xpose.msra.mxu0 0
      %872 = vmatprep.subr.bf16.mxu0 0
      %873 = vmatpush1.bf16.xpose.msra.mxu0 0
      %874 = vmatprep.subr.bf16.mxu0 0
      %875 = vmatpush1.bf16.xpose.msra.mxu0 0
      %876 = vmatprep.subr.bf16.mxu0 0
      %877 = vmatpush1.bf16.xpose.msra.mxu0 0
      %878 = vmatprep.subr.bf16.mxu0 0
      %879 = vmatpush1.bf16.xpose.msra.mxu0 0
      %880 = vmatprep.subr.bf16.mxu0 0
      %881 = vmatpush1.bf16.xpose.msra.mxu0 0
      %882 = vmatprep.subr.bf16.mxu0 0
      %883 = vmatpush1.bf16.xpose.msra.mxu0 0
      %884 = vmatprep.subr.bf16.mxu0 0
      %885 = vmatpush1.bf16.xpose.msra.mxu0 0
      %886 = vmatprep.subr.bf16.mxu0 0
      %887 = vmatpush1.bf16.xpose.msra.mxu0 0
      %888 = vmatprep.subr.bf16.mxu0 0
      %889 = vmatpush1.bf16.xpose.msra.mxu0 0
      %890 = vmatprep.subr.bf16.mxu0 0
      %891 = vmatpush1.bf16.xpose.msra.mxu0 0
      %892 = vmatprep.subr.bf16.mxu0 0
      %893 = vmatpush1.bf16.xpose.msra.mxu0 0
      %894 = vmatprep.subr.bf16.mxu0 0
      %895 = vmatpush1.bf16.xpose.msra.mxu0 0
      %896 = vmatprep.subr.bf16.mxu0 0
      %897 = vmatpush1.bf16.xpose.msra.mxu0 0
      %898 = vmatprep.subr.bf16.mxu0 0
      %899 = vmatpush1.bf16.xpose.msra.mxu0 0
      %900 = vmatprep.mubr.bf16.mxu0 0
      %901 = vmatmul.mubr.bf16.gmra.mrb[0].mxu0 %v863
      %v902 = vpop.f32.mrb[0].mxu0
      %v903 = vadd.f32 0.0, %v902
      %v904 = vpop.f32.mrb[0].mxu0
      %v905 = vpop.f32.mrb[0].mxu0
      %v906 = vadd.f32 0.0, %v905
      %v907 = vpop.f32.mrb[0].mxu0
      %908 = vdwg.mxu0
      %v909 = vsel %vm720, %v762, -inf
      %910 = vmax.xlane.f32.xlu0 %v909
      %v911 = vpop.xlane.xlu0 %910
      %v912 = vsel %vm720, %v765, -inf
      %913 = vmax.xlane.f32.xlu0 %v912
      %v914 = vpop.xlane.xlu0 %913
      %v915 = vsel %vm720, %v809, -inf
      %916 = vmax.xlane.f32.xlu0 %v915
      %v917 = vpop.xlane.xlu0 %916
      %v918 = vsel %vm720, %v812, -inf
      %919 = vmax.xlane.f32.xlu0 %v918
      %v920 = vpop.xlane.xlu0 %919
      %v921 = vsel %vm720, %v856, -inf
      %922 = vmax.xlane.f32.xlu0 %v921
      %v923 = vpop.xlane.xlu0 %922
      %v924 = vsel %vm720, %v859, -inf
      %925 = vmax.xlane.f32.xlu0 %v924
      %v926 = vpop.xlane.xlu0 %925
      %v927 = vsel %vm720, %v903, -inf
      %928 = vmax.xlane.f32.xlu0 %v927
      %v929 = vpop.xlane.xlu0 %928
      %v930 = vsel %vm720, %v906, -inf
      %931 = vmax.xlane.f32.xlu0 %v930
      %v932 = vpop.xlane.xlu0 %931
      %v933 = vsub.f32 %v762, %v911
      %v934 = vsub.f32 %v765, %v914
      %v935 = vsub.f32 %v809, %v917
      %v936 = vsub.f32 %v812, %v920
      %v937 = vsub.f32 %v856, %v923
      %v938 = vsub.f32 %v859, %v926
      %v939 = vsub.f32 %v903, %v929
      %v940 = vsub.f32 %v906, %v932
      %v941 = vmul.f32 %v933, 1.442695
      %v942 = vpow.pop %v941
      %v943 = vmul.f32 %v934, 1.442695
      %v944 = vpow.pop %v943
      %v945 = vmul.f32 %v935, 1.442695
      %v946 = vpow.pop %v945
      %v947 = vmul.f32 %v936, 1.442695
      %v948 = vpow.pop %v947
      %v949 = vmul.f32 %v937, 1.442695
      %v950 = vpow.pop %v949
      %v951 = vmul.f32 %v938, 1.442695
      %v952 = vpow.pop %v951
      %v953 = vmul.f32 %v939, 1.442695
      %v954 = vpow.pop %v953
      %v955 = vmul.f32 %v940, 1.442695
      %v956 = vpow.pop %v955
      %v957 = vsel %vm720, %v942, 0.0
      %958 = vadd.xlane.f32.xlu0 %v957
      %v959 = vpop.xlane.xlu0 %958
      %v960 = vsel %vm720, %v944, 0.0
      %961 = vadd.xlane.f32.xlu0 %v960
      %v962 = vpop.xlane.xlu0 %961
      %v963 = vsel %vm720, %v946, 0.0
      %964 = vadd.xlane.f32.xlu0 %v963
      %v965 = vpop.xlane.xlu0 %964
      %v966 = vsel %vm720, %v948, 0.0
      %967 = vadd.xlane.f32.xlu0 %v966
      %v968 = vpop.xlane.xlu0 %967
      %v969 = vsel %vm720, %v950, 0.0
      %970 = vadd.xlane.f32.xlu0 %v969
      %v971 = vpop.xlane.xlu0 %970
      %v972 = vsel %vm720, %v952, 0.0
      %973 = vadd.xlane.f32.xlu0 %v972
      %v974 = vpop.xlane.xlu0 %973
      %v975 = vsel %vm720, %v954, 0.0
      %976 = vadd.xlane.f32.xlu0 %v975
      %v977 = vpop.xlane.xlu0 %976
      %v978 = vsel %vm720, %v956, 0.0
      %979 = vadd.xlane.f32.xlu0 %v978
      %v980 = vpop.xlane.xlu0 %979
      %v981 = vrcp.pop %v959
      %v982 = vrcp.pop %v962
      %v983 = vrcp.pop %v965
      %v984 = vrcp.pop %v968
      %v985 = vrcp.pop %v971
      %v986 = vrcp.pop %v974
      %v987 = vrcp.pop %v977
      %v988 = vrcp.pop %v980
      %v989 = vmul.f32 %v942, %v981
      %v990 = vmul.f32 %v944, %v982
      %v991 = vmul.f32 %v946, %v983
      %v992 = vmul.f32 %v948, %v984
      %v993 = vmul.f32 %v950, %v985
      %v994 = vmul.f32 %v952, %v986
      %v995 = vmul.f32 %v954, %v987
      %v996 = vmul.f32 %v956, %v988
      %v997 = vpack.c.bf16 %v990, %v989
      %v998 = vpack.c.bf16 %v992, %v991
      %v999 = vpack.c.bf16 %v994, %v993
      %v1000 = vpack.c.bf16 %v996, %v995
      %v1002 = vsel %vm720, %v997, 0
      %1004 = vmatprep.subr.bf16.mxu0 0
      %1005 = vmatpush1.bf16.msra.mxu0 %v716
      %1006 = vmatprep.subr.bf16.mxu0 0
      %1007 = vmatpush1.bf16.msra.mxu0 0
      %1008 = vmatprep.subr.bf16.mxu0 0
      %1009 = vmatpush1.bf16.msra.mxu0 0
      %1010 = vmatprep.subr.bf16.mxu0 0
      %1011 = vmatpush1.bf16.msra.mxu0 0
      %1012 = vmatprep.subr.bf16.mxu0 0
      %1013 = vmatpush1.bf16.msra.mxu0 0
      %1014 = vmatprep.subr.bf16.mxu0 0
      %1015 = vmatpush1.bf16.msra.mxu0 0
      %1016 = vmatprep.subr.bf16.mxu0 0
      %1017 = vmatpush1.bf16.msra.mxu0 0
      %1018 = vmatprep.subr.bf16.mxu0 0
      %1019 = vmatpush1.bf16.msra.mxu0 0
      %1020 = vmatprep.subr.bf16.mxu0 0
      %1021 = vmatpush1.bf16.msra.mxu0 0
      %1022 = vmatprep.subr.bf16.mxu0 0
      %1023 = vmatpush1.bf16.msra.mxu0 0
      %1024 = vmatprep.subr.bf16.mxu0 0
      %1025 = vmatpush1.bf16.msra.mxu0 0
      %1026 = vmatprep.subr.bf16.mxu0 0
      %1027 = vmatpush1.bf16.msra.mxu0 0
      %1028 = vmatprep.subr.bf16.mxu0 0
      %1029 = vmatpush1.bf16.msra.mxu0 0
      %1030 = vmatprep.subr.bf16.mxu0 0
      %1031 = vmatpush1.bf16.msra.mxu0 0
      %1032 = vmatprep.subr.bf16.mxu0 0
      %1033 = vmatpush1.bf16.msra.mxu0 0
      %1034 = vmatprep.subr.bf16.mxu0 0
      %1035 = vmatpush1.bf16.msra.mxu0 0
      %1036 = vmatprep.mubr.bf16.mxu0 0
      %1037 = vmatmul.mubr.bf16.gmra.mrb[0].mxu0 %v1002
      %v1038 = vpop.f32.mrb[0].mxu0
      %v1039 = vadd.f32 0.0, %v1038
      %v1040 = vpop.f32.mrb[0].mxu0
      %v1041 = vpop.f32.mrb[0].mxu0
      %v1042 = vadd.f32 0.0, %v1041
      %v1043 = vpop.f32.mrb[0].mxu0
      %1044 = vdwg.mxu0
      %v1046 = vsel %vm720, %v998, 0
      %1048 = vmatprep.subr.bf16.mxu0 0
      %1049 = vmatpush1.bf16.msra.mxu0 %v717
      %1050 = vmatprep.subr.bf16.mxu0 0
      %1051 = vmatpush1.bf16.msra.mxu0 0
      %1052 = vmatprep.subr.bf16.mxu0 0
      %1053 = vmatpush1.bf16.msra.mxu0 0
      %1054 = vmatprep.subr.bf16.mxu0 0
      %1055 = vmatpush1.bf16.msra.mxu0 0
      %1056 = vmatprep.subr.bf16.mxu0 0
      %1057 = vmatpush1.bf16.msra.mxu0 0
      %1058 = vmatprep.subr.bf16.mxu0 0
      %1059 = vmatpush1.bf16.msra.mxu0 0
      %1060 = vmatprep.subr.bf16.mxu0 0
      %1061 = vmatpush1.bf16.msra.mxu0 0
      %1062 = vmatprep.subr.bf16.mxu0 0
      %1063 = vmatpush1.bf16.msra.mxu0 0
      %1064 = vmatprep.subr.bf16.mxu0 0
      %1065 = vmatpush1.bf16.msra.mxu0 0
      %1066 = vmatprep.subr.bf16.mxu0 0
      %1067 = vmatpush1.bf16.msra.mxu0 0
      %1068 = vmatprep.subr.bf16.mxu0 0
      %1069 = vmatpush1.bf16.msra.mxu0 0
      %1070 = vmatprep.subr.bf16.mxu0 0
      %1071 = vmatpush1.bf16.msra.mxu0 0
      %1072 = vmatprep.subr.bf16.mxu0 0
      %1073 = vmatpush1.bf16.msra.mxu0 0
      %1074 = vmatprep.subr.bf16.mxu0 0
      %1075 = vmatpush1.bf16.msra.mxu0 0
      %1076 = vmatprep.subr.bf16.mxu0 0
      %1077 = vmatpush1.bf16.msra.mxu0 0
      %1078 = vmatprep.subr.bf16.mxu0 0
      %1079 = vmatpush1.bf16.msra.mxu0 0
      %1080 = vmatprep.mubr.bf16.mxu0 0
      %1081 = vmatmul.mubr.bf16.gmra.mrb[0].mxu0 %v1046
      %v1082 = vpop.f32.mrb[0].mxu0
      %v1083 = vadd.f32 0.0, %v1082
      %v1084 = vpop.f32.mrb[0].mxu0
      %v1085 = vpop.f32.mrb[0].mxu0
      %v1086 = vadd.f32 0.0, %v1085
      %v1087 = vpop.f32.mrb[0].mxu0
      %1088 = vdwg.mxu0
      %v1090 = vsel %vm720, %v999, 0
      %1092 = vmatprep.subr.bf16.mxu0 0
      %1093 = vmatpush1.bf16.msra.mxu0 %v718
      %1094 = vmatprep.subr.bf16.mxu0 0
      %1095 = vmatpush1.bf16.msra.mxu0 0
      %1096 = vmatprep.subr.bf16.mxu0 0
      %1097 = vmatpush1.bf16.msra.mxu0 0
      %1098 = vmatprep.subr.bf16.mxu0 0
      %1099 = vmatpush1.bf16.msra.mxu0 0
      %1100 = vmatprep.subr.bf16.mxu0 0
      %1101 = vmatpush1.bf16.msra.mxu0 0
      %1102 = vmatprep.subr.bf16.mxu0 0
      %1103 = vmatpush1.bf16.msra.mxu0 0
      %1104 = vmatprep.subr.bf16.mxu0 0
      %1105 = vmatpush1.bf16.msra.mxu0 0
      %1106 = vmatprep.subr.bf16.mxu0 0
      %1107 = vmatpush1.bf16.msra.mxu0 0
      %1108 = vmatprep.subr.bf16.mxu0 0
      %1109 = vmatpush1.bf16.msra.mxu0 0
      %1110 = vmatprep.subr.bf16.mxu0 0
      %1111 = vmatpush1.bf16.msra.mxu0 0
      %1112 = vmatprep.subr.bf16.mxu0 0
      %1113 = vmatpush1.bf16.msra.mxu0 0
      %1114 = vmatprep.subr.bf16.mxu0 0
      %1115 = vmatpush1.bf16.msra.mxu0 0
      %1116 = vmatprep.subr.bf16.mxu0 0
      %1117 = vmatpush1.bf16.msra.mxu0 0
      %1118 = vmatprep.subr.bf16.mxu0 0
      %1119 = vmatpush1.bf16.msra.mxu0 0
      %1120 = vmatprep.subr.bf16.mxu0 0
      %1121 = vmatpush1.bf16.msra.mxu0 0
      %1122 = vmatprep.subr.bf16.mxu0 0
      %1123 = vmatpush1.bf16.msra.mxu0 0
      %1124 = vmatprep.mubr.bf16.mxu0 0
      %1125 = vmatmul.mubr.bf16.gmra.mrb[0].mxu0 %v1090
      %v1126 = vpop.f32.mrb[0].mxu0
      %v1127 = vadd.f32 0.0, %v1126
      %v1128 = vpop.f32.mrb[0].mxu0
      %v1129 = vpop.f32.mrb[0].mxu0
      %v1130 = vadd.f32 0.0, %v1129
      %v1131 = vpop.f32.mrb[0].mxu0
      %1132 = vdwg.mxu0
      %v1134 = vsel %vm720, %v1000, 0
      %1136 = vmatprep.subr.bf16.mxu0 0
      %1137 = vmatpush1.bf16.msra.mxu0 %v719
      %1138 = vmatprep.subr.bf16.mxu0 0
      %1139 = vmatpush1.bf16.msra.mxu0 0
      %1140 = vmatprep.subr.bf16.mxu0 0
      %1141 = vmatpush1.bf16.msra.mxu0 0
      %1142 = vmatprep.subr.bf16.mxu0 0
      %1143 = vmatpush1.bf16.msra.mxu0 0
      %1144 = vmatprep.subr.bf16.mxu0 0
      %1145 = vmatpush1.bf16.msra.mxu0 0
      %1146 = vmatprep.subr.bf16.mxu0 0
      %1147 = vmatpush1.bf16.msra.mxu0 0
      %1148 = vmatprep.subr.bf16.mxu0 0
      %1149 = vmatpush1.bf16.msra.mxu0 0
      %1150 = vmatprep.subr.bf16.mxu0 0
      %1151 = vmatpush1.bf16.msra.mxu0 0
      %1152 = vmatprep.subr.bf16.mxu0 0
      %1153 = vmatpush1.bf16.msra.mxu0 0
      %1154 = vmatprep.subr.bf16.mxu0 0
      %1155 = vmatpush1.bf16.msra.mxu0 0
      %1156 = vmatprep.subr.bf16.mxu0 0
      %1157 = vmatpush1.bf16.msra.mxu0 0
      %1158 = vmatprep.subr.bf16.mxu0 0
      %1159 = vmatpush1.bf16.msra.mxu0 0
      %1160 = vmatprep.subr.bf16.mxu0 0
      %1161 = vmatpush1.bf16.msra.mxu0 0
      %1162 = vmatprep.subr.bf16.mxu0 0
      %1163 = vmatpush1.bf16.msra.mxu0 0
      %1164 = vmatprep.subr.bf16.mxu0 0
      %1165 = vmatpush1.bf16.msra.mxu0 0
      %1166 = vmatprep.subr.bf16.mxu0 0
      %1167 = vmatpush1.bf16.msra.mxu0 0
      %1168 = vmatprep.mubr.bf16.mxu0 0
      %1169 = vmatmul.mubr.bf16.gmra.mrb[0].mxu0 %v1134
      %v1170 = vpop.f32.mrb[0].mxu0
      %v1171 = vadd.f32 0.0, %v1170
      %v1172 = vpop.f32.mrb[0].mxu0
      %v1173 = vpop.f32.mrb[0].mxu0
      %v1174 = vadd.f32 0.0, %v1173
      %v1175 = vpop.f32.mrb[0].mxu0
      %1176 = vdwg.mxu0
      %v1177 = vpack.c.bf16 %v1042, %v1039
      %v1178 = vpack.c.bf16 %v1086, %v1083
      %v1179 = vpack.c.bf16 %v1130, %v1127
      %v1180 = vpack.c.bf16 %v1174, %v1171
      %v1185 = vunpack.c.l.b16 %v1177
      %v1186 = vunpack.c.h.b16 %v1177
      %v1187 = vunpack.c.l.b16 %v1178
      %v1188 = vunpack.c.h.b16 %v1178
      %v1189 = vunpack.c.l.b16 %v1179
      %v1190 = vunpack.c.h.b16 %v1179
      %v1191 = vunpack.c.l.b16 %v1180
      %v1192 = vunpack.c.h.b16 %v1180
      %v1193 = vpack.c.b16 %v1185, %v1185
      %v1194 = vpack.c.b16 %v1186, %v1186
      %v1195 = vpack.c.b16 %v1187, %v1187
      %v1196 = vpack.c.b16 %v1188, %v1188
      %v1197 = vpack.c.b16 %v1189, %v1189
      %v1198 = vpack.c.b16 %v1190, %v1190
      %v1199 = vpack.c.b16 %v1191, %v1191
      %v1200 = vpack.c.b16 %v1192, %v1192
      %vm1209 = vcmask 125952
      %1210 = vst.msk [vmem:[%s294] sm:$0xf] %vm1209, %v1193
      %1211 = vst.msk [vmem:[%s294 + $0x4] sm:$0xf] %vm1209, %v1194
      %1212 = vst.msk [vmem:[%s294 + $0x8] sm:$0xf] %vm1209, %v1195
      %1213 = vst.msk [vmem:[%s294 + $0xc] sm:$0xf] %vm1209, %v1196
      %1214 = vst.msk [vmem:[%s294 + $0x10] sm:$0xf] %vm1209, %v1197
      %1215 = vst.msk [vmem:[%s294 + $0x14] sm:$0xf] %vm1209, %v1198
      %1216 = vst.msk [vmem:[%s294 + $0x18] sm:$0xf] %vm1209, %v1199
      %1217 = vst.msk [vmem:[%s294 + $0x1c] sm:$0xf] %vm1209, %v1200
      %s1218 = scalar_lea.vmem %s3, 16
      %v1219 = vld [vmem:[%s1218] sm:$0xf]
      %v1220 = vld [vmem:[%s1218 + $0x4] sm:$0xf]
      %v1221 = vld [vmem:[%s1218 + $0x8] sm:$0xf]
      %v1222 = vld [vmem:[%s1218 + $0xc] sm:$0xf]
      %v1227 = vunpack.c.l.b16 %v1219
      %v1228 = vunpack.c.l.b16 %v1220
      %v1229 = vunpack.c.l.b16 %v1221
      %v1230 = vunpack.c.l.b16 %v1222
      %v1231 = vpack.c.b16 %v1228, %v1227
      %v1232 = vpack.c.b16 %v1230, %v1229
      %1235 = vmatprep.subr.bf16.mxu0 0
      %1236 = vmatpush1.bf16.msra.mxu0 %v1231
      %1237 = vmatprep.subr.bf16.mxu0 0
      %1238 = vmatpush1.bf16.msra.mxu0 %v1232
      %1239 = vmatprep.subr.bf16.mxu0 0
      %1240 = vmatpush1.bf16.msra.mxu0 0
      %1241 = vmatprep.subr.bf16.mxu0 0
      %1242 = vmatpush1.bf16.msra.mxu0 0
      %1243 = vmatprep.subr.bf16.mxu0 0
      %1244 = vmatpush1.bf16.msra.mxu0 0
      %1245 = vmatprep.subr.bf16.mxu0 0
      %1246 = vmatpush1.bf16.msra.mxu0 0
      %1247 = vmatprep.subr.bf16.mxu0 0
      %1248 = vmatpush1.bf16.msra.mxu0 0
      %1249 = vmatprep.subr.bf16.mxu0 0
      %1250 = vmatpush1.bf16.msra.mxu0 0
      %1251 = vmatprep.subr.bf16.mxu0 0
      %1252 = vmatpush1.bf16.msra.mxu0 0
      %1253 = vmatprep.subr.bf16.mxu0 0
      %1254 = vmatpush1.bf16.msra.mxu0 0
      %1255 = vmatprep.subr.bf16.mxu0 0
      %1256 = vmatpush1.bf16.msra.mxu0 0
      %1257 = vmatprep.subr.bf16.mxu0 0
      %1258 = vmatpush1.bf16.msra.mxu0 0
      %1259 = vmatprep.subr.bf16.mxu0 0
      %1260 = vmatpush1.bf16.msra.mxu0 0
      %1261 = vmatprep.subr.bf16.mxu0 0
      %1262 = vmatpush1.bf16.msra.mxu0 0
      %1263 = vmatprep.subr.bf16.mxu0 0
      %1264 = vmatpush1.bf16.msra.mxu0 0
      %1265 = vmatprep.subr.bf16.mxu0 0
      %1266 = vmatpush1.bf16.msra.mxu0 0
      %1267 = vmatprep.mubr.bf16.mxu0 0
      %1268 = vmatmul.mubr.bf16.gmra.mrb[0].mxu0 %v470
      %v1269 = vpop.f32.mrb[0].mxu0
      %v1270 = vadd.f32 0.0, %v1269
      %v1271 = vpop.f32.mrb[0].mxu0
      %v1272 = vpop.f32.mrb[0].mxu0
      %v1273 = vadd.f32 0.0, %v1272
      %v1274 = vpop.f32.mrb[0].mxu0
      %1275 = vmatprep.mubr.bf16.mxu0 0
      %1276 = vmatmul.mubr.bf16.gmra.mrb[0].mxu0 %v473
      %v1277 = vpop.f32.mrb[0].mxu0
      %v1278 = vadd.f32 0.0, %v1277
      %v1279 = vpop.f32.mrb[0].mxu0
      %v1280 = vpop.f32.mrb[0].mxu0
      %v1281 = vadd.f32 0.0, %v1280
      %v1282 = vpop.f32.mrb[0].mxu0
      %1283 = vmatprep.mubr.bf16.mxu0 0
      %1284 = vmatmul.mubr.bf16.gmra.mrb[0].mxu0 %v476
      %v1285 = vpop.f32.mrb[0].mxu0
      %v1286 = vadd.f32 0.0, %v1285
      %v1287 = vpop.f32.mrb[0].mxu0
      %v1288 = vpop.f32.mrb[0].mxu0
      %v1289 = vadd.f32 0.0, %v1288
      %v1290 = vpop.f32.mrb[0].mxu0
      %1291 = vmatprep.mubr.bf16.mxu0 0
      %1292 = vmatmul.mubr.bf16.gmra.mrb[0].mxu0 %v479
      %v1293 = vpop.f32.mrb[0].mxu0
      %v1294 = vadd.f32 0.0, %v1293
      %v1295 = vpop.f32.mrb[0].mxu0
      %v1296 = vpop.f32.mrb[0].mxu0
      %v1297 = vadd.f32 0.0, %v1296
      %v1298 = vpop.f32.mrb[0].mxu0
      %1299 = vdwg.mxu0
      %s1300 = scalar_lea.vmem %s4, 16
      %v1301 = vld [vmem:[%s1300] sm:$0xf]
      %v1302 = vld [vmem:[%s1300 + $0x4] sm:$0xf]
      %v1303 = vld [vmem:[%s1300 + $0x8] sm:$0xf]
      %v1304 = vld [vmem:[%s1300 + $0xc] sm:$0xf]
      %v1309 = vunpack.c.l.b16 %v1301
      %v1310 = vunpack.c.l.b16 %v1302
      %v1311 = vunpack.c.l.b16 %v1303
      %v1312 = vunpack.c.l.b16 %v1304
      %v1313 = vpack.c.b16 %v1310, %v1309
      %v1314 = vpack.c.b16 %v1312, %v1311
      %1317 = vmatprep.subr.bf16.mxu0 0
      %1318 = vmatpush1.bf16.msra.mxu0 %v1313
      %1319 = vmatprep.subr.bf16.mxu0 0
      %1320 = vmatpush1.bf16.msra.mxu0 %v1314
      %1321 = vmatprep.subr.bf16.mxu0 0
      %1322 = vmatpush1.bf16.msra.mxu0 0
      %1323 = vmatprep.subr.bf16.mxu0 0
      %1324 = vmatpush1.bf16.msra.mxu0 0
      %1325 = vmatprep.subr.bf16.mxu0 0
      %1326 = vmatpush1.bf16.msra.mxu0 0
      %1327 = vmatprep.subr.bf16.mxu0 0
      %1328 = vmatpush1.bf16.msra.mxu0 0
      %1329 = vmatprep.subr.bf16.mxu0 0
      %1330 = vmatpush1.bf16.msra.mxu0 0
      %1331 = vmatprep.subr.bf16.mxu0 0
      %1332 = vmatpush1.bf16.msra.mxu0 0
      %1333 = vmatprep.subr.bf16.mxu0 0
      %1334 = vmatpush1.bf16.msra.mxu0 0
      %1335 = vmatprep.subr.bf16.mxu0 0
      %1336 = vmatpush1.bf16.msra.mxu0 0
      %1337 = vmatprep.subr.bf16.mxu0 0
      %1338 = vmatpush1.bf16.msra.mxu0 0
      %1339 = vmatprep.subr.bf16.mxu0 0
      %1340 = vmatpush1.bf16.msra.mxu0 0
      %1341 = vmatprep.subr.bf16.mxu0 0
      %1342 = vmatpush1.bf16.msra.mxu0 0
      %1343 = vmatprep.subr.bf16.mxu0 0
      %1344 = vmatpush1.bf16.msra.mxu0 0
      %1345 = vmatprep.subr.bf16.mxu0 0
      %1346 = vmatpush1.bf16.msra.mxu0 0
      %1347 = vmatprep.subr.bf16.mxu0 0
      %1348 = vmatpush1.bf16.msra.mxu0 0
      %1349 = vmatprep.mubr.bf16.mxu0 0
      %1350 = vmatmul.mubr.bf16.gmra.mrb[0].mxu0 %v470
      %v1351 = vpop.f32.mrb[0].mxu0
      %v1352 = vadd.f32 0.0, %v1351
      %v1353 = vpop.f32.mrb[0].mxu0
      %v1354 = vpop.f32.mrb[0].mxu0
      %v1355 = vadd.f32 0.0, %v1354
      %v1356 = vpop.f32.mrb[0].mxu0
      %1357 = vmatprep.mubr.bf16.mxu0 0
      %1358 = vmatmul.mubr.bf16.gmra.mrb[0].mxu0 %v473
      %v1359 = vpop.f32.mrb[0].mxu0
      %v1360 = vadd.f32 0.0, %v1359
      %v1361 = vpop.f32.mrb[0].mxu0
      %v1362 = vpop.f32.mrb[0].mxu0
      %v1363 = vadd.f32 0.0, %v1362
      %v1364 = vpop.f32.mrb[0].mxu0
      %1365 = vmatprep.mubr.bf16.mxu0 0
      %1366 = vmatmul.mubr.bf16.gmra.mrb[0].mxu0 %v476
      %v1367 = vpop.f32.mrb[0].mxu0
      %v1368 = vadd.f32 0.0, %v1367
      %v1369 = vpop.f32.mrb[0].mxu0
      %v1370 = vpop.f32.mrb[0].mxu0
      %v1371 = vadd.f32 0.0, %v1370
      %v1372 = vpop.f32.mrb[0].mxu0
      %1373 = vmatprep.mubr.bf16.mxu0 0
      %1374 = vmatmul.mubr.bf16.gmra.mrb[0].mxu0 %v479
      %v1375 = vpop.f32.mrb[0].mxu0
      %v1376 = vadd.f32 0.0, %v1375
      %v1377 = vpop.f32.mrb[0].mxu0
      %v1378 = vpop.f32.mrb[0].mxu0
      %v1379 = vadd.f32 0.0, %v1378
      %v1380 = vpop.f32.mrb[0].mxu0
      %1381 = vdwg.mxu0
      %s1382 = scalar_lea.vmem %s5, 16
      %v1383 = vld [vmem:[%s1382] sm:$0xf]
      %v1384 = vld [vmem:[%s1382 + $0x4] sm:$0xf]
      %v1385 = vld [vmem:[%s1382 + $0x8] sm:$0xf]
      %v1386 = vld [vmem:[%s1382 + $0xc] sm:$0xf]
      %v1391 = vunpack.c.l.b16 %v1383
      %v1392 = vunpack.c.l.b16 %v1384
      %v1393 = vunpack.c.l.b16 %v1385
      %v1394 = vunpack.c.l.b16 %v1386
      %v1395 = vpack.c.b16 %v1392, %v1391
      %v1396 = vpack.c.b16 %v1394, %v1393
      %1399 = vmatprep.subr.bf16.mxu0 0
      %1400 = vmatpush1.bf16.msra.mxu0 %v1395
      %1401 = vmatprep.subr.bf16.mxu0 0
      %1402 = vmatpush1.bf16.msra.mxu0 %v1396
      %1403 = vmatprep.subr.bf16.mxu0 0
      %1404 = vmatpush1.bf16.msra.mxu0 0
      %1405 = vmatprep.subr.bf16.mxu0 0
      %1406 = vmatpush1.bf16.msra.mxu0 0
      %1407 = vmatprep.subr.bf16.mxu0 0
      %1408 = vmatpush1.bf16.msra.mxu0 0
      %1409 = vmatprep.subr.bf16.mxu0 0
      %1410 = vmatpush1.bf16.msra.mxu0 0
      %1411 = vmatprep.subr.bf16.mxu0 0
      %1412 = vmatpush1.bf16.msra.mxu0 0
      %1413 = vmatprep.subr.bf16.mxu0 0
      %1414 = vmatpush1.bf16.msra.mxu0 0
      %1415 = vmatprep.subr.bf16.mxu0 0
      %1416 = vmatpush1.bf16.msra.mxu0 0
      %1417 = vmatprep.subr.bf16.mxu0 0
      %1418 = vmatpush1.bf16.msra.mxu0 0
      %1419 = vmatprep.subr.bf16.mxu0 0
      %1420 = vmatpush1.bf16.msra.mxu0 0
      %1421 = vmatprep.subr.bf16.mxu0 0
      %1422 = vmatpush1.bf16.msra.mxu0 0
      %1423 = vmatprep.subr.bf16.mxu0 0
      %1424 = vmatpush1.bf16.msra.mxu0 0
      %1425 = vmatprep.subr.bf16.mxu0 0
      %1426 = vmatpush1.bf16.msra.mxu0 0
      %1427 = vmatprep.subr.bf16.mxu0 0
      %1428 = vmatpush1.bf16.msra.mxu0 0
      %1429 = vmatprep.subr.bf16.mxu0 0
      %1430 = vmatpush1.bf16.msra.mxu0 0
      %1431 = vmatprep.mubr.bf16.mxu0 0
      %1432 = vmatmul.mubr.bf16.gmra.mrb[0].mxu0 %v470
      %v1433 = vpop.f32.mrb[0].mxu0
      %v1434 = vadd.f32 0.0, %v1433
      %v1435 = vpop.f32.mrb[0].mxu0
      %v1436 = vpop.f32.mrb[0].mxu0
      %v1437 = vadd.f32 0.0, %v1436
      %v1438 = vpop.f32.mrb[0].mxu0
      %1439 = vmatprep.mubr.bf16.mxu0 0
      %1440 = vmatmul.mubr.bf16.gmra.mrb[0].mxu0 %v473
      %v1441 = vpop.f32.mrb[0].mxu0
      %v1442 = vadd.f32 0.0, %v1441
      %v1443 = vpop.f32.mrb[0].mxu0
      %v1444 = vpop.f32.mrb[0].mxu0
      %v1445 = vadd.f32 0.0, %v1444
      %v1446 = vpop.f32.mrb[0].mxu0
      %1447 = vmatprep.mubr.bf16.mxu0 0
      %1448 = vmatmul.mubr.bf16.gmra.mrb[0].mxu0 %v476
      %v1449 = vpop.f32.mrb[0].mxu0
      %v1450 = vadd.f32 0.0, %v1449
      %v1451 = vpop.f32.mrb[0].mxu0
      %v1452 = vpop.f32.mrb[0].mxu0
      %v1453 = vadd.f32 0.0, %v1452
      %v1454 = vpop.f32.mrb[0].mxu0
      %1455 = vmatprep.mubr.bf16.mxu0 0
      %1456 = vmatmul.mubr.bf16.gmra.mrb[0].mxu0 %v479
      %v1457 = vpop.f32.mrb[0].mxu0
      %v1458 = vadd.f32 0.0, %v1457
      %v1459 = vpop.f32.mrb[0].mxu0
      %v1460 = vpop.f32.mrb[0].mxu0
      %v1461 = vadd.f32 0.0, %v1460
      %v1462 = vpop.f32.mrb[0].mxu0
      %1463 = vdwg.mxu0
      %v1464 = vpack.c.bf16 %v1273, %v1270
      %v1465 = vpack.c.bf16 %v1281, %v1278
      %v1466 = vpack.c.bf16 %v1289, %v1286
      %v1467 = vpack.c.bf16 %v1297, %v1294
      %v1468 = vpack.c.bf16 %v1355, %v1352
      %v1469 = vpack.c.bf16 %v1363, %v1360
      %v1470 = vpack.c.bf16 %v1371, %v1368
      %v1471 = vpack.c.bf16 %v1379, %v1376
      %v1472 = vpack.c.bf16 %v1437, %v1434
      %v1473 = vpack.c.bf16 %v1445, %v1442
      %v1474 = vpack.c.bf16 %v1453, %v1450
      %v1475 = vpack.c.bf16 %v1461, %v1458
      %v1477 = vsel %vm720, %v1464, 0
      %v1480 = vsel %vm720, %v1468, 0
      %1482 = vmatprep.subr.bf16.mxu0 0
      %1483 = vmatpush1.bf16.xpose.msra.mxu0 %v1480
      %1484 = vmatprep.subr.bf16.mxu0 0
      %1485 = vmatpush1.bf16.xpose.msra.mxu0 0
      %1486 = vmatprep.subr.bf16.mxu0 0
      %1487 = vmatpush1.bf16.xpose.msra.mxu0 0
      %1488 = vmatprep.subr.bf16.mxu0 0
      %1489 = vmatpush1.bf16.xpose.msra.mxu0 0
      %1490 = vmatprep.subr.bf16.mxu0 0
      %1491 = vmatpush1.bf16.xpose.msra.mxu0 0
      %1492 = vmatprep.subr.bf16.mxu0 0
      %1493 = vmatpush1.bf16.xpose.msra.mxu0 0
      %1494 = vmatprep.subr.bf16.mxu0 0
      %1495 = vmatpush1.bf16.xpose.msra.mxu0 0
      %1496 = vmatprep.subr.bf16.mxu0 0
      %1497 = vmatpush1.bf16.xpose.msra.mxu0 0
      %1498 = vmatprep.subr.bf16.mxu0 0
      %1499 = vmatpush1.bf16.xpose.msra.mxu0 0
      %1500 = vmatprep.subr.bf16.mxu0 0
      %1501 = vmatpush1.bf16.xpose.msra.mxu0 0
      %1502 = vmatprep.subr.bf16.mxu0 0
      %1503 = vmatpush1.bf16.xpose.msra.mxu0 0
      %1504 = vmatprep.subr.bf16.mxu0 0
      %1505 = vmatpush1.bf16.xpose.msra.mxu0 0
      %1506 = vmatprep.subr.bf16.mxu0 0
      %1507 = vmatpush1.bf16.xpose.msra.mxu0 0
      %1508 = vmatprep.subr.bf16.mxu0 0
      %1509 = vmatpush1.bf16.xpose.msra.mxu0 0
      %1510 = vmatprep.subr.bf16.mxu0 0
      %1511 = vmatpush1.bf16.xpose.msra.mxu0 0
      %1512 = vmatprep.subr.bf16.mxu0 0
      %1513 = vmatpush1.bf16.xpose.msra.mxu0 0
      %1514 = vmatprep.mubr.bf16.mxu0 0
      %1515 = vmatmul.mubr.bf16.gmra.mrb[0].mxu0 %v1477
      %v1516 = vpop.f32.mrb[0].mxu0
      %v1517 = vadd.f32 0.0, %v1516
      %v1518 = vpop.f32.mrb[0].mxu0
      %v1519 = vpop.f32.mrb[0].mxu0
      %v1520 = vadd.f32 0.0, %v1519
      %v1521 = vpop.f32.mrb[0].mxu0
      %1522 = vdwg.mxu0
      %v1524 = vsel %vm720, %v1465, 0
      %v1527 = vsel %vm720, %v1469, 0
      %1529 = vmatprep.subr.bf16.mxu0 0
      %1530 = vmatpush1.bf16.xpose.msra.mxu0 %v1527
      %1531 = vmatprep.subr.bf16.mxu0 0
      %1532 = vmatpush1.bf16.xpose.msra.mxu0 0
      %1533 = vmatprep.subr.bf16.mxu0 0
      %1534 = vmatpush1.bf16.xpose.msra.mxu0 0
      %1535 = vmatprep.subr.bf16.mxu0 0
      %1536 = vmatpush1.bf16.xpose.msra.mxu0 0
      %1537 = vmatprep.subr.bf16.mxu0 0
      %1538 = vmatpush1.bf16.xpose.msra.mxu0 0
      %1539 = vmatprep.subr.bf16.mxu0 0
      %1540 = vmatpush1.bf16.xpose.msra.mxu0 0
      %1541 = vmatprep.subr.bf16.mxu0 0
      %1542 = vmatpush1.bf16.xpose.msra.mxu0 0
      %1543 = vmatprep.subr.bf16.mxu0 0
      %1544 = vmatpush1.bf16.xpose.msra.mxu0 0
      %1545 = vmatprep.subr.bf16.mxu0 0
      %1546 = vmatpush1.bf16.xpose.msra.mxu0 0
      %1547 = vmatprep.subr.bf16.mxu0 0
      %1548 = vmatpush1.bf16.xpose.msra.mxu0 0
      %1549 = vmatprep.subr.bf16.mxu0 0
      %1550 = vmatpush1.bf16.xpose.msra.mxu0 0
      %1551 = vmatprep.subr.bf16.mxu0 0
      %1552 = vmatpush1.bf16.xpose.msra.mxu0 0
      %1553 = vmatprep.subr.bf16.mxu0 0
      %1554 = vmatpush1.bf16.xpose.msra.mxu0 0
      %1555 = vmatprep.subr.bf16.mxu0 0
      %1556 = vmatpush1.bf16.xpose.msra.mxu0 0
      %1557 = vmatprep.subr.bf16.mxu0 0
      %1558 = vmatpush1.bf16.xpose.msra.mxu0 0
      %1559 = vmatprep.subr.bf16.mxu0 0
      %1560 = vmatpush1.bf16.xpose.msra.mxu0 0
      %1561 = vmatprep.mubr.bf16.mxu0 0
      %1562 = vmatmul.mubr.bf16.gmra.mrb[0].mxu0 %v1524
      %v1563 = vpop.f32.mrb[0].mxu0
      %v1564 = vadd.f32 0.0, %v1563
      %v1565 = vpop.f32.mrb[0].mxu0
      %v1566 = vpop.f32.mrb[0].mxu0
      %v1567 = vadd.f32 0.0, %v1566
      %v1568 = vpop.f32.mrb[0].mxu0
      %1569 = vdwg.mxu0
      %v1571 = vsel %vm720, %v1466, 0
      %v1574 = vsel %vm720, %v1470, 0
      %1576 = vmatprep.subr.bf16.mxu0 0
      %1577 = vmatpush1.bf16.xpose.msra.mxu0 %v1574
      %1578 = vmatprep.subr.bf16.mxu0 0
      %1579 = vmatpush1.bf16.xpose.msra.mxu0 0
      %1580 = vmatprep.subr.bf16.mxu0 0
      %1581 = vmatpush1.bf16.xpose.msra.mxu0 0
      %1582 = vmatprep.subr.bf16.mxu0 0
      %1583 = vmatpush1.bf16.xpose.msra.mxu0 0
      %1584 = vmatprep.subr.bf16.mxu0 0
      %1585 = vmatpush1.bf16.xpose.msra.mxu0 0
      %1586 = vmatprep.subr.bf16.mxu0 0
      %1587 = vmatpush1.bf16.xpose.msra.mxu0 0
      %1588 = vmatprep.subr.bf16.mxu0 0
      %1589 = vmatpush1.bf16.xpose.msra.mxu0 0
      %1590 = vmatprep.subr.bf16.mxu0 0
      %1591 = vmatpush1.bf16.xpose.msra.mxu0 0
      %1592 = vmatprep.subr.bf16.mxu0 0
      %1593 = vmatpush1.bf16.xpose.msra.mxu0 0
      %1594 = vmatprep.subr.bf16.mxu0 0
      %1595 = vmatpush1.bf16.xpose.msra.mxu0 0
      %1596 = vmatprep.subr.bf16.mxu0 0
      %1597 = vmatpush1.bf16.xpose.msra.mxu0 0
      %1598 = vmatprep.subr.bf16.mxu0 0
      %1599 = vmatpush1.bf16.xpose.msra.mxu0 0
      %1600 = vmatprep.subr.bf16.mxu0 0
      %1601 = vmatpush1.bf16.xpose.msra.mxu0 0
      %1602 = vmatprep.subr.bf16.mxu0 0
      %1603 = vmatpush1.bf16.xpose.msra.mxu0 0
      %1604 = vmatprep.subr.bf16.mxu0 0
      %1605 = vmatpush1.bf16.xpose.msra.mxu0 0
      %1606 = vmatprep.subr.bf16.mxu0 0
      %1607 = vmatpush1.bf16.xpose.msra.mxu0 0
      %1608 = vmatprep.mubr.bf16.mxu0 0
      %1609 = vmatmul.mubr.bf16.gmra.mrb[0].mxu0 %v1571
      %v1610 = vpop.f32.mrb[0].mxu0
      %v1611 = vadd.f32 0.0, %v1610
      %v1612 = vpop.f32.mrb[0].mxu0
      %v1613 = vpop.f32.mrb[0].mxu0
      %v1614 = vadd.f32 0.0, %v1613
      %v1615 = vpop.f32.mrb[0].mxu0
      %1616 = vdwg.mxu0
      %v1618 = vsel %vm720, %v1467, 0
      %v1621 = vsel %vm720, %v1471, 0
      %1623 = vmatprep.subr.bf16.mxu0 0
      %1624 = vmatpush1.bf16.xpose.msra.mxu0 %v1621
      %1625 = vmatprep.subr.bf16.mxu0 0
      %1626 = vmatpush1.bf16.xpose.msra.mxu0 0
      %1627 = vmatprep.subr.bf16.mxu0 0
      %1628 = vmatpush1.bf16.xpose.msra.mxu0 0
      %1629 = vmatprep.subr.bf16.mxu0 0
      %1630 = vmatpush1.bf16.xpose.msra.mxu0 0
      %1631 = vmatprep.subr.bf16.mxu0 0
      %1632 = vmatpush1.bf16.xpose.msra.mxu0 0
      %1633 = vmatprep.subr.bf16.mxu0 0
      %1634 = vmatpush1.bf16.xpose.msra.mxu0 0
      %1635 = vmatprep.subr.bf16.mxu0 0
      %1636 = vmatpush1.bf16.xpose.msra.mxu0 0
      %1637 = vmatprep.subr.bf16.mxu0 0
      %1638 = vmatpush1.bf16.xpose.msra.mxu0 0
      %1639 = vmatprep.subr.bf16.mxu0 0
      %1640 = vmatpush1.bf16.xpose.msra.mxu0 0
      %1641 = vmatprep.subr.bf16.mxu0 0
      %1642 = vmatpush1.bf16.xpose.msra.mxu0 0
      %1643 = vmatprep.subr.bf16.mxu0 0
      %1644 = vmatpush1.bf16.xpose.msra.mxu0 0
      %1645 = vmatprep.subr.bf16.mxu0 0
      %1646 = vmatpush1.bf16.xpose.msra.mxu0 0
      %1647 = vmatprep.subr.bf16.mxu0 0
      %1648 = vmatpush1.bf16.xpose.msra.mxu0 0
      %1649 = vmatprep.subr.bf16.mxu0 0
      %1650 = vmatpush1.bf16.xpose.msra.mxu0 0
      %1651 = vmatprep.subr.bf16.mxu0 0
      %1652 = vmatpush1.bf16.xpose.msra.mxu0 0
      %1653 = vmatprep.subr.bf16.mxu0 0
      %1654 = vmatpush1.bf16.xpose.msra.mxu0 0
      %1655 = vmatprep.mubr.bf16.mxu0 0
      %1656 = vmatmul.mubr.bf16.gmra.mrb[0].mxu0 %v1618
      %v1657 = vpop.f32.mrb[0].mxu0
      %v1658 = vadd.f32 0.0, %v1657
      %v1659 = vpop.f32.mrb[0].mxu0
      %v1660 = vpop.f32.mrb[0].mxu0
      %v1661 = vadd.f32 0.0, %v1660
      %v1662 = vpop.f32.mrb[0].mxu0
      %1663 = vdwg.mxu0
      %v1664 = vsel %vm720, %v1517, -inf
      %1665 = vmax.xlane.f32.xlu0 %v1664
      %v1666 = vpop.xlane.xlu0 %1665
      %v1667 = vsel %vm720, %v1520, -inf
      %1668 = vmax.xlane.f32.xlu0 %v1667
      %v1669 = vpop.xlane.xlu0 %1668
      %v1670 = vsel %vm720, %v1564, -inf
      %1671 = vmax.xlane.f32.xlu0 %v1670
      %v1672 = vpop.xlane.xlu0 %1671
      %v1673 = vsel %vm720, %v1567, -inf
      %1674 = vmax.xlane.f32.xlu0 %v1673
      %v1675 = vpop.xlane.xlu0 %1674
      %v1676 = vsel %vm720, %v1611, -inf
      %1677 = vmax.xlane.f32.xlu0 %v1676
      %v1678 = vpop.xlane.xlu0 %1677
      %v1679 = vsel %vm720, %v1614, -inf
      %1680 = vmax.xlane.f32.xlu0 %v1679
      %v1681 = vpop.xlane.xlu0 %1680
      %v1682 = vsel %vm720, %v1658, -inf
      %1683 = vmax.xlane.f32.xlu0 %v1682
      %v1684 = vpop.xlane.xlu0 %1683
      %v1685 = vsel %vm720, %v1661, -inf
      %1686 = vmax.xlane.f32.xlu0 %v1685
      %v1687 = vpop.xlane.xlu0 %1686
      %v1688 = vsub.f32 %v1517, %v1666
      %v1689 = vsub.f32 %v1520, %v1669
      %v1690 = vsub.f32 %v1564, %v1672
      %v1691 = vsub.f32 %v1567, %v1675
      %v1692 = vsub.f32 %v1611, %v1678
      %v1693 = vsub.f32 %v1614, %v1681
      %v1694 = vsub.f32 %v1658, %v1684
      %v1695 = vsub.f32 %v1661, %v1687
      %v1696 = vmul.f32 %v1688, 1.442695
      %v1697 = vpow.pop %v1696
      %v1698 = vmul.f32 %v1689, 1.442695
      %v1699 = vpow.pop %v1698
      %v1700 = vmul.f32 %v1690, 1.442695
      %v1701 = vpow.pop %v1700
      %v1702 = vmul.f32 %v1691, 1.442695
      %v1703 = vpow.pop %v1702
      %v1704 = vmul.f32 %v1692, 1.442695
      %v1705 = vpow.pop %v1704
      %v1706 = vmul.f32 %v1693, 1.442695
      %v1707 = vpow.pop %v1706
      %v1708 = vmul.f32 %v1694, 1.442695
      %v1709 = vpow.pop %v1708
      %v1710 = vmul.f32 %v1695, 1.442695
      %v1711 = vpow.pop %v1710
      %v1712 = vsel %vm720, %v1697, 0.0
      %1713 = vadd.xlane.f32.xlu0 %v1712
      %v1714 = vpop.xlane.xlu0 %1713
      %v1715 = vsel %vm720, %v1699, 0.0
      %1716 = vadd.xlane.f32.xlu0 %v1715
      %v1717 = vpop.xlane.xlu0 %1716
      %v1718 = vsel %vm720, %v1701, 0.0
      %1719 = vadd.xlane.f32.xlu0 %v1718
      %v1720 = vpop.xlane.xlu0 %1719
      %v1721 = vsel %vm720, %v1703, 0.0
      %1722 = vadd.xlane.f32.xlu0 %v1721
      %v1723 = vpop.xlane.xlu0 %1722
      %v1724 = vsel %vm720, %v1705, 0.0
      %1725 = vadd.xlane.f32.xlu0 %v1724
      %v1726 = vpop.xlane.xlu0 %1725
      %v1727 = vsel %vm720, %v1707, 0.0
      %1728 = vadd.xlane.f32.xlu0 %v1727
      %v1729 = vpop.xlane.xlu0 %1728
      %v1730 = vsel %vm720, %v1709, 0.0
      %1731 = vadd.xlane.f32.xlu0 %v1730
      %v1732 = vpop.xlane.xlu0 %1731
      %v1733 = vsel %vm720, %v1711, 0.0
      %1734 = vadd.xlane.f32.xlu0 %v1733
      %v1735 = vpop.xlane.xlu0 %1734
      %v1736 = vrcp.pop %v1714
      %v1737 = vrcp.pop %v1717
      %v1738 = vrcp.pop %v1720
      %v1739 = vrcp.pop %v1723
      %v1740 = vrcp.pop %v1726
      %v1741 = vrcp.pop %v1729
      %v1742 = vrcp.pop %v1732
      %v1743 = vrcp.pop %v1735
      %v1744 = vmul.f32 %v1697, %v1736
      %v1745 = vmul.f32 %v1699, %v1737
      %v1746 = vmul.f32 %v1701, %v1738
      %v1747 = vmul.f32 %v1703, %v1739
      %v1748 = vmul.f32 %v1705, %v1740
      %v1749 = vmul.f32 %v1707, %v1741
      %v1750 = vmul.f32 %v1709, %v1742
      %v1751 = vmul.f32 %v1711, %v1743
      %v1752 = vpack.c.bf16 %v1745, %v1744
      %v1753 = vpack.c.bf16 %v1747, %v1746
      %v1754 = vpack.c.bf16 %v1749, %v1748
      %v1755 = vpack.c.bf16 %v1751, %v1750
      %v1757 = vsel %vm720, %v1752, 0
      %1759 = vmatprep.subr.bf16.mxu0 0
      %1760 = vmatpush1.bf16.msra.mxu0 %v1472
      %1761 = vmatprep.subr.bf16.mxu0 0
      %1762 = vmatpush1.bf16.msra.mxu0 0
      %1763 = vmatprep.subr.bf16.mxu0 0
      %1764 = vmatpush1.bf16.msra.mxu0 0
      %1765 = vmatprep.subr.bf16.mxu0 0
      %1766 = vmatpush1.bf16.msra.mxu0 0
      %1767 = vmatprep.subr.bf16.mxu0 0
      %1768 = vmatpush1.bf16.msra.mxu0 0
      %1769 = vmatprep.subr.bf16.mxu0 0
      %1770 = vmatpush1.bf16.msra.mxu0 0
      %1771 = vmatprep.subr.bf16.mxu0 0
      %1772 = vmatpush1.bf16.msra.mxu0 0
      %1773 = vmatprep.subr.bf16.mxu0 0
      %1774 = vmatpush1.bf16.msra.mxu0 0
      %1775 = vmatprep.subr.bf16.mxu0 0
      %1776 = vmatpush1.bf16.msra.mxu0 0
      %1777 = vmatprep.subr.bf16.mxu0 0
      %1778 = vmatpush1.bf16.msra.mxu0 0
      %1779 = vmatprep.subr.bf16.mxu0 0
      %1780 = vmatpush1.bf16.msra.mxu0 0
      %1781 = vmatprep.subr.bf16.mxu0 0
      %1782 = vmatpush1.bf16.msra.mxu0 0
      %1783 = vmatprep.subr.bf16.mxu0 0
      %1784 = vmatpush1.bf16.msra.mxu0 0
      %1785 = vmatprep.subr.bf16.mxu0 0
      %1786 = vmatpush1.bf16.msra.mxu0 0
      %1787 = vmatprep.subr.bf16.mxu0 0
      %1788 = vmatpush1.bf16.msra.mxu0 0
      %1789 = vmatprep.subr.bf16.mxu0 0
      %1790 = vmatpush1.bf16.msra.mxu0 0
      %1791 = vmatprep.mubr.bf16.mxu0 0
      %1792 = vmatmul.mubr.bf16.gmra.mrb[0].mxu0 %v1757
      %v1793 = vpop.f32.mrb[0].mxu0
      %v1794 = vadd.f32 0.0, %v1793
      %v1795 = vpop.f32.mrb[0].mxu0
      %v1796 = vpop.f32.mrb[0].mxu0
      %v1797 = vadd.f32 0.0, %v1796
      %v1798 = vpop.f32.mrb[0].mxu0
      %1799 = vdwg.mxu0
      %v1801 = vsel %vm720, %v1753, 0
      %1803 = vmatprep.subr.bf16.mxu0 0
      %1804 = vmatpush1.bf16.msra.mxu0 %v1473
      %1805 = vmatprep.subr.bf16.mxu0 0
      %1806 = vmatpush1.bf16.msra.mxu0 0
      %1807 = vmatprep.subr.bf16.mxu0 0
      %1808 = vmatpush1.bf16.msra.mxu0 0
      %1809 = vmatprep.subr.bf16.mxu0 0
      %1810 = vmatpush1.bf16.msra.mxu0 0
      %1811 = vmatprep.subr.bf16.mxu0 0
      %1812 = vmatpush1.bf16.msra.mxu0 0
      %1813 = vmatprep.subr.bf16.mxu0 0
      %1814 = vmatpush1.bf16.msra.mxu0 0
      %1815 = vmatprep.subr.bf16.mxu0 0
      %1816 = vmatpush1.bf16.msra.mxu0 0
      %1817 = vmatprep.subr.bf16.mxu0 0
      %1818 = vmatpush1.bf16.msra.mxu0 0
      %1819 = vmatprep.subr.bf16.mxu0 0
      %1820 = vmatpush1.bf16.msra.mxu0 0
      %1821 = vmatprep.subr.bf16.mxu0 0
      %1822 = vmatpush1.bf16.msra.mxu0 0
      %1823 = vmatprep.subr.bf16.mxu0 0
      %1824 = vmatpush1.bf16.msra.mxu0 0
      %1825 = vmatprep.subr.bf16.mxu0 0
      %1826 = vmatpush1.bf16.msra.mxu0 0
      %1827 = vmatprep.subr.bf16.mxu0 0
      %1828 = vmatpush1.bf16.msra.mxu0 0
      %1829 = vmatprep.subr.bf16.mxu0 0
      %1830 = vmatpush1.bf16.msra.mxu0 0
      %1831 = vmatprep.subr.bf16.mxu0 0
      %1832 = vmatpush1.bf16.msra.mxu0 0
      %1833 = vmatprep.subr.bf16.mxu0 0
      %1834 = vmatpush1.bf16.msra.mxu0 0
      %1835 = vmatprep.mubr.bf16.mxu0 0
      %1836 = vmatmul.mubr.bf16.gmra.mrb[0].mxu0 %v1801
      %v1837 = vpop.f32.mrb[0].mxu0
      %v1838 = vadd.f32 0.0, %v1837
      %v1839 = vpop.f32.mrb[0].mxu0
      %v1840 = vpop.f32.mrb[0].mxu0
      %v1841 = vadd.f32 0.0, %v1840
      %v1842 = vpop.f32.mrb[0].mxu0
      %1843 = vdwg.mxu0
      %v1845 = vsel %vm720, %v1754, 0
      %1847 = vmatprep.subr.bf16.mxu0 0
      %1848 = vmatpush1.bf16.msra.mxu0 %v1474
      %1849 = vmatprep.subr.bf16.mxu0 0
      %1850 = vmatpush1.bf16.msra.mxu0 0
      %1851 = vmatprep.subr.bf16.mxu0 0
      %1852 = vmatpush1.bf16.msra.mxu0 0
      %1853 = vmatprep.subr.bf16.mxu0 0
      %1854 = vmatpush1.bf16.msra.mxu0 0
      %1855 = vmatprep.subr.bf16.mxu0 0
      %1856 = vmatpush1.bf16.msra.mxu0 0
      %1857 = vmatprep.subr.bf16.mxu0 0
      %1858 = vmatpush1.bf16.msra.mxu0 0
      %1859 = vmatprep.subr.bf16.mxu0 0
      %1860 = vmatpush1.bf16.msra.mxu0 0
      %1861 = vmatprep.subr.bf16.mxu0 0
      %1862 = vmatpush1.bf16.msra.mxu0 0
      %1863 = vmatprep.subr.bf16.mxu0 0
      %1864 = vmatpush1.bf16.msra.mxu0 0
      %1865 = vmatprep.subr.bf16.mxu0 0
      %1866 = vmatpush1.bf16.msra.mxu0 0
      %1867 = vmatprep.subr.bf16.mxu0 0
      %1868 = vmatpush1.bf16.msra.mxu0 0
      %1869 = vmatprep.subr.bf16.mxu0 0
      %1870 = vmatpush1.bf16.msra.mxu0 0
      %1871 = vmatprep.subr.bf16.mxu0 0
      %1872 = vmatpush1.bf16.msra.mxu0 0
      %1873 = vmatprep.subr.bf16.mxu0 0
      %1874 = vmatpush1.bf16.msra.mxu0 0
      %1875 = vmatprep.subr.bf16.mxu0 0
      %1876 = vmatpush1.bf16.msra.mxu0 0
      %1877 = vmatprep.subr.bf16.mxu0 0
      %1878 = vmatpush1.bf16.msra.mxu0 0
      %1879 = vmatprep.mubr.bf16.mxu0 0
      %1880 = vmatmul.mubr.bf16.gmra.mrb[0].mxu0 %v1845
      %v1881 = vpop.f32.mrb[0].mxu0
      %v1882 = vadd.f32 0.0, %v1881
      %v1883 = vpop.f32.mrb[0].mxu0
      %v1884 = vpop.f32.mrb[0].mxu0
      %v1885 = vadd.f32 0.0, %v1884
      %v1886 = vpop.f32.mrb[0].mxu0
      %1887 = vdwg.mxu0
      %v1889 = vsel %vm720, %v1755, 0
      %1891 = vmatprep.subr.bf16.mxu0 0
      %1892 = vmatpush1.bf16.msra.mxu0 %v1475
      %1893 = vmatprep.subr.bf16.mxu0 0
      %1894 = vmatpush1.bf16.msra.mxu0 0
      %1895 = vmatprep.subr.bf16.mxu0 0
      %1896 = vmatpush1.bf16.msra.mxu0 0
      %1897 = vmatprep.subr.bf16.mxu0 0
      %1898 = vmatpush1.bf16.msra.mxu0 0
      %1899 = vmatprep.subr.bf16.mxu0 0
      %1900 = vmatpush1.bf16.msra.mxu0 0
      %1901 = vmatprep.subr.bf16.mxu0 0
      %1902 = vmatpush1.bf16.msra.mxu0 0
      %1903 = vmatprep.subr.bf16.mxu0 0
      %1904 = vmatpush1.bf16.msra.mxu0 0
      %1905 = vmatprep.subr.bf16.mxu0 0
      %1906 = vmatpush1.bf16.msra.mxu0 0
      %1907 = vmatprep.subr.bf16.mxu0 0
      %1908 = vmatpush1.bf16.msra.mxu0 0
      %1909 = vmatprep.subr.bf16.mxu0 0
      %1910 = vmatpush1.bf16.msra.mxu0 0
      %1911 = vmatprep.subr.bf16.mxu0 0
      %1912 = vmatpush1.bf16.msra.mxu0 0
      %1913 = vmatprep.subr.bf16.mxu0 0
      %1914 = vmatpush1.bf16.msra.mxu0 0
      %1915 = vmatprep.subr.bf16.mxu0 0
      %1916 = vmatpush1.bf16.msra.mxu0 0
      %1917 = vmatprep.subr.bf16.mxu0 0
      %1918 = vmatpush1.bf16.msra.mxu0 0
      %1919 = vmatprep.subr.bf16.mxu0 0
      %1920 = vmatpush1.bf16.msra.mxu0 0
      %1921 = vmatprep.subr.bf16.mxu0 0
      %1922 = vmatpush1.bf16.msra.mxu0 0
      %1923 = vmatprep.mubr.bf16.mxu0 0
      %1924 = vmatmul.mubr.bf16.gmra.mrb[0].mxu0 %v1889
      %v1925 = vpop.f32.mrb[0].mxu0
      %v1926 = vadd.f32 0.0, %v1925
      %v1927 = vpop.f32.mrb[0].mxu0
      %v1928 = vpop.f32.mrb[0].mxu0
      %v1929 = vadd.f32 0.0, %v1928
      %v1930 = vpop.f32.mrb[0].mxu0
      %1931 = vdwg.mxu0
      %v1932 = vpack.c.bf16 %v1797, %v1794
      %v1933 = vpack.c.bf16 %v1841, %v1838
      %v1934 = vpack.c.bf16 %v1885, %v1882
      %v1935 = vpack.c.bf16 %v1929, %v1926
      %v1940 = vunpack.c.l.b16 %v1932
      %v1941 = vunpack.c.h.b16 %v1932
      %v1942 = vunpack.c.l.b16 %v1933
      %v1943 = vunpack.c.h.b16 %v1933
      %v1944 = vunpack.c.l.b16 %v1934
      %v1945 = vunpack.c.h.b16 %v1934
      %v1946 = vunpack.c.l.b16 %v1935
      %v1947 = vunpack.c.h.b16 %v1935
      %v1948 = vpack.c.b16 %v1940, %v1940
      %v1949 = vpack.c.b16 %v1941, %v1941
      %v1950 = vpack.c.b16 %v1942, %v1942
      %v1951 = vpack.c.b16 %v1943, %v1943
      %v1952 = vpack.c.b16 %v1944, %v1944
      %v1953 = vpack.c.b16 %v1945, %v1945
      %v1954 = vpack.c.b16 %v1946, %v1946
      %v1955 = vpack.c.b16 %v1947, %v1947
      %1956 = vrot.lane.b32.xlu0 %v1948, 16
      %v1957 = vpop.permute.xlu0 %1956
      %1958 = vrot.lane.b32.xlu0 %v1949, 16
      %v1959 = vpop.permute.xlu0 %1958
      %1960 = vrot.lane.b32.xlu0 %v1950, 16
      %v1961 = vpop.permute.xlu0 %1960
      %1962 = vrot.lane.b32.xlu0 %v1951, 16
      %v1963 = vpop.permute.xlu0 %1962
      %1964 = vrot.lane.b32.xlu0 %v1952, 16
      %v1965 = vpop.permute.xlu0 %1964
      %1966 = vrot.lane.b32.xlu0 %v1953, 16
      %v1967 = vpop.permute.xlu0 %1966
      %1968 = vrot.lane.b32.xlu0 %v1954, 16
      %v1969 = vpop.permute.xlu0 %1968
      %1970 = vrot.lane.b32.xlu0 %v1955, 16
      %v1971 = vpop.permute.xlu0 %1970
      %vm1980 = vcmask 257152
      %1981 = vst.msk [vmem:[%s294] sm:$0xf] %vm1980, %v1957
      %1982 = vst.msk [vmem:[%s294 + $0x4] sm:$0xf] %vm1980, %v1959
      %1983 = vst.msk [vmem:[%s294 + $0x8] sm:$0xf] %vm1980, %v1961
      %1984 = vst.msk [vmem:[%s294 + $0xc] sm:$0xf] %vm1980, %v1963
      %1985 = vst.msk [vmem:[%s294 + $0x10] sm:$0xf] %vm1980, %v1965
      %1986 = vst.msk [vmem:[%s294 + $0x14] sm:$0xf] %vm1980, %v1967
      %1987 = vst.msk [vmem:[%s294 + $0x18] sm:$0xf] %vm1980, %v1969
      %1988 = vst.msk [vmem:[%s294 + $0x1c] sm:$0xf] %vm1980, %v1971
      %s1989 = smul.u32 4, %s22
      %p1990 = scmp.lt.s32.totalorder %s21, 1
      %s1991 = scalar_select %p1990, %s21, 1
      %p1992 = scmp.lt.s32.totalorder %s1989, 3
      %s1993 = scalar_select %p1992, %s1989, 3
      %s1994 = smul.addr %s1993, 2
      %s1995 = smul.addr %s1991, 8
      %s1996 = sadd.s32 %s1994, %s1995
      %s1997 = smul.addr %s1996, 4
      %s1998 = scalar_lea.vmem %s6, %s1997
      // Predicated region
      $region45: #{vivit_forward.9} parent=43 // pred_check
        %p1999 = pneg %p182
      $region46: #{vivit_forward.9} parent=43 // pred_check_branch
        %2001 = sbr.rel (%p1999) target = $region48
      $region47: #{vivit_forward.9} parent=43 // pred_region
        %s2002 = smul.u32 4, %s22
      $region48: #{vivit_forward.9} parent=43 // pred_fallthru
        _
    $region44: #{vivit_forward.9} parent=5 // pred_fallthru
      _
    %p2003 = scmp.le.s32.totalorder 2, %s12
    // Predicated region
    $region49: #{vivit_forward.9} parent=5 // pred_check
      %p2004 = pneg %p2003
    $region50: #{vivit_forward.9} parent=5 // pred_check_branch
      %2006 = sbr.rel (%p2004) target = $region52
    $region51: #{vivit_forward.9} parent=5 // pred_region
      %s2007 = ssub.s32 %s12, 2
      // Predicated region
      $region53: #{vivit_forward.9} parent=51 // pred_check
        %p2008 = pneg %p188
      $region54: #{vivit_forward.9} parent=51 // pred_check_branch
        %2010 = sbr.rel (%p2008) target = $region56
      $region55: #{vivit_forward.9} parent=51 // pred_region
        %s2011 = smul.u32 4, %s24
        %p2012 = scmp.lt.s32.totalorder %s23, 1
        %s2013 = scalar_select %p2012, %s23, 1
        %p2014 = scmp.lt.s32.totalorder %s2011, 3
        %s2015 = scalar_select %p2014, %s2011, 3
        %s2016 = smul.addr %s2015, 2
        %s2017 = smul.addr %s2013, 8
        %s2018 = sadd.s32 %s2016, %s2017
        %s2019 = smul.addr %s2018, 4
        %s2020 = scalar_lea.vmem %s6, %s2019
      $region56: #{vivit_forward.9} parent=51 // pred_fallthru
        _
    $region52: #{vivit_forward.9} parent=5 // pred_fallthru
      _
  $region6: #{vivit_forward.9} parent=0 // loop_footer
    %s16 = sadd.s32 1, %s12
  $region7: #{vivit_forward.9} parent=0 // loop_footer_branch
    %11 = sbr.rel target = $region3
  $region8: #{vivit_forward.9} parent=0 // loop_exit
    _

// kernel: vivit_forward.11
$region0: #{vivit_forward.11}
  #allocation0 [shape = 'u32[]', space=smem, size = 0x4, offset = 0x4, fixed_abs, tag = 'smem constant byte address 0x4 - core index']
  #allocation1 [shape = 'u32[144,128]{1,0:T(1,128)}', space=vmem, size = 0x12000, scoped, tag = 'internal scratch']
  %s0 = inlined_call_operand.vmem [shape: bf16[128,32], index: 0, kind: input, shape index: {}]
  %s1 = inlined_call_operand.vmem [shape: bf16[128,32], index: 1, kind: input, shape index: {}]
  %s2 = inlined_call_operand.vmem [shape: bf16[128,32], index: 2, kind: input, shape index: {}]
  %s3 = inlined_call_operand.vmem [shape: bf16[32,32], index: 3, kind: input, shape index: {}]
  %s4 = inlined_call_operand.vmem [shape: bf16[32,32], index: 4, kind: input, shape index: {}]
  %s5 = inlined_call_operand.vmem [shape: f32[1,32], index: 5, kind: input, shape index: {}]
  %s6 = inlined_call_operand.vmem [shape: f32[1,32], index: 6, kind: input, shape index: {}]
  %s7 = inlined_call_operand.vmem [shape: f32[1,32], index: 7, kind: input, shape index: {}]
  %s8 = inlined_call_operand.vmem [shape: bf16[32,64], index: 8, kind: input, shape index: {}]
  %s9 = inlined_call_operand.vmem [shape: f32[1,64], index: 9, kind: input, shape index: {}]
  %s10 = inlined_call_operand.vmem [shape: bf16[64,32], index: 10, kind: input, shape index: {}]
  %s11 = inlined_call_operand.vmem [shape: f32[1,32], index: 11, kind: input, shape index: {}]
  %s12 = inlined_call_operand.vmem [shape: bf16[128,32], index: 12, kind: output, shape index: {}]
  %s13 = sld [smem:[#allocation0]]
  $region81: #{vivit_forward.11} parent=0
    _
  %s15 = ssub.s32 1, %s13
  %s16 = scalar_select 0, %s15, %s13
  loop: start=0, step=1, limit=4
  $region2: #{vivit_forward.11} parent=0 // loop_pre_header
    _
  $region3: #{vivit_forward.11} parent=0 // loop_header
    %s18 = sphi 0, %s22
    %p19 = scmp.ge.s32.totalorder %s18, 4
    %s28 = sphi 0, %s30
    %s31 = sphi 0, %s28
    %s32 = sphi 0, %s31
    %s48 = sphi 0, %s32
    %s54 = sphi 0, %s56
    %s57 = sphi 0, %s54
    %s58 = sphi 0, %s57
    %s74 = sphi 0, %s58
    %s80 = sphi 0, %s82
    %s83 = sphi 0, %s80
    %s84 = sphi 0, %s83
    %s100 = sphi 0, %s84
    %s104 = sphi 0, %s104
    %s106 = sphi 0, %s104
    %s107 = sphi 0, %s106
    %s121 = sphi 0, %s107
    %s125 = sphi 0, %s125
    %s127 = sphi 0, %s125
    %s128 = sphi 0, %s127
    %s142 = sphi 0, %s128
    %s146 = sphi 0, %s146
    %s148 = sphi 0, %s146
    %s149 = sphi 0, %s148
    %s163 = sphi 0, %s149
    %s167 = sphi 0, %s167
    %s169 = sphi 0, %s167
    %s170 = sphi 0, %s169
    %s184 = sphi 0, %s170
    %s188 = sphi 0, %s188
    %s190 = sphi 0, %s188
    %s191 = sphi 0, %s190
    %s205 = sphi 0, %s191
    %s209 = sphi 0, %s209
    %s211 = sphi 0, %s209
    %s212 = sphi 0, %s211
    %s226 = sphi 0, %s212
    %s230 = sphi 0, %s230
    %s232 = sphi 0, %s230
    %s233 = sphi 0, %s232
    %s247 = sphi 0, %s233
    %s251 = sphi 0, %s251
    %s253 = sphi 0, %s251
    %s254 = sphi 0, %s253
    %s268 = sphi 0, %s254
    %s272 = sphi 0, %s272
    %s274 = sphi 0, %s272
    %s275 = sphi 0, %s274
    %s289 = sphi 0, %s275
    %s295 = sphi 0, %s297
    %s298 = sphi 0, %s295
    %s299 = sphi 0, %s298
    %s315 = sphi 0, %s299
  $region4: #{vivit_forward.11} parent=0 // loop_header_branch
    %21 = sbr.rel (%p19) target = $region8
  $region5: #{vivit_forward.11} parent=0 // loop_body
    %s23 = ssub.s32 %s18, 1
    %s24 = ssub.s32 %s18, 2
    %s25 = sadd.s32 %s18, 1
    %s26 = ssub.s32 %s18, %s25
    %p27 = scmp.eq.s32.totalorder %s26, 0
    %s29 = sadd.s32 %s28, 1
    %s30 = scalar_select %p27, %s28, %s29
    %p33 = pneg %p27
    %p34 = scmp.eq.s32.totalorder %s18, 1
    %p35 = por %p33, %p34
    %p36 = scmp.ne.s32.totalorder %s28, %s31
    %p37 = scmp.eq.s32.totalorder %s18, 0
    %p38 = por %p36, %p37
    %p39 = scmp.ne.s32.totalorder %s28, %s31
    %p40 = scmp.eq.s32.totalorder %s23, 1
    %p41 = por %p39, %p40
    %p42 = scmp.ne.s32.totalorder %s31, %s32
    %p43 = scmp.eq.s32.totalorder %s23, 0
    %p44 = por %p42, %p43
    %p45 = scmp.ne.s32.totalorder %s31, %s32
    %p46 = scmp.eq.s32.totalorder %s24, 1
    %p47 = por %p45, %p46
    %p49 = scmp.ne.s32.totalorder %s32, %s48
    %p50 = scmp.eq.s32.totalorder %s24, 0
    %p51 = por %p49, %p50
    %s52 = ssub.s32 %s18, %s25
    %p53 = scmp.eq.s32.totalorder %s52, 0
    %s55 = sadd.s32 %s54, 1
    %s56 = scalar_select %p53, %s54, %s55
    %p59 = pneg %p53
    %p60 = scmp.eq.s32.totalorder %s18, 1
    %p61 = por %p59, %p60
    %p62 = scmp.ne.s32.totalorder %s54, %s57
    %p63 = scmp.eq.s32.totalorder %s18, 0
    %p64 = por %p62, %p63
    %p65 = scmp.ne.s32.totalorder %s54, %s57
    %p66 = scmp.eq.s32.totalorder %s23, 1
    %p67 = por %p65, %p66
    %p68 = scmp.ne.s32.totalorder %s57, %s58
    %p69 = scmp.eq.s32.totalorder %s23, 0
    %p70 = por %p68, %p69
    %p71 = scmp.ne.s32.totalorder %s57, %s58
    %p72 = scmp.eq.s32.totalorder %s24, 1
    %p73 = por %p71, %p72
    %p75 = scmp.ne.s32.totalorder %s58, %s74
    %p76 = scmp.eq.s32.totalorder %s24, 0
    %p77 = por %p75, %p76
    %s78 = ssub.s32 %s18, %s25
    %p79 = scmp.eq.s32.totalorder %s78, 0
    %s81 = sadd.s32 %s80, 1
    %s82 = scalar_select %p79, %s80, %s81
    %p85 = pneg %p79
    %p86 = scmp.eq.s32.totalorder %s18, 1
    %p87 = por %p85, %p86
    %p88 = scmp.ne.s32.totalorder %s80, %s83
    %p89 = scmp.eq.s32.totalorder %s18, 0
    %p90 = por %p88, %p89
    %p91 = scmp.ne.s32.totalorder %s80, %s83
    %p92 = scmp.eq.s32.totalorder %s23, 1
    %p93 = por %p91, %p92
    %p94 = scmp.ne.s32.totalorder %s83, %s84
    %p95 = scmp.eq.s32.totalorder %s23, 0
    %p96 = por %p94, %p95
    %p97 = scmp.ne.s32.totalorder %s83, %s84
    %p98 = scmp.eq.s32.totalorder %s24, 1
    %p99 = por %p97, %p98
    %p101 = scmp.ne.s32.totalorder %s84, %s100
    %p102 = scmp.eq.s32.totalorder %s24, 0
    %p103 = por %p101, %p102
    %s105 = sadd.s32 %s104, 1
    %p108 = scmp.eq.s32.totalorder %s18, 1
    %p109 = scmp.ne.s32.totalorder %s104, %s106
    %p110 = scmp.eq.s32.totalorder %s18, 0
    %p111 = por %p109, %p110
    %p112 = scmp.ne.s32.totalorder %s104, %s106
    %p113 = scmp.eq.s32.totalorder %s23, 1
    %p114 = por %p112, %p113
    %p115 = scmp.ne.s32.totalorder %s106, %s107
    %p116 = scmp.eq.s32.totalorder %s23, 0
    %p117 = por %p115, %p116
    %p118 = scmp.ne.s32.totalorder %s106, %s107
    %p119 = scmp.eq.s32.totalorder %s24, 1
    %p120 = por %p118, %p119
    %p122 = scmp.ne.s32.totalorder %s107, %s121
    %p123 = scmp.eq.s32.totalorder %s24, 0
    %p124 = por %p122, %p123
    %s126 = sadd.s32 %s125, 1
    %p129 = scmp.eq.s32.totalorder %s18, 1
    %p130 = scmp.ne.s32.totalorder %s125, %s127
    %p131 = scmp.eq.s32.totalorder %s18, 0
    %p132 = por %p130, %p131
    %p133 = scmp.ne.s32.totalorder %s125, %s127
    %p134 = scmp.eq.s32.totalorder %s23, 1
    %p135 = por %p133, %p134
    %p136 = scmp.ne.s32.totalorder %s127, %s128
    %p137 = scmp.eq.s32.totalorder %s23, 0
    %p138 = por %p136, %p137
    %p139 = scmp.ne.s32.totalorder %s127, %s128
    %p140 = scmp.eq.s32.totalorder %s24, 1
    %p141 = por %p139, %p140
    %p143 = scmp.ne.s32.totalorder %s128, %s142
    %p144 = scmp.eq.s32.totalorder %s24, 0
    %p145 = por %p143, %p144
    %s147 = sadd.s32 %s146, 1
    %p150 = scmp.eq.s32.totalorder %s18, 1
    %p151 = scmp.ne.s32.totalorder %s146, %s148
    %p152 = scmp.eq.s32.totalorder %s18, 0
    %p153 = por %p151, %p152
    %p154 = scmp.ne.s32.totalorder %s146, %s148
    %p155 = scmp.eq.s32.totalorder %s23, 1
    %p156 = por %p154, %p155
    %p157 = scmp.ne.s32.totalorder %s148, %s149
    %p158 = scmp.eq.s32.totalorder %s23, 0
    %p159 = por %p157, %p158
    %p160 = scmp.ne.s32.totalorder %s148, %s149
    %p161 = scmp.eq.s32.totalorder %s24, 1
    %p162 = por %p160, %p161
    %p164 = scmp.ne.s32.totalorder %s149, %s163
    %p165 = scmp.eq.s32.totalorder %s24, 0
    %p166 = por %p164, %p165
    %s168 = sadd.s32 %s167, 1
    %p171 = scmp.eq.s32.totalorder %s18, 1
    %p172 = scmp.ne.s32.totalorder %s167, %s169
    %p173 = scmp.eq.s32.totalorder %s18, 0
    %p174 = por %p172, %p173
    %p175 = scmp.ne.s32.totalorder %s167, %s169
    %p176 = scmp.eq.s32.totalorder %s23, 1
    %p177 = por %p175, %p176
    %p178 = scmp.ne.s32.totalorder %s169, %s170
    %p179 = scmp.eq.s32.totalorder %s23, 0
    %p180 = por %p178, %p179
    %p181 = scmp.ne.s32.totalorder %s169, %s170
    %p182 = scmp.eq.s32.totalorder %s24, 1
    %p183 = por %p181, %p182
    %p185 = scmp.ne.s32.totalorder %s170, %s184
    %p186 = scmp.eq.s32.totalorder %s24, 0
    %p187 = por %p185, %p186
    %s189 = sadd.s32 %s188, 1
    %p192 = scmp.eq.s32.totalorder %s18, 1
    %p193 = scmp.ne.s32.totalorder %s188, %s190
    %p194 = scmp.eq.s32.totalorder %s18, 0
    %p195 = por %p193, %p194
    %p196 = scmp.ne.s32.totalorder %s188, %s190
    %p197 = scmp.eq.s32.totalorder %s23, 1
    %p198 = por %p196, %p197
    %p199 = scmp.ne.s32.totalorder %s190, %s191
    %p200 = scmp.eq.s32.totalorder %s23, 0
    %p201 = por %p199, %p200
    %p202 = scmp.ne.s32.totalorder %s190, %s191
    %p203 = scmp.eq.s32.totalorder %s24, 1
    %p204 = por %p202, %p203
    %p206 = scmp.ne.s32.totalorder %s191, %s205
    %p207 = scmp.eq.s32.totalorder %s24, 0
    %p208 = por %p206, %p207
    %s210 = sadd.s32 %s209, 1
    %p213 = scmp.eq.s32.totalorder %s18, 1
    %p214 = scmp.ne.s32.totalorder %s209, %s211
    %p215 = scmp.eq.s32.totalorder %s18, 0
    %p216 = por %p214, %p215
    %p217 = scmp.ne.s32.totalorder %s209, %s211
    %p218 = scmp.eq.s32.totalorder %s23, 1
    %p219 = por %p217, %p218
    %p220 = scmp.ne.s32.totalorder %s211, %s212
    %p221 = scmp.eq.s32.totalorder %s23, 0
    %p222 = por %p220, %p221
    %p223 = scmp.ne.s32.totalorder %s211, %s212
    %p224 = scmp.eq.s32.totalorder %s24, 1
    %p225 = por %p223, %p224
    %p227 = scmp.ne.s32.totalorder %s212, %s226
    %p228 = scmp.eq.s32.totalorder %s24, 0
    %p229 = por %p227, %p228
    %s231 = sadd.s32 %s230, 1
    %p234 = scmp.eq.s32.totalorder %s18, 1
    %p235 = scmp.ne.s32.totalorder %s230, %s232
    %p236 = scmp.eq.s32.totalorder %s18, 0
    %p237 = por %p235, %p236
    %p238 = scmp.ne.s32.totalorder %s230, %s232
    %p239 = scmp.eq.s32.totalorder %s23, 1
    %p240 = por %p238, %p239
    %p241 = scmp.ne.s32.totalorder %s232, %s233
    %p242 = scmp.eq.s32.totalorder %s23, 0
    %p243 = por %p241, %p242
    %p244 = scmp.ne.s32.totalorder %s232, %s233
    %p245 = scmp.eq.s32.totalorder %s24, 1
    %p246 = por %p244, %p245
    %p248 = scmp.ne.s32.totalorder %s233, %s247
    %p249 = scmp.eq.s32.totalorder %s24, 0
    %p250 = por %p248, %p249
    %s252 = sadd.s32 %s251, 1
    %p255 = scmp.eq.s32.totalorder %s18, 1
    %p256 = scmp.ne.s32.totalorder %s251, %s253
    %p257 = scmp.eq.s32.totalorder %s18, 0
    %p258 = por %p256, %p257
    %p259 = scmp.ne.s32.totalorder %s251, %s253
    %p260 = scmp.eq.s32.totalorder %s23, 1
    %p261 = por %p259, %p260
    %p262 = scmp.ne.s32.totalorder %s253, %s254
    %p263 = scmp.eq.s32.totalorder %s23, 0
    %p264 = por %p262, %p263
    %p265 = scmp.ne.s32.totalorder %s253, %s254
    %p266 = scmp.eq.s32.totalorder %s24, 1
    %p267 = por %p265, %p266
    %p269 = scmp.ne.s32.totalorder %s254, %s268
    %p270 = scmp.eq.s32.totalorder %s24, 0
    %p271 = por %p269, %p270
    %s273 = sadd.s32 %s272, 1
    %p276 = scmp.eq.s32.totalorder %s18, 1
    %p277 = scmp.ne.s32.totalorder %s272, %s274
    %p278 = scmp.eq.s32.totalorder %s18, 0
    %p279 = por %p277, %p278
    %p280 = scmp.ne.s32.totalorder %s272, %s274
    %p281 = scmp.eq.s32.totalorder %s23, 1
    %p282 = por %p280, %p281
    %p283 = scmp.ne.s32.totalorder %s274, %s275
    %p284 = scmp.eq.s32.totalorder %s23, 0
    %p285 = por %p283, %p284
    %p286 = scmp.ne.s32.totalorder %s274, %s275
    %p287 = scmp.eq.s32.totalorder %s24, 1
    %p288 = por %p286, %p287
    %p290 = scmp.ne.s32.totalorder %s275, %s289
    %p291 = scmp.eq.s32.totalorder %s24, 0
    %p292 = por %p290, %p291
    %s293 = ssub.s32 %s18, %s25
    %p294 = scmp.eq.s32.totalorder %s293, 0
    %s296 = sadd.s32 %s295, 1
    %s297 = scalar_select %p294, %s295, %s296
    %p300 = pneg %p294
    %p301 = scmp.eq.s32.totalorder %s18, 1
    %p302 = por %p300, %p301
    %p303 = scmp.ne.s32.totalorder %s295, %s298
    %p304 = scmp.eq.s32.totalorder %s18, 0
    %p305 = por %p303, %p304
    %p306 = scmp.ne.s32.totalorder %s295, %s298
    %p307 = scmp.eq.s32.totalorder %s23, 1
    %p308 = por %p306, %p307
    %p309 = scmp.ne.s32.totalorder %s298, %s299
    %p310 = scmp.eq.s32.totalorder %s23, 0
    %p311 = por %p309, %p310
    %p312 = scmp.ne.s32.totalorder %s298, %s299
    %p313 = scmp.eq.s32.totalorder %s24, 1
    %p314 = por %p312, %p313
    %p316 = scmp.ne.s32.totalorder %s299, %s315
    %p317 = scmp.eq.s32.totalorder %s24, 0
    %p318 = por %p316, %p317
    %p319 = scmp.le.s32.totalorder 1, %s18
    %p320 = scmp.lt.s32.totalorder %s18, 3
    %p321 = pnand %p319, %p320
    %p322 = pneg %p321
    // Predicated region
    $region9: #{vivit_forward.11} parent=5 // pred_check
      _
    $region10: #{vivit_forward.11} parent=5 // pred_check_branch
      %324 = sbr.rel (%p321) target = $region12
    $region11: #{vivit_forward.11} parent=5 // pred_region
      %s325 = ssub.s32 %s18, 1
      // Predicated region
      $region13: #{vivit_forward.11} parent=11 // pred_check
        %p326 = pneg %p117
      $region14: #{vivit_forward.11} parent=11 // pred_check_branch
        %328 = sbr.rel (%p326) target = $region16
      $region15: #{vivit_forward.11} parent=11 // pred_region
        _
      $region16: #{vivit_forward.11} parent=11 // pred_fallthru
        _
      // Predicated region
      $region17: #{vivit_forward.11} parent=11 // pred_check
        %p329 = pneg %p138
      $region18: #{vivit_forward.11} parent=11 // pred_check_branch
        %331 = sbr.rel (%p329) target = $region20
      $region19: #{vivit_forward.11} parent=11 // pred_region
        _
      $region20: #{vivit_forward.11} parent=11 // pred_fallthru
        _
      // Predicated region
      $region21: #{vivit_forward.11} parent=11 // pred_check
        %p332 = pneg %p159
      $region22: #{vivit_forward.11} parent=11 // pred_check_branch
        %334 = sbr.rel (%p332) target = $region24
      $region23: #{vivit_forward.11} parent=11 // pred_region
        _
      $region24: #{vivit_forward.11} parent=11 // pred_fallthru
        _
      // Predicated region
      $region25: #{vivit_forward.11} parent=11 // pred_check
        %p335 = pneg %p180
      $region26: #{vivit_forward.11} parent=11 // pred_check_branch
        %337 = sbr.rel (%p335) target = $region28
      $region27: #{vivit_forward.11} parent=11 // pred_region
        _
      $region28: #{vivit_forward.11} parent=11 // pred_fallthru
        _
      // Predicated region
      $region29: #{vivit_forward.11} parent=11 // pred_check
        %p338 = pneg %p201
      $region30: #{vivit_forward.11} parent=11 // pred_check_branch
        %340 = sbr.rel (%p338) target = $region32
      $region31: #{vivit_forward.11} parent=11 // pred_region
        _
      $region32: #{vivit_forward.11} parent=11 // pred_fallthru
        _
      // Predicated region
      $region33: #{vivit_forward.11} parent=11 // pred_check
        %p341 = pneg %p222
      $region34: #{vivit_forward.11} parent=11 // pred_check_branch
        %343 = sbr.rel (%p341) target = $region36
      $region35: #{vivit_forward.11} parent=11 // pred_region
        _
      $region36: #{vivit_forward.11} parent=11 // pred_fallthru
        _
      // Predicated region
      $region37: #{vivit_forward.11} parent=11 // pred_check
        %p344 = pneg %p243
      $region38: #{vivit_forward.11} parent=11 // pred_check_branch
        %346 = sbr.rel (%p344) target = $region40
      $region39: #{vivit_forward.11} parent=11 // pred_region
        _
      $region40: #{vivit_forward.11} parent=11 // pred_fallthru
        _
      // Predicated region
      $region41: #{vivit_forward.11} parent=11 // pred_check
        %p347 = pneg %p264
      $region42: #{vivit_forward.11} parent=11 // pred_check_branch
        %349 = sbr.rel (%p347) target = $region44
      $region43: #{vivit_forward.11} parent=11 // pred_region
        _
      $region44: #{vivit_forward.11} parent=11 // pred_fallthru
        _
      // Predicated region
      $region45: #{vivit_forward.11} parent=11 // pred_check
        %p350 = pneg %p285
      $region46: #{vivit_forward.11} parent=11 // pred_check_branch
        %352 = sbr.rel (%p350) target = $region48
      $region47: #{vivit_forward.11} parent=11 // pred_region
        _
      $region48: #{vivit_forward.11} parent=11 // pred_fallthru
        _
    $region12: #{vivit_forward.11} parent=5 // pred_fallthru
      _
    %p353 = scmp.lt.s32.totalorder %s18, 2
    // Predicated region
    $region49: #{vivit_forward.11} parent=5 // pred_check
      %p354 = pneg %p353
    $region50: #{vivit_forward.11} parent=5 // pred_check_branch
      %356 = sbr.rel (%p354) target = $region52
    $region51: #{vivit_forward.11} parent=5 // pred_region
      // Predicated region
      $region53: #{vivit_forward.11} parent=51 // pred_check
        %p357 = pneg %p38
      $region54: #{vivit_forward.11} parent=51 // pred_check_branch
        %359 = sbr.rel (%p357) target = $region56
      $region55: #{vivit_forward.11} parent=51 // pred_region
        %s360 = smul.u32 8, %s18
        %p361 = scmp.lt.s32.totalorder %s360, 15
        %s362 = scalar_select %p361, %s360, 15
        %s363 = smul.addr %s362, 4
        %s364 = scalar_lea.vmem %s0, %s363
        %s365 = smul.u32 8, %s18
      $region56: #{vivit_forward.11} parent=51 // pred_fallthru
        _
      // Predicated region
      $region57: #{vivit_forward.11} parent=51 // pred_check
        %p366 = pneg %p64
      $region58: #{vivit_forward.11} parent=51 // pred_check_branch
        %368 = sbr.rel (%p366) target = $region60
      $region59: #{vivit_forward.11} parent=51 // pred_region
        %s369 = smul.u32 8, %s18
        %p370 = scmp.lt.s32.totalorder %s369, 15
        %s371 = scalar_select %p370, %s369, 15
        %s372 = smul.addr %s371, 4
        %s373 = scalar_lea.vmem %s1, %s372
        %s374 = smul.u32 8, %s18
      $region60: #{vivit_forward.11} parent=51 // pred_fallthru
        _
      // Predicated region
      $region61: #{vivit_forward.11} parent=51 // pred_check
        %p375 = pneg %p90
      $region62: #{vivit_forward.11} parent=51 // pred_check_branch
        %377 = sbr.rel (%p375) target = $region64
      $region63: #{vivit_forward.11} parent=51 // pred_region
        %s378 = smul.u32 8, %s18
        %p379 = scmp.lt.s32.totalorder %s378, 15
        %s380 = scalar_select %p379, %s378, 15
        %s381 = smul.addr %s380, 4
        %s382 = scalar_lea.vmem %s2, %s381
        %s383 = smul.u32 8, %s18
      $region64: #{vivit_forward.11} parent=51 // pred_fallthru
        _
    $region52: #{vivit_forward.11} parent=5 // pred_fallthru
      _
    %p384 = scmp.le.s32.totalorder 1, %s18
    %p385 = scmp.lt.s32.totalorder %s18, 3
    %p386 = pnand %p384, %p385
    %p387 = pneg %p386
    // Predicated region
    $region65: #{vivit_forward.11} parent=5 // pred_check
      _
    $region66: #{vivit_forward.11} parent=5 // pred_check_branch
      %389 = sbr.rel (%p386) target = $region68
    $region67: #{vivit_forward.11} parent=5 // pred_region
      %s390 = ssub.s32 %s18, 1
      %s391 = smul.u32 8, %s23
      %p392 = scmp.lt.s32.totalorder %s391, 15
      %s393 = scalar_select %p392, %s391, 15
      %s394 = smul.addr %s393, 4
      %s395 = scalar_lea.vmem %s0, %s394
      %p396 = pneg %p44
      %p397 = pneg %p41
      %s398 = smul.u32 8, %s23
      %p399 = scmp.lt.s32.totalorder %s398, 15
      %s400 = scalar_select %p399, %s398, 15
      %s401 = smul.addr %s400, 4
      %s402 = scalar_lea.vmem %s1, %s401
      %p403 = pneg %p70
      %p404 = pneg %p67
      %s405 = smul.u32 8, %s23
      %p406 = scmp.lt.s32.totalorder %s405, 15
      %s407 = scalar_select %p406, %s405, 15
      %s408 = smul.addr %s407, 4
      %s409 = scalar_lea.vmem %s2, %s408
      %p410 = pneg %p96
      %p411 = pneg %p93
      %p412 = pneg %p117
      %p413 = pneg %p114
      %p414 = pneg %p138
      %p415 = pneg %p135
      %p416 = pneg %p159
      %p417 = pneg %p156
      %p418 = pneg %p180
      %p419 = pneg %p177
      %p420 = pneg %p201
      %p421 = pneg %p198
      %p422 = pneg %p222
      %p423 = pneg %p219
      %p424 = pneg %p243
      %p425 = pneg %p240
      %p426 = pneg %p264
      %p427 = pneg %p261
      %p428 = pneg %p285
      %p429 = pneg %p282
      %p430 = pneg %p311
      %p431 = pneg %p308
      %s432 = smul.u32 8, %s23
      %p433 = scmp.lt.s32.totalorder %s432, 15
      %s434 = scalar_select %p433, %s432, 15
      %s435 = smul.addr %s434, 4
      %s436 = scalar_lea.vmem %s12, %s435
      %s437 = smul.u32 8, %s23
      %p438 = scmp.lt.s32.totalorder %s437, 15
      %s439 = scalar_select %p438, %s437, 15
      %s440 = smul.addr %s439, 4
      %s441 = scalar_lea.vmem %s0, %s440
      %s442 = smul.u32 8, %s23
      %s443 = smul.u32 8, %s23
      %p444 = scmp.lt.s32.totalorder %s443, 15
      %s445 = scalar_select %p444, %s443, 15
      %s446 = smul.addr %s445, 4
      %s447 = scalar_lea.vmem %s1, %s446
      %s448 = smul.u32 8, %s23
      %s449 = smul.u32 8, %s23
      %p450 = scmp.lt.s32.totalorder %s449, 15
      %s451 = scalar_select %p450, %s449, 15
      %s452 = smul.addr %s451, 4
      %s453 = scalar_lea.vmem %s2, %s452
      %s454 = smul.u32 8, %s23
      %s455 = smul.u32 8, %s23
      %p456 = scmp.lt.s32.totalorder %s455, 15
      %s457 = scalar_select %p456, %s455, 15
      %s458 = smul.addr %s457, 4
      %s459 = scalar_lea.vmem %s12, %s458
      %s460 = smul.u32 8, %s23
      %v462 = vld [vmem:[%s441] sm:$0xf]
      %v463 = vld [vmem:[%s441 + $0x4] sm:$0xf]
      %v464 = vld [vmem:[%s441 + $0x8] sm:$0xf]
      %v465 = vld [vmem:[%s441 + $0xc] sm:$0xf]
      %v466 = vld [vmem:[%s441 + $0x10] sm:$0xf]
      %v467 = vld [vmem:[%s441 + $0x14] sm:$0xf]
      %v468 = vld [vmem:[%s441 + $0x18] sm:$0xf]
      %v469 = vld [vmem:[%s441 + $0x1c] sm:$0xf]
      %v470 = vld [vmem:[%s3] sm:$0xf]
      %v471 = vld [vmem:[%s3 + $0x4] sm:$0xf]
      %v472 = vld [vmem:[%s3 + $0x8] sm:$0xf]
      %v473 = vld [vmem:[%s3 + $0xc] sm:$0xf]
      %v474 = vld [vmem:[%s447] sm:$0xf]
      %v475 = vld [vmem:[%s447 + $0x4] sm:$0xf]
      %v476 = vld [vmem:[%s447 + $0x8] sm:$0xf]
      %v477 = vld [vmem:[%s447 + $0xc] sm:$0xf]
      %v478 = vld [vmem:[%s447 + $0x10] sm:$0xf]
      %v479 = vld [vmem:[%s447 + $0x14] sm:$0xf]
      %v480 = vld [vmem:[%s447 + $0x18] sm:$0xf]
      %v481 = vld [vmem:[%s447 + $0x1c] sm:$0xf]
      %v482 = vld [vmem:[%s4] sm:$0xf]
      %v483 = vld [vmem:[%s4 + $0x4] sm:$0xf]
      %v484 = vld [vmem:[%s4 + $0x8] sm:$0xf]
      %v485 = vld [vmem:[%s4 + $0xc] sm:$0xf]
      %v494 = vunpack.c.l.b16 %v474
      %v495 = vunpack.c.l.b16 %v475
      %v496 = vunpack.c.l.b16 %v476
      %v497 = vunpack.c.l.b16 %v477
      %v498 = vunpack.c.l.b16 %v478
      %v499 = vunpack.c.l.b16 %v479
      %v500 = vunpack.c.l.b16 %v480
      %v501 = vunpack.c.l.b16 %v481
      %v502 = vpack.c.b16 %v495, %v494
      %v503 = vpack.c.b16 %v497, %v496
      %v504 = vpack.c.b16 %v499, %v498
      %v505 = vpack.c.b16 %v501, %v500
      %v510 = vunpack.c.l.b16 %v482
      %v511 = vunpack.c.l.b16 %v483
      %v512 = vunpack.c.l.b16 %v484
      %v513 = vunpack.c.l.b16 %v485
      %v514 = vpack.c.b16 %v511, %v510
      %v515 = vpack.c.b16 %v513, %v512
      %vm518 = vcmask 261120
      %v520 = vsel %vm518, %v502, 0
      %v523 = vsel %vm518, %v503, 0
      %v526 = vsel %vm518, %v504, 0
      %v529 = vsel %vm518, %v505, 0
      %531 = vmatprep.subr.bf16.mxu0 0
      %532 = vmatpush1.bf16.msra.mxu0 %v514
      %533 = vmatprep.subr.bf16.mxu0 0
      %534 = vmatpush1.bf16.msra.mxu0 %v515
      %535 = vmatprep.subr.bf16.mxu0 0
      %536 = vmatpush1.bf16.msra.mxu0 0
      %537 = vmatprep.subr.bf16.mxu0 0
      %538 = vmatpush1.bf16.msra.mxu0 0
      %539 = vmatprep.subr.bf16.mxu0 0
      %540 = vmatpush1.bf16.msra.mxu0 0
      %541 = vmatprep.subr.bf16.mxu0 0
      %542 = vmatpush1.bf16.msra.mxu0 0
      %543 = vmatprep.subr.bf16.mxu0 0
      %544 = vmatpush1.bf16.msra.mxu0 0
      %545 = vmatprep.subr.bf16.mxu0 0
      %546 = vmatpush1.bf16.msra.mxu0 0
      %547 = vmatprep.subr.bf16.mxu0 0
      %548 = vmatpush1.bf16.msra.mxu0 0
      %549 = vmatprep.subr.bf16.mxu0 0
      %550 = vmatpush1.bf16.msra.mxu0 0
      %551 = vmatprep.subr.bf16.mxu0 0
      %552 = vmatpush1.bf16.msra.mxu0 0
      %553 = vmatprep.subr.bf16.mxu0 0
      %554 = vmatpush1.bf16.msra.mxu0 0
      %555 = vmatprep.subr.bf16.mxu0 0
      %556 = vmatpush1.bf16.msra.mxu0 0
      %557 = vmatprep.subr.bf16.mxu0 0
      %558 = vmatpush1.bf16.msra.mxu0 0
      %559 = vmatprep.subr.bf16.mxu0 0
      %560 = vmatpush1.bf16.msra.mxu0 0
      %561 = vmatprep.subr.bf16.mxu0 0
      %562 = vmatpush1.bf16.msra.mxu0 0
      %563 = vmatprep.mubr.bf16.mxu0 0
      %564 = vmatmul.mubr.bf16.gmra.mrb[0].mxu0 %v520
      %v565 = vpop.f32.mrb[0].mxu0
      %v566 = vadd.f32 0.0, %v565
      %v567 = vpop.f32.mrb[0].mxu0
      %v568 = vpop.f32.mrb[0].mxu0
      %v569 = vadd.f32 0.0, %v568
      %v570 = vpop.f32.mrb[0].mxu0
      %571 = vmatprep.mubr.bf16.mxu0 0
      %572 = vmatmul.mubr.bf16.gmra.mrb[0].mxu0 %v523
      %v573 = vpop.f32.mrb[0].mxu0
      %v574 = vadd.f32 0.0, %v573
      %v575 = vpop.f32.mrb[0].mxu0
      %v576 = vpop.f32.mrb[0].mxu0
      %v577 = vadd.f32 0.0, %v576
      %v578 = vpop.f32.mrb[0].mxu0
      %579 = vmatprep.mubr.bf16.mxu0 0
      %580 = vmatmul.mubr.bf16.gmra.mrb[0].mxu0 %v526
      %v581 = vpop.f32.mrb[0].mxu0
      %v582 = vadd.f32 0.0, %v581
      %v583 = vpop.f32.mrb[0].mxu0
      %v584 = vpop.f32.mrb[0].mxu0
      %v585 = vadd.f32 0.0, %v584
      %v586 = vpop.f32.mrb[0].mxu0
      %587 = vmatprep.mubr.bf16.mxu0 0
      %588 = vmatmul.mubr.bf16.gmra.mrb[0].mxu0 %v529
      %v589 = vpop.f32.mrb[0].mxu0
      %v590 = vadd.f32 0.0, %v589
      %v591 = vpop.f32.mrb[0].mxu0
      %v592 = vpop.f32.mrb[0].mxu0
      %v593 = vadd.f32 0.0, %v592
      %v594 = vpop.f32.mrb[0].mxu0
      %595 = vdwg.mxu0
      %v604 = vunpack.c.l.b16 %v462
      %v605 = vunpack.c.l.b16 %v463
      %v606 = vunpack.c.l.b16 %v464
      %v607 = vunpack.c.l.b16 %v465
      %v608 = vunpack.c.l.b16 %v466
      %v609 = vunpack.c.l.b16 %v467
      %v610 = vunpack.c.l.b16 %v468
      %v611 = vunpack.c.l.b16 %v469
      %v612 = vpack.c.b16 %v605, %v604
      %v613 = vpack.c.b16 %v607, %v606
      %v614 = vpack.c.b16 %v609, %v608
      %v615 = vpack.c.b16 %v611, %v610
      %v620 = vunpack.c.l.b16 %v470
      %v621 = vunpack.c.l.b16 %v471
      %v622 = vunpack.c.l.b16 %v472
      %v623 = vunpack.c.l.b16 %v473
      %v624 = vpack.c.b16 %v621, %v620
      %v625 = vpack.c.b16 %v623, %v622
      %v629 = vsel %vm518, %v612, 0
      %v632 = vsel %vm518, %v613, 0
      %v635 = vsel %vm518, %v614, 0
      %v638 = vsel %vm518, %v615, 0
      %640 = vmatprep.subr.bf16.mxu0 0
      %641 = vmatpush1.bf16.msra.mxu0 %v624
      %642 = vmatprep.subr.bf16.mxu0 0
      %643 = vmatpush1.bf16.msra.mxu0 %v625
      %644 = vmatprep.subr.bf16.mxu0 0
      %645 = vmatpush1.bf16.msra.mxu0 0
      %646 = vmatprep.subr.bf16.mxu0 0
      %647 = vmatpush1.bf16.msra.mxu0 0
      %648 = vmatprep.subr.bf16.mxu0 0
      %649 = vmatpush1.bf16.msra.mxu0 0
      %650 = vmatprep.subr.bf16.mxu0 0
      %651 = vmatpush1.bf16.msra.mxu0 0
      %652 = vmatprep.subr.bf16.mxu0 0
      %653 = vmatpush1.bf16.msra.mxu0 0
      %654 = vmatprep.subr.bf16.mxu0 0
      %655 = vmatpush1.bf16.msra.mxu0 0
      %656 = vmatprep.subr.bf16.mxu0 0
      %657 = vmatpush1.bf16.msra.mxu0 0
      %658 = vmatprep.subr.bf16.mxu0 0
      %659 = vmatpush1.bf16.msra.mxu0 0
      %660 = vmatprep.subr.bf16.mxu0 0
      %661 = vmatpush1.bf16.msra.mxu0 0
      %662 = vmatprep.subr.bf16.mxu0 0
      %663 = vmatpush1.bf16.msra.mxu0 0
      %664 = vmatprep.subr.bf16.mxu0 0
      %665 = vmatpush1.bf16.msra.mxu0 0
      %666 = vmatprep.subr.bf16.mxu0 0
      %667 = vmatpush1.bf16.msra.mxu0 0
      %668 = vmatprep.subr.bf16.mxu0 0
      %669 = vmatpush1.bf16.msra.mxu0 0
      %670 = vmatprep.subr.bf16.mxu0 0
      %671 = vmatpush1.bf16.msra.mxu0 0
      %672 = vmatprep.mubr.bf16.mxu0 0
      %673 = vmatmul.mubr.bf16.gmra.mrb[0].mxu0 %v629
      %v674 = vpop.f32.mrb[0].mxu0
      %v675 = vadd.f32 %v566, %v674
      %v676 = vpop.f32.mrb[0].mxu0
      %v677 = vpop.f32.mrb[0].mxu0
      %v678 = vadd.f32 %v569, %v677
      %v679 = vpop.f32.mrb[0].mxu0
      %680 = vmatprep.mubr.bf16.mxu0 0
      %681 = vmatmul.mubr.bf16.gmra.mrb[0].mxu0 %v632
      %v682 = vpop.f32.mrb[0].mxu0
      %v683 = vadd.f32 %v574, %v682
      %v684 = vpop.f32.mrb[0].mxu0
      %v685 = vpop.f32.mrb[0].mxu0
      %v686 = vadd.f32 %v577, %v685
      %v687 = vpop.f32.mrb[0].mxu0
      %688 = vmatprep.mubr.bf16.mxu0 0
      %689 = vmatmul.mubr.bf16.gmra.mrb[0].mxu0 %v635
      %v690 = vpop.f32.mrb[0].mxu0
      %v691 = vadd.f32 %v582, %v690
      %v692 = vpop.f32.mrb[0].mxu0
      %v693 = vpop.f32.mrb[0].mxu0
      %v694 = vadd.f32 %v585, %v693
      %v695 = vpop.f32.mrb[0].mxu0
      %696 = vmatprep.mubr.bf16.mxu0 0
      %697 = vmatmul.mubr.bf16.gmra.mrb[0].mxu0 %v638
      %v698 = vpop.f32.mrb[0].mxu0
      %v699 = vadd.f32 %v590, %v698
      %v700 = vpop.f32.mrb[0].mxu0
      %v701 = vpop.f32.mrb[0].mxu0
      %v702 = vadd.f32 %v593, %v701
      %v703 = vpop.f32.mrb[0].mxu0
      %704 = vdwg.mxu0
      %v705 = vld [vmem:[%s5] sm:$0x1]
      %v707 = vlaneseq
      %v708 = vshrl.u32 %v707, 7
      %v709 = vsub.s32 0, %v708
      %v710 = vrot.slane %v705, %v709
      %v712 = vadd.f32 %v675, %v710
      %v713 = vadd.f32 %v678, %v710
      %v714 = vadd.f32 %v683, %v710
      %v715 = vadd.f32 %v686, %v710
      %v716 = vadd.f32 %v691, %v710
      %v717 = vadd.f32 %v694, %v710
      %v718 = vadd.f32 %v699, %v710
      %v719 = vadd.f32 %v702, %v710
      %v720 = vld [vmem:[%s453] sm:$0xf]
      %v721 = vld [vmem:[%s453 + $0x4] sm:$0xf]
      %v722 = vld [vmem:[%s453 + $0x8] sm:$0xf]
      %v723 = vld [vmem:[%s453 + $0xc] sm:$0xf]
      %v724 = vld [vmem:[%s453 + $0x10] sm:$0xf]
      %v725 = vld [vmem:[%s453 + $0x14] sm:$0xf]
      %v726 = vld [vmem:[%s453 + $0x18] sm:$0xf]
      %v727 = vld [vmem:[%s453 + $0x1c] sm:$0xf]
      %v728 = vunpack.c.l.bf16 %v720
      %v729 = vunpack.c.l.bf16 %v721
      %v730 = vunpack.c.l.bf16 %v722
      %v731 = vunpack.c.l.bf16 %v723
      %v732 = vunpack.c.l.bf16 %v724
      %v733 = vunpack.c.l.bf16 %v725
      %v734 = vunpack.c.l.bf16 %v726
      %v735 = vunpack.c.l.bf16 %v727
      %v736 = vadd.f32 %v712, %v728
      %v737 = vadd.f32 %v713, %v729
      %v738 = vadd.f32 %v714, %v730
      %v739 = vadd.f32 %v715, %v731
      %v740 = vadd.f32 %v716, %v732
      %v741 = vadd.f32 %v717, %v733
      %v742 = vadd.f32 %v718, %v734
      %v743 = vadd.f32 %v719, %v735
      %v744 = vsel %vm518, %v736, 0.0
      %745 = vadd.xlane.f32.xlu0 %v744
      %v746 = vpop.xlane.xlu0 %745
      %v747 = vsel %vm518, %v737, 0.0
      %748 = vadd.xlane.f32.xlu0 %v747
      %v749 = vpop.xlane.xlu0 %748
      %v750 = vsel %vm518, %v738, 0.0
      %751 = vadd.xlane.f32.xlu0 %v750
      %v752 = vpop.xlane.xlu0 %751
      %v753 = vsel %vm518, %v739, 0.0
      %754 = vadd.xlane.f32.xlu0 %v753
      %v755 = vpop.xlane.xlu0 %754
      %v756 = vsel %vm518, %v740, 0.0
      %757 = vadd.xlane.f32.xlu0 %v756
      %v758 = vpop.xlane.xlu0 %757
      %v759 = vsel %vm518, %v741, 0.0
      %760 = vadd.xlane.f32.xlu0 %v759
      %v761 = vpop.xlane.xlu0 %760
      %v762 = vsel %vm518, %v742, 0.0
      %763 = vadd.xlane.f32.xlu0 %v762
      %v764 = vpop.xlane.xlu0 %763
      %v765 = vsel %vm518, %v743, 0.0
      %766 = vadd.xlane.f32.xlu0 %v765
      %v767 = vpop.xlane.xlu0 %766
      %v768 = vrcp.pop 32.0
      %v769 = vmul.f32 %v746, %v768
      %v770 = vmul.f32 %v749, %v768
      %v771 = vmul.f32 %v752, %v768
      %v772 = vmul.f32 %v755, %v768
      %v773 = vmul.f32 %v758, %v768
      %v774 = vmul.f32 %v761, %v768
      %v775 = vmul.f32 %v764, %v768
      %v776 = vmul.f32 %v767, %v768
      %v777 = vsub.f32 %v736, %v769
      %v778 = vsub.f32 %v737, %v770
      %v779 = vsub.f32 %v738, %v771
      %v780 = vsub.f32 %v739, %v772
      %v781 = vsub.f32 %v740, %v773
      %v782 = vsub.f32 %v741, %v774
      %v783 = vsub.f32 %v742, %v775
      %v784 = vsub.f32 %v743, %v776
      %v785 = vmul.f32 %v777, %v777
      %v786 = vmul.f32 %v778, %v778
      %v787 = vmul.f32 %v779, %v779
      %v788 = vmul.f32 %v780, %v780
      %v789 = vmul.f32 %v781, %v781
      %v790 = vmul.f32 %v782, %v782
      %v791 = vmul.f32 %v783, %v783
      %v792 = vmul.f32 %v784, %v784
      %v793 = vsel %vm518, %v785, 0.0
      %794 = vadd.xlane.f32.xlu0 %v793
      %v795 = vpop.xlane.xlu0 %794
      %v796 = vsel %vm518, %v786, 0.0
      %797 = vadd.xlane.f32.xlu0 %v796
      %v798 = vpop.xlane.xlu0 %797
      %v799 = vsel %vm518, %v787, 0.0
      %800 = vadd.xlane.f32.xlu0 %v799
      %v801 = vpop.xlane.xlu0 %800
      %v802 = vsel %vm518, %v788, 0.0
      %803 = vadd.xlane.f32.xlu0 %v802
      %v804 = vpop.xlane.xlu0 %803
      %v805 = vsel %vm518, %v789, 0.0
      %806 = vadd.xlane.f32.xlu0 %v805
      %v807 = vpop.xlane.xlu0 %806
      %v808 = vsel %vm518, %v790, 0.0
      %809 = vadd.xlane.f32.xlu0 %v808
      %v810 = vpop.xlane.xlu0 %809
      %v811 = vsel %vm518, %v791, 0.0
      %812 = vadd.xlane.f32.xlu0 %v811
      %v813 = vpop.xlane.xlu0 %812
      %v814 = vsel %vm518, %v792, 0.0
      %815 = vadd.xlane.f32.xlu0 %v814
      %v816 = vpop.xlane.xlu0 %815
      %v817 = vmul.f32 %v795, %v768
      %v818 = vmul.f32 %v798, %v768
      %v819 = vmul.f32 %v801, %v768
      %v820 = vmul.f32 %v804, %v768
      %v821 = vmul.f32 %v807, %v768
      %v822 = vmul.f32 %v810, %v768
      %v823 = vmul.f32 %v813, %v768
      %v824 = vmul.f32 %v816, %v768
      %v825 = vadd.f32 %v817, 1e-05
      %v826 = vadd.f32 %v818, 1e-05
      %v827 = vadd.f32 %v819, 1e-05
      %v828 = vadd.f32 %v820, 1e-05
      %v829 = vadd.f32 %v821, 1e-05
      %v830 = vadd.f32 %v822, 1e-05
      %v831 = vadd.f32 %v823, 1e-05
      %v832 = vadd.f32 %v824, 1e-05
      %v833 = vrsqrt.pop %v825
      %v834 = vrsqrt.pop %v826
      %v835 = vrsqrt.pop %v827
      %v836 = vrsqrt.pop %v828
      %v837 = vrsqrt.pop %v829
      %v838 = vrsqrt.pop %v830
      %v839 = vrsqrt.pop %v831
      %v840 = vrsqrt.pop %v832
      %v841 = vmul.f32 %v777, %v833
      %v842 = vmul.f32 %v778, %v834
      %v843 = vmul.f32 %v779, %v835
      %v844 = vmul.f32 %v780, %v836
      %v845 = vmul.f32 %v781, %v837
      %v846 = vmul.f32 %v782, %v838
      %v847 = vmul.f32 %v783, %v839
      %v848 = vmul.f32 %v784, %v840
      %v849 = vld [vmem:[%s6] sm:$0x1]
      %v851 = vlaneseq
      %v852 = vshrl.u32 %v851, 7
      %v853 = vsub.s32 0, %v852
      %v854 = vrot.slane %v849, %v853
      %v856 = vmul.f32 %v841, %v854
      %v857 = vmul.f32 %v842, %v854
      %v858 = vmul.f32 %v843, %v854
      %v859 = vmul.f32 %v844, %v854
      %v860 = vmul.f32 %v845, %v854
      %v861 = vmul.f32 %v846, %v854
      %v862 = vmul.f32 %v847, %v854
      %v863 = vmul.f32 %v848, %v854
      %v864 = vld [vmem:[%s7] sm:$0x1]
      %v866 = vlaneseq
      %v867 = vshrl.u32 %v866, 7
      %v868 = vsub.s32 0, %v867
      %v869 = vrot.slane %v864, %v868
      %v871 = vadd.f32 %v856, %v869
      %v872 = vadd.f32 %v857, %v869
      %v873 = vadd.f32 %v858, %v869
      %v874 = vadd.f32 %v859, %v869
      %v875 = vadd.f32 %v860, %v869
      %v876 = vadd.f32 %v861, %v869
      %v877 = vadd.f32 %v862, %v869
      %v878 = vadd.f32 %v863, %v869
      %v879 = vpack.c.bf16 %v872, %v871
      %v880 = vpack.c.bf16 %v874, %v873
      %v881 = vpack.c.bf16 %v876, %v875
      %v882 = vpack.c.bf16 %v878, %v877
      %v883 = vld [vmem:[%s8] sm:$0xf]
      %v884 = vld [vmem:[%s8 + $0x4] sm:$0xf]
      %v885 = vld [vmem:[%s8 + $0x8] sm:$0xf]
      %v886 = vld [vmem:[%s8 + $0xc] sm:$0xf]
      %v887 = vld [vmem:[%s9] sm:$0x1]
      %v889 = vlaneseq
      %v890 = vshrl.u32 %v889, 7
      %v891 = vsub.s32 0, %v890
      %v892 = vrot.slane %v887, %v891
      %v898 = vunpack.c.l.b16 %v883
      %v899 = vunpack.c.l.b16 %v884
      %v900 = vunpack.c.l.b16 %v885
      %v901 = vunpack.c.l.b16 %v886
      %v902 = vpack.c.b16 %v899, %v898
      %v903 = vpack.c.b16 %v901, %v900
      %v907 = vsel %vm518, %v879, 0
      %v910 = vsel %vm518, %v880, 0
      %v913 = vsel %vm518, %v881, 0
      %v916 = vsel %vm518, %v882, 0
      %918 = vmatprep.subr.bf16.mxu0 0
      %919 = vmatpush1.bf16.msra.mxu0 %v902
      %920 = vmatprep.subr.bf16.mxu0 0
      %921 = vmatpush1.bf16.msra.mxu0 %v903
      %922 = vmatprep.subr.bf16.mxu0 0
      %923 = vmatpush1.bf16.msra.mxu0 0
      %924 = vmatprep.subr.bf16.mxu0 0
      %925 = vmatpush1.bf16.msra.mxu0 0
      %926 = vmatprep.subr.bf16.mxu0 0
      %927 = vmatpush1.bf16.msra.mxu0 0
      %928 = vmatprep.subr.bf16.mxu0 0
      %929 = vmatpush1.bf16.msra.mxu0 0
      %930 = vmatprep.subr.bf16.mxu0 0
      %931 = vmatpush1.bf16.msra.mxu0 0
      %932 = vmatprep.subr.bf16.mxu0 0
      %933 = vmatpush1.bf16.msra.mxu0 0
      %934 = vmatprep.subr.bf16.mxu0 0
      %935 = vmatpush1.bf16.msra.mxu0 0
      %936 = vmatprep.subr.bf16.mxu0 0
      %937 = vmatpush1.bf16.msra.mxu0 0
      %938 = vmatprep.subr.bf16.mxu0 0
      %939 = vmatpush1.bf16.msra.mxu0 0
      %940 = vmatprep.subr.bf16.mxu0 0
      %941 = vmatpush1.bf16.msra.mxu0 0
      %942 = vmatprep.subr.bf16.mxu0 0
      %943 = vmatpush1.bf16.msra.mxu0 0
      %944 = vmatprep.subr.bf16.mxu0 0
      %945 = vmatpush1.bf16.msra.mxu0 0
      %946 = vmatprep.subr.bf16.mxu0 0
      %947 = vmatpush1.bf16.msra.mxu0 0
      %948 = vmatprep.subr.bf16.mxu0 0
      %949 = vmatpush1.bf16.msra.mxu0 0
      %950 = vmatprep.mubr.bf16.mxu0 0
      %951 = vmatmul.mubr.bf16.gmra.mrb[0].mxu0 %v907
      %v952 = vpop.f32.mrb[0].mxu0
      %v953 = vadd.f32 %v892, %v952
      %v954 = vpop.f32.mrb[0].mxu0
      %v955 = vpop.f32.mrb[0].mxu0
      %v956 = vadd.f32 %v892, %v955
      %v957 = vpop.f32.mrb[0].mxu0
      %958 = vmatprep.mubr.bf16.mxu0 0
      %959 = vmatmul.mubr.bf16.gmra.mrb[0].mxu0 %v910
      %v960 = vpop.f32.mrb[0].mxu0
      %v961 = vadd.f32 %v892, %v960
      %v962 = vpop.f32.mrb[0].mxu0
      %v963 = vpop.f32.mrb[0].mxu0
      %v964 = vadd.f32 %v892, %v963
      %v965 = vpop.f32.mrb[0].mxu0
      %966 = vmatprep.mubr.bf16.mxu0 0
      %967 = vmatmul.mubr.bf16.gmra.mrb[0].mxu0 %v913
      %v968 = vpop.f32.mrb[0].mxu0
      %v969 = vadd.f32 %v892, %v968
      %v970 = vpop.f32.mrb[0].mxu0
      %v971 = vpop.f32.mrb[0].mxu0
      %v972 = vadd.f32 %v892, %v971
      %v973 = vpop.f32.mrb[0].mxu0
      %974 = vmatprep.mubr.bf16.mxu0 0
      %975 = vmatmul.mubr.bf16.gmra.mrb[0].mxu0 %v916
      %v976 = vpop.f32.mrb[0].mxu0
      %v977 = vadd.f32 %v892, %v976
      %v978 = vpop.f32.mrb[0].mxu0
      %v979 = vpop.f32.mrb[0].mxu0
      %v980 = vadd.f32 %v892, %v979
      %v981 = vpop.f32.mrb[0].mxu0
      %982 = vdwg.mxu0
      %v983 = vmul.f32 %v953, 0.5
      %v984 = vmul.f32 %v956, 0.5
      %v985 = vmul.f32 %v961, 0.5
      %v986 = vmul.f32 %v964, 0.5
      %v987 = vmul.f32 %v969, 0.5
      %v988 = vmul.f32 %v972, 0.5
      %v989 = vmul.f32 %v977, 0.5
      %v990 = vmul.f32 %v980, 0.5
      %v991 = vmul.f32 %v953, 0.70710677
      %v992 = vmul.f32 %v956, 0.70710677
      %v993 = vmul.f32 %v961, 0.70710677
      %v994 = vmul.f32 %v964, 0.70710677
      %v995 = vmul.f32 %v969, 0.70710677
      %v996 = vmul.f32 %v972, 0.70710677
      %v997 = vmul.f32 %v977, 0.70710677
      %v998 = vmul.f32 %v980, 0.70710677
      %v999 = verf.f32.pop %v991
      %v1000 = verf.f32.pop %v992
      %v1001 = verf.f32.pop %v993
      %v1002 = verf.f32.pop %v994
      %v1003 = verf.f32.pop %v995
      %v1004 = verf.f32.pop %v996
      %v1005 = verf.f32.pop %v997
      %v1006 = verf.f32.pop %v998
      %v1007 = vadd.f32 %v999, 1.0
      %v1008 = vadd.f32 %v1000, 1.0
      %v1009 = vadd.f32 %v1001, 1.0
      %v1010 = vadd.f32 %v1002, 1.0
      %v1011 = vadd.f32 %v1003, 1.0
      %v1012 = vadd.f32 %v1004, 1.0
      %v1013 = vadd.f32 %v1005, 1.0
      %v1014 = vadd.f32 %v1006, 1.0
      %v1015 = vmul.f32 %v983, %v1007
      %v1016 = vmul.f32 %v984, %v1008
      %v1017 = vmul.f32 %v985, %v1009
      %v1018 = vmul.f32 %v986, %v1010
      %v1019 = vmul.f32 %v987, %v1011
      %v1020 = vmul.f32 %v988, %v1012
      %v1021 = vmul.f32 %v989, %v1013
      %v1022 = vmul.f32 %v990, %v1014
      %v1023 = vpack.c.bf16 %v1016, %v1015
      %v1024 = vpack.c.bf16 %v1018, %v1017
      %v1025 = vpack.c.bf16 %v1020, %v1019
      %v1026 = vpack.c.bf16 %v1022, %v1021
      %v1027 = vld [vmem:[%s10] sm:$0xf]
      %v1028 = vld [vmem:[%s10 + $0x4] sm:$0xf]
      %v1029 = vld [vmem:[%s10 + $0x8] sm:$0xf]
      %v1030 = vld [vmem:[%s10 + $0xc] sm:$0xf]
      %v1031 = vld [vmem:[%s10 + $0x10] sm:$0xf]
      %v1032 = vld [vmem:[%s10 + $0x14] sm:$0xf]
      %v1033 = vld [vmem:[%s10 + $0x18] sm:$0xf]
      %v1034 = vld [vmem:[%s10 + $0x1c] sm:$0xf]
      %v1035 = vld [vmem:[%s11] sm:$0x1]
      %v1037 = vlaneseq
      %v1038 = vshrl.u32 %v1037, 7
      %v1039 = vsub.s32 0, %v1038
      %v1040 = vrot.slane %v1035, %v1039
      %v1050 = vunpack.c.l.b16 %v1027
      %v1051 = vunpack.c.l.b16 %v1028
      %v1052 = vunpack.c.l.b16 %v1029
      %v1053 = vunpack.c.l.b16 %v1030
      %v1054 = vunpack.c.l.b16 %v1031
      %v1055 = vunpack.c.l.b16 %v1032
      %v1056 = vunpack.c.l.b16 %v1033
      %v1057 = vunpack.c.l.b16 %v1034
      %v1058 = vpack.c.b16 %v1051, %v1050
      %v1059 = vpack.c.b16 %v1053, %v1052
      %v1060 = vpack.c.b16 %v1055, %v1054
      %v1061 = vpack.c.b16 %v1057, %v1056
      %vm1066 = vcmask 523264
      %v1068 = vsel %vm1066, %v1023, 0
      %v1071 = vsel %vm1066, %v1024, 0
      %v1074 = vsel %vm1066, %v1025, 0
      %v1077 = vsel %vm1066, %v1026, 0
      %1079 = vmatprep.subr.bf16.mxu0 0
      %1080 = vmatpush1.bf16.msra.mxu0 %v1058
      %1081 = vmatprep.subr.bf16.mxu0 0
      %1082 = vmatpush1.bf16.msra.mxu0 %v1059
      %1083 = vmatprep.subr.bf16.mxu0 0
      %1084 = vmatpush1.bf16.msra.mxu0 %v1060
      %1085 = vmatprep.subr.bf16.mxu0 0
      %1086 = vmatpush1.bf16.msra.mxu0 %v1061
      %1087 = vmatprep.subr.bf16.mxu0 0
      %1088 = vmatpush1.bf16.msra.mxu0 0
      %1089 = vmatprep.subr.bf16.mxu0 0
      %1090 = vmatpush1.bf16.msra.mxu0 0
      %1091 = vmatprep.subr.bf16.mxu0 0
      %1092 = vmatpush1.bf16.msra.mxu0 0
      %1093 = vmatprep.subr.bf16.mxu0 0
      %1094 = vmatpush1.bf16.msra.mxu0 0
      %1095 = vmatprep.subr.bf16.mxu0 0
      %1096 = vmatpush1.bf16.msra.mxu0 0
      %1097 = vmatprep.subr.bf16.mxu0 0
      %1098 = vmatpush1.bf16.msra.mxu0 0
      %1099 = vmatprep.subr.bf16.mxu0 0
      %1100 = vmatpush1.bf16.msra.mxu0 0
      %1101 = vmatprep.subr.bf16.mxu0 0
      %1102 = vmatpush1.bf16.msra.mxu0 0
      %1103 = vmatprep.subr.bf16.mxu0 0
      %1104 = vmatpush1.bf16.msra.mxu0 0
      %1105 = vmatprep.subr.bf16.mxu0 0
      %1106 = vmatpush1.bf16.msra.mxu0 0
      %1107 = vmatprep.subr.bf16.mxu0 0
      %1108 = vmatpush1.bf16.msra.mxu0 0
      %1109 = vmatprep.subr.bf16.mxu0 0
      %1110 = vmatpush1.bf16.msra.mxu0 0
      %1111 = vmatprep.mubr.bf16.mxu0 0
      %1112 = vmatmul.mubr.bf16.gmra.mrb[0].mxu0 %v1068
      %v1113 = vpop.f32.mrb[0].mxu0
      %v1114 = vadd.f32 %v1040, %v1113
      %v1115 = vpop.f32.mrb[0].mxu0
      %v1116 = vpop.f32.mrb[0].mxu0
      %v1117 = vadd.f32 %v1040, %v1116
      %v1118 = vpop.f32.mrb[0].mxu0
      %1119 = vmatprep.mubr.bf16.mxu0 0
      %1120 = vmatmul.mubr.bf16.gmra.mrb[0].mxu0 %v1071
      %v1121 = vpop.f32.mrb[0].mxu0
      %v1122 = vadd.f32 %v1040, %v1121
      %v1123 = vpop.f32.mrb[0].mxu0
      %v1124 = vpop.f32.mrb[0].mxu0
      %v1125 = vadd.f32 %v1040, %v1124
      %v1126 = vpop.f32.mrb[0].mxu0
      %1127 = vmatprep.mubr.bf16.mxu0 0
      %1128 = vmatmul.mubr.bf16.gmra.mrb[0].mxu0 %v1074
      %v1129 = vpop.f32.mrb[0].mxu0
      %v1130 = vadd.f32 %v1040, %v1129
      %v1131 = vpop.f32.mrb[0].mxu0
      %v1132 = vpop.f32.mrb[0].mxu0
      %v1133 = vadd.f32 %v1040, %v1132
      %v1134 = vpop.f32.mrb[0].mxu0
      %1135 = vmatprep.mubr.bf16.mxu0 0
      %1136 = vmatmul.mubr.bf16.gmra.mrb[0].mxu0 %v1077
      %v1137 = vpop.f32.mrb[0].mxu0
      %v1138 = vadd.f32 %v1040, %v1137
      %v1139 = vpop.f32.mrb[0].mxu0
      %v1140 = vpop.f32.mrb[0].mxu0
      %v1141 = vadd.f32 %v1040, %v1140
      %v1142 = vpop.f32.mrb[0].mxu0
      %1143 = vdwg.mxu0
      %v1144 = vadd.f32 %v1114, %v736
      %v1145 = vadd.f32 %v1117, %v737
      %v1146 = vadd.f32 %v1122, %v738
      %v1147 = vadd.f32 %v1125, %v739
      %v1148 = vadd.f32 %v1130, %v740
      %v1149 = vadd.f32 %v1133, %v741
      %v1150 = vadd.f32 %v1138, %v742
      %v1151 = vadd.f32 %v1141, %v743
      %v1152 = vpack.c.bf16 %v1145, %v1144
      %v1153 = vpack.c.bf16 %v1147, %v1146
      %v1154 = vpack.c.bf16 %v1149, %v1148
      %v1155 = vpack.c.bf16 %v1151, %v1150
      %v1160 = vunpack.c.l.b16 %v1152
      %v1161 = vunpack.c.h.b16 %v1152
      %v1162 = vunpack.c.l.b16 %v1153
      %v1163 = vunpack.c.h.b16 %v1153
      %v1164 = vunpack.c.l.b16 %v1154
      %v1165 = vunpack.c.h.b16 %v1154
      %v1166 = vunpack.c.l.b16 %v1155
      %v1167 = vunpack.c.h.b16 %v1155
      %v1168 = vpack.c.b16 %v1160, %v1160
      %v1169 = vpack.c.b16 %v1161, %v1161
      %v1170 = vpack.c.b16 %v1162, %v1162
      %v1171 = vpack.c.b16 %v1163, %v1163
      %v1172 = vpack.c.b16 %v1164, %v1164
      %v1173 = vpack.c.b16 %v1165, %v1165
      %v1174 = vpack.c.b16 %v1166, %v1166
      %v1175 = vpack.c.b16 %v1167, %v1167
      %vm1184 = vcmask 257024
      %1185 = vst.msk [vmem:[%s459] sm:$0xf] %vm1184, %v1168
      %1186 = vst.msk [vmem:[%s459 + $0x4] sm:$0xf] %vm1184, %v1169
      %1187 = vst.msk [vmem:[%s459 + $0x8] sm:$0xf] %vm1184, %v1170
      %1188 = vst.msk [vmem:[%s459 + $0xc] sm:$0xf] %vm1184, %v1171
      %1189 = vst.msk [vmem:[%s459 + $0x10] sm:$0xf] %vm1184, %v1172
      %1190 = vst.msk [vmem:[%s459 + $0x14] sm:$0xf] %vm1184, %v1173
      %1191 = vst.msk [vmem:[%s459 + $0x18] sm:$0xf] %vm1184, %v1174
      %1192 = vst.msk [vmem:[%s459 + $0x1c] sm:$0xf] %vm1184, %v1175
      %s1193 = smul.u32 8, %s23
      %p1194 = scmp.lt.s32.totalorder %s1193, 15
      %s1195 = scalar_select %p1194, %s1193, 15
      %s1196 = smul.addr %s1195, 4
      %s1197 = scalar_lea.vmem %s12, %s1196
      // Predicated region
      $region69: #{vivit_forward.11} parent=67 // pred_check
        %p1198 = pneg %p308
      $region70: #{vivit_forward.11} parent=67 // pred_check_branch
        %1200 = sbr.rel (%p1198) target = $region72
      $region71: #{vivit_forward.11} parent=67 // pred_region
        %s1201 = smul.u32 8, %s23
      $region72: #{vivit_forward.11} parent=67 // pred_fallthru
        _
    $region68: #{vivit_forward.11} parent=5 // pred_fallthru
      _
    %p1202 = scmp.le.s32.totalorder 2, %s18
    // Predicated region
    $region73: #{vivit_forward.11} parent=5 // pred_check
      %p1203 = pneg %p1202
    $region74: #{vivit_forward.11} parent=5 // pred_check_branch
      %1205 = sbr.rel (%p1203) target = $region76
    $region75: #{vivit_forward.11} parent=5 // pred_region
      %s1206 = ssub.s32 %s18, 2
      // Predicated region
      $region77: #{vivit_forward.11} parent=75 // pred_check
        %p1207 = pneg %p314
      $region78: #{vivit_forward.11} parent=75 // pred_check_branch
        %1209 = sbr.rel (%p1207) target = $region80
      $region79: #{vivit_forward.11} parent=75 // pred_region
        %s1210 = smul.u32 8, %s24
        %p1211 = scmp.lt.s32.totalorder %s1210, 15
        %s1212 = scalar_select %p1211, %s1210, 15
        %s1213 = smul.addr %s1212, 4
        %s1214 = scalar_lea.vmem %s12, %s1213
      $region80: #{vivit_forward.11} parent=75 // pred_fallthru
        _
    $region76: #{vivit_forward.11} parent=5 // pred_fallthru
      _
  $region6: #{vivit_forward.11} parent=0 // loop_footer
    %s22 = sadd.s32 1, %s18
  $region7: #{vivit_forward.11} parent=0 // loop_footer_branch
    %17 = sbr.rel target = $region3
  $region8: #{vivit_forward.11} parent=0 // loop_exit
    _

// kernel: vivit_forward.10
$region0: #{vivit_forward.10}
  #allocation0 [shape = 'u32[]', space=smem, size = 0x4, offset = 0x4, fixed_abs, tag = 'smem constant byte address 0x4 - core index']
  #allocation1 [shape = 'u32[144,128]{1,0:T(1,128)}', space=vmem, size = 0x12000, scoped, tag = 'internal scratch']
  %s0 = inlined_call_operand.vmem [shape: bf16[2,4,16,32], index: 0, kind: input, shape index: {}]
  %s1 = inlined_call_operand.vmem [shape: f32[1,32], index: 1, kind: input, shape index: {}]
  %s2 = inlined_call_operand.vmem [shape: f32[1,32], index: 2, kind: input, shape index: {}]
  %s3 = inlined_call_operand.vmem [shape: bf16[2,32,16], index: 3, kind: input, shape index: {}]
  %s4 = inlined_call_operand.vmem [shape: bf16[2,32,16], index: 4, kind: input, shape index: {}]
  %s5 = inlined_call_operand.vmem [shape: bf16[2,32,16], index: 5, kind: input, shape index: {}]
  %s6 = inlined_call_operand.vmem [shape: bf16[2,4,16,32], index: 6, kind: output, shape index: {}]
  %s7 = sld [smem:[#allocation0]]
  $region57: #{vivit_forward.10} parent=0
    _
  %s9 = ssub.s32 1, %s7
  %s10 = scalar_select 0, %s9, %s7
  loop: start=0, step=1, limit=4
  $region2: #{vivit_forward.10} parent=0 // loop_pre_header
    _
  $region3: #{vivit_forward.10} parent=0 // loop_header
    %s12 = sphi 0, %s16
    %p13 = scmp.ge.s32.totalorder %s12, 4
    %s19 = sphi 0, %s31
    %s20 = sphi 0, %s27
    %s21 = sphi 0, %s19
    %s22 = sphi 0, %s20
    %s23 = sphi 0, %s21
    %s24 = sphi 0, %s22
    %s36 = sphi 0, %s38
    %s39 = sphi 0, %s36
    %s40 = sphi 0, %s39
    %s56 = sphi 0, %s40
    %s60 = sphi 0, %s60
    %s62 = sphi 0, %s60
    %s63 = sphi 0, %s62
    %s77 = sphi 0, %s63
    %s81 = sphi 0, %s81
    %s83 = sphi 0, %s81
    %s84 = sphi 0, %s83
    %s98 = sphi 0, %s84
    %s102 = sphi 0, %s102
    %s104 = sphi 0, %s102
    %s105 = sphi 0, %s104
    %s119 = sphi 0, %s105
    %s123 = sphi 0, %s123
    %s125 = sphi 0, %s123
    %s126 = sphi 0, %s125
    %s140 = sphi 0, %s126
    %s144 = sphi 0, %s144
    %s146 = sphi 0, %s144
    %s147 = sphi 0, %s146
    %s161 = sphi 0, %s147
    %s169 = sphi 0, %s171
    %s172 = sphi 0, %s169
    %s173 = sphi 0, %s172
    %s189 = sphi 0, %s173
  $region4: #{vivit_forward.10} parent=0 // loop_header_branch
    %15 = sbr.rel (%p13) target = $region8
  $region5: #{vivit_forward.10} parent=0 // loop_body
    %s17 = ssub.s32 %s12, 1
    %s18 = ssub.s32 %s12, 2
    %s25 = sadd.s32 1, %s20
    %p26 = scmp.ge.s32.totalorder %s25, 1
    %s27 = scalar_select %p26, 0, %s25
    %s28 = sadd.s32 1, %s19
    %s29 = scalar_select %p26, %s28, %s19
    %p30 = scmp.ge.s32.totalorder %s29, 2
    %s31 = scalar_select %p30, 0, %s29
    %s32 = ssub.s32 %s19, %s31
    %s33 = ssub.s32 %s20, %s27
    %s34 = sor.u32 %s32, %s33
    %p35 = scmp.eq.s32.totalorder %s34, 0
    %s37 = sadd.s32 %s36, 1
    %s38 = scalar_select %p35, %s36, %s37
    %p41 = pneg %p35
    %p42 = scmp.eq.s32.totalorder %s12, 1
    %p43 = por %p41, %p42
    %p44 = scmp.ne.s32.totalorder %s36, %s39
    %p45 = scmp.eq.s32.totalorder %s12, 0
    %p46 = por %p44, %p45
    %p47 = scmp.ne.s32.totalorder %s36, %s39
    %p48 = scmp.eq.s32.totalorder %s17, 1
    %p49 = por %p47, %p48
    %p50 = scmp.ne.s32.totalorder %s39, %s40
    %p51 = scmp.eq.s32.totalorder %s17, 0
    %p52 = por %p50, %p51
    %p53 = scmp.ne.s32.totalorder %s39, %s40
    %p54 = scmp.eq.s32.totalorder %s18, 1
    %p55 = por %p53, %p54
    %p57 = scmp.ne.s32.totalorder %s40, %s56
    %p58 = scmp.eq.s32.totalorder %s18, 0
    %p59 = por %p57, %p58
    %s61 = sadd.s32 %s60, 1
    %p64 = scmp.eq.s32.totalorder %s12, 1
    %p65 = scmp.ne.s32.totalorder %s60, %s62
    %p66 = scmp.eq.s32.totalorder %s12, 0
    %p67 = por %p65, %p66
    %p68 = scmp.ne.s32.totalorder %s60, %s62
    %p69 = scmp.eq.s32.totalorder %s17, 1
    %p70 = por %p68, %p69
    %p71 = scmp.ne.s32.totalorder %s62, %s63
    %p72 = scmp.eq.s32.totalorder %s17, 0
    %p73 = por %p71, %p72
    %p74 = scmp.ne.s32.totalorder %s62, %s63
    %p75 = scmp.eq.s32.totalorder %s18, 1
    %p76 = por %p74, %p75
    %p78 = scmp.ne.s32.totalorder %s63, %s77
    %p79 = scmp.eq.s32.totalorder %s18, 0
    %p80 = por %p78, %p79
    %s82 = sadd.s32 %s81, 1
    %p85 = scmp.eq.s32.totalorder %s12, 1
    %p86 = scmp.ne.s32.totalorder %s81, %s83
    %p87 = scmp.eq.s32.totalorder %s12, 0
    %p88 = por %p86, %p87
    %p89 = scmp.ne.s32.totalorder %s81, %s83
    %p90 = scmp.eq.s32.totalorder %s17, 1
    %p91 = por %p89, %p90
    %p92 = scmp.ne.s32.totalorder %s83, %s84
    %p93 = scmp.eq.s32.totalorder %s17, 0
    %p94 = por %p92, %p93
    %p95 = scmp.ne.s32.totalorder %s83, %s84
    %p96 = scmp.eq.s32.totalorder %s18, 1
    %p97 = por %p95, %p96
    %p99 = scmp.ne.s32.totalorder %s84, %s98
    %p100 = scmp.eq.s32.totalorder %s18, 0
    %p101 = por %p99, %p100
    %s103 = sadd.s32 %s102, 1
    %p106 = scmp.eq.s32.totalorder %s12, 1
    %p107 = scmp.ne.s32.totalorder %s102, %s104
    %p108 = scmp.eq.s32.totalorder %s12, 0
    %p109 = por %p107, %p108
    %p110 = scmp.ne.s32.totalorder %s102, %s104
    %p111 = scmp.eq.s32.totalorder %s17, 1
    %p112 = por %p110, %p111
    %p113 = scmp.ne.s32.totalorder %s104, %s105
    %p114 = scmp.eq.s32.totalorder %s17, 0
    %p115 = por %p113, %p114
    %p116 = scmp.ne.s32.totalorder %s104, %s105
    %p117 = scmp.eq.s32.totalorder %s18, 1
    %p118 = por %p116, %p117
    %p120 = scmp.ne.s32.totalorder %s105, %s119
    %p121 = scmp.eq.s32.totalorder %s18, 0
    %p122 = por %p120, %p121
    %s124 = sadd.s32 %s123, 1
    %p127 = scmp.eq.s32.totalorder %s12, 1
    %p128 = scmp.ne.s32.totalorder %s123, %s125
    %p129 = scmp.eq.s32.totalorder %s12, 0
    %p130 = por %p128, %p129
    %p131 = scmp.ne.s32.totalorder %s123, %s125
    %p132 = scmp.eq.s32.totalorder %s17, 1
    %p133 = por %p131, %p132
    %p134 = scmp.ne.s32.totalorder %s125, %s126
    %p135 = scmp.eq.s32.totalorder %s17, 0
    %p136 = por %p134, %p135
    %p137 = scmp.ne.s32.totalorder %s125, %s126
    %p138 = scmp.eq.s32.totalorder %s18, 1
    %p139 = por %p137, %p138
    %p141 = scmp.ne.s32.totalorder %s126, %s140
    %p142 = scmp.eq.s32.totalorder %s18, 0
    %p143 = por %p141, %p142
    %s145 = sadd.s32 %s144, 1
    %p148 = scmp.eq.s32.totalorder %s12, 1
    %p149 = scmp.ne.s32.totalorder %s144, %s146
    %p150 = scmp.eq.s32.totalorder %s12, 0
    %p151 = por %p149, %p150
    %p152 = scmp.ne.s32.totalorder %s144, %s146
    %p153 = scmp.eq.s32.totalorder %s17, 1
    %p154 = por %p152, %p153
    %p155 = scmp.ne.s32.totalorder %s146, %s147
    %p156 = scmp.eq.s32.totalorder %s17, 0
    %p157 = por %p155, %p156
    %p158 = scmp.ne.s32.totalorder %s146, %s147
    %p159 = scmp.eq.s32.totalorder %s18, 1
    %p160 = por %p158, %p159
    %p162 = scmp.ne.s32.totalorder %s147, %s161
    %p163 = scmp.eq.s32.totalorder %s18, 0
    %p164 = por %p162, %p163
    %s165 = ssub.s32 %s19, %s31
    %s166 = ssub.s32 %s20, %s27
    %s167 = sor.u32 %s165, %s166
    %p168 = scmp.eq.s32.totalorder %s167, 0
    %s170 = sadd.s32 %s169, 1
    %s171 = scalar_select %p168, %s169, %s170
    %p174 = pneg %p168
    %p175 = scmp.eq.s32.totalorder %s12, 1
    %p176 = por %p174, %p175
    %p177 = scmp.ne.s32.totalorder %s169, %s172
    %p178 = scmp.eq.s32.totalorder %s12, 0
    %p179 = por %p177, %p178
    %p180 = scmp.ne.s32.totalorder %s169, %s172
    %p181 = scmp.eq.s32.totalorder %s17, 1
    %p182 = por %p180, %p181
    %p183 = scmp.ne.s32.totalorder %s172, %s173
    %p184 = scmp.eq.s32.totalorder %s17, 0
    %p185 = por %p183, %p184
    %p186 = scmp.ne.s32.totalorder %s172, %s173
    %p187 = scmp.eq.s32.totalorder %s18, 1
    %p188 = por %p186, %p187
    %p190 = scmp.ne.s32.totalorder %s173, %s189
    %p191 = scmp.eq.s32.totalorder %s18, 0
    %p192 = por %p190, %p191
    %p193 = scmp.le.s32.totalorder 1, %s12
    %p194 = scmp.lt.s32.totalorder %s12, 3
    %p195 = pnand %p193, %p194
    %p196 = pneg %p195
    // Predicated region
    $region9: #{vivit_forward.10} parent=5 // pred_check
      _
    $region10: #{vivit_forward.10} parent=5 // pred_check_branch
      %198 = sbr.rel (%p195) target = $region12
    $region11: #{vivit_forward.10} parent=5 // pred_region
      %s199 = ssub.s32 %s12, 1
      // Predicated region
      $region13: #{vivit_forward.10} parent=11 // pred_check
        %p200 = pneg %p73
      $region14: #{vivit_forward.10} parent=11 // pred_check_branch
        %202 = sbr.rel (%p200) target = $region16
      $region15: #{vivit_forward.10} parent=11 // pred_region
        _
      $region16: #{vivit_forward.10} parent=11 // pred_fallthru
        _
      // Predicated region
      $region17: #{vivit_forward.10} parent=11 // pred_check
        %p203 = pneg %p94
      $region18: #{vivit_forward.10} parent=11 // pred_check_branch
        %205 = sbr.rel (%p203) target = $region20
      $region19: #{vivit_forward.10} parent=11 // pred_region
        _
      $region20: #{vivit_forward.10} parent=11 // pred_fallthru
        _
      // Predicated region
      $region21: #{vivit_forward.10} parent=11 // pred_check
        %p206 = pneg %p115
      $region22: #{vivit_forward.10} parent=11 // pred_check_branch
        %208 = sbr.rel (%p206) target = $region24
      $region23: #{vivit_forward.10} parent=11 // pred_region
        _
      $region24: #{vivit_forward.10} parent=11 // pred_fallthru
        _
      // Predicated region
      $region25: #{vivit_forward.10} parent=11 // pred_check
        %p209 = pneg %p136
      $region26: #{vivit_forward.10} parent=11 // pred_check_branch
        %211 = sbr.rel (%p209) target = $region28
      $region27: #{vivit_forward.10} parent=11 // pred_region
        _
      $region28: #{vivit_forward.10} parent=11 // pred_fallthru
        _
      // Predicated region
      $region29: #{vivit_forward.10} parent=11 // pred_check
        %p212 = pneg %p157
      $region30: #{vivit_forward.10} parent=11 // pred_check_branch
        %214 = sbr.rel (%p212) target = $region32
      $region31: #{vivit_forward.10} parent=11 // pred_region
        _
      $region32: #{vivit_forward.10} parent=11 // pred_fallthru
        _
    $region12: #{vivit_forward.10} parent=5 // pred_fallthru
      _
    %p215 = scmp.lt.s32.totalorder %s12, 2
    // Predicated region
    $region33: #{vivit_forward.10} parent=5 // pred_check
      %p216 = pneg %p215
    $region34: #{vivit_forward.10} parent=5 // pred_check_branch
      %218 = sbr.rel (%p216) target = $region36
    $region35: #{vivit_forward.10} parent=5 // pred_region
      // Predicated region
      $region37: #{vivit_forward.10} parent=35 // pred_check
        %p219 = pneg %p46
      $region38: #{vivit_forward.10} parent=35 // pred_check_branch
        %221 = sbr.rel (%p219) target = $region40
      $region39: #{vivit_forward.10} parent=35 // pred_region
        %s222 = smul.u32 2, %s20
        %p223 = scmp.lt.s32.totalorder %s19, 1
        %s224 = scalar_select %p223, %s19, 1
        %p225 = scmp.lt.s32.totalorder %s222, 1
        %s226 = scalar_select %p225, %s222, 1
        %s227 = smul.addr %s224, 8
        %s228 = sadd.s32 %s226, %s227
        %s229 = smul.addr %s228, 4
        %s230 = scalar_lea.vmem %s0, %s229
        %s231 = smul.u32 2, %s20
      $region40: #{vivit_forward.10} parent=35 // pred_fallthru
        _
    $region36: #{vivit_forward.10} parent=5 // pred_fallthru
      _
    %p232 = scmp.le.s32.totalorder 1, %s12
    %p233 = scmp.lt.s32.totalorder %s12, 3
    %p234 = pnand %p232, %p233
    %p235 = pneg %p234
    // Predicated region
    $region41: #{vivit_forward.10} parent=5 // pred_check
      _
    $region42: #{vivit_forward.10} parent=5 // pred_check_branch
      %237 = sbr.rel (%p234) target = $region44
    $region43: #{vivit_forward.10} parent=5 // pred_region
      %s238 = ssub.s32 %s12, 1
      %s239 = smul.u32 2, %s22
      %p240 = scmp.lt.s32.totalorder %s21, 1
      %s241 = scalar_select %p240, %s21, 1
      %p242 = scmp.lt.s32.totalorder %s239, 1
      %s243 = scalar_select %p242, %s239, 1
      %s244 = smul.addr %s241, 8
      %s245 = sadd.s32 %s243, %s244
      %s246 = smul.addr %s245, 4
      %s247 = scalar_lea.vmem %s0, %s246
      %p248 = pneg %p52
      %p249 = pneg %p49
      %p250 = pneg %p73
      %p251 = pneg %p70
      %p252 = pneg %p94
      %p253 = pneg %p91
      %p254 = pneg %p115
      %p255 = pneg %p112
      %p256 = pneg %p136
      %p257 = pneg %p133
      %p258 = pneg %p157
      %p259 = pneg %p154
      %p260 = pneg %p185
      %p261 = pneg %p182
      %s262 = smul.u32 2, %s22
      %p263 = scmp.lt.s32.totalorder %s21, 1
      %s264 = scalar_select %p263, %s21, 1
      %p265 = scmp.lt.s32.totalorder %s262, 1
      %s266 = scalar_select %p265, %s262, 1
      %s267 = smul.addr %s264, 8
      %s268 = sadd.s32 %s266, %s267
      %s269 = smul.addr %s268, 4
      %s270 = scalar_lea.vmem %s6, %s269
      %s271 = smul.u32 2, %s22
      %p272 = scmp.lt.s32.totalorder %s21, 1
      %s273 = scalar_select %p272, %s21, 1
      %p274 = scmp.lt.s32.totalorder %s271, 1
      %s275 = scalar_select %p274, %s271, 1
      %s276 = smul.addr %s273, 8
      %s277 = sadd.s32 %s275, %s276
      %s278 = smul.addr %s277, 4
      %s279 = scalar_lea.vmem %s0, %s278
      %s280 = smul.u32 2, %s22
      %s281 = smul.u32 2, %s22
      %p282 = scmp.lt.s32.totalorder %s21, 1
      %s283 = scalar_select %p282, %s21, 1
      %p284 = scmp.lt.s32.totalorder %s281, 1
      %s285 = scalar_select %p284, %s281, 1
      %s286 = smul.addr %s283, 8
      %s287 = sadd.s32 %s285, %s286
      %s288 = smul.addr %s287, 4
      %s289 = scalar_lea.vmem %s6, %s288
      %s290 = smul.u32 2, %s22
      %v292 = vld [vmem:[%s279] sm:$0xf]
      %v293 = vld [vmem:[%s279 + $0x4] sm:$0xf]
      %v294 = vld [vmem:[%s279 + $0x8] sm:$0xf]
      %v295 = vld [vmem:[%s279 + $0xc] sm:$0xf]
      %v296 = vld [vmem:[%s279 + $0x10] sm:$0xf]
      %v297 = vld [vmem:[%s279 + $0x14] sm:$0xf]
      %v298 = vld [vmem:[%s279 + $0x18] sm:$0xf]
      %v299 = vld [vmem:[%s279 + $0x1c] sm:$0xf]
      %v300 = vunpack.c.l.bf16 %v292
      %v301 = vunpack.c.l.bf16 %v293
      %v302 = vunpack.c.l.bf16 %v294
      %v303 = vunpack.c.l.bf16 %v295
      %v304 = vunpack.c.l.bf16 %v296
      %v305 = vunpack.c.l.bf16 %v297
      %v306 = vunpack.c.l.bf16 %v298
      %v307 = vunpack.c.l.bf16 %v299
      %vm308 = vcmask 261120
      %v309 = vsel %vm308, %v300, 0.0
      %310 = vadd.xlane.f32.xlu0 %v309
      %v311 = vpop.xlane.xlu0 %310
      %v312 = vsel %vm308, %v301, 0.0
      %313 = vadd.xlane.f32.xlu0 %v312
      %v314 = vpop.xlane.xlu0 %313
      %v315 = vsel %vm308, %v302, 0.0
      %316 = vadd.xlane.f32.xlu0 %v315
      %v317 = vpop.xlane.xlu0 %316
      %v318 = vsel %vm308, %v303, 0.0
      %319 = vadd.xlane.f32.xlu0 %v318
      %v320 = vpop.xlane.xlu0 %319
      %v321 = vsel %vm308, %v304, 0.0
      %322 = vadd.xlane.f32.xlu0 %v321
      %v323 = vpop.xlane.xlu0 %322
      %v324 = vsel %vm308, %v305, 0.0
      %325 = vadd.xlane.f32.xlu0 %v324
      %v326 = vpop.xlane.xlu0 %325
      %v327 = vsel %vm308, %v306, 0.0
      %328 = vadd.xlane.f32.xlu0 %v327
      %v329 = vpop.xlane.xlu0 %328
      %v330 = vsel %vm308, %v307, 0.0
      %331 = vadd.xlane.f32.xlu0 %v330
      %v332 = vpop.xlane.xlu0 %331
      %v333 = vrcp.pop 32.0
      %v334 = vmul.f32 %v311, %v333
      %v335 = vmul.f32 %v314, %v333
      %v336 = vmul.f32 %v317, %v333
      %v337 = vmul.f32 %v320, %v333
      %v338 = vmul.f32 %v323, %v333
      %v339 = vmul.f32 %v326, %v333
      %v340 = vmul.f32 %v329, %v333
      %v341 = vmul.f32 %v332, %v333
      %v342 = vsub.f32 %v300, %v334
      %v343 = vsub.f32 %v301, %v335
      %v344 = vsub.f32 %v302, %v336
      %v345 = vsub.f32 %v303, %v337
      %v346 = vsub.f32 %v304, %v338
      %v347 = vsub.f32 %v305, %v339
      %v348 = vsub.f32 %v306, %v340
      %v349 = vsub.f32 %v307, %v341
      %v350 = vmul.f32 %v342, %v342
      %v351 = vmul.f32 %v343, %v343
      %v352 = vmul.f32 %v344, %v344
      %v353 = vmul.f32 %v345, %v345
      %v354 = vmul.f32 %v346, %v346
      %v355 = vmul.f32 %v347, %v347
      %v356 = vmul.f32 %v348, %v348
      %v357 = vmul.f32 %v349, %v349
      %v358 = vsel %vm308, %v350, 0.0
      %359 = vadd.xlane.f32.xlu0 %v358
      %v360 = vpop.xlane.xlu0 %359
      %v361 = vsel %vm308, %v351, 0.0
      %362 = vadd.xlane.f32.xlu0 %v361
      %v363 = vpop.xlane.xlu0 %362
      %v364 = vsel %vm308, %v352, 0.0
      %365 = vadd.xlane.f32.xlu0 %v364
      %v366 = vpop.xlane.xlu0 %365
      %v367 = vsel %vm308, %v353, 0.0
      %368 = vadd.xlane.f32.xlu0 %v367
      %v369 = vpop.xlane.xlu0 %368
      %v370 = vsel %vm308, %v354, 0.0
      %371 = vadd.xlane.f32.xlu0 %v370
      %v372 = vpop.xlane.xlu0 %371
      %v373 = vsel %vm308, %v355, 0.0
      %374 = vadd.xlane.f32.xlu0 %v373
      %v375 = vpop.xlane.xlu0 %374
      %v376 = vsel %vm308, %v356, 0.0
      %377 = vadd.xlane.f32.xlu0 %v376
      %v378 = vpop.xlane.xlu0 %377
      %v379 = vsel %vm308, %v357, 0.0
      %380 = vadd.xlane.f32.xlu0 %v379
      %v381 = vpop.xlane.xlu0 %380
      %v382 = vmul.f32 %v360, %v333
      %v383 = vmul.f32 %v363, %v333
      %v384 = vmul.f32 %v366, %v333
      %v385 = vmul.f32 %v369, %v333
      %v386 = vmul.f32 %v372, %v333
      %v387 = vmul.f32 %v375, %v333
      %v388 = vmul.f32 %v378, %v333
      %v389 = vmul.f32 %v381, %v333
      %v390 = vadd.f32 %v382, 1e-05
      %v391 = vadd.f32 %v383, 1e-05
      %v392 = vadd.f32 %v384, 1e-05
      %v393 = vadd.f32 %v385, 1e-05
      %v394 = vadd.f32 %v386, 1e-05
      %v395 = vadd.f32 %v387, 1e-05
      %v396 = vadd.f32 %v388, 1e-05
      %v397 = vadd.f32 %v389, 1e-05
      %v398 = vrsqrt.pop %v390
      %v399 = vrsqrt.pop %v391
      %v400 = vrsqrt.pop %v392
      %v401 = vrsqrt.pop %v393
      %v402 = vrsqrt.pop %v394
      %v403 = vrsqrt.pop %v395
      %v404 = vrsqrt.pop %v396
      %v405 = vrsqrt.pop %v397
      %v406 = vmul.f32 %v342, %v398
      %v407 = vmul.f32 %v343, %v399
      %v408 = vmul.f32 %v344, %v400
      %v409 = vmul.f32 %v345, %v401
      %v410 = vmul.f32 %v346, %v402
      %v411 = vmul.f32 %v347, %v403
      %v412 = vmul.f32 %v348, %v404
      %v413 = vmul.f32 %v349, %v405
      %v414 = vld [vmem:[%s1] sm:$0x1]
      %v416 = vlaneseq
      %v417 = vshrl.u32 %v416, 7
      %v418 = vsub.s32 0, %v417
      %v419 = vrot.slane %v414, %v418
      %v421 = vmul.f32 %v406, %v419
      %v422 = vmul.f32 %v407, %v419
      %v423 = vmul.f32 %v408, %v419
      %v424 = vmul.f32 %v409, %v419
      %v425 = vmul.f32 %v410, %v419
      %v426 = vmul.f32 %v411, %v419
      %v427 = vmul.f32 %v412, %v419
      %v428 = vmul.f32 %v413, %v419
      %v429 = vld [vmem:[%s2] sm:$0x1]
      %v431 = vlaneseq
      %v432 = vshrl.u32 %v431, 7
      %v433 = vsub.s32 0, %v432
      %v434 = vrot.slane %v429, %v433
      %v436 = vadd.f32 %v421, %v434
      %v437 = vadd.f32 %v422, %v434
      %v438 = vadd.f32 %v423, %v434
      %v439 = vadd.f32 %v424, %v434
      %v440 = vadd.f32 %v425, %v434
      %v441 = vadd.f32 %v426, %v434
      %v442 = vadd.f32 %v427, %v434
      %v443 = vadd.f32 %v428, %v434
      %v444 = vcombine.low %v436, %v440
      %v445 = vcombine.high %v436, %v440
      %v447 = vunpack.c.l.s4 1983009808
      %v448 = vunpack.c.0.s8 %v447
      %v449 = vlaneseq
      %v450 = vshrl.u32 %v449, 7
      %v451 = vsub.s32 %v448, %v450
      %v452 = vrot.slane %v444, %v451
      %v454 = vunpack.c.l.s4 1983009808
      %v455 = vunpack.c.0.s8 %v454
      %v456 = vlaneseq
      %v457 = vshrl.u32 %v456, 7
      %v458 = vsub.s32 %v455, %v457
      %v459 = vrot.slane %v445, %v458
      %v460 = vcombine.low %v438, %v442
      %v461 = vcombine.high %v438, %v442
      %v463 = vunpack.c.l.s4 1983009808
      %v464 = vunpack.c.0.s8 %v463
      %v465 = vlaneseq
      %v466 = vshrl.u32 %v465, 7
      %v467 = vsub.s32 %v464, %v466
      %v468 = vrot.slane %v460, %v467
      %v470 = vunpack.c.l.s4 1983009808
      %v471 = vunpack.c.0.s8 %v470
      %v472 = vlaneseq
      %v473 = vshrl.u32 %v472, 7
      %v474 = vsub.s32 %v471, %v473
      %v475 = vrot.slane %v461, %v474
      %v476 = vcombine.low %v452, %v468
      %v477 = vcombine.high %v452, %v468
      %v479 = vunpack.c.l.s4 1934713408
      %v480 = vunpack.c.0.s8 %v479
      %v481 = vlaneseq
      %v482 = vshrl.u32 %v481, 7
      %v483 = vsub.s32 %v480, %v482
      %v484 = vrot.slane %v476, %v483
      %v486 = vunpack.c.l.s4 1934713408
      %v487 = vunpack.c.0.s8 %v486
      %v488 = vlaneseq
      %v489 = vshrl.u32 %v488, 7
      %v490 = vsub.s32 %v487, %v489
      %v491 = vrot.slane %v477, %v490
      %v492 = vcombine.low %v459, %v475
      %v493 = vcombine.high %v459, %v475
      %v495 = vunpack.c.l.s4 1934713408
      %v496 = vunpack.c.0.s8 %v495
      %v497 = vlaneseq
      %v498 = vshrl.u32 %v497, 7
      %v499 = vsub.s32 %v496, %v498
      %v500 = vrot.slane %v492, %v499
      %v502 = vunpack.c.l.s4 1934713408
      %v503 = vunpack.c.0.s8 %v502
      %v504 = vlaneseq
      %v505 = vshrl.u32 %v504, 7
      %v506 = vsub.s32 %v503, %v505
      %v507 = vrot.slane %v493, %v506
      %v508 = vcombine.high %v484, 0.0
      %v509 = vcombine.high %v491, 0.0
      %v510 = vcombine.high %v500, 0.0
      %v511 = vcombine.high %v507, 0.0
      %v512 = vcombine.low %v437, %v441
      %v513 = vcombine.high %v437, %v441
      %v515 = vunpack.c.l.s4 1983009808
      %v516 = vunpack.c.0.s8 %v515
      %v517 = vlaneseq
      %v518 = vshrl.u32 %v517, 7
      %v519 = vsub.s32 %v516, %v518
      %v520 = vrot.slane %v512, %v519
      %v522 = vunpack.c.l.s4 1983009808
      %v523 = vunpack.c.0.s8 %v522
      %v524 = vlaneseq
      %v525 = vshrl.u32 %v524, 7
      %v526 = vsub.s32 %v523, %v525
      %v527 = vrot.slane %v513, %v526
      %v528 = vcombine.low %v439, %v443
      %v529 = vcombine.high %v439, %v443
      %v531 = vunpack.c.l.s4 1983009808
      %v532 = vunpack.c.0.s8 %v531
      %v533 = vlaneseq
      %v534 = vshrl.u32 %v533, 7
      %v535 = vsub.s32 %v532, %v534
      %v536 = vrot.slane %v528, %v535
      %v538 = vunpack.c.l.s4 1983009808
      %v539 = vunpack.c.0.s8 %v538
      %v540 = vlaneseq
      %v541 = vshrl.u32 %v540, 7
      %v542 = vsub.s32 %v539, %v541
      %v543 = vrot.slane %v529, %v542
      %v544 = vcombine.low %v520, %v536
      %v545 = vcombine.high %v520, %v536
      %v547 = vunpack.c.l.s4 1934713408
      %v548 = vunpack.c.0.s8 %v547
      %v549 = vlaneseq
      %v550 = vshrl.u32 %v549, 7
      %v551 = vsub.s32 %v548, %v550
      %v552 = vrot.slane %v544, %v551
      %v554 = vunpack.c.l.s4 1934713408
      %v555 = vunpack.c.0.s8 %v554
      %v556 = vlaneseq
      %v557 = vshrl.u32 %v556, 7
      %v558 = vsub.s32 %v555, %v557
      %v559 = vrot.slane %v545, %v558
      %v560 = vcombine.low %v527, %v543
      %v561 = vcombine.high %v527, %v543
      %v563 = vunpack.c.l.s4 1934713408
      %v564 = vunpack.c.0.s8 %v563
      %v565 = vlaneseq
      %v566 = vshrl.u32 %v565, 7
      %v567 = vsub.s32 %v564, %v566
      %v568 = vrot.slane %v560, %v567
      %v570 = vunpack.c.l.s4 1934713408
      %v571 = vunpack.c.0.s8 %v570
      %v572 = vlaneseq
      %v573 = vshrl.u32 %v572, 7
      %v574 = vsub.s32 %v571, %v573
      %v575 = vrot.slane %v561, %v574
      %v576 = vcombine.high %v552, 0.0
      %v577 = vcombine.high %v559, 0.0
      %v578 = vcombine.high %v568, 0.0
      %v579 = vcombine.high %v575, 0.0
      %v596 = vcombine.low %v484, %v508
      %v597 = vcombine.low %v491, %v509
      %v598 = vcombine.low %v500, %v510
      %v599 = vcombine.low %v507, %v511
      %v600 = vcombine.low %v552, %v576
      %v601 = vcombine.low %v559, %v577
      %v602 = vcombine.low %v568, %v578
      %v603 = vcombine.low %v575, %v579
      %v612 = vpack.c.bf16 %v597, %v596
      %v613 = vpack.c.bf16 %v599, %v598
      %v614 = vpack.c.bf16 %v601, %v600
      %v615 = vpack.c.bf16 %v603, %v602
      %v616 = vld [vmem:[%s3] sm:$0xf]
      %v617 = vld [vmem:[%s3 + $0x4] sm:$0xf]
      %v618 = vld [vmem:[%s3 + $0x8] sm:$0xf]
      %v619 = vld [vmem:[%s3 + $0xc] sm:$0xf]
      %v624 = vunpack.c.l.b16 %v616
      %v625 = vunpack.c.l.b16 %v617
      %v626 = vunpack.c.l.b16 %v618
      %v627 = vunpack.c.l.b16 %v619
      %v628 = vpack.c.b16 %v625, %v624
      %v629 = vpack.c.b16 %v627, %v626
      %v633 = vsel %vm308, %v612, 0
      %v636 = vsel %vm308, %v613, 0
      %v639 = vsel %vm308, %v614, 0
      %v642 = vsel %vm308, %v615, 0
      %644 = vmatprep.subr.bf16.mxu0 0
      %645 = vmatpush1.bf16.msra.mxu0 %v628
      %646 = vmatprep.subr.bf16.mxu0 0
      %647 = vmatpush1.bf16.msra.mxu0 %v629
      %648 = vmatprep.subr.bf16.mxu0 0
      %649 = vmatpush1.bf16.msra.mxu0 0
      %650 = vmatprep.subr.bf16.mxu0 0
      %651 = vmatpush1.bf16.msra.mxu0 0
      %652 = vmatprep.subr.bf16.mxu0 0
      %653 = vmatpush1.bf16.msra.mxu0 0
      %654 = vmatprep.subr.bf16.mxu0 0
      %655 = vmatpush1.bf16.msra.mxu0 0
      %656 = vmatprep.subr.bf16.mxu0 0
      %657 = vmatpush1.bf16.msra.mxu0 0
      %658 = vmatprep.subr.bf16.mxu0 0
      %659 = vmatpush1.bf16.msra.mxu0 0
      %660 = vmatprep.subr.bf16.mxu0 0
      %661 = vmatpush1.bf16.msra.mxu0 0
      %662 = vmatprep.subr.bf16.mxu0 0
      %663 = vmatpush1.bf16.msra.mxu0 0
      %664 = vmatprep.subr.bf16.mxu0 0
      %665 = vmatpush1.bf16.msra.mxu0 0
      %666 = vmatprep.subr.bf16.mxu0 0
      %667 = vmatpush1.bf16.msra.mxu0 0
      %668 = vmatprep.subr.bf16.mxu0 0
      %669 = vmatpush1.bf16.msra.mxu0 0
      %670 = vmatprep.subr.bf16.mxu0 0
      %671 = vmatpush1.bf16.msra.mxu0 0
      %672 = vmatprep.subr.bf16.mxu0 0
      %673 = vmatpush1.bf16.msra.mxu0 0
      %674 = vmatprep.subr.bf16.mxu0 0
      %675 = vmatpush1.bf16.msra.mxu0 0
      %676 = vmatprep.mubr.bf16.mxu0 0
      %677 = vmatmul.mubr.bf16.gmra.mrb[0].mxu0 %v633
      %v678 = vpop.f32.mrb[0].mxu0
      %v679 = vadd.f32 0.0, %v678
      %v680 = vpop.f32.mrb[0].mxu0
      %v681 = vpop.f32.mrb[0].mxu0
      %v682 = vadd.f32 0.0, %v681
      %v683 = vpop.f32.mrb[0].mxu0
      %684 = vmatprep.mubr.bf16.mxu0 0
      %685 = vmatmul.mubr.bf16.gmra.mrb[0].mxu0 %v636
      %v686 = vpop.f32.mrb[0].mxu0
      %v687 = vadd.f32 0.0, %v686
      %v688 = vpop.f32.mrb[0].mxu0
      %v689 = vpop.f32.mrb[0].mxu0
      %v690 = vadd.f32 0.0, %v689
      %v691 = vpop.f32.mrb[0].mxu0
      %692 = vmatprep.mubr.bf16.mxu0 0
      %693 = vmatmul.mubr.bf16.gmra.mrb[0].mxu0 %v639
      %v694 = vpop.f32.mrb[0].mxu0
      %v695 = vadd.f32 0.0, %v694
      %v696 = vpop.f32.mrb[0].mxu0
      %v697 = vpop.f32.mrb[0].mxu0
      %v698 = vadd.f32 0.0, %v697
      %v699 = vpop.f32.mrb[0].mxu0
      %700 = vmatprep.mubr.bf16.mxu0 0
      %701 = vmatmul.mubr.bf16.gmra.mrb[0].mxu0 %v642
      %v702 = vpop.f32.mrb[0].mxu0
      %v703 = vadd.f32 0.0, %v702
      %v704 = vpop.f32.mrb[0].mxu0
      %v705 = vpop.f32.mrb[0].mxu0
      %v706 = vadd.f32 0.0, %v705
      %v707 = vpop.f32.mrb[0].mxu0
      %708 = vdwg.mxu0
      %v709 = vld [vmem:[%s4] sm:$0xf]
      %v710 = vld [vmem:[%s4 + $0x4] sm:$0xf]
      %v711 = vld [vmem:[%s4 + $0x8] sm:$0xf]
      %v712 = vld [vmem:[%s4 + $0xc] sm:$0xf]
      %v717 = vunpack.c.l.b16 %v709
      %v718 = vunpack.c.l.b16 %v710
      %v719 = vunpack.c.l.b16 %v711
      %v720 = vunpack.c.l.b16 %v712
      %v721 = vpack.c.b16 %v718, %v717
      %v722 = vpack.c.b16 %v720, %v719
      %725 = vmatprep.subr.bf16.mxu0 0
      %726 = vmatpush1.bf16.msra.mxu0 %v721
      %727 = vmatprep.subr.bf16.mxu0 0
      %728 = vmatpush1.bf16.msra.mxu0 %v722
      %729 = vmatprep.subr.bf16.mxu0 0
      %730 = vmatpush1.bf16.msra.mxu0 0
      %731 = vmatprep.subr.bf16.mxu0 0
      %732 = vmatpush1.bf16.msra.mxu0 0
      %733 = vmatprep.subr.bf16.mxu0 0
      %734 = vmatpush1.bf16.msra.mxu0 0
      %735 = vmatprep.subr.bf16.mxu0 0
      %736 = vmatpush1.bf16.msra.mxu0 0
      %737 = vmatprep.subr.bf16.mxu0 0
      %738 = vmatpush1.bf16.msra.mxu0 0
      %739 = vmatprep.subr.bf16.mxu0 0
      %740 = vmatpush1.bf16.msra.mxu0 0
      %741 = vmatprep.subr.bf16.mxu0 0
      %742 = vmatpush1.bf16.msra.mxu0 0
      %743 = vmatprep.subr.bf16.mxu0 0
      %744 = vmatpush1.bf16.msra.mxu0 0
      %745 = vmatprep.subr.bf16.mxu0 0
      %746 = vmatpush1.bf16.msra.mxu0 0
      %747 = vmatprep.subr.bf16.mxu0 0
      %748 = vmatpush1.bf16.msra.mxu0 0
      %749 = vmatprep.subr.bf16.mxu0 0
      %750 = vmatpush1.bf16.msra.mxu0 0
      %751 = vmatprep.subr.bf16.mxu0 0
      %752 = vmatpush1.bf16.msra.mxu0 0
      %753 = vmatprep.subr.bf16.mxu0 0
      %754 = vmatpush1.bf16.msra.mxu0 0
      %755 = vmatprep.subr.bf16.mxu0 0
      %756 = vmatpush1.bf16.msra.mxu0 0
      %757 = vmatprep.mubr.bf16.mxu0 0
      %758 = vmatmul.mubr.bf16.gmra.mrb[0].mxu0 %v633
      %v759 = vpop.f32.mrb[0].mxu0
      %v760 = vadd.f32 0.0, %v759
      %v761 = vpop.f32.mrb[0].mxu0
      %v762 = vpop.f32.mrb[0].mxu0
      %v763 = vadd.f32 0.0, %v762
      %v764 = vpop.f32.mrb[0].mxu0
      %765 = vmatprep.mubr.bf16.mxu0 0
      %766 = vmatmul.mubr.bf16.gmra.mrb[0].mxu0 %v636
      %v767 = vpop.f32.mrb[0].mxu0
      %v768 = vadd.f32 0.0, %v767
      %v769 = vpop.f32.mrb[0].mxu0
      %v770 = vpop.f32.mrb[0].mxu0
      %v771 = vadd.f32 0.0, %v770
      %v772 = vpop.f32.mrb[0].mxu0
      %773 = vmatprep.mubr.bf16.mxu0 0
      %774 = vmatmul.mubr.bf16.gmra.mrb[0].mxu0 %v639
      %v775 = vpop.f32.mrb[0].mxu0
      %v776 = vadd.f32 0.0, %v775
      %v777 = vpop.f32.mrb[0].mxu0
      %v778 = vpop.f32.mrb[0].mxu0
      %v779 = vadd.f32 0.0, %v778
      %v780 = vpop.f32.mrb[0].mxu0
      %781 = vmatprep.mubr.bf16.mxu0 0
      %782 = vmatmul.mubr.bf16.gmra.mrb[0].mxu0 %v642
      %v783 = vpop.f32.mrb[0].mxu0
      %v784 = vadd.f32 0.0, %v783
      %v785 = vpop.f32.mrb[0].mxu0
      %v786 = vpop.f32.mrb[0].mxu0
      %v787 = vadd.f32 0.0, %v786
      %v788 = vpop.f32.mrb[0].mxu0
      %789 = vdwg.mxu0
      %v790 = vld [vmem:[%s5] sm:$0xf]
      %v791 = vld [vmem:[%s5 + $0x4] sm:$0xf]
      %v792 = vld [vmem:[%s5 + $0x8] sm:$0xf]
      %v793 = vld [vmem:[%s5 + $0xc] sm:$0xf]
      %v798 = vunpack.c.l.b16 %v790
      %v799 = vunpack.c.l.b16 %v791
      %v800 = vunpack.c.l.b16 %v792
      %v801 = vunpack.c.l.b16 %v793
      %v802 = vpack.c.b16 %v799, %v798
      %v803 = vpack.c.b16 %v801, %v800
      %806 = vmatprep.subr.bf16.mxu0 0
      %807 = vmatpush1.bf16.msra.mxu0 %v802
      %808 = vmatprep.subr.bf16.mxu0 0
      %809 = vmatpush1.bf16.msra.mxu0 %v803
      %810 = vmatprep.subr.bf16.mxu0 0
      %811 = vmatpush1.bf16.msra.mxu0 0
      %812 = vmatprep.subr.bf16.mxu0 0
      %813 = vmatpush1.bf16.msra.mxu0 0
      %814 = vmatprep.subr.bf16.mxu0 0
      %815 = vmatpush1.bf16.msra.mxu0 0
      %816 = vmatprep.subr.bf16.mxu0 0
      %817 = vmatpush1.bf16.msra.mxu0 0
      %818 = vmatprep.subr.bf16.mxu0 0
      %819 = vmatpush1.bf16.msra.mxu0 0
      %820 = vmatprep.subr.bf16.mxu0 0
      %821 = vmatpush1.bf16.msra.mxu0 0
      %822 = vmatprep.subr.bf16.mxu0 0
      %823 = vmatpush1.bf16.msra.mxu0 0
      %824 = vmatprep.subr.bf16.mxu0 0
      %825 = vmatpush1.bf16.msra.mxu0 0
      %826 = vmatprep.subr.bf16.mxu0 0
      %827 = vmatpush1.bf16.msra.mxu0 0
      %828 = vmatprep.subr.bf16.mxu0 0
      %829 = vmatpush1.bf16.msra.mxu0 0
      %830 = vmatprep.subr.bf16.mxu0 0
      %831 = vmatpush1.bf16.msra.mxu0 0
      %832 = vmatprep.subr.bf16.mxu0 0
      %833 = vmatpush1.bf16.msra.mxu0 0
      %834 = vmatprep.subr.bf16.mxu0 0
      %835 = vmatpush1.bf16.msra.mxu0 0
      %836 = vmatprep.subr.bf16.mxu0 0
      %837 = vmatpush1.bf16.msra.mxu0 0
      %838 = vmatprep.mubr.bf16.mxu0 0
      %839 = vmatmul.mubr.bf16.gmra.mrb[0].mxu0 %v633
      %v840 = vpop.f32.mrb[0].mxu0
      %v841 = vadd.f32 0.0, %v840
      %v842 = vpop.f32.mrb[0].mxu0
      %v843 = vpop.f32.mrb[0].mxu0
      %v844 = vadd.f32 0.0, %v843
      %v845 = vpop.f32.mrb[0].mxu0
      %846 = vmatprep.mubr.bf16.mxu0 0
      %847 = vmatmul.mubr.bf16.gmra.mrb[0].mxu0 %v636
      %v848 = vpop.f32.mrb[0].mxu0
      %v849 = vadd.f32 0.0, %v848
      %v850 = vpop.f32.mrb[0].mxu0
      %v851 = vpop.f32.mrb[0].mxu0
      %v852 = vadd.f32 0.0, %v851
      %v853 = vpop.f32.mrb[0].mxu0
      %854 = vmatprep.mubr.bf16.mxu0 0
      %855 = vmatmul.mubr.bf16.gmra.mrb[0].mxu0 %v639
      %v856 = vpop.f32.mrb[0].mxu0
      %v857 = vadd.f32 0.0, %v856
      %v858 = vpop.f32.mrb[0].mxu0
      %v859 = vpop.f32.mrb[0].mxu0
      %v860 = vadd.f32 0.0, %v859
      %v861 = vpop.f32.mrb[0].mxu0
      %862 = vmatprep.mubr.bf16.mxu0 0
      %863 = vmatmul.mubr.bf16.gmra.mrb[0].mxu0 %v642
      %v864 = vpop.f32.mrb[0].mxu0
      %v865 = vadd.f32 0.0, %v864
      %v866 = vpop.f32.mrb[0].mxu0
      %v867 = vpop.f32.mrb[0].mxu0
      %v868 = vadd.f32 0.0, %v867
      %v869 = vpop.f32.mrb[0].mxu0
      %870 = vdwg.mxu0
      %v879 = vcombine.high %v679, %v679
      %v880 = vcombine.high %v682, %v682
      %v881 = vcombine.high %v687, %v687
      %v882 = vcombine.high %v690, %v690
      %v883 = vcombine.high %v695, %v695
      %v884 = vcombine.high %v698, %v698
      %v885 = vcombine.high %v703, %v703
      %v886 = vcombine.high %v706, %v706
      %v895 = vpack.c.bf16 %v679, %v679
      %v896 = vpack.c.bf16 %v879, %v879
      %v897 = vpack.c.bf16 %v682, %v682
      %v898 = vpack.c.bf16 %v880, %v880
      %v899 = vpack.c.bf16 %v687, %v687
      %v900 = vpack.c.bf16 %v881, %v881
      %v901 = vpack.c.bf16 %v690, %v690
      %v902 = vpack.c.bf16 %v882, %v882
      %v903 = vpack.c.bf16 %v695, %v695
      %v904 = vpack.c.bf16 %v883, %v883
      %v905 = vpack.c.bf16 %v698, %v698
      %v906 = vpack.c.bf16 %v884, %v884
      %v907 = vpack.c.bf16 %v703, %v703
      %v908 = vpack.c.bf16 %v885, %v885
      %v909 = vpack.c.bf16 %v706, %v706
      %v910 = vpack.c.bf16 %v886, %v886
      %v919 = vcombine.high %v760, %v760
      %v920 = vcombine.high %v763, %v763
      %v921 = vcombine.high %v768, %v768
      %v922 = vcombine.high %v771, %v771
      %v923 = vcombine.high %v776, %v776
      %v924 = vcombine.high %v779, %v779
      %v925 = vcombine.high %v784, %v784
      %v926 = vcombine.high %v787, %v787
      %v935 = vpack.c.bf16 %v760, %v760
      %v936 = vpack.c.bf16 %v919, %v919
      %v937 = vpack.c.bf16 %v763, %v763
      %v938 = vpack.c.bf16 %v920, %v920
      %v939 = vpack.c.bf16 %v768, %v768
      %v940 = vpack.c.bf16 %v921, %v921
      %v941 = vpack.c.bf16 %v771, %v771
      %v942 = vpack.c.bf16 %v922, %v922
      %v943 = vpack.c.bf16 %v776, %v776
      %v944 = vpack.c.bf16 %v923, %v923
      %v945 = vpack.c.bf16 %v779, %v779
      %v946 = vpack.c.bf16 %v924, %v924
      %v947 = vpack.c.bf16 %v784, %v784
      %v948 = vpack.c.bf16 %v925, %v925
      %v949 = vpack.c.bf16 %v787, %v787
      %v950 = vpack.c.bf16 %v926, %v926
      %v959 = vcombine.high %v841, %v841
      %v960 = vcombine.high %v844, %v844
      %v961 = vcombine.high %v849, %v849
      %v962 = vcombine.high %v852, %v852
      %v963 = vcombine.high %v857, %v857
      %v964 = vcombine.high %v860, %v860
      %v965 = vcombine.high %v865, %v865
      %v966 = vcombine.high %v868, %v868
      %v975 = vpack.c.bf16 %v841, %v841
      %v976 = vpack.c.bf16 %v959, %v959
      %v977 = vpack.c.bf16 %v844, %v844
      %v978 = vpack.c.bf16 %v960, %v960
      %v979 = vpack.c.bf16 %v849, %v849
      %v980 = vpack.c.bf16 %v961, %v961
      %v981 = vpack.c.bf16 %v852, %v852
      %v982 = vpack.c.bf16 %v962, %v962
      %v983 = vpack.c.bf16 %v857, %v857
      %v984 = vpack.c.bf16 %v963, %v963
      %v985 = vpack.c.bf16 %v860, %v860
      %v986 = vpack.c.bf16 %v964, %v964
      %v987 = vpack.c.bf16 %v865, %v865
      %v988 = vpack.c.bf16 %v965, %v965
      %v989 = vpack.c.bf16 %v868, %v868
      %v990 = vpack.c.bf16 %v966, %v966
      %vm991 = vcmask 130048
      %v993 = vsel %vm991, %v895, 0
      %v996 = vsel %vm991, %v935, 0
      %998 = vmatprep.subr.bf16.mxu0 0
      %999 = vmatpush1.bf16.xpose.msra.mxu0 %v996
      %1000 = vmatprep.subr.bf16.mxu0 0
      %1001 = vmatpush1.bf16.xpose.msra.mxu0 0
      %1002 = vmatprep.subr.bf16.mxu0 0
      %1003 = vmatpush1.bf16.xpose.msra.mxu0 0
      %1004 = vmatprep.subr.bf16.mxu0 0
      %1005 = vmatpush1.bf16.xpose.msra.mxu0 0
      %1006 = vmatprep.subr.bf16.mxu0 0
      %1007 = vmatpush1.bf16.xpose.msra.mxu0 0
      %1008 = vmatprep.subr.bf16.mxu0 0
      %1009 = vmatpush1.bf16.xpose.msra.mxu0 0
      %1010 = vmatprep.subr.bf16.mxu0 0
      %1011 = vmatpush1.bf16.xpose.msra.mxu0 0
      %1012 = vmatprep.subr.bf16.mxu0 0
      %1013 = vmatpush1.bf16.xpose.msra.mxu0 0
      %1014 = vmatprep.subr.bf16.mxu0 0
      %1015 = vmatpush1.bf16.xpose.msra.mxu0 0
      %1016 = vmatprep.subr.bf16.mxu0 0
      %1017 = vmatpush1.bf16.xpose.msra.mxu0 0
      %1018 = vmatprep.subr.bf16.mxu0 0
      %1019 = vmatpush1.bf16.xpose.msra.mxu0 0
      %1020 = vmatprep.subr.bf16.mxu0 0
      %1021 = vmatpush1.bf16.xpose.msra.mxu0 0
      %1022 = vmatprep.subr.bf16.mxu0 0
      %1023 = vmatpush1.bf16.xpose.msra.mxu0 0
      %1024 = vmatprep.subr.bf16.mxu0 0
      %1025 = vmatpush1.bf16.xpose.msra.mxu0 0
      %1026 = vmatprep.subr.bf16.mxu0 0
      %1027 = vmatpush1.bf16.xpose.msra.mxu0 0
      %1028 = vmatprep.subr.bf16.mxu0 0
      %1029 = vmatpush1.bf16.xpose.msra.mxu0 0
      %1030 = vmatprep.mubr.bf16.mxu0 0
      %1031 = vmatmul.mubr.bf16.gmra.mrb[0].mxu0 %v993
      %v1032 = vpop.f32.mrb[0].mxu0
      %v1033 = vadd.f32 0.0, %v1032
      %v1034 = vpop.f32.mrb[0].mxu0
      %v1035 = vpop.f32.mrb[0].mxu0
      %v1036 = vpop.f32.mrb[0].mxu0
      %1037 = vdwg.mxu0
      %v1039 = vsel %vm991, %v896, 0
      %v1042 = vsel %vm991, %v936, 0
      %1044 = vmatprep.subr.bf16.mxu0 0
      %1045 = vmatpush1.bf16.xpose.msra.mxu0 %v1042
      %1046 = vmatprep.subr.bf16.mxu0 0
      %1047 = vmatpush1.bf16.xpose.msra.mxu0 0
      %1048 = vmatprep.subr.bf16.mxu0 0
      %1049 = vmatpush1.bf16.xpose.msra.mxu0 0
      %1050 = vmatprep.subr.bf16.mxu0 0
      %1051 = vmatpush1.bf16.xpose.msra.mxu0 0
      %1052 = vmatprep.subr.bf16.mxu0 0
      %1053 = vmatpush1.bf16.xpose.msra.mxu0 0
      %1054 = vmatprep.subr.bf16.mxu0 0
      %1055 = vmatpush1.bf16.xpose.msra.mxu0 0
      %1056 = vmatprep.subr.bf16.mxu0 0
      %1057 = vmatpush1.bf16.xpose.msra.mxu0 0
      %1058 = vmatprep.subr.bf16.mxu0 0
      %1059 = vmatpush1.bf16.xpose.msra.mxu0 0
      %1060 = vmatprep.subr.bf16.mxu0 0
      %1061 = vmatpush1.bf16.xpose.msra.mxu0 0
      %1062 = vmatprep.subr.bf16.mxu0 0
      %1063 = vmatpush1.bf16.xpose.msra.mxu0 0
      %1064 = vmatprep.subr.bf16.mxu0 0
      %1065 = vmatpush1.bf16.xpose.msra.mxu0 0
      %1066 = vmatprep.subr.bf16.mxu0 0
      %1067 = vmatpush1.bf16.xpose.msra.mxu0 0
      %1068 = vmatprep.subr.bf16.mxu0 0
      %1069 = vmatpush1.bf16.xpose.msra.mxu0 0
      %1070 = vmatprep.subr.bf16.mxu0 0
      %1071 = vmatpush1.bf16.xpose.msra.mxu0 0
      %1072 = vmatprep.subr.bf16.mxu0 0
      %1073 = vmatpush1.bf16.xpose.msra.mxu0 0
      %1074 = vmatprep.subr.bf16.mxu0 0
      %1075 = vmatpush1.bf16.xpose.msra.mxu0 0
      %1076 = vmatprep.mubr.bf16.mxu0 0
      %1077 = vmatmul.mubr.bf16.gmra.mrb[0].mxu0 %v1039
      %v1078 = vpop.f32.mrb[0].mxu0
      %v1079 = vadd.f32 0.0, %v1078
      %v1080 = vpop.f32.mrb[0].mxu0
      %v1081 = vpop.f32.mrb[0].mxu0
      %v1082 = vpop.f32.mrb[0].mxu0
      %1083 = vdwg.mxu0
      %v1085 = vsel %vm991, %v897, 0
      %v1088 = vsel %vm991, %v937, 0
      %1090 = vmatprep.subr.bf16.mxu0 0
      %1091 = vmatpush1.bf16.xpose.msra.mxu0 %v1088
      %1092 = vmatprep.subr.bf16.mxu0 0
      %1093 = vmatpush1.bf16.xpose.msra.mxu0 0
      %1094 = vmatprep.subr.bf16.mxu0 0
      %1095 = vmatpush1.bf16.xpose.msra.mxu0 0
      %1096 = vmatprep.subr.bf16.mxu0 0
      %1097 = vmatpush1.bf16.xpose.msra.mxu0 0
      %1098 = vmatprep.subr.bf16.mxu0 0
      %1099 = vmatpush1.bf16.xpose.msra.mxu0 0
      %1100 = vmatprep.subr.bf16.mxu0 0
      %1101 = vmatpush1.bf16.xpose.msra.mxu0 0
      %1102 = vmatprep.subr.bf16.mxu0 0
      %1103 = vmatpush1.bf16.xpose.msra.mxu0 0
      %1104 = vmatprep.subr.bf16.mxu0 0
      %1105 = vmatpush1.bf16.xpose.msra.mxu0 0
      %1106 = vmatprep.subr.bf16.mxu0 0
      %1107 = vmatpush1.bf16.xpose.msra.mxu0 0
      %1108 = vmatprep.subr.bf16.mxu0 0
      %1109 = vmatpush1.bf16.xpose.msra.mxu0 0
      %1110 = vmatprep.subr.bf16.mxu0 0
      %1111 = vmatpush1.bf16.xpose.msra.mxu0 0
      %1112 = vmatprep.subr.bf16.mxu0 0
      %1113 = vmatpush1.bf16.xpose.msra.mxu0 0
      %1114 = vmatprep.subr.bf16.mxu0 0
      %1115 = vmatpush1.bf16.xpose.msra.mxu0 0
      %1116 = vmatprep.subr.bf16.mxu0 0
      %1117 = vmatpush1.bf16.xpose.msra.mxu0 0
      %1118 = vmatprep.subr.bf16.mxu0 0
      %1119 = vmatpush1.bf16.xpose.msra.mxu0 0
      %1120 = vmatprep.subr.bf16.mxu0 0
      %1121 = vmatpush1.bf16.xpose.msra.mxu0 0
      %1122 = vmatprep.mubr.bf16.mxu0 0
      %1123 = vmatmul.mubr.bf16.gmra.mrb[0].mxu0 %v1085
      %v1124 = vpop.f32.mrb[0].mxu0
      %v1125 = vadd.f32 0.0, %v1124
      %v1126 = vpop.f32.mrb[0].mxu0
      %v1127 = vpop.f32.mrb[0].mxu0
      %v1128 = vpop.f32.mrb[0].mxu0
      %1129 = vdwg.mxu0
      %v1131 = vsel %vm991, %v898, 0
      %v1134 = vsel %vm991, %v938, 0
      %1136 = vmatprep.subr.bf16.mxu0 0
      %1137 = vmatpush1.bf16.xpose.msra.mxu0 %v1134
      %1138 = vmatprep.subr.bf16.mxu0 0
      %1139 = vmatpush1.bf16.xpose.msra.mxu0 0
      %1140 = vmatprep.subr.bf16.mxu0 0
      %1141 = vmatpush1.bf16.xpose.msra.mxu0 0
      %1142 = vmatprep.subr.bf16.mxu0 0
      %1143 = vmatpush1.bf16.xpose.msra.mxu0 0
      %1144 = vmatprep.subr.bf16.mxu0 0
      %1145 = vmatpush1.bf16.xpose.msra.mxu0 0
      %1146 = vmatprep.subr.bf16.mxu0 0
      %1147 = vmatpush1.bf16.xpose.msra.mxu0 0
      %1148 = vmatprep.subr.bf16.mxu0 0
      %1149 = vmatpush1.bf16.xpose.msra.mxu0 0
      %1150 = vmatprep.subr.bf16.mxu0 0
      %1151 = vmatpush1.bf16.xpose.msra.mxu0 0
      %1152 = vmatprep.subr.bf16.mxu0 0
      %1153 = vmatpush1.bf16.xpose.msra.mxu0 0
      %1154 = vmatprep.subr.bf16.mxu0 0
      %1155 = vmatpush1.bf16.xpose.msra.mxu0 0
      %1156 = vmatprep.subr.bf16.mxu0 0
      %1157 = vmatpush1.bf16.xpose.msra.mxu0 0
      %1158 = vmatprep.subr.bf16.mxu0 0
      %1159 = vmatpush1.bf16.xpose.msra.mxu0 0
      %1160 = vmatprep.subr.bf16.mxu0 0
      %1161 = vmatpush1.bf16.xpose.msra.mxu0 0
      %1162 = vmatprep.subr.bf16.mxu0 0
      %1163 = vmatpush1.bf16.xpose.msra.mxu0 0
      %1164 = vmatprep.subr.bf16.mxu0 0
      %1165 = vmatpush1.bf16.xpose.msra.mxu0 0
      %1166 = vmatprep.subr.bf16.mxu0 0
      %1167 = vmatpush1.bf16.xpose.msra.mxu0 0
      %1168 = vmatprep.mubr.bf16.mxu0 0
      %1169 = vmatmul.mubr.bf16.gmra.mrb[0].mxu0 %v1131
      %v1170 = vpop.f32.mrb[0].mxu0
      %v1171 = vadd.f32 0.0, %v1170
      %v1172 = vpop.f32.mrb[0].mxu0
      %v1173 = vpop.f32.mrb[0].mxu0
      %v1174 = vpop.f32.mrb[0].mxu0
      %1175 = vdwg.mxu0
      %v1177 = vsel %vm991, %v899, 0
      %v1180 = vsel %vm991, %v939, 0
      %1182 = vmatprep.subr.bf16.mxu0 0
      %1183 = vmatpush1.bf16.xpose.msra.mxu0 %v1180
      %1184 = vmatprep.subr.bf16.mxu0 0
      %1185 = vmatpush1.bf16.xpose.msra.mxu0 0
      %1186 = vmatprep.subr.bf16.mxu0 0
      %1187 = vmatpush1.bf16.xpose.msra.mxu0 0
      %1188 = vmatprep.subr.bf16.mxu0 0
      %1189 = vmatpush1.bf16.xpose.msra.mxu0 0
      %1190 = vmatprep.subr.bf16.mxu0 0
      %1191 = vmatpush1.bf16.xpose.msra.mxu0 0
      %1192 = vmatprep.subr.bf16.mxu0 0
      %1193 = vmatpush1.bf16.xpose.msra.mxu0 0
      %1194 = vmatprep.subr.bf16.mxu0 0
      %1195 = vmatpush1.bf16.xpose.msra.mxu0 0
      %1196 = vmatprep.subr.bf16.mxu0 0
      %1197 = vmatpush1.bf16.xpose.msra.mxu0 0
      %1198 = vmatprep.subr.bf16.mxu0 0
      %1199 = vmatpush1.bf16.xpose.msra.mxu0 0
      %1200 = vmatprep.subr.bf16.mxu0 0
      %1201 = vmatpush1.bf16.xpose.msra.mxu0 0
      %1202 = vmatprep.subr.bf16.mxu0 0
      %1203 = vmatpush1.bf16.xpose.msra.mxu0 0
      %1204 = vmatprep.subr.bf16.mxu0 0
      %1205 = vmatpush1.bf16.xpose.msra.mxu0 0
      %1206 = vmatprep.subr.bf16.mxu0 0
      %1207 = vmatpush1.bf16.xpose.msra.mxu0 0
      %1208 = vmatprep.subr.bf16.mxu0 0
      %1209 = vmatpush1.bf16.xpose.msra.mxu0 0
      %1210 = vmatprep.subr.bf16.mxu0 0
      %1211 = vmatpush1.bf16.xpose.msra.mxu0 0
      %1212 = vmatprep.subr.bf16.mxu0 0
      %1213 = vmatpush1.bf16.xpose.msra.mxu0 0
      %1214 = vmatprep.mubr.bf16.mxu0 0
      %1215 = vmatmul.mubr.bf16.gmra.mrb[0].mxu0 %v1177
      %v1216 = vpop.f32.mrb[0].mxu0
      %v1217 = vadd.f32 0.0, %v1216
      %v1218 = vpop.f32.mrb[0].mxu0
      %v1219 = vpop.f32.mrb[0].mxu0
      %v1220 = vpop.f32.mrb[0].mxu0
      %1221 = vdwg.mxu0
      %v1223 = vsel %vm991, %v900, 0
      %v1226 = vsel %vm991, %v940, 0
      %1228 = vmatprep.subr.bf16.mxu0 0
      %1229 = vmatpush1.bf16.xpose.msra.mxu0 %v1226
      %1230 = vmatprep.subr.bf16.mxu0 0
      %1231 = vmatpush1.bf16.xpose.msra.mxu0 0
      %1232 = vmatprep.subr.bf16.mxu0 0
      %1233 = vmatpush1.bf16.xpose.msra.mxu0 0
      %1234 = vmatprep.subr.bf16.mxu0 0
      %1235 = vmatpush1.bf16.xpose.msra.mxu0 0
      %1236 = vmatprep.subr.bf16.mxu0 0
      %1237 = vmatpush1.bf16.xpose.msra.mxu0 0
      %1238 = vmatprep.subr.bf16.mxu0 0
      %1239 = vmatpush1.bf16.xpose.msra.mxu0 0
      %1240 = vmatprep.subr.bf16.mxu0 0
      %1241 = vmatpush1.bf16.xpose.msra.mxu0 0
      %1242 = vmatprep.subr.bf16.mxu0 0
      %1243 = vmatpush1.bf16.xpose.msra.mxu0 0
      %1244 = vmatprep.subr.bf16.mxu0 0
      %1245 = vmatpush1.bf16.xpose.msra.mxu0 0
      %1246 = vmatprep.subr.bf16.mxu0 0
      %1247 = vmatpush1.bf16.xpose.msra.mxu0 0
      %1248 = vmatprep.subr.bf16.mxu0 0
      %1249 = vmatpush1.bf16.xpose.msra.mxu0 0
      %1250 = vmatprep.subr.bf16.mxu0 0
      %1251 = vmatpush1.bf16.xpose.msra.mxu0 0
      %1252 = vmatprep.subr.bf16.mxu0 0
      %1253 = vmatpush1.bf16.xpose.msra.mxu0 0
      %1254 = vmatprep.subr.bf16.mxu0 0
      %1255 = vmatpush1.bf16.xpose.msra.mxu0 0
      %1256 = vmatprep.subr.bf16.mxu0 0
      %1257 = vmatpush1.bf16.xpose.msra.mxu0 0
      %1258 = vmatprep.subr.bf16.mxu0 0
      %1259 = vmatpush1.bf16.xpose.msra.mxu0 0
      %1260 = vmatprep.mubr.bf16.mxu0 0
      %1261 = vmatmul.mubr.bf16.gmra.mrb[0].mxu0 %v1223
      %v1262 = vpop.f32.mrb[0].mxu0
      %v1263 = vadd.f32 0.0, %v1262
      %v1264 = vpop.f32.mrb[0].mxu0
      %v1265 = vpop.f32.mrb[0].mxu0
      %v1266 = vpop.f32.mrb[0].mxu0
      %1267 = vdwg.mxu0
      %v1269 = vsel %vm991, %v901, 0
      %v1272 = vsel %vm991, %v941, 0
      %1274 = vmatprep.subr.bf16.mxu0 0
      %1275 = vmatpush1.bf16.xpose.msra.mxu0 %v1272
      %1276 = vmatprep.subr.bf16.mxu0 0
      %1277 = vmatpush1.bf16.xpose.msra.mxu0 0
      %1278 = vmatprep.subr.bf16.mxu0 0
      %1279 = vmatpush1.bf16.xpose.msra.mxu0 0
      %1280 = vmatprep.subr.bf16.mxu0 0
      %1281 = vmatpush1.bf16.xpose.msra.mxu0 0
      %1282 = vmatprep.subr.bf16.mxu0 0
      %1283 = vmatpush1.bf16.xpose.msra.mxu0 0
      %1284 = vmatprep.subr.bf16.mxu0 0
      %1285 = vmatpush1.bf16.xpose.msra.mxu0 0
      %1286 = vmatprep.subr.bf16.mxu0 0
      %1287 = vmatpush1.bf16.xpose.msra.mxu0 0
      %1288 = vmatprep.subr.bf16.mxu0 0
      %1289 = vmatpush1.bf16.xpose.msra.mxu0 0
      %1290 = vmatprep.subr.bf16.mxu0 0
      %1291 = vmatpush1.bf16.xpose.msra.mxu0 0
      %1292 = vmatprep.subr.bf16.mxu0 0
      %1293 = vmatpush1.bf16.xpose.msra.mxu0 0
      %1294 = vmatprep.subr.bf16.mxu0 0
      %1295 = vmatpush1.bf16.xpose.msra.mxu0 0
      %1296 = vmatprep.subr.bf16.mxu0 0
      %1297 = vmatpush1.bf16.xpose.msra.mxu0 0
      %1298 = vmatprep.subr.bf16.mxu0 0
      %1299 = vmatpush1.bf16.xpose.msra.mxu0 0
      %1300 = vmatprep.subr.bf16.mxu0 0
      %1301 = vmatpush1.bf16.xpose.msra.mxu0 0
      %1302 = vmatprep.subr.bf16.mxu0 0
      %1303 = vmatpush1.bf16.xpose.msra.mxu0 0
      %1304 = vmatprep.subr.bf16.mxu0 0
      %1305 = vmatpush1.bf16.xpose.msra.mxu0 0
      %1306 = vmatprep.mubr.bf16.mxu0 0
      %1307 = vmatmul.mubr.bf16.gmra.mrb[0].mxu0 %v1269
      %v1308 = vpop.f32.mrb[0].mxu0
      %v1309 = vadd.f32 0.0, %v1308
      %v1310 = vpop.f32.mrb[0].mxu0
      %v1311 = vpop.f32.mrb[0].mxu0
      %v1312 = vpop.f32.mrb[0].mxu0
      %1313 = vdwg.mxu0
      %v1315 = vsel %vm991, %v902, 0
      %v1318 = vsel %vm991, %v942, 0
      %1320 = vmatprep.subr.bf16.mxu0 0
      %1321 = vmatpush1.bf16.xpose.msra.mxu0 %v1318
      %1322 = vmatprep.subr.bf16.mxu0 0
      %1323 = vmatpush1.bf16.xpose.msra.mxu0 0
      %1324 = vmatprep.subr.bf16.mxu0 0
      %1325 = vmatpush1.bf16.xpose.msra.mxu0 0
      %1326 = vmatprep.subr.bf16.mxu0 0
      %1327 = vmatpush1.bf16.xpose.msra.mxu0 0
      %1328 = vmatprep.subr.bf16.mxu0 0
      %1329 = vmatpush1.bf16.xpose.msra.mxu0 0
      %1330 = vmatprep.subr.bf16.mxu0 0
      %1331 = vmatpush1.bf16.xpose.msra.mxu0 0
      %1332 = vmatprep.subr.bf16.mxu0 0
      %1333 = vmatpush1.bf16.xpose.msra.mxu0 0
      %1334 = vmatprep.subr.bf16.mxu0 0
      %1335 = vmatpush1.bf16.xpose.msra.mxu0 0
      %1336 = vmatprep.subr.bf16.mxu0 0
      %1337 = vmatpush1.bf16.xpose.msra.mxu0 0
      %1338 = vmatprep.subr.bf16.mxu0 0
      %1339 = vmatpush1.bf16.xpose.msra.mxu0 0
      %1340 = vmatprep.subr.bf16.mxu0 0
      %1341 = vmatpush1.bf16.xpose.msra.mxu0 0
      %1342 = vmatprep.subr.bf16.mxu0 0
      %1343 = vmatpush1.bf16.xpose.msra.mxu0 0
      %1344 = vmatprep.subr.bf16.mxu0 0
      %1345 = vmatpush1.bf16.xpose.msra.mxu0 0
      %1346 = vmatprep.subr.bf16.mxu0 0
      %1347 = vmatpush1.bf16.xpose.msra.mxu0 0
      %1348 = vmatprep.subr.bf16.mxu0 0
      %1349 = vmatpush1.bf16.xpose.msra.mxu0 0
      %1350 = vmatprep.subr.bf16.mxu0 0
      %1351 = vmatpush1.bf16.xpose.msra.mxu0 0
      %1352 = vmatprep.mubr.bf16.mxu0 0
      %1353 = vmatmul.mubr.bf16.gmra.mrb[0].mxu0 %v1315
      %v1354 = vpop.f32.mrb[0].mxu0
      %v1355 = vadd.f32 0.0, %v1354
      %v1356 = vpop.f32.mrb[0].mxu0
      %v1357 = vpop.f32.mrb[0].mxu0
      %v1358 = vpop.f32.mrb[0].mxu0
      %1359 = vdwg.mxu0
      %v1361 = vsel %vm991, %v903, 0
      %v1364 = vsel %vm991, %v943, 0
      %1366 = vmatprep.subr.bf16.mxu0 0
      %1367 = vmatpush1.bf16.xpose.msra.mxu0 %v1364
      %1368 = vmatprep.subr.bf16.mxu0 0
      %1369 = vmatpush1.bf16.xpose.msra.mxu0 0
      %1370 = vmatprep.subr.bf16.mxu0 0
      %1371 = vmatpush1.bf16.xpose.msra.mxu0 0
      %1372 = vmatprep.subr.bf16.mxu0 0
      %1373 = vmatpush1.bf16.xpose.msra.mxu0 0
      %1374 = vmatprep.subr.bf16.mxu0 0
      %1375 = vmatpush1.bf16.xpose.msra.mxu0 0
      %1376 = vmatprep.subr.bf16.mxu0 0
      %1377 = vmatpush1.bf16.xpose.msra.mxu0 0
      %1378 = vmatprep.subr.bf16.mxu0 0
      %1379 = vmatpush1.bf16.xpose.msra.mxu0 0
      %1380 = vmatprep.subr.bf16.mxu0 0
      %1381 = vmatpush1.bf16.xpose.msra.mxu0 0
      %1382 = vmatprep.subr.bf16.mxu0 0
      %1383 = vmatpush1.bf16.xpose.msra.mxu0 0
      %1384 = vmatprep.subr.bf16.mxu0 0
      %1385 = vmatpush1.bf16.xpose.msra.mxu0 0
      %1386 = vmatprep.subr.bf16.mxu0 0
      %1387 = vmatpush1.bf16.xpose.msra.mxu0 0
      %1388 = vmatprep.subr.bf16.mxu0 0
      %1389 = vmatpush1.bf16.xpose.msra.mxu0 0
      %1390 = vmatprep.subr.bf16.mxu0 0
      %1391 = vmatpush1.bf16.xpose.msra.mxu0 0
      %1392 = vmatprep.subr.bf16.mxu0 0
      %1393 = vmatpush1.bf16.xpose.msra.mxu0 0
      %1394 = vmatprep.subr.bf16.mxu0 0
      %1395 = vmatpush1.bf16.xpose.msra.mxu0 0
      %1396 = vmatprep.subr.bf16.mxu0 0
      %1397 = vmatpush1.bf16.xpose.msra.mxu0 0
      %1398 = vmatprep.mubr.bf16.mxu0 0
      %1399 = vmatmul.mubr.bf16.gmra.mrb[0].mxu0 %v1361
      %v1400 = vpop.f32.mrb[0].mxu0
      %v1401 = vadd.f32 0.0, %v1400
      %v1402 = vpop.f32.mrb[0].mxu0
      %v1403 = vpop.f32.mrb[0].mxu0
      %v1404 = vpop.f32.mrb[0].mxu0
      %1405 = vdwg.mxu0
      %v1407 = vsel %vm991, %v904, 0
      %v1410 = vsel %vm991, %v944, 0
      %1412 = vmatprep.subr.bf16.mxu0 0
      %1413 = vmatpush1.bf16.xpose.msra.mxu0 %v1410
      %1414 = vmatprep.subr.bf16.mxu0 0
      %1415 = vmatpush1.bf16.xpose.msra.mxu0 0
      %1416 = vmatprep.subr.bf16.mxu0 0
      %1417 = vmatpush1.bf16.xpose.msra.mxu0 0
      %1418 = vmatprep.subr.bf16.mxu0 0
      %1419 = vmatpush1.bf16.xpose.msra.mxu0 0
      %1420 = vmatprep.subr.bf16.mxu0 0
      %1421 = vmatpush1.bf16.xpose.msra.mxu0 0
      %1422 = vmatprep.subr.bf16.mxu0 0
      %1423 = vmatpush1.bf16.xpose.msra.mxu0 0
      %1424 = vmatprep.subr.bf16.mxu0 0
      %1425 = vmatpush1.bf16.xpose.msra.mxu0 0
      %1426 = vmatprep.subr.bf16.mxu0 0
      %1427 = vmatpush1.bf16.xpose.msra.mxu0 0
      %1428 = vmatprep.subr.bf16.mxu0 0
      %1429 = vmatpush1.bf16.xpose.msra.mxu0 0
      %1430 = vmatprep.subr.bf16.mxu0 0
      %1431 = vmatpush1.bf16.xpose.msra.mxu0 0
      %1432 = vmatprep.subr.bf16.mxu0 0
      %1433 = vmatpush1.bf16.xpose.msra.mxu0 0
      %1434 = vmatprep.subr.bf16.mxu0 0
      %1435 = vmatpush1.bf16.xpose.msra.mxu0 0
      %1436 = vmatprep.subr.bf16.mxu0 0
      %1437 = vmatpush1.bf16.xpose.msra.mxu0 0
      %1438 = vmatprep.subr.bf16.mxu0 0
      %1439 = vmatpush1.bf16.xpose.msra.mxu0 0
      %1440 = vmatprep.subr.bf16.mxu0 0
      %1441 = vmatpush1.bf16.xpose.msra.mxu0 0
      %1442 = vmatprep.subr.bf16.mxu0 0
      %1443 = vmatpush1.bf16.xpose.msra.mxu0 0
      %1444 = vmatprep.mubr.bf16.mxu0 0
      %1445 = vmatmul.mubr.bf16.gmra.mrb[0].mxu0 %v1407
      %v1446 = vpop.f32.mrb[0].mxu0
      %v1447 = vadd.f32 0.0, %v1446
      %v1448 = vpop.f32.mrb[0].mxu0
      %v1449 = vpop.f32.mrb[0].mxu0
      %v1450 = vpop.f32.mrb[0].mxu0
      %1451 = vdwg.mxu0
      %v1453 = vsel %vm991, %v905, 0
      %v1456 = vsel %vm991, %v945, 0
      %1458 = vmatprep.subr.bf16.mxu0 0
      %1459 = vmatpush1.bf16.xpose.msra.mxu0 %v1456
      %1460 = vmatprep.subr.bf16.mxu0 0
      %1461 = vmatpush1.bf16.xpose.msra.mxu0 0
      %1462 = vmatprep.subr.bf16.mxu0 0
      %1463 = vmatpush1.bf16.xpose.msra.mxu0 0
      %1464 = vmatprep.subr.bf16.mxu0 0
      %1465 = vmatpush1.bf16.xpose.msra.mxu0 0
      %1466 = vmatprep.subr.bf16.mxu0 0
      %1467 = vmatpush1.bf16.xpose.msra.mxu0 0
      %1468 = vmatprep.subr.bf16.mxu0 0
      %1469 = vmatpush1.bf16.xpose.msra.mxu0 0
      %1470 = vmatprep.subr.bf16.mxu0 0
      %1471 = vmatpush1.bf16.xpose.msra.mxu0 0
      %1472 = vmatprep.subr.bf16.mxu0 0
      %1473 = vmatpush1.bf16.xpose.msra.mxu0 0
      %1474 = vmatprep.subr.bf16.mxu0 0
      %1475 = vmatpush1.bf16.xpose.msra.mxu0 0
      %1476 = vmatprep.subr.bf16.mxu0 0
      %1477 = vmatpush1.bf16.xpose.msra.mxu0 0
      %1478 = vmatprep.subr.bf16.mxu0 0
      %1479 = vmatpush1.bf16.xpose.msra.mxu0 0
      %1480 = vmatprep.subr.bf16.mxu0 0
      %1481 = vmatpush1.bf16.xpose.msra.mxu0 0
      %1482 = vmatprep.subr.bf16.mxu0 0
      %1483 = vmatpush1.bf16.xpose.msra.mxu0 0
      %1484 = vmatprep.subr.bf16.mxu0 0
      %1485 = vmatpush1.bf16.xpose.msra.mxu0 0
      %1486 = vmatprep.subr.bf16.mxu0 0
      %1487 = vmatpush1.bf16.xpose.msra.mxu0 0
      %1488 = vmatprep.subr.bf16.mxu0 0
      %1489 = vmatpush1.bf16.xpose.msra.mxu0 0
      %1490 = vmatprep.mubr.bf16.mxu0 0
      %1491 = vmatmul.mubr.bf16.gmra.mrb[0].mxu0 %v1453
      %v1492 = vpop.f32.mrb[0].mxu0
      %v1493 = vadd.f32 0.0, %v1492
      %v1494 = vpop.f32.mrb[0].mxu0
      %v1495 = vpop.f32.mrb[0].mxu0
      %v1496 = vpop.f32.mrb[0].mxu0
      %1497 = vdwg.mxu0
      %v1499 = vsel %vm991, %v906, 0
      %v1502 = vsel %vm991, %v946, 0
      %1504 = vmatprep.subr.bf16.mxu0 0
      %1505 = vmatpush1.bf16.xpose.msra.mxu0 %v1502
      %1506 = vmatprep.subr.bf16.mxu0 0
      %1507 = vmatpush1.bf16.xpose.msra.mxu0 0
      %1508 = vmatprep.subr.bf16.mxu0 0
      %1509 = vmatpush1.bf16.xpose.msra.mxu0 0
      %1510 = vmatprep.subr.bf16.mxu0 0
      %1511 = vmatpush1.bf16.xpose.msra.mxu0 0
      %1512 = vmatprep.subr.bf16.mxu0 0
      %1513 = vmatpush1.bf16.xpose.msra.mxu0 0
      %1514 = vmatprep.subr.bf16.mxu0 0
      %1515 = vmatpush1.bf16.xpose.msra.mxu0 0
      %1516 = vmatprep.subr.bf16.mxu0 0
      %1517 = vmatpush1.bf16.xpose.msra.mxu0 0
      %1518 = vmatprep.subr.bf16.mxu0 0
      %1519 = vmatpush1.bf16.xpose.msra.mxu0 0
      %1520 = vmatprep.subr.bf16.mxu0 0
      %1521 = vmatpush1.bf16.xpose.msra.mxu0 0
      %1522 = vmatprep.subr.bf16.mxu0 0
      %1523 = vmatpush1.bf16.xpose.msra.mxu0 0
      %1524 = vmatprep.subr.bf16.mxu0 0
      %1525 = vmatpush1.bf16.xpose.msra.mxu0 0
      %1526 = vmatprep.subr.bf16.mxu0 0
      %1527 = vmatpush1.bf16.xpose.msra.mxu0 0
      %1528 = vmatprep.subr.bf16.mxu0 0
      %1529 = vmatpush1.bf16.xpose.msra.mxu0 0
      %1530 = vmatprep.subr.bf16.mxu0 0
      %1531 = vmatpush1.bf16.xpose.msra.mxu0 0
      %1532 = vmatprep.subr.bf16.mxu0 0
      %1533 = vmatpush1.bf16.xpose.msra.mxu0 0
      %1534 = vmatprep.subr.bf16.mxu0 0
      %1535 = vmatpush1.bf16.xpose.msra.mxu0 0
      %1536 = vmatprep.mubr.bf16.mxu0 0
      %1537 = vmatmul.mubr.bf16.gmra.mrb[0].mxu0 %v1499
      %v1538 = vpop.f32.mrb[0].mxu0
      %v1539 = vadd.f32 0.0, %v1538
      %v1540 = vpop.f32.mrb[0].mxu0
      %v1541 = vpop.f32.mrb[0].mxu0
      %v1542 = vpop.f32.mrb[0].mxu0
      %1543 = vdwg.mxu0
      %v1545 = vsel %vm991, %v907, 0
      %v1548 = vsel %vm991, %v947, 0
      %1550 = vmatprep.subr.bf16.mxu0 0
      %1551 = vmatpush1.bf16.xpose.msra.mxu0 %v1548
      %1552 = vmatprep.subr.bf16.mxu0 0
      %1553 = vmatpush1.bf16.xpose.msra.mxu0 0
      %1554 = vmatprep.subr.bf16.mxu0 0
      %1555 = vmatpush1.bf16.xpose.msra.mxu0 0
      %1556 = vmatprep.subr.bf16.mxu0 0
      %1557 = vmatpush1.bf16.xpose.msra.mxu0 0
      %1558 = vmatprep.subr.bf16.mxu0 0
      %1559 = vmatpush1.bf16.xpose.msra.mxu0 0
      %1560 = vmatprep.subr.bf16.mxu0 0
      %1561 = vmatpush1.bf16.xpose.msra.mxu0 0
      %1562 = vmatprep.subr.bf16.mxu0 0
      %1563 = vmatpush1.bf16.xpose.msra.mxu0 0
      %1564 = vmatprep.subr.bf16.mxu0 0
      %1565 = vmatpush1.bf16.xpose.msra.mxu0 0
      %1566 = vmatprep.subr.bf16.mxu0 0
      %1567 = vmatpush1.bf16.xpose.msra.mxu0 0
      %1568 = vmatprep.subr.bf16.mxu0 0
      %1569 = vmatpush1.bf16.xpose.msra.mxu0 0
      %1570 = vmatprep.subr.bf16.mxu0 0
      %1571 = vmatpush1.bf16.xpose.msra.mxu0 0
      %1572 = vmatprep.subr.bf16.mxu0 0
      %1573 = vmatpush1.bf16.xpose.msra.mxu0 0
      %1574 = vmatprep.subr.bf16.mxu0 0
      %1575 = vmatpush1.bf16.xpose.msra.mxu0 0
      %1576 = vmatprep.subr.bf16.mxu0 0
      %1577 = vmatpush1.bf16.xpose.msra.mxu0 0
      %1578 = vmatprep.subr.bf16.mxu0 0
      %1579 = vmatpush1.bf16.xpose.msra.mxu0 0
      %1580 = vmatprep.subr.bf16.mxu0 0
      %1581 = vmatpush1.bf16.xpose.msra.mxu0 0
      %1582 = vmatprep.mubr.bf16.mxu0 0
      %1583 = vmatmul.mubr.bf16.gmra.mrb[0].mxu0 %v1545
      %v1584 = vpop.f32.mrb[0].mxu0
      %v1585 = vadd.f32 0.0, %v1584
      %v1586 = vpop.f32.mrb[0].mxu0
      %v1587 = vpop.f32.mrb[0].mxu0
      %v1588 = vpop.f32.mrb[0].mxu0
      %1589 = vdwg.mxu0
      %v1591 = vsel %vm991, %v908, 0
      %v1594 = vsel %vm991, %v948, 0
      %1596 = vmatprep.subr.bf16.mxu0 0
      %1597 = vmatpush1.bf16.xpose.msra.mxu0 %v1594
      %1598 = vmatprep.subr.bf16.mxu0 0
      %1599 = vmatpush1.bf16.xpose.msra.mxu0 0
      %1600 = vmatprep.subr.bf16.mxu0 0
      %1601 = vmatpush1.bf16.xpose.msra.mxu0 0
      %1602 = vmatprep.subr.bf16.mxu0 0
      %1603 = vmatpush1.bf16.xpose.msra.mxu0 0
      %1604 = vmatprep.subr.bf16.mxu0 0
      %1605 = vmatpush1.bf16.xpose.msra.mxu0 0
      %1606 = vmatprep.subr.bf16.mxu0 0
      %1607 = vmatpush1.bf16.xpose.msra.mxu0 0
      %1608 = vmatprep.subr.bf16.mxu0 0
      %1609 = vmatpush1.bf16.xpose.msra.mxu0 0
      %1610 = vmatprep.subr.bf16.mxu0 0
      %1611 = vmatpush1.bf16.xpose.msra.mxu0 0
      %1612 = vmatprep.subr.bf16.mxu0 0
      %1613 = vmatpush1.bf16.xpose.msra.mxu0 0
      %1614 = vmatprep.subr.bf16.mxu0 0
      %1615 = vmatpush1.bf16.xpose.msra.mxu0 0
      %1616 = vmatprep.subr.bf16.mxu0 0
      %1617 = vmatpush1.bf16.xpose.msra.mxu0 0
      %1618 = vmatprep.subr.bf16.mxu0 0
      %1619 = vmatpush1.bf16.xpose.msra.mxu0 0
      %1620 = vmatprep.subr.bf16.mxu0 0
      %1621 = vmatpush1.bf16.xpose.msra.mxu0 0
      %1622 = vmatprep.subr.bf16.mxu0 0
      %1623 = vmatpush1.bf16.xpose.msra.mxu0 0
      %1624 = vmatprep.subr.bf16.mxu0 0
      %1625 = vmatpush1.bf16.xpose.msra.mxu0 0
      %1626 = vmatprep.subr.bf16.mxu0 0
      %1627 = vmatpush1.bf16.xpose.msra.mxu0 0
      %1628 = vmatprep.mubr.bf16.mxu0 0
      %1629 = vmatmul.mubr.bf16.gmra.mrb[0].mxu0 %v1591
      %v1630 = vpop.f32.mrb[0].mxu0
      %v1631 = vadd.f32 0.0, %v1630
      %v1632 = vpop.f32.mrb[0].mxu0
      %v1633 = vpop.f32.mrb[0].mxu0
      %v1634 = vpop.f32.mrb[0].mxu0
      %1635 = vdwg.mxu0
      %v1637 = vsel %vm991, %v909, 0
      %v1640 = vsel %vm991, %v949, 0
      %1642 = vmatprep.subr.bf16.mxu0 0
      %1643 = vmatpush1.bf16.xpose.msra.mxu0 %v1640
      %1644 = vmatprep.subr.bf16.mxu0 0
      %1645 = vmatpush1.bf16.xpose.msra.mxu0 0
      %1646 = vmatprep.subr.bf16.mxu0 0
      %1647 = vmatpush1.bf16.xpose.msra.mxu0 0
      %1648 = vmatprep.subr.bf16.mxu0 0
      %1649 = vmatpush1.bf16.xpose.msra.mxu0 0
      %1650 = vmatprep.subr.bf16.mxu0 0
      %1651 = vmatpush1.bf16.xpose.msra.mxu0 0
      %1652 = vmatprep.subr.bf16.mxu0 0
      %1653 = vmatpush1.bf16.xpose.msra.mxu0 0
      %1654 = vmatprep.subr.bf16.mxu0 0
      %1655 = vmatpush1.bf16.xpose.msra.mxu0 0
      %1656 = vmatprep.subr.bf16.mxu0 0
      %1657 = vmatpush1.bf16.xpose.msra.mxu0 0
      %1658 = vmatprep.subr.bf16.mxu0 0
      %1659 = vmatpush1.bf16.xpose.msra.mxu0 0
      %1660 = vmatprep.subr.bf16.mxu0 0
      %1661 = vmatpush1.bf16.xpose.msra.mxu0 0
      %1662 = vmatprep.subr.bf16.mxu0 0
      %1663 = vmatpush1.bf16.xpose.msra.mxu0 0
      %1664 = vmatprep.subr.bf16.mxu0 0
      %1665 = vmatpush1.bf16.xpose.msra.mxu0 0
      %1666 = vmatprep.subr.bf16.mxu0 0
      %1667 = vmatpush1.bf16.xpose.msra.mxu0 0
      %1668 = vmatprep.subr.bf16.mxu0 0
      %1669 = vmatpush1.bf16.xpose.msra.mxu0 0
      %1670 = vmatprep.subr.bf16.mxu0 0
      %1671 = vmatpush1.bf16.xpose.msra.mxu0 0
      %1672 = vmatprep.subr.bf16.mxu0 0
      %1673 = vmatpush1.bf16.xpose.msra.mxu0 0
      %1674 = vmatprep.mubr.bf16.mxu0 0
      %1675 = vmatmul.mubr.bf16.gmra.mrb[0].mxu0 %v1637
      %v1676 = vpop.f32.mrb[0].mxu0
      %v1677 = vadd.f32 0.0, %v1676
      %v1678 = vpop.f32.mrb[0].mxu0
      %v1679 = vpop.f32.mrb[0].mxu0
      %v1680 = vpop.f32.mrb[0].mxu0
      %1681 = vdwg.mxu0
      %v1683 = vsel %vm991, %v910, 0
      %v1686 = vsel %vm991, %v950, 0
      %1688 = vmatprep.subr.bf16.mxu0 0
      %1689 = vmatpush1.bf16.xpose.msra.mxu0 %v1686
      %1690 = vmatprep.subr.bf16.mxu0 0
      %1691 = vmatpush1.bf16.xpose.msra.mxu0 0
      %1692 = vmatprep.subr.bf16.mxu0 0
      %1693 = vmatpush1.bf16.xpose.msra.mxu0 0
      %1694 = vmatprep.subr.bf16.mxu0 0
      %1695 = vmatpush1.bf16.xpose.msra.mxu0 0
      %1696 = vmatprep.subr.bf16.mxu0 0
      %1697 = vmatpush1.bf16.xpose.msra.mxu0 0
      %1698 = vmatprep.subr.bf16.mxu0 0
      %1699 = vmatpush1.bf16.xpose.msra.mxu0 0
      %1700 = vmatprep.subr.bf16.mxu0 0
      %1701 = vmatpush1.bf16.xpose.msra.mxu0 0
      %1702 = vmatprep.subr.bf16.mxu0 0
      %1703 = vmatpush1.bf16.xpose.msra.mxu0 0
      %1704 = vmatprep.subr.bf16.mxu0 0
      %1705 = vmatpush1.bf16.xpose.msra.mxu0 0
      %1706 = vmatprep.subr.bf16.mxu0 0
      %1707 = vmatpush1.bf16.xpose.msra.mxu0 0
      %1708 = vmatprep.subr.bf16.mxu0 0
      %1709 = vmatpush1.bf16.xpose.msra.mxu0 0
      %1710 = vmatprep.subr.bf16.mxu0 0
      %1711 = vmatpush1.bf16.xpose.msra.mxu0 0
      %1712 = vmatprep.subr.bf16.mxu0 0
      %1713 = vmatpush1.bf16.xpose.msra.mxu0 0
      %1714 = vmatprep.subr.bf16.mxu0 0
      %1715 = vmatpush1.bf16.xpose.msra.mxu0 0
      %1716 = vmatprep.subr.bf16.mxu0 0
      %1717 = vmatpush1.bf16.xpose.msra.mxu0 0
      %1718 = vmatprep.subr.bf16.mxu0 0
      %1719 = vmatpush1.bf16.xpose.msra.mxu0 0
      %1720 = vmatprep.mubr.bf16.mxu0 0
      %1721 = vmatmul.mubr.bf16.gmra.mrb[0].mxu0 %v1683
      %v1722 = vpop.f32.mrb[0].mxu0
      %v1723 = vadd.f32 0.0, %v1722
      %v1724 = vpop.f32.mrb[0].mxu0
      %v1725 = vpop.f32.mrb[0].mxu0
      %v1726 = vpop.f32.mrb[0].mxu0
      %1727 = vdwg.mxu0
      %vm1728 = vcmask 27648
      %v1729 = vsel %vm1728, %v1033, -inf
      %1730 = vmax.xlane.f32.xlu0 %v1729
      %v1731 = vpop.xlane.xlu0 %1730
      %v1732 = vsel %vm1728, %v1079, -inf
      %1733 = vmax.xlane.f32.xlu0 %v1732
      %v1734 = vpop.xlane.xlu0 %1733
      %v1735 = vsel %vm1728, %v1125, -inf
      %1736 = vmax.xlane.f32.xlu0 %v1735
      %v1737 = vpop.xlane.xlu0 %1736
      %v1738 = vsel %vm1728, %v1171, -inf
      %1739 = vmax.xlane.f32.xlu0 %v1738
      %v1740 = vpop.xlane.xlu0 %1739
      %v1741 = vsel %vm1728, %v1217, -inf
      %1742 = vmax.xlane.f32.xlu0 %v1741
      %v1743 = vpop.xlane.xlu0 %1742
      %v1744 = vsel %vm1728, %v1263, -inf
      %1745 = vmax.xlane.f32.xlu0 %v1744
      %v1746 = vpop.xlane.xlu0 %1745
      %v1747 = vsel %vm1728, %v1309, -inf
      %1748 = vmax.xlane.f32.xlu0 %v1747
      %v1749 = vpop.xlane.xlu0 %1748
      %v1750 = vsel %vm1728, %v1355, -inf
      %1751 = vmax.xlane.f32.xlu0 %v1750
      %v1752 = vpop.xlane.xlu0 %1751
      %v1753 = vsel %vm1728, %v1401, -inf
      %1754 = vmax.xlane.f32.xlu0 %v1753
      %v1755 = vpop.xlane.xlu0 %1754
      %v1756 = vsel %vm1728, %v1447, -inf
      %1757 = vmax.xlane.f32.xlu0 %v1756
      %v1758 = vpop.xlane.xlu0 %1757
      %v1759 = vsel %vm1728, %v1493, -inf
      %1760 = vmax.xlane.f32.xlu0 %v1759
      %v1761 = vpop.xlane.xlu0 %1760
      %v1762 = vsel %vm1728, %v1539, -inf
      %1763 = vmax.xlane.f32.xlu0 %v1762
      %v1764 = vpop.xlane.xlu0 %1763
      %v1765 = vsel %vm1728, %v1585, -inf
      %1766 = vmax.xlane.f32.xlu0 %v1765
      %v1767 = vpop.xlane.xlu0 %1766
      %v1768 = vsel %vm1728, %v1631, -inf
      %1769 = vmax.xlane.f32.xlu0 %v1768
      %v1770 = vpop.xlane.xlu0 %1769
      %v1771 = vsel %vm1728, %v1677, -inf
      %1772 = vmax.xlane.f32.xlu0 %v1771
      %v1773 = vpop.xlane.xlu0 %1772
      %v1774 = vsel %vm1728, %v1723, -inf
      %1775 = vmax.xlane.f32.xlu0 %v1774
      %v1776 = vpop.xlane.xlu0 %1775
      %v1777 = vsub.f32 %v1033, %v1731
      %v1778 = vsub.f32 %v1079, %v1734
      %v1779 = vsub.f32 %v1125, %v1737
      %v1780 = vsub.f32 %v1171, %v1740
      %v1781 = vsub.f32 %v1217, %v1743
      %v1782 = vsub.f32 %v1263, %v1746
      %v1783 = vsub.f32 %v1309, %v1749
      %v1784 = vsub.f32 %v1355, %v1752
      %v1785 = vsub.f32 %v1401, %v1755
      %v1786 = vsub.f32 %v1447, %v1758
      %v1787 = vsub.f32 %v1493, %v1761
      %v1788 = vsub.f32 %v1539, %v1764
      %v1789 = vsub.f32 %v1585, %v1767
      %v1790 = vsub.f32 %v1631, %v1770
      %v1791 = vsub.f32 %v1677, %v1773
      %v1792 = vsub.f32 %v1723, %v1776
      %v1793 = vmul.f32 %v1777, 1.442695
      %v1794 = vpow.pop %v1793
      %v1795 = vmul.f32 %v1778, 1.442695
      %v1796 = vpow.pop %v1795
      %v1797 = vmul.f32 %v1779, 1.442695
      %v1798 = vpow.pop %v1797
      %v1799 = vmul.f32 %v1780, 1.442695
      %v1800 = vpow.pop %v1799
      %v1801 = vmul.f32 %v1781, 1.442695
      %v1802 = vpow.pop %v1801
      %v1803 = vmul.f32 %v1782, 1.442695
      %v1804 = vpow.pop %v1803
      %v1805 = vmul.f32 %v1783, 1.442695
      %v1806 = vpow.pop %v1805
      %v1807 = vmul.f32 %v1784, 1.442695
      %v1808 = vpow.pop %v1807
      %v1809 = vmul.f32 %v1785, 1.442695
      %v1810 = vpow.pop %v1809
      %v1811 = vmul.f32 %v1786, 1.442695
      %v1812 = vpow.pop %v1811
      %v1813 = vmul.f32 %v1787, 1.442695
      %v1814 = vpow.pop %v1813
      %v1815 = vmul.f32 %v1788, 1.442695
      %v1816 = vpow.pop %v1815
      %v1817 = vmul.f32 %v1789, 1.442695
      %v1818 = vpow.pop %v1817
      %v1819 = vmul.f32 %v1790, 1.442695
      %v1820 = vpow.pop %v1819
      %v1821 = vmul.f32 %v1791, 1.442695
      %v1822 = vpow.pop %v1821
      %v1823 = vmul.f32 %v1792, 1.442695
      %v1824 = vpow.pop %v1823
      %v1825 = vsel %vm1728, %v1794, 0.0
      %1826 = vadd.xlane.f32.xlu0 %v1825
      %v1827 = vpop.xlane.xlu0 %1826
      %v1828 = vsel %vm1728, %v1796, 0.0
      %1829 = vadd.xlane.f32.xlu0 %v1828
      %v1830 = vpop.xlane.xlu0 %1829
      %v1831 = vsel %vm1728, %v1798, 0.0
      %1832 = vadd.xlane.f32.xlu0 %v1831
      %v1833 = vpop.xlane.xlu0 %1832
      %v1834 = vsel %vm1728, %v1800, 0.0
      %1835 = vadd.xlane.f32.xlu0 %v1834
      %v1836 = vpop.xlane.xlu0 %1835
      %v1837 = vsel %vm1728, %v1802, 0.0
      %1838 = vadd.xlane.f32.xlu0 %v1837
      %v1839 = vpop.xlane.xlu0 %1838
      %v1840 = vsel %vm1728, %v1804, 0.0
      %1841 = vadd.xlane.f32.xlu0 %v1840
      %v1842 = vpop.xlane.xlu0 %1841
      %v1843 = vsel %vm1728, %v1806, 0.0
      %1844 = vadd.xlane.f32.xlu0 %v1843
      %v1845 = vpop.xlane.xlu0 %1844
      %v1846 = vsel %vm1728, %v1808, 0.0
      %1847 = vadd.xlane.f32.xlu0 %v1846
      %v1848 = vpop.xlane.xlu0 %1847
      %v1849 = vsel %vm1728, %v1810, 0.0
      %1850 = vadd.xlane.f32.xlu0 %v1849
      %v1851 = vpop.xlane.xlu0 %1850
      %v1852 = vsel %vm1728, %v1812, 0.0
      %1853 = vadd.xlane.f32.xlu0 %v1852
      %v1854 = vpop.xlane.xlu0 %1853
      %v1855 = vsel %vm1728, %v1814, 0.0
      %1856 = vadd.xlane.f32.xlu0 %v1855
      %v1857 = vpop.xlane.xlu0 %1856
      %v1858 = vsel %vm1728, %v1816, 0.0
      %1859 = vadd.xlane.f32.xlu0 %v1858
      %v1860 = vpop.xlane.xlu0 %1859
      %v1861 = vsel %vm1728, %v1818, 0.0
      %1862 = vadd.xlane.f32.xlu0 %v1861
      %v1863 = vpop.xlane.xlu0 %1862
      %v1864 = vsel %vm1728, %v1820, 0.0
      %1865 = vadd.xlane.f32.xlu0 %v1864
      %v1866 = vpop.xlane.xlu0 %1865
      %v1867 = vsel %vm1728, %v1822, 0.0
      %1868 = vadd.xlane.f32.xlu0 %v1867
      %v1869 = vpop.xlane.xlu0 %1868
      %v1870 = vsel %vm1728, %v1824, 0.0
      %1871 = vadd.xlane.f32.xlu0 %v1870
      %v1872 = vpop.xlane.xlu0 %1871
      %v1873 = vrcp.pop %v1827
      %v1874 = vrcp.pop %v1830
      %v1875 = vrcp.pop %v1833
      %v1876 = vrcp.pop %v1836
      %v1877 = vrcp.pop %v1839
      %v1878 = vrcp.pop %v1842
      %v1879 = vrcp.pop %v1845
      %v1880 = vrcp.pop %v1848
      %v1881 = vrcp.pop %v1851
      %v1882 = vrcp.pop %v1854
      %v1883 = vrcp.pop %v1857
      %v1884 = vrcp.pop %v1860
      %v1885 = vrcp.pop %v1863
      %v1886 = vrcp.pop %v1866
      %v1887 = vrcp.pop %v1869
      %v1888 = vrcp.pop %v1872
      %v1889 = vmul.f32 %v1794, %v1873
      %v1890 = vmul.f32 %v1796, %v1874
      %v1891 = vmul.f32 %v1798, %v1875
      %v1892 = vmul.f32 %v1800, %v1876
      %v1893 = vmul.f32 %v1802, %v1877
      %v1894 = vmul.f32 %v1804, %v1878
      %v1895 = vmul.f32 %v1806, %v1879
      %v1896 = vmul.f32 %v1808, %v1880
      %v1897 = vmul.f32 %v1810, %v1881
      %v1898 = vmul.f32 %v1812, %v1882
      %v1899 = vmul.f32 %v1814, %v1883
      %v1900 = vmul.f32 %v1816, %v1884
      %v1901 = vmul.f32 %v1818, %v1885
      %v1902 = vmul.f32 %v1820, %v1886
      %v1903 = vmul.f32 %v1822, %v1887
      %v1904 = vmul.f32 %v1824, %v1888
      %v1905 = vpack.c.bf16 %v1889, %v1889
      %v1906 = vpack.c.bf16 %v1890, %v1890
      %v1907 = vpack.c.bf16 %v1891, %v1891
      %v1908 = vpack.c.bf16 %v1892, %v1892
      %v1909 = vpack.c.bf16 %v1893, %v1893
      %v1910 = vpack.c.bf16 %v1894, %v1894
      %v1911 = vpack.c.bf16 %v1895, %v1895
      %v1912 = vpack.c.bf16 %v1896, %v1896
      %v1913 = vpack.c.bf16 %v1897, %v1897
      %v1914 = vpack.c.bf16 %v1898, %v1898
      %v1915 = vpack.c.bf16 %v1899, %v1899
      %v1916 = vpack.c.bf16 %v1900, %v1900
      %v1917 = vpack.c.bf16 %v1901, %v1901
      %v1918 = vpack.c.bf16 %v1902, %v1902
      %v1919 = vpack.c.bf16 %v1903, %v1903
      %v1920 = vpack.c.bf16 %v1904, %v1904
      %vm1921 = vcmask 31744
      %v1923 = vsel %vm1921, %v1905, 0
      %vm1925 = vcmask 1041408
      %v1927 = vsel %vm1925, %v975, 0
      %1929 = vmatprep.subr.bf16.mxu0 0
      %1930 = vmatpush1.bf16.msra.mxu0 %v1927
      %1931 = vmatprep.subr.bf16.mxu0 0
      %1932 = vmatpush1.bf16.msra.mxu0 0
      %1933 = vmatprep.subr.bf16.mxu0 0
      %1934 = vmatpush1.bf16.msra.mxu0 0
      %1935 = vmatprep.subr.bf16.mxu0 0
      %1936 = vmatpush1.bf16.msra.mxu0 0
      %1937 = vmatprep.subr.bf16.mxu0 0
      %1938 = vmatpush1.bf16.msra.mxu0 0
      %1939 = vmatprep.subr.bf16.mxu0 0
      %1940 = vmatpush1.bf16.msra.mxu0 0
      %1941 = vmatprep.subr.bf16.mxu0 0
      %1942 = vmatpush1.bf16.msra.mxu0 0
      %1943 = vmatprep.subr.bf16.mxu0 0
      %1944 = vmatpush1.bf16.msra.mxu0 0
      %1945 = vmatprep.subr.bf16.mxu0 0
      %1946 = vmatpush1.bf16.msra.mxu0 0
      %1947 = vmatprep.subr.bf16.mxu0 0
      %1948 = vmatpush1.bf16.msra.mxu0 0
      %1949 = vmatprep.subr.bf16.mxu0 0
      %1950 = vmatpush1.bf16.msra.mxu0 0
      %1951 = vmatprep.subr.bf16.mxu0 0
      %1952 = vmatpush1.bf16.msra.mxu0 0
      %1953 = vmatprep.subr.bf16.mxu0 0
      %1954 = vmatpush1.bf16.msra.mxu0 0
      %1955 = vmatprep.subr.bf16.mxu0 0
      %1956 = vmatpush1.bf16.msra.mxu0 0
      %1957 = vmatprep.subr.bf16.mxu0 0
      %1958 = vmatpush1.bf16.msra.mxu0 0
      %1959 = vmatprep.subr.bf16.mxu0 0
      %1960 = vmatpush1.bf16.msra.mxu0 0
      %1961 = vmatprep.mubr.bf16.mxu0 0
      %1962 = vmatmul.mubr.bf16.gmra.mrb[0].mxu0 %v1923
      %v1963 = vpop.f32.mrb[0].mxu0
      %v1964 = vadd.f32 0.0, %v1963
      %v1965 = vpop.f32.mrb[0].mxu0
      %v1966 = vpop.f32.mrb[0].mxu0
      %v1967 = vpop.f32.mrb[0].mxu0
      %1968 = vdwg.mxu0
      %v1970 = vsel %vm1921, %v1906, 0
      %v1973 = vsel %vm1925, %v976, 0
      %1975 = vmatprep.subr.bf16.mxu0 0
      %1976 = vmatpush1.bf16.msra.mxu0 %v1973
      %1977 = vmatprep.subr.bf16.mxu0 0
      %1978 = vmatpush1.bf16.msra.mxu0 0
      %1979 = vmatprep.subr.bf16.mxu0 0
      %1980 = vmatpush1.bf16.msra.mxu0 0
      %1981 = vmatprep.subr.bf16.mxu0 0
      %1982 = vmatpush1.bf16.msra.mxu0 0
      %1983 = vmatprep.subr.bf16.mxu0 0
      %1984 = vmatpush1.bf16.msra.mxu0 0
      %1985 = vmatprep.subr.bf16.mxu0 0
      %1986 = vmatpush1.bf16.msra.mxu0 0
      %1987 = vmatprep.subr.bf16.mxu0 0
      %1988 = vmatpush1.bf16.msra.mxu0 0
      %1989 = vmatprep.subr.bf16.mxu0 0
      %1990 = vmatpush1.bf16.msra.mxu0 0
      %1991 = vmatprep.subr.bf16.mxu0 0
      %1992 = vmatpush1.bf16.msra.mxu0 0
      %1993 = vmatprep.subr.bf16.mxu0 0
      %1994 = vmatpush1.bf16.msra.mxu0 0
      %1995 = vmatprep.subr.bf16.mxu0 0
      %1996 = vmatpush1.bf16.msra.mxu0 0
      %1997 = vmatprep.subr.bf16.mxu0 0
      %1998 = vmatpush1.bf16.msra.mxu0 0
      %1999 = vmatprep.subr.bf16.mxu0 0
      %2000 = vmatpush1.bf16.msra.mxu0 0
      %2001 = vmatprep.subr.bf16.mxu0 0
      %2002 = vmatpush1.bf16.msra.mxu0 0
      %2003 = vmatprep.subr.bf16.mxu0 0
      %2004 = vmatpush1.bf16.msra.mxu0 0
      %2005 = vmatprep.subr.bf16.mxu0 0
      %2006 = vmatpush1.bf16.msra.mxu0 0
      %2007 = vmatprep.mubr.bf16.mxu0 0
      %2008 = vmatmul.mubr.bf16.gmra.mrb[0].mxu0 %v1970
      %v2009 = vpop.f32.mrb[0].mxu0
      %v2010 = vadd.f32 0.0, %v2009
      %v2011 = vpop.f32.mrb[0].mxu0
      %v2012 = vpop.f32.mrb[0].mxu0
      %v2013 = vpop.f32.mrb[0].mxu0
      %2014 = vdwg.mxu0
      %v2016 = vsel %vm1921, %v1907, 0
      %v2019 = vsel %vm1925, %v977, 0
      %2021 = vmatprep.subr.bf16.mxu0 0
      %2022 = vmatpush1.bf16.msra.mxu0 %v2019
      %2023 = vmatprep.subr.bf16.mxu0 0
      %2024 = vmatpush1.bf16.msra.mxu0 0
      %2025 = vmatprep.subr.bf16.mxu0 0
      %2026 = vmatpush1.bf16.msra.mxu0 0
      %2027 = vmatprep.subr.bf16.mxu0 0
      %2028 = vmatpush1.bf16.msra.mxu0 0
      %2029 = vmatprep.subr.bf16.mxu0 0
      %2030 = vmatpush1.bf16.msra.mxu0 0
      %2031 = vmatprep.subr.bf16.mxu0 0
      %2032 = vmatpush1.bf16.msra.mxu0 0
      %2033 = vmatprep.subr.bf16.mxu0 0
      %2034 = vmatpush1.bf16.msra.mxu0 0
      %2035 = vmatprep.subr.bf16.mxu0 0
      %2036 = vmatpush1.bf16.msra.mxu0 0
      %2037 = vmatprep.subr.bf16.mxu0 0
      %2038 = vmatpush1.bf16.msra.mxu0 0
      %2039 = vmatprep.subr.bf16.mxu0 0
      %2040 = vmatpush1.bf16.msra.mxu0 0
      %2041 = vmatprep.subr.bf16.mxu0 0
      %2042 = vmatpush1.bf16.msra.mxu0 0
      %2043 = vmatprep.subr.bf16.mxu0 0
      %2044 = vmatpush1.bf16.msra.mxu0 0
      %2045 = vmatprep.subr.bf16.mxu0 0
      %2046 = vmatpush1.bf16.msra.mxu0 0
      %2047 = vmatprep.subr.bf16.mxu0 0
      %2048 = vmatpush1.bf16.msra.mxu0 0
      %2049 = vmatprep.subr.bf16.mxu0 0
      %2050 = vmatpush1.bf16.msra.mxu0 0
      %2051 = vmatprep.subr.bf16.mxu0 0
      %2052 = vmatpush1.bf16.msra.mxu0 0
      %2053 = vmatprep.mubr.bf16.mxu0 0
      %2054 = vmatmul.mubr.bf16.gmra.mrb[0].mxu0 %v2016
      %v2055 = vpop.f32.mrb[0].mxu0
      %v2056 = vadd.f32 0.0, %v2055
      %v2057 = vpop.f32.mrb[0].mxu0
      %v2058 = vpop.f32.mrb[0].mxu0
      %v2059 = vpop.f32.mrb[0].mxu0
      %2060 = vdwg.mxu0
      %v2062 = vsel %vm1921, %v1908, 0
      %v2065 = vsel %vm1925, %v978, 0
      %2067 = vmatprep.subr.bf16.mxu0 0
      %2068 = vmatpush1.bf16.msra.mxu0 %v2065
      %2069 = vmatprep.subr.bf16.mxu0 0
      %2070 = vmatpush1.bf16.msra.mxu0 0
      %2071 = vmatprep.subr.bf16.mxu0 0
      %2072 = vmatpush1.bf16.msra.mxu0 0
      %2073 = vmatprep.subr.bf16.mxu0 0
      %2074 = vmatpush1.bf16.msra.mxu0 0
      %2075 = vmatprep.subr.bf16.mxu0 0
      %2076 = vmatpush1.bf16.msra.mxu0 0
      %2077 = vmatprep.subr.bf16.mxu0 0
      %2078 = vmatpush1.bf16.msra.mxu0 0
      %2079 = vmatprep.subr.bf16.mxu0 0
      %2080 = vmatpush1.bf16.msra.mxu0 0
      %2081 = vmatprep.subr.bf16.mxu0 0
      %2082 = vmatpush1.bf16.msra.mxu0 0
      %2083 = vmatprep.subr.bf16.mxu0 0
      %2084 = vmatpush1.bf16.msra.mxu0 0
      %2085 = vmatprep.subr.bf16.mxu0 0
      %2086 = vmatpush1.bf16.msra.mxu0 0
      %2087 = vmatprep.subr.bf16.mxu0 0
      %2088 = vmatpush1.bf16.msra.mxu0 0
      %2089 = vmatprep.subr.bf16.mxu0 0
      %2090 = vmatpush1.bf16.msra.mxu0 0
      %2091 = vmatprep.subr.bf16.mxu0 0
      %2092 = vmatpush1.bf16.msra.mxu0 0
      %2093 = vmatprep.subr.bf16.mxu0 0
      %2094 = vmatpush1.bf16.msra.mxu0 0
      %2095 = vmatprep.subr.bf16.mxu0 0
      %2096 = vmatpush1.bf16.msra.mxu0 0
      %2097 = vmatprep.subr.bf16.mxu0 0
      %2098 = vmatpush1.bf16.msra.mxu0 0
      %2099 = vmatprep.mubr.bf16.mxu0 0
      %2100 = vmatmul.mubr.bf16.gmra.mrb[0].mxu0 %v2062
      %v2101 = vpop.f32.mrb[0].mxu0
      %v2102 = vadd.f32 0.0, %v2101
      %v2103 = vpop.f32.mrb[0].mxu0
      %v2104 = vpop.f32.mrb[0].mxu0
      %v2105 = vpop.f32.mrb[0].mxu0
      %2106 = vdwg.mxu0
      %v2108 = vsel %vm1921, %v1909, 0
      %v2111 = vsel %vm1925, %v979, 0
      %2113 = vmatprep.subr.bf16.mxu0 0
      %2114 = vmatpush1.bf16.msra.mxu0 %v2111
      %2115 = vmatprep.subr.bf16.mxu0 0
      %2116 = vmatpush1.bf16.msra.mxu0 0
      %2117 = vmatprep.subr.bf16.mxu0 0
      %2118 = vmatpush1.bf16.msra.mxu0 0
      %2119 = vmatprep.subr.bf16.mxu0 0
      %2120 = vmatpush1.bf16.msra.mxu0 0
      %2121 = vmatprep.subr.bf16.mxu0 0
      %2122 = vmatpush1.bf16.msra.mxu0 0
      %2123 = vmatprep.subr.bf16.mxu0 0
      %2124 = vmatpush1.bf16.msra.mxu0 0
      %2125 = vmatprep.subr.bf16.mxu0 0
      %2126 = vmatpush1.bf16.msra.mxu0 0
      %2127 = vmatprep.subr.bf16.mxu0 0
      %2128 = vmatpush1.bf16.msra.mxu0 0
      %2129 = vmatprep.subr.bf16.mxu0 0
      %2130 = vmatpush1.bf16.msra.mxu0 0
      %2131 = vmatprep.subr.bf16.mxu0 0
      %2132 = vmatpush1.bf16.msra.mxu0 0
      %2133 = vmatprep.subr.bf16.mxu0 0
      %2134 = vmatpush1.bf16.msra.mxu0 0
      %2135 = vmatprep.subr.bf16.mxu0 0
      %2136 = vmatpush1.bf16.msra.mxu0 0
      %2137 = vmatprep.subr.bf16.mxu0 0
      %2138 = vmatpush1.bf16.msra.mxu0 0
      %2139 = vmatprep.subr.bf16.mxu0 0
      %2140 = vmatpush1.bf16.msra.mxu0 0
      %2141 = vmatprep.subr.bf16.mxu0 0
      %2142 = vmatpush1.bf16.msra.mxu0 0
      %2143 = vmatprep.subr.bf16.mxu0 0
      %2144 = vmatpush1.bf16.msra.mxu0 0
      %2145 = vmatprep.mubr.bf16.mxu0 0
      %2146 = vmatmul.mubr.bf16.gmra.mrb[0].mxu0 %v2108
      %v2147 = vpop.f32.mrb[0].mxu0
      %v2148 = vadd.f32 0.0, %v2147
      %v2149 = vpop.f32.mrb[0].mxu0
      %v2150 = vpop.f32.mrb[0].mxu0
      %v2151 = vpop.f32.mrb[0].mxu0
      %2152 = vdwg.mxu0
      %v2154 = vsel %vm1921, %v1910, 0
      %v2157 = vsel %vm1925, %v980, 0
      %2159 = vmatprep.subr.bf16.mxu0 0
      %2160 = vmatpush1.bf16.msra.mxu0 %v2157
      %2161 = vmatprep.subr.bf16.mxu0 0
      %2162 = vmatpush1.bf16.msra.mxu0 0
      %2163 = vmatprep.subr.bf16.mxu0 0
      %2164 = vmatpush1.bf16.msra.mxu0 0
      %2165 = vmatprep.subr.bf16.mxu0 0
      %2166 = vmatpush1.bf16.msra.mxu0 0
      %2167 = vmatprep.subr.bf16.mxu0 0
      %2168 = vmatpush1.bf16.msra.mxu0 0
      %2169 = vmatprep.subr.bf16.mxu0 0
      %2170 = vmatpush1.bf16.msra.mxu0 0
      %2171 = vmatprep.subr.bf16.mxu0 0
      %2172 = vmatpush1.bf16.msra.mxu0 0
      %2173 = vmatprep.subr.bf16.mxu0 0
      %2174 = vmatpush1.bf16.msra.mxu0 0
      %2175 = vmatprep.subr.bf16.mxu0 0
      %2176 = vmatpush1.bf16.msra.mxu0 0
      %2177 = vmatprep.subr.bf16.mxu0 0
      %2178 = vmatpush1.bf16.msra.mxu0 0
      %2179 = vmatprep.subr.bf16.mxu0 0
      %2180 = vmatpush1.bf16.msra.mxu0 0
      %2181 = vmatprep.subr.bf16.mxu0 0
      %2182 = vmatpush1.bf16.msra.mxu0 0
      %2183 = vmatprep.subr.bf16.mxu0 0
      %2184 = vmatpush1.bf16.msra.mxu0 0
      %2185 = vmatprep.subr.bf16.mxu0 0
      %2186 = vmatpush1.bf16.msra.mxu0 0
      %2187 = vmatprep.subr.bf16.mxu0 0
      %2188 = vmatpush1.bf16.msra.mxu0 0
      %2189 = vmatprep.subr.bf16.mxu0 0
      %2190 = vmatpush1.bf16.msra.mxu0 0
      %2191 = vmatprep.mubr.bf16.mxu0 0
      %2192 = vmatmul.mubr.bf16.gmra.mrb[0].mxu0 %v2154
      %v2193 = vpop.f32.mrb[0].mxu0
      %v2194 = vadd.f32 0.0, %v2193
      %v2195 = vpop.f32.mrb[0].mxu0
      %v2196 = vpop.f32.mrb[0].mxu0
      %v2197 = vpop.f32.mrb[0].mxu0
      %2198 = vdwg.mxu0
      %v2200 = vsel %vm1921, %v1911, 0
      %v2203 = vsel %vm1925, %v981, 0
      %2205 = vmatprep.subr.bf16.mxu0 0
      %2206 = vmatpush1.bf16.msra.mxu0 %v2203
      %2207 = vmatprep.subr.bf16.mxu0 0
      %2208 = vmatpush1.bf16.msra.mxu0 0
      %2209 = vmatprep.subr.bf16.mxu0 0
      %2210 = vmatpush1.bf16.msra.mxu0 0
      %2211 = vmatprep.subr.bf16.mxu0 0
      %2212 = vmatpush1.bf16.msra.mxu0 0
      %2213 = vmatprep.subr.bf16.mxu0 0
      %2214 = vmatpush1.bf16.msra.mxu0 0
      %2215 = vmatprep.subr.bf16.mxu0 0
      %2216 = vmatpush1.bf16.msra.mxu0 0
      %2217 = vmatprep.subr.bf16.mxu0 0
      %2218 = vmatpush1.bf16.msra.mxu0 0
      %2219 = vmatprep.subr.bf16.mxu0 0
      %2220 = vmatpush1.bf16.msra.mxu0 0
      %2221 = vmatprep.subr.bf16.mxu0 0
      %2222 = vmatpush1.bf16.msra.mxu0 0
      %2223 = vmatprep.subr.bf16.mxu0 0
      %2224 = vmatpush1.bf16.msra.mxu0 0
      %2225 = vmatprep.subr.bf16.mxu0 0
      %2226 = vmatpush1.bf16.msra.mxu0 0
      %2227 = vmatprep.subr.bf16.mxu0 0
      %2228 = vmatpush1.bf16.msra.mxu0 0
      %2229 = vmatprep.subr.bf16.mxu0 0
      %2230 = vmatpush1.bf16.msra.mxu0 0
      %2231 = vmatprep.subr.bf16.mxu0 0
      %2232 = vmatpush1.bf16.msra.mxu0 0
      %2233 = vmatprep.subr.bf16.mxu0 0
      %2234 = vmatpush1.bf16.msra.mxu0 0
      %2235 = vmatprep.subr.bf16.mxu0 0
      %2236 = vmatpush1.bf16.msra.mxu0 0
      %2237 = vmatprep.mubr.bf16.mxu0 0
      %2238 = vmatmul.mubr.bf16.gmra.mrb[0].mxu0 %v2200
      %v2239 = vpop.f32.mrb[0].mxu0
      %v2240 = vadd.f32 0.0, %v2239
      %v2241 = vpop.f32.mrb[0].mxu0
      %v2242 = vpop.f32.mrb[0].mxu0
      %v2243 = vpop.f32.mrb[0].mxu0
      %2244 = vdwg.mxu0
      %v2246 = vsel %vm1921, %v1912, 0
      %v2249 = vsel %vm1925, %v982, 0
      %2251 = vmatprep.subr.bf16.mxu0 0
      %2252 = vmatpush1.bf16.msra.mxu0 %v2249
      %2253 = vmatprep.subr.bf16.mxu0 0
      %2254 = vmatpush1.bf16.msra.mxu0 0
      %2255 = vmatprep.subr.bf16.mxu0 0
      %2256 = vmatpush1.bf16.msra.mxu0 0
      %2257 = vmatprep.subr.bf16.mxu0 0
      %2258 = vmatpush1.bf16.msra.mxu0 0
      %2259 = vmatprep.subr.bf16.mxu0 0
      %2260 = vmatpush1.bf16.msra.mxu0 0
      %2261 = vmatprep.subr.bf16.mxu0 0
      %2262 = vmatpush1.bf16.msra.mxu0 0
      %2263 = vmatprep.subr.bf16.mxu0 0
      %2264 = vmatpush1.bf16.msra.mxu0 0
      %2265 = vmatprep.subr.bf16.mxu0 0
      %2266 = vmatpush1.bf16.msra.mxu0 0
      %2267 = vmatprep.subr.bf16.mxu0 0
      %2268 = vmatpush1.bf16.msra.mxu0 0
      %2269 = vmatprep.subr.bf16.mxu0 0
      %2270 = vmatpush1.bf16.msra.mxu0 0
      %2271 = vmatprep.subr.bf16.mxu0 0
      %2272 = vmatpush1.bf16.msra.mxu0 0
      %2273 = vmatprep.subr.bf16.mxu0 0
      %2274 = vmatpush1.bf16.msra.mxu0 0
      %2275 = vmatprep.subr.bf16.mxu0 0
      %2276 = vmatpush1.bf16.msra.mxu0 0
      %2277 = vmatprep.subr.bf16.mxu0 0
      %2278 = vmatpush1.bf16.msra.mxu0 0
      %2279 = vmatprep.subr.bf16.mxu0 0
      %2280 = vmatpush1.bf16.msra.mxu0 0
      %2281 = vmatprep.subr.bf16.mxu0 0
      %2282 = vmatpush1.bf16.msra.mxu0 0
      %2283 = vmatprep.mubr.bf16.mxu0 0
      %2284 = vmatmul.mubr.bf16.gmra.mrb[0].mxu0 %v2246
      %v2285 = vpop.f32.mrb[0].mxu0
      %v2286 = vadd.f32 0.0, %v2285
      %v2287 = vpop.f32.mrb[0].mxu0
      %v2288 = vpop.f32.mrb[0].mxu0
      %v2289 = vpop.f32.mrb[0].mxu0
      %2290 = vdwg.mxu0
      %v2292 = vsel %vm1921, %v1913, 0
      %v2295 = vsel %vm1925, %v983, 0
      %2297 = vmatprep.subr.bf16.mxu0 0
      %2298 = vmatpush1.bf16.msra.mxu0 %v2295
      %2299 = vmatprep.subr.bf16.mxu0 0
      %2300 = vmatpush1.bf16.msra.mxu0 0
      %2301 = vmatprep.subr.bf16.mxu0 0
      %2302 = vmatpush1.bf16.msra.mxu0 0
      %2303 = vmatprep.subr.bf16.mxu0 0
      %2304 = vmatpush1.bf16.msra.mxu0 0
      %2305 = vmatprep.subr.bf16.mxu0 0
      %2306 = vmatpush1.bf16.msra.mxu0 0
      %2307 = vmatprep.subr.bf16.mxu0 0
      %2308 = vmatpush1.bf16.msra.mxu0 0
      %2309 = vmatprep.subr.bf16.mxu0 0
      %2310 = vmatpush1.bf16.msra.mxu0 0
      %2311 = vmatprep.subr.bf16.mxu0 0
      %2312 = vmatpush1.bf16.msra.mxu0 0
      %2313 = vmatprep.subr.bf16.mxu0 0
      %2314 = vmatpush1.bf16.msra.mxu0 0
      %2315 = vmatprep.subr.bf16.mxu0 0
      %2316 = vmatpush1.bf16.msra.mxu0 0
      %2317 = vmatprep.subr.bf16.mxu0 0
      %2318 = vmatpush1.bf16.msra.mxu0 0
      %2319 = vmatprep.subr.bf16.mxu0 0
      %2320 = vmatpush1.bf16.msra.mxu0 0
      %2321 = vmatprep.subr.bf16.mxu0 0
      %2322 = vmatpush1.bf16.msra.mxu0 0
      %2323 = vmatprep.subr.bf16.mxu0 0
      %2324 = vmatpush1.bf16.msra.mxu0 0
      %2325 = vmatprep.subr.bf16.mxu0 0
      %2326 = vmatpush1.bf16.msra.mxu0 0
      %2327 = vmatprep.subr.bf16.mxu0 0
      %2328 = vmatpush1.bf16.msra.mxu0 0
      %2329 = vmatprep.mubr.bf16.mxu0 0
      %2330 = vmatmul.mubr.bf16.gmra.mrb[0].mxu0 %v2292
      %v2331 = vpop.f32.mrb[0].mxu0
      %v2332 = vadd.f32 0.0, %v2331
      %v2333 = vpop.f32.mrb[0].mxu0
      %v2334 = vpop.f32.mrb[0].mxu0
      %v2335 = vpop.f32.mrb[0].mxu0
      %2336 = vdwg.mxu0
      %v2338 = vsel %vm1921, %v1914, 0
      %v2341 = vsel %vm1925, %v984, 0
      %2343 = vmatprep.subr.bf16.mxu0 0
      %2344 = vmatpush1.bf16.msra.mxu0 %v2341
      %2345 = vmatprep.subr.bf16.mxu0 0
      %2346 = vmatpush1.bf16.msra.mxu0 0
      %2347 = vmatprep.subr.bf16.mxu0 0
      %2348 = vmatpush1.bf16.msra.mxu0 0
      %2349 = vmatprep.subr.bf16.mxu0 0
      %2350 = vmatpush1.bf16.msra.mxu0 0
      %2351 = vmatprep.subr.bf16.mxu0 0
      %2352 = vmatpush1.bf16.msra.mxu0 0
      %2353 = vmatprep.subr.bf16.mxu0 0
      %2354 = vmatpush1.bf16.msra.mxu0 0
      %2355 = vmatprep.subr.bf16.mxu0 0
      %2356 = vmatpush1.bf16.msra.mxu0 0
      %2357 = vmatprep.subr.bf16.mxu0 0
      %2358 = vmatpush1.bf16.msra.mxu0 0
      %2359 = vmatprep.subr.bf16.mxu0 0
      %2360 = vmatpush1.bf16.msra.mxu0 0
      %2361 = vmatprep.subr.bf16.mxu0 0
      %2362 = vmatpush1.bf16.msra.mxu0 0
      %2363 = vmatprep.subr.bf16.mxu0 0
      %2364 = vmatpush1.bf16.msra.mxu0 0
      %2365 = vmatprep.subr.bf16.mxu0 0
      %2366 = vmatpush1.bf16.msra.mxu0 0
      %2367 = vmatprep.subr.bf16.mxu0 0
      %2368 = vmatpush1.bf16.msra.mxu0 0
      %2369 = vmatprep.subr.bf16.mxu0 0
      %2370 = vmatpush1.bf16.msra.mxu0 0
      %2371 = vmatprep.subr.bf16.mxu0 0
      %2372 = vmatpush1.bf16.msra.mxu0 0
      %2373 = vmatprep.subr.bf16.mxu0 0
      %2374 = vmatpush1.bf16.msra.mxu0 0
      %2375 = vmatprep.mubr.bf16.mxu0 0
      %2376 = vmatmul.mubr.bf16.gmra.mrb[0].mxu0 %v2338
      %v2377 = vpop.f32.mrb[0].mxu0
      %v2378 = vadd.f32 0.0, %v2377
      %v2379 = vpop.f32.mrb[0].mxu0
      %v2380 = vpop.f32.mrb[0].mxu0
      %v2381 = vpop.f32.mrb[0].mxu0
      %2382 = vdwg.mxu0
      %v2384 = vsel %vm1921, %v1915, 0
      %v2387 = vsel %vm1925, %v985, 0
      %2389 = vmatprep.subr.bf16.mxu0 0
      %2390 = vmatpush1.bf16.msra.mxu0 %v2387
      %2391 = vmatprep.subr.bf16.mxu0 0
      %2392 = vmatpush1.bf16.msra.mxu0 0
      %2393 = vmatprep.subr.bf16.mxu0 0
      %2394 = vmatpush1.bf16.msra.mxu0 0
      %2395 = vmatprep.subr.bf16.mxu0 0
      %2396 = vmatpush1.bf16.msra.mxu0 0
      %2397 = vmatprep.subr.bf16.mxu0 0
      %2398 = vmatpush1.bf16.msra.mxu0 0
      %2399 = vmatprep.subr.bf16.mxu0 0
      %2400 = vmatpush1.bf16.msra.mxu0 0
      %2401 = vmatprep.subr.bf16.mxu0 0
      %2402 = vmatpush1.bf16.msra.mxu0 0
      %2403 = vmatprep.subr.bf16.mxu0 0
      %2404 = vmatpush1.bf16.msra.mxu0 0
      %2405 = vmatprep.subr.bf16.mxu0 0
      %2406 = vmatpush1.bf16.msra.mxu0 0
      %2407 = vmatprep.subr.bf16.mxu0 0
      %2408 = vmatpush1.bf16.msra.mxu0 0
      %2409 = vmatprep.subr.bf16.mxu0 0
      %2410 = vmatpush1.bf16.msra.mxu0 0
      %2411 = vmatprep.subr.bf16.mxu0 0
      %2412 = vmatpush1.bf16.msra.mxu0 0
      %2413 = vmatprep.subr.bf16.mxu0 0
      %2414 = vmatpush1.bf16.msra.mxu0 0
      %2415 = vmatprep.subr.bf16.mxu0 0
      %2416 = vmatpush1.bf16.msra.mxu0 0
      %2417 = vmatprep.subr.bf16.mxu0 0
      %2418 = vmatpush1.bf16.msra.mxu0 0
      %2419 = vmatprep.subr.bf16.mxu0 0
      %2420 = vmatpush1.bf16.msra.mxu0 0
      %2421 = vmatprep.mubr.bf16.mxu0 0
      %2422 = vmatmul.mubr.bf16.gmra.mrb[0].mxu0 %v2384
      %v2423 = vpop.f32.mrb[0].mxu0
      %v2424 = vadd.f32 0.0, %v2423
      %v2425 = vpop.f32.mrb[0].mxu0
      %v2426 = vpop.f32.mrb[0].mxu0
      %v2427 = vpop.f32.mrb[0].mxu0
      %2428 = vdwg.mxu0
      %v2430 = vsel %vm1921, %v1916, 0
      %v2433 = vsel %vm1925, %v986, 0
      %2435 = vmatprep.subr.bf16.mxu0 0
      %2436 = vmatpush1.bf16.msra.mxu0 %v2433
      %2437 = vmatprep.subr.bf16.mxu0 0
      %2438 = vmatpush1.bf16.msra.mxu0 0
      %2439 = vmatprep.subr.bf16.mxu0 0
      %2440 = vmatpush1.bf16.msra.mxu0 0
      %2441 = vmatprep.subr.bf16.mxu0 0
      %2442 = vmatpush1.bf16.msra.mxu0 0
      %2443 = vmatprep.subr.bf16.mxu0 0
      %2444 = vmatpush1.bf16.msra.mxu0 0
      %2445 = vmatprep.subr.bf16.mxu0 0
      %2446 = vmatpush1.bf16.msra.mxu0 0
      %2447 = vmatprep.subr.bf16.mxu0 0
      %2448 = vmatpush1.bf16.msra.mxu0 0
      %2449 = vmatprep.subr.bf16.mxu0 0
      %2450 = vmatpush1.bf16.msra.mxu0 0
      %2451 = vmatprep.subr.bf16.mxu0 0
      %2452 = vmatpush1.bf16.msra.mxu0 0
      %2453 = vmatprep.subr.bf16.mxu0 0
      %2454 = vmatpush1.bf16.msra.mxu0 0
      %2455 = vmatprep.subr.bf16.mxu0 0
      %2456 = vmatpush1.bf16.msra.mxu0 0
      %2457 = vmatprep.subr.bf16.mxu0 0
      %2458 = vmatpush1.bf16.msra.mxu0 0
      %2459 = vmatprep.subr.bf16.mxu0 0
      %2460 = vmatpush1.bf16.msra.mxu0 0
      %2461 = vmatprep.subr.bf16.mxu0 0
      %2462 = vmatpush1.bf16.msra.mxu0 0
      %2463 = vmatprep.subr.bf16.mxu0 0
      %2464 = vmatpush1.bf16.msra.mxu0 0
      %2465 = vmatprep.subr.bf16.mxu0 0
      %2466 = vmatpush1.bf16.msra.mxu0 0
      %2467 = vmatprep.mubr.bf16.mxu0 0
      %2468 = vmatmul.mubr.bf16.gmra.mrb[0].mxu0 %v2430
      %v2469 = vpop.f32.mrb[0].mxu0
      %v2470 = vadd.f32 0.0, %v2469
      %v2471 = vpop.f32.mrb[0].mxu0
      %v2472 = vpop.f32.mrb[0].mxu0
      %v2473 = vpop.f32.mrb[0].mxu0
      %2474 = vdwg.mxu0
      %v2476 = vsel %vm1921, %v1917, 0
      %v2479 = vsel %vm1925, %v987, 0
      %2481 = vmatprep.subr.bf16.mxu0 0
      %2482 = vmatpush1.bf16.msra.mxu0 %v2479
      %2483 = vmatprep.subr.bf16.mxu0 0
      %2484 = vmatpush1.bf16.msra.mxu0 0
      %2485 = vmatprep.subr.bf16.mxu0 0
      %2486 = vmatpush1.bf16.msra.mxu0 0
      %2487 = vmatprep.subr.bf16.mxu0 0
      %2488 = vmatpush1.bf16.msra.mxu0 0
      %2489 = vmatprep.subr.bf16.mxu0 0
      %2490 = vmatpush1.bf16.msra.mxu0 0
      %2491 = vmatprep.subr.bf16.mxu0 0
      %2492 = vmatpush1.bf16.msra.mxu0 0
      %2493 = vmatprep.subr.bf16.mxu0 0
      %2494 = vmatpush1.bf16.msra.mxu0 0
      %2495 = vmatprep.subr.bf16.mxu0 0
      %2496 = vmatpush1.bf16.msra.mxu0 0
      %2497 = vmatprep.subr.bf16.mxu0 0
      %2498 = vmatpush1.bf16.msra.mxu0 0
      %2499 = vmatprep.subr.bf16.mxu0 0
      %2500 = vmatpush1.bf16.msra.mxu0 0
      %2501 = vmatprep.subr.bf16.mxu0 0
      %2502 = vmatpush1.bf16.msra.mxu0 0
      %2503 = vmatprep.subr.bf16.mxu0 0
      %2504 = vmatpush1.bf16.msra.mxu0 0
      %2505 = vmatprep.subr.bf16.mxu0 0
      %2506 = vmatpush1.bf16.msra.mxu0 0
      %2507 = vmatprep.subr.bf16.mxu0 0
      %2508 = vmatpush1.bf16.msra.mxu0 0
      %2509 = vmatprep.subr.bf16.mxu0 0
      %2510 = vmatpush1.bf16.msra.mxu0 0
      %2511 = vmatprep.subr.bf16.mxu0 0
      %2512 = vmatpush1.bf16.msra.mxu0 0
      %2513 = vmatprep.mubr.bf16.mxu0 0
      %2514 = vmatmul.mubr.bf16.gmra.mrb[0].mxu0 %v2476
      %v2515 = vpop.f32.mrb[0].mxu0
      %v2516 = vadd.f32 0.0, %v2515
      %v2517 = vpop.f32.mrb[0].mxu0
      %v2518 = vpop.f32.mrb[0].mxu0
      %v2519 = vpop.f32.mrb[0].mxu0
      %2520 = vdwg.mxu0
      %v2522 = vsel %vm1921, %v1918, 0
      %v2525 = vsel %vm1925, %v988, 0
      %2527 = vmatprep.subr.bf16.mxu0 0
      %2528 = vmatpush1.bf16.msra.mxu0 %v2525
      %2529 = vmatprep.subr.bf16.mxu0 0
      %2530 = vmatpush1.bf16.msra.mxu0 0
      %2531 = vmatprep.subr.bf16.mxu0 0
      %2532 = vmatpush1.bf16.msra.mxu0 0
      %2533 = vmatprep.subr.bf16.mxu0 0
      %2534 = vmatpush1.bf16.msra.mxu0 0
      %2535 = vmatprep.subr.bf16.mxu0 0
      %2536 = vmatpush1.bf16.msra.mxu0 0
      %2537 = vmatprep.subr.bf16.mxu0 0
      %2538 = vmatpush1.bf16.msra.mxu0 0
      %2539 = vmatprep.subr.bf16.mxu0 0
      %2540 = vmatpush1.bf16.msra.mxu0 0
      %2541 = vmatprep.subr.bf16.mxu0 0
      %2542 = vmatpush1.bf16.msra.mxu0 0
      %2543 = vmatprep.subr.bf16.mxu0 0
      %2544 = vmatpush1.bf16.msra.mxu0 0
      %2545 = vmatprep.subr.bf16.mxu0 0
      %2546 = vmatpush1.bf16.msra.mxu0 0
      %2547 = vmatprep.subr.bf16.mxu0 0
      %2548 = vmatpush1.bf16.msra.mxu0 0
      %2549 = vmatprep.subr.bf16.mxu0 0
      %2550 = vmatpush1.bf16.msra.mxu0 0
      %2551 = vmatprep.subr.bf16.mxu0 0
      %2552 = vmatpush1.bf16.msra.mxu0 0
      %2553 = vmatprep.subr.bf16.mxu0 0
      %2554 = vmatpush1.bf16.msra.mxu0 0
      %2555 = vmatprep.subr.bf16.mxu0 0
      %2556 = vmatpush1.bf16.msra.mxu0 0
      %2557 = vmatprep.subr.bf16.mxu0 0
      %2558 = vmatpush1.bf16.msra.mxu0 0
      %2559 = vmatprep.mubr.bf16.mxu0 0
      %2560 = vmatmul.mubr.bf16.gmra.mrb[0].mxu0 %v2522
      %v2561 = vpop.f32.mrb[0].mxu0
      %v2562 = vadd.f32 0.0, %v2561
      %v2563 = vpop.f32.mrb[0].mxu0
      %v2564 = vpop.f32.mrb[0].mxu0
      %v2565 = vpop.f32.mrb[0].mxu0
      %2566 = vdwg.mxu0
      %v2568 = vsel %vm1921, %v1919, 0
      %v2571 = vsel %vm1925, %v989, 0
      %2573 = vmatprep.subr.bf16.mxu0 0
      %2574 = vmatpush1.bf16.msra.mxu0 %v2571
      %2575 = vmatprep.subr.bf16.mxu0 0
      %2576 = vmatpush1.bf16.msra.mxu0 0
      %2577 = vmatprep.subr.bf16.mxu0 0
      %2578 = vmatpush1.bf16.msra.mxu0 0
      %2579 = vmatprep.subr.bf16.mxu0 0
      %2580 = vmatpush1.bf16.msra.mxu0 0
      %2581 = vmatprep.subr.bf16.mxu0 0
      %2582 = vmatpush1.bf16.msra.mxu0 0
      %2583 = vmatprep.subr.bf16.mxu0 0
      %2584 = vmatpush1.bf16.msra.mxu0 0
      %2585 = vmatprep.subr.bf16.mxu0 0
      %2586 = vmatpush1.bf16.msra.mxu0 0
      %2587 = vmatprep.subr.bf16.mxu0 0
      %2588 = vmatpush1.bf16.msra.mxu0 0
      %2589 = vmatprep.subr.bf16.mxu0 0
      %2590 = vmatpush1.bf16.msra.mxu0 0
      %2591 = vmatprep.subr.bf16.mxu0 0
      %2592 = vmatpush1.bf16.msra.mxu0 0
      %2593 = vmatprep.subr.bf16.mxu0 0
      %2594 = vmatpush1.bf16.msra.mxu0 0
      %2595 = vmatprep.subr.bf16.mxu0 0
      %2596 = vmatpush1.bf16.msra.mxu0 0
      %2597 = vmatprep.subr.bf16.mxu0 0
      %2598 = vmatpush1.bf16.msra.mxu0 0
      %2599 = vmatprep.subr.bf16.mxu0 0
      %2600 = vmatpush1.bf16.msra.mxu0 0
      %2601 = vmatprep.subr.bf16.mxu0 0
      %2602 = vmatpush1.bf16.msra.mxu0 0
      %2603 = vmatprep.subr.bf16.mxu0 0
      %2604 = vmatpush1.bf16.msra.mxu0 0
      %2605 = vmatprep.mubr.bf16.mxu0 0
      %2606 = vmatmul.mubr.bf16.gmra.mrb[0].mxu0 %v2568
      %v2607 = vpop.f32.mrb[0].mxu0
      %v2608 = vadd.f32 0.0, %v2607
      %v2609 = vpop.f32.mrb[0].mxu0
      %v2610 = vpop.f32.mrb[0].mxu0
      %v2611 = vpop.f32.mrb[0].mxu0
      %2612 = vdwg.mxu0
      %v2614 = vsel %vm1921, %v1920, 0
      %v2617 = vsel %vm1925, %v990, 0
      %2619 = vmatprep.subr.bf16.mxu0 0
      %2620 = vmatpush1.bf16.msra.mxu0 %v2617
      %2621 = vmatprep.subr.bf16.mxu0 0
      %2622 = vmatpush1.bf16.msra.mxu0 0
      %2623 = vmatprep.subr.bf16.mxu0 0
      %2624 = vmatpush1.bf16.msra.mxu0 0
      %2625 = vmatprep.subr.bf16.mxu0 0
      %2626 = vmatpush1.bf16.msra.mxu0 0
      %2627 = vmatprep.subr.bf16.mxu0 0
      %2628 = vmatpush1.bf16.msra.mxu0 0
      %2629 = vmatprep.subr.bf16.mxu0 0
      %2630 = vmatpush1.bf16.msra.mxu0 0
      %2631 = vmatprep.subr.bf16.mxu0 0
      %2632 = vmatpush1.bf16.msra.mxu0 0
      %2633 = vmatprep.subr.bf16.mxu0 0
      %2634 = vmatpush1.bf16.msra.mxu0 0
      %2635 = vmatprep.subr.bf16.mxu0 0
      %2636 = vmatpush1.bf16.msra.mxu0 0
      %2637 = vmatprep.subr.bf16.mxu0 0
      %2638 = vmatpush1.bf16.msra.mxu0 0
      %2639 = vmatprep.subr.bf16.mxu0 0
      %2640 = vmatpush1.bf16.msra.mxu0 0
      %2641 = vmatprep.subr.bf16.mxu0 0
      %2642 = vmatpush1.bf16.msra.mxu0 0
      %2643 = vmatprep.subr.bf16.mxu0 0
      %2644 = vmatpush1.bf16.msra.mxu0 0
      %2645 = vmatprep.subr.bf16.mxu0 0
      %2646 = vmatpush1.bf16.msra.mxu0 0
      %2647 = vmatprep.subr.bf16.mxu0 0
      %2648 = vmatpush1.bf16.msra.mxu0 0
      %2649 = vmatprep.subr.bf16.mxu0 0
      %2650 = vmatpush1.bf16.msra.mxu0 0
      %2651 = vmatprep.mubr.bf16.mxu0 0
      %2652 = vmatmul.mubr.bf16.gmra.mrb[0].mxu0 %v2614
      %v2653 = vpop.f32.mrb[0].mxu0
      %v2654 = vadd.f32 0.0, %v2653
      %v2655 = vpop.f32.mrb[0].mxu0
      %v2656 = vpop.f32.mrb[0].mxu0
      %v2657 = vpop.f32.mrb[0].mxu0
      %2658 = vdwg.mxu0
      %v2659 = vcombine.low %v1964, %v2056
      %v2661 = vunpack.c.l.s4 1983009808
      %v2662 = vunpack.c.0.s8 %v2661
      %v2663 = vlaneseq
      %v2664 = vshrl.u32 %v2663, 7
      %v2665 = vsub.s32 %v2662, %v2664
      %v2666 = vrot.slane %v2659, %v2665
      %v2667 = vcombine.low %v2010, %v2102
      %v2669 = vunpack.c.l.s4 1983009808
      %v2670 = vunpack.c.0.s8 %v2669
      %v2671 = vlaneseq
      %v2672 = vshrl.u32 %v2671, 7
      %v2673 = vsub.s32 %v2670, %v2672
      %v2674 = vrot.slane %v2667, %v2673
      %v2675 = vcombine.low %v2148, %v2240
      %v2677 = vunpack.c.l.s4 1983009808
      %v2678 = vunpack.c.0.s8 %v2677
      %v2679 = vlaneseq
      %v2680 = vshrl.u32 %v2679, 7
      %v2681 = vsub.s32 %v2678, %v2680
      %v2682 = vrot.slane %v2675, %v2681
      %v2683 = vcombine.low %v2194, %v2286
      %v2685 = vunpack.c.l.s4 1983009808
      %v2686 = vunpack.c.0.s8 %v2685
      %v2687 = vlaneseq
      %v2688 = vshrl.u32 %v2687, 7
      %v2689 = vsub.s32 %v2686, %v2688
      %v2690 = vrot.slane %v2683, %v2689
      %v2691 = vcombine.low %v2666, %v2674
      %v2692 = vcombine.high %v2666, %v2674
      %v2694 = vunpack.c.l.s4 1934713408
      %v2695 = vunpack.c.0.s8 %v2694
      %v2696 = vlaneseq
      %v2697 = vshrl.u32 %v2696, 7
      %v2698 = vsub.s32 %v2695, %v2697
      %v2699 = vrot.slane %v2691, %v2698
      %v2701 = vunpack.c.l.s4 1934713408
      %v2702 = vunpack.c.0.s8 %v2701
      %v2703 = vlaneseq
      %v2704 = vshrl.u32 %v2703, 7
      %v2705 = vsub.s32 %v2702, %v2704
      %v2706 = vrot.slane %v2692, %v2705
      %v2707 = vcombine.low %v2682, %v2690
      %v2708 = vcombine.high %v2682, %v2690
      %v2710 = vunpack.c.l.s4 1934713408
      %v2711 = vunpack.c.0.s8 %v2710
      %v2712 = vlaneseq
      %v2713 = vshrl.u32 %v2712, 7
      %v2714 = vsub.s32 %v2711, %v2713
      %v2715 = vrot.slane %v2707, %v2714
      %v2717 = vunpack.c.l.s4 1934713408
      %v2718 = vunpack.c.0.s8 %v2717
      %v2719 = vlaneseq
      %v2720 = vshrl.u32 %v2719, 7
      %v2721 = vsub.s32 %v2718, %v2720
      %v2722 = vrot.slane %v2708, %v2721
      %v2723 = vcombine.low %v2699, %v2715
      %v2724 = vcombine.high %v2699, %v2715
      %v2725 = vcombine.low %v2706, %v2722
      %v2726 = vcombine.high %v2706, %v2722
      %v2727 = vcombine.low %v2332, %v2424
      %v2729 = vunpack.c.l.s4 1983009808
      %v2730 = vunpack.c.0.s8 %v2729
      %v2731 = vlaneseq
      %v2732 = vshrl.u32 %v2731, 7
      %v2733 = vsub.s32 %v2730, %v2732
      %v2734 = vrot.slane %v2727, %v2733
      %v2735 = vcombine.low %v2378, %v2470
      %v2737 = vunpack.c.l.s4 1983009808
      %v2738 = vunpack.c.0.s8 %v2737
      %v2739 = vlaneseq
      %v2740 = vshrl.u32 %v2739, 7
      %v2741 = vsub.s32 %v2738, %v2740
      %v2742 = vrot.slane %v2735, %v2741
      %v2743 = vcombine.low %v2516, %v2608
      %v2745 = vunpack.c.l.s4 1983009808
      %v2746 = vunpack.c.0.s8 %v2745
      %v2747 = vlaneseq
      %v2748 = vshrl.u32 %v2747, 7
      %v2749 = vsub.s32 %v2746, %v2748
      %v2750 = vrot.slane %v2743, %v2749
      %v2751 = vcombine.low %v2562, %v2654
      %v2753 = vunpack.c.l.s4 1983009808
      %v2754 = vunpack.c.0.s8 %v2753
      %v2755 = vlaneseq
      %v2756 = vshrl.u32 %v2755, 7
      %v2757 = vsub.s32 %v2754, %v2756
      %v2758 = vrot.slane %v2751, %v2757
      %v2759 = vcombine.low %v2734, %v2742
      %v2760 = vcombine.high %v2734, %v2742
      %v2762 = vunpack.c.l.s4 1934713408
      %v2763 = vunpack.c.0.s8 %v2762
      %v2764 = vlaneseq
      %v2765 = vshrl.u32 %v2764, 7
      %v2766 = vsub.s32 %v2763, %v2765
      %v2767 = vrot.slane %v2759, %v2766
      %v2769 = vunpack.c.l.s4 1934713408
      %v2770 = vunpack.c.0.s8 %v2769
      %v2771 = vlaneseq
      %v2772 = vshrl.u32 %v2771, 7
      %v2773 = vsub.s32 %v2770, %v2772
      %v2774 = vrot.slane %v2760, %v2773
      %v2775 = vcombine.low %v2750, %v2758
      %v2776 = vcombine.high %v2750, %v2758
      %v2778 = vunpack.c.l.s4 1934713408
      %v2779 = vunpack.c.0.s8 %v2778
      %v2780 = vlaneseq
      %v2781 = vshrl.u32 %v2780, 7
      %v2782 = vsub.s32 %v2779, %v2781
      %v2783 = vrot.slane %v2775, %v2782
      %v2785 = vunpack.c.l.s4 1934713408
      %v2786 = vunpack.c.0.s8 %v2785
      %v2787 = vlaneseq
      %v2788 = vshrl.u32 %v2787, 7
      %v2789 = vsub.s32 %v2786, %v2788
      %v2790 = vrot.slane %v2776, %v2789
      %v2791 = vcombine.low %v2767, %v2783
      %v2792 = vcombine.high %v2767, %v2783
      %v2793 = vcombine.low %v2774, %v2790
      %v2794 = vcombine.high %v2774, %v2790
      %v2795 = vpack.c.bf16 %v2791, %v2723
      %v2796 = vpack.c.bf16 %v2792, %v2724
      %v2797 = vpack.c.bf16 %v2793, %v2725
      %v2798 = vpack.c.bf16 %v2794, %v2726
      %v2803 = vunpack.c.l.b16 %v2795
      %v2804 = vunpack.c.h.b16 %v2795
      %v2805 = vunpack.c.l.b16 %v2796
      %v2806 = vunpack.c.h.b16 %v2796
      %v2807 = vunpack.c.l.b16 %v2797
      %v2808 = vunpack.c.h.b16 %v2797
      %v2809 = vunpack.c.l.b16 %v2798
      %v2810 = vunpack.c.h.b16 %v2798
      %v2811 = vpack.c.b16 %v2803, %v2803
      %v2812 = vpack.c.b16 %v2804, %v2804
      %v2813 = vpack.c.b16 %v2805, %v2805
      %v2814 = vpack.c.b16 %v2806, %v2806
      %v2815 = vpack.c.b16 %v2807, %v2807
      %v2816 = vpack.c.b16 %v2808, %v2808
      %v2817 = vpack.c.b16 %v2809, %v2809
      %v2818 = vpack.c.b16 %v2810, %v2810
      %vm2827 = vcmask 125952
      %2828 = vst.msk [vmem:[%s289] sm:$0xf] %vm2827, %v2811
      %2829 = vst.msk [vmem:[%s289 + $0x4] sm:$0xf] %vm2827, %v2812
      %2830 = vst.msk [vmem:[%s289 + $0x8] sm:$0xf] %vm2827, %v2813
      %2831 = vst.msk [vmem:[%s289 + $0xc] sm:$0xf] %vm2827, %v2814
      %2832 = vst.msk [vmem:[%s289 + $0x10] sm:$0xf] %vm2827, %v2815
      %2833 = vst.msk [vmem:[%s289 + $0x14] sm:$0xf] %vm2827, %v2816
      %2834 = vst.msk [vmem:[%s289 + $0x18] sm:$0xf] %vm2827, %v2817
      %2835 = vst.msk [vmem:[%s289 + $0x1c] sm:$0xf] %vm2827, %v2818
      %s2836 = scalar_lea.vmem %s3, 16
      %v2837 = vld [vmem:[%s2836] sm:$0xf]
      %v2838 = vld [vmem:[%s2836 + $0x4] sm:$0xf]
      %v2839 = vld [vmem:[%s2836 + $0x8] sm:$0xf]
      %v2840 = vld [vmem:[%s2836 + $0xc] sm:$0xf]
      %v2845 = vunpack.c.l.b16 %v2837
      %v2846 = vunpack.c.l.b16 %v2838
      %v2847 = vunpack.c.l.b16 %v2839
      %v2848 = vunpack.c.l.b16 %v2840
      %v2849 = vpack.c.b16 %v2846, %v2845
      %v2850 = vpack.c.b16 %v2848, %v2847
      %2853 = vmatprep.subr.bf16.mxu0 0
      %2854 = vmatpush1.bf16.msra.mxu0 %v2849
      %2855 = vmatprep.subr.bf16.mxu0 0
      %2856 = vmatpush1.bf16.msra.mxu0 %v2850
      %2857 = vmatprep.subr.bf16.mxu0 0
      %2858 = vmatpush1.bf16.msra.mxu0 0
      %2859 = vmatprep.subr.bf16.mxu0 0
      %2860 = vmatpush1.bf16.msra.mxu0 0
      %2861 = vmatprep.subr.bf16.mxu0 0
      %2862 = vmatpush1.bf16.msra.mxu0 0
      %2863 = vmatprep.subr.bf16.mxu0 0
      %2864 = vmatpush1.bf16.msra.mxu0 0
      %2865 = vmatprep.subr.bf16.mxu0 0
      %2866 = vmatpush1.bf16.msra.mxu0 0
      %2867 = vmatprep.subr.bf16.mxu0 0
      %2868 = vmatpush1.bf16.msra.mxu0 0
      %2869 = vmatprep.subr.bf16.mxu0 0
      %2870 = vmatpush1.bf16.msra.mxu0 0
      %2871 = vmatprep.subr.bf16.mxu0 0
      %2872 = vmatpush1.bf16.msra.mxu0 0
      %2873 = vmatprep.subr.bf16.mxu0 0
      %2874 = vmatpush1.bf16.msra.mxu0 0
      %2875 = vmatprep.subr.bf16.mxu0 0
      %2876 = vmatpush1.bf16.msra.mxu0 0
      %2877 = vmatprep.subr.bf16.mxu0 0
      %2878 = vmatpush1.bf16.msra.mxu0 0
      %2879 = vmatprep.subr.bf16.mxu0 0
      %2880 = vmatpush1.bf16.msra.mxu0 0
      %2881 = vmatprep.subr.bf16.mxu0 0
      %2882 = vmatpush1.bf16.msra.mxu0 0
      %2883 = vmatprep.subr.bf16.mxu0 0
      %2884 = vmatpush1.bf16.msra.mxu0 0
      %2885 = vmatprep.mubr.bf16.mxu0 0
      %2886 = vmatmul.mubr.bf16.gmra.mrb[0].mxu0 %v633
      %v2887 = vpop.f32.mrb[0].mxu0
      %v2888 = vadd.f32 0.0, %v2887
      %v2889 = vpop.f32.mrb[0].mxu0
      %v2890 = vpop.f32.mrb[0].mxu0
      %v2891 = vadd.f32 0.0, %v2890
      %v2892 = vpop.f32.mrb[0].mxu0
      %2893 = vmatprep.mubr.bf16.mxu0 0
      %2894 = vmatmul.mubr.bf16.gmra.mrb[0].mxu0 %v636
      %v2895 = vpop.f32.mrb[0].mxu0
      %v2896 = vadd.f32 0.0, %v2895
      %v2897 = vpop.f32.mrb[0].mxu0
      %v2898 = vpop.f32.mrb[0].mxu0
      %v2899 = vadd.f32 0.0, %v2898
      %v2900 = vpop.f32.mrb[0].mxu0
      %2901 = vmatprep.mubr.bf16.mxu0 0
      %2902 = vmatmul.mubr.bf16.gmra.mrb[0].mxu0 %v639
      %v2903 = vpop.f32.mrb[0].mxu0
      %v2904 = vadd.f32 0.0, %v2903
      %v2905 = vpop.f32.mrb[0].mxu0
      %v2906 = vpop.f32.mrb[0].mxu0
      %v2907 = vadd.f32 0.0, %v2906
      %v2908 = vpop.f32.mrb[0].mxu0
      %2909 = vmatprep.mubr.bf16.mxu0 0
      %2910 = vmatmul.mubr.bf16.gmra.mrb[0].mxu0 %v642
      %v2911 = vpop.f32.mrb[0].mxu0
      %v2912 = vadd.f32 0.0, %v2911
      %v2913 = vpop.f32.mrb[0].mxu0
      %v2914 = vpop.f32.mrb[0].mxu0
      %v2915 = vadd.f32 0.0, %v2914
      %v2916 = vpop.f32.mrb[0].mxu0
      %2917 = vdwg.mxu0
      %s2918 = scalar_lea.vmem %s4, 16
      %v2919 = vld [vmem:[%s2918] sm:$0xf]
      %v2920 = vld [vmem:[%s2918 + $0x4] sm:$0xf]
      %v2921 = vld [vmem:[%s2918 + $0x8] sm:$0xf]
      %v2922 = vld [vmem:[%s2918 + $0xc] sm:$0xf]
      %v2927 = vunpack.c.l.b16 %v2919
      %v2928 = vunpack.c.l.b16 %v2920
      %v2929 = vunpack.c.l.b16 %v2921
      %v2930 = vunpack.c.l.b16 %v2922
      %v2931 = vpack.c.b16 %v2928, %v2927
      %v2932 = vpack.c.b16 %v2930, %v2929
      %2935 = vmatprep.subr.bf16.mxu0 0
      %2936 = vmatpush1.bf16.msra.mxu0 %v2931
      %2937 = vmatprep.subr.bf16.mxu0 0
      %2938 = vmatpush1.bf16.msra.mxu0 %v2932
      %2939 = vmatprep.subr.bf16.mxu0 0
      %2940 = vmatpush1.bf16.msra.mxu0 0
      %2941 = vmatprep.subr.bf16.mxu0 0
      %2942 = vmatpush1.bf16.msra.mxu0 0
      %2943 = vmatprep.subr.bf16.mxu0 0
      %2944 = vmatpush1.bf16.msra.mxu0 0
      %2945 = vmatprep.subr.bf16.mxu0 0
      %2946 = vmatpush1.bf16.msra.mxu0 0
      %2947 = vmatprep.subr.bf16.mxu0 0
      %2948 = vmatpush1.bf16.msra.mxu0 0
      %2949 = vmatprep.subr.bf16.mxu0 0
      %2950 = vmatpush1.bf16.msra.mxu0 0
      %2951 = vmatprep.subr.bf16.mxu0 0
      %2952 = vmatpush1.bf16.msra.mxu0 0
      %2953 = vmatprep.subr.bf16.mxu0 0
      %2954 = vmatpush1.bf16.msra.mxu0 0
      %2955 = vmatprep.subr.bf16.mxu0 0
      %2956 = vmatpush1.bf16.msra.mxu0 0
      %2957 = vmatprep.subr.bf16.mxu0 0
      %2958 = vmatpush1.bf16.msra.mxu0 0
      %2959 = vmatprep.subr.bf16.mxu0 0
      %2960 = vmatpush1.bf16.msra.mxu0 0
      %2961 = vmatprep.subr.bf16.mxu0 0
      %2962 = vmatpush1.bf16.msra.mxu0 0
      %2963 = vmatprep.subr.bf16.mxu0 0
      %2964 = vmatpush1.bf16.msra.mxu0 0
      %2965 = vmatprep.subr.bf16.mxu0 0
      %2966 = vmatpush1.bf16.msra.mxu0 0
      %2967 = vmatprep.mubr.bf16.mxu0 0
      %2968 = vmatmul.mubr.bf16.gmra.mrb[0].mxu0 %v633
      %v2969 = vpop.f32.mrb[0].mxu0
      %v2970 = vadd.f32 0.0, %v2969
      %v2971 = vpop.f32.mrb[0].mxu0
      %v2972 = vpop.f32.mrb[0].mxu0
      %v2973 = vadd.f32 0.0, %v2972
      %v2974 = vpop.f32.mrb[0].mxu0
      %2975 = vmatprep.mubr.bf16.mxu0 0
      %2976 = vmatmul.mubr.bf16.gmra.mrb[0].mxu0 %v636
      %v2977 = vpop.f32.mrb[0].mxu0
      %v2978 = vadd.f32 0.0, %v2977
      %v2979 = vpop.f32.mrb[0].mxu0
      %v2980 = vpop.f32.mrb[0].mxu0
      %v2981 = vadd.f32 0.0, %v2980
      %v2982 = vpop.f32.mrb[0].mxu0
      %2983 = vmatprep.mubr.bf16.mxu0 0
      %2984 = vmatmul.mubr.bf16.gmra.mrb[0].mxu0 %v639
      %v2985 = vpop.f32.mrb[0].mxu0
      %v2986 = vadd.f32 0.0, %v2985
      %v2987 = vpop.f32.mrb[0].mxu0
      %v2988 = vpop.f32.mrb[0].mxu0
      %v2989 = vadd.f32 0.0, %v2988
      %v2990 = vpop.f32.mrb[0].mxu0
      %2991 = vmatprep.mubr.bf16.mxu0 0
      %2992 = vmatmul.mubr.bf16.gmra.mrb[0].mxu0 %v642
      %v2993 = vpop.f32.mrb[0].mxu0
      %v2994 = vadd.f32 0.0, %v2993
      %v2995 = vpop.f32.mrb[0].mxu0
      %v2996 = vpop.f32.mrb[0].mxu0
      %v2997 = vadd.f32 0.0, %v2996
      %v2998 = vpop.f32.mrb[0].mxu0
      %2999 = vdwg.mxu0
      %s3000 = scalar_lea.vmem %s5, 16
      %v3001 = vld [vmem:[%s3000] sm:$0xf]
      %v3002 = vld [vmem:[%s3000 + $0x4] sm:$0xf]
      %v3003 = vld [vmem:[%s3000 + $0x8] sm:$0xf]
      %v3004 = vld [vmem:[%s3000 + $0xc] sm:$0xf]
      %v3009 = vunpack.c.l.b16 %v3001
      %v3010 = vunpack.c.l.b16 %v3002
      %v3011 = vunpack.c.l.b16 %v3003
      %v3012 = vunpack.c.l.b16 %v3004
      %v3013 = vpack.c.b16 %v3010, %v3009
      %v3014 = vpack.c.b16 %v3012, %v3011
      %3017 = vmatprep.subr.bf16.mxu0 0
      %3018 = vmatpush1.bf16.msra.mxu0 %v3013
      %3019 = vmatprep.subr.bf16.mxu0 0
      %3020 = vmatpush1.bf16.msra.mxu0 %v3014
      %3021 = vmatprep.subr.bf16.mxu0 0
      %3022 = vmatpush1.bf16.msra.mxu0 0
      %3023 = vmatprep.subr.bf16.mxu0 0
      %3024 = vmatpush1.bf16.msra.mxu0 0
      %3025 = vmatprep.subr.bf16.mxu0 0
      %3026 = vmatpush1.bf16.msra.mxu0 0
      %3027 = vmatprep.subr.bf16.mxu0 0
      %3028 = vmatpush1.bf16.msra.mxu0 0
      %3029 = vmatprep.subr.bf16.mxu0 0
      %3030 = vmatpush1.bf16.msra.mxu0 0
      %3031 = vmatprep.subr.bf16.mxu0 0
      %3032 = vmatpush1.bf16.msra.mxu0 0
      %3033 = vmatprep.subr.bf16.mxu0 0
      %3034 = vmatpush1.bf16.msra.mxu0 0
      %3035 = vmatprep.subr.bf16.mxu0 0
      %3036 = vmatpush1.bf16.msra.mxu0 0
      %3037 = vmatprep.subr.bf16.mxu0 0
      %3038 = vmatpush1.bf16.msra.mxu0 0
      %3039 = vmatprep.subr.bf16.mxu0 0
      %3040 = vmatpush1.bf16.msra.mxu0 0
      %3041 = vmatprep.subr.bf16.mxu0 0
      %3042 = vmatpush1.bf16.msra.mxu0 0
      %3043 = vmatprep.subr.bf16.mxu0 0
      %3044 = vmatpush1.bf16.msra.mxu0 0
      %3045 = vmatprep.subr.bf16.mxu0 0
      %3046 = vmatpush1.bf16.msra.mxu0 0
      %3047 = vmatprep.subr.bf16.mxu0 0
      %3048 = vmatpush1.bf16.msra.mxu0 0
      %3049 = vmatprep.mubr.bf16.mxu0 0
      %3050 = vmatmul.mubr.bf16.gmra.mrb[0].mxu0 %v633
      %v3051 = vpop.f32.mrb[0].mxu0
      %v3052 = vadd.f32 0.0, %v3051
      %v3053 = vpop.f32.mrb[0].mxu0
      %v3054 = vpop.f32.mrb[0].mxu0
      %v3055 = vadd.f32 0.0, %v3054
      %v3056 = vpop.f32.mrb[0].mxu0
      %3057 = vmatprep.mubr.bf16.mxu0 0
      %3058 = vmatmul.mubr.bf16.gmra.mrb[0].mxu0 %v636
      %v3059 = vpop.f32.mrb[0].mxu0
      %v3060 = vadd.f32 0.0, %v3059
      %v3061 = vpop.f32.mrb[0].mxu0
      %v3062 = vpop.f32.mrb[0].mxu0
      %v3063 = vadd.f32 0.0, %v3062
      %v3064 = vpop.f32.mrb[0].mxu0
      %3065 = vmatprep.mubr.bf16.mxu0 0
      %3066 = vmatmul.mubr.bf16.gmra.mrb[0].mxu0 %v639
      %v3067 = vpop.f32.mrb[0].mxu0
      %v3068 = vadd.f32 0.0, %v3067
      %v3069 = vpop.f32.mrb[0].mxu0
      %v3070 = vpop.f32.mrb[0].mxu0
      %v3071 = vadd.f32 0.0, %v3070
      %v3072 = vpop.f32.mrb[0].mxu0
      %3073 = vmatprep.mubr.bf16.mxu0 0
      %3074 = vmatmul.mubr.bf16.gmra.mrb[0].mxu0 %v642
      %v3075 = vpop.f32.mrb[0].mxu0
      %v3076 = vadd.f32 0.0, %v3075
      %v3077 = vpop.f32.mrb[0].mxu0
      %v3078 = vpop.f32.mrb[0].mxu0
      %v3079 = vadd.f32 0.0, %v3078
      %v3080 = vpop.f32.mrb[0].mxu0
      %3081 = vdwg.mxu0
      %v3090 = vcombine.high %v2888, %v2888
      %v3091 = vcombine.high %v2891, %v2891
      %v3092 = vcombine.high %v2896, %v2896
      %v3093 = vcombine.high %v2899, %v2899
      %v3094 = vcombine.high %v2904, %v2904
      %v3095 = vcombine.high %v2907, %v2907
      %v3096 = vcombine.high %v2912, %v2912
      %v3097 = vcombine.high %v2915, %v2915
      %v3106 = vpack.c.bf16 %v2888, %v2888
      %v3107 = vpack.c.bf16 %v3090, %v3090
      %v3108 = vpack.c.bf16 %v2891, %v2891
      %v3109 = vpack.c.bf16 %v3091, %v3091
      %v3110 = vpack.c.bf16 %v2896, %v2896
      %v3111 = vpack.c.bf16 %v3092, %v3092
      %v3112 = vpack.c.bf16 %v2899, %v2899
      %v3113 = vpack.c.bf16 %v3093, %v3093
      %v3114 = vpack.c.bf16 %v2904, %v2904
      %v3115 = vpack.c.bf16 %v3094, %v3094
      %v3116 = vpack.c.bf16 %v2907, %v2907
      %v3117 = vpack.c.bf16 %v3095, %v3095
      %v3118 = vpack.c.bf16 %v2912, %v2912
      %v3119 = vpack.c.bf16 %v3096, %v3096
      %v3120 = vpack.c.bf16 %v2915, %v2915
      %v3121 = vpack.c.bf16 %v3097, %v3097
      %v3130 = vcombine.high %v2970, %v2970
      %v3131 = vcombine.high %v2973, %v2973
      %v3132 = vcombine.high %v2978, %v2978
      %v3133 = vcombine.high %v2981, %v2981
      %v3134 = vcombine.high %v2986, %v2986
      %v3135 = vcombine.high %v2989, %v2989
      %v3136 = vcombine.high %v2994, %v2994
      %v3137 = vcombine.high %v2997, %v2997
      %v3146 = vpack.c.bf16 %v2970, %v2970
      %v3147 = vpack.c.bf16 %v3130, %v3130
      %v3148 = vpack.c.bf16 %v2973, %v2973
      %v3149 = vpack.c.bf16 %v3131, %v3131
      %v3150 = vpack.c.bf16 %v2978, %v2978
      %v3151 = vpack.c.bf16 %v3132, %v3132
      %v3152 = vpack.c.bf16 %v2981, %v2981
      %v3153 = vpack.c.bf16 %v3133, %v3133
      %v3154 = vpack.c.bf16 %v2986, %v2986
      %v3155 = vpack.c.bf16 %v3134, %v3134
      %v3156 = vpack.c.bf16 %v2989, %v2989
      %v3157 = vpack.c.bf16 %v3135, %v3135
      %v3158 = vpack.c.bf16 %v2994, %v2994
      %v3159 = vpack.c.bf16 %v3136, %v3136
      %v3160 = vpack.c.bf16 %v2997, %v2997
      %v3161 = vpack.c.bf16 %v3137, %v3137
      %v3170 = vcombine.high %v3052, %v3052
      %v3171 = vcombine.high %v3055, %v3055
      %v3172 = vcombine.high %v3060, %v3060
      %v3173 = vcombine.high %v3063, %v3063
      %v3174 = vcombine.high %v3068, %v3068
      %v3175 = vcombine.high %v3071, %v3071
      %v3176 = vcombine.high %v3076, %v3076
      %v3177 = vcombine.high %v3079, %v3079
      %v3186 = vpack.c.bf16 %v3052, %v3052
      %v3187 = vpack.c.bf16 %v3170, %v3170
      %v3188 = vpack.c.bf16 %v3055, %v3055
      %v3189 = vpack.c.bf16 %v3171, %v3171
      %v3190 = vpack.c.bf16 %v3060, %v3060
      %v3191 = vpack.c.bf16 %v3172, %v3172
      %v3192 = vpack.c.bf16 %v3063, %v3063
      %v3193 = vpack.c.bf16 %v3173, %v3173
      %v3194 = vpack.c.bf16 %v3068, %v3068
      %v3195 = vpack.c.bf16 %v3174, %v3174
      %v3196 = vpack.c.bf16 %v3071, %v3071
      %v3197 = vpack.c.bf16 %v3175, %v3175
      %v3198 = vpack.c.bf16 %v3076, %v3076
      %v3199 = vpack.c.bf16 %v3176, %v3176
      %v3200 = vpack.c.bf16 %v3079, %v3079
      %v3201 = vpack.c.bf16 %v3177, %v3177
      %v3203 = vsel %vm991, %v3106, 0
      %v3206 = vsel %vm991, %v3146, 0
      %3208 = vmatprep.subr.bf16.mxu0 0
      %3209 = vmatpush1.bf16.xpose.msra.mxu0 %v3206
      %3210 = vmatprep.subr.bf16.mxu0 0
      %3211 = vmatpush1.bf16.xpose.msra.mxu0 0
      %3212 = vmatprep.subr.bf16.mxu0 0
      %3213 = vmatpush1.bf16.xpose.msra.mxu0 0
      %3214 = vmatprep.subr.bf16.mxu0 0
      %3215 = vmatpush1.bf16.xpose.msra.mxu0 0
      %3216 = vmatprep.subr.bf16.mxu0 0
      %3217 = vmatpush1.bf16.xpose.msra.mxu0 0
      %3218 = vmatprep.subr.bf16.mxu0 0
      %3219 = vmatpush1.bf16.xpose.msra.mxu0 0
      %3220 = vmatprep.subr.bf16.mxu0 0
      %3221 = vmatpush1.bf16.xpose.msra.mxu0 0
      %3222 = vmatprep.subr.bf16.mxu0 0
      %3223 = vmatpush1.bf16.xpose.msra.mxu0 0
      %3224 = vmatprep.subr.bf16.mxu0 0
      %3225 = vmatpush1.bf16.xpose.msra.mxu0 0
      %3226 = vmatprep.subr.bf16.mxu0 0
      %3227 = vmatpush1.bf16.xpose.msra.mxu0 0
      %3228 = vmatprep.subr.bf16.mxu0 0
      %3229 = vmatpush1.bf16.xpose.msra.mxu0 0
      %3230 = vmatprep.subr.bf16.mxu0 0
      %3231 = vmatpush1.bf16.xpose.msra.mxu0 0
      %3232 = vmatprep.subr.bf16.mxu0 0
      %3233 = vmatpush1.bf16.xpose.msra.mxu0 0
      %3234 = vmatprep.subr.bf16.mxu0 0
      %3235 = vmatpush1.bf16.xpose.msra.mxu0 0
      %3236 = vmatprep.subr.bf16.mxu0 0
      %3237 = vmatpush1.bf16.xpose.msra.mxu0 0
      %3238 = vmatprep.subr.bf16.mxu0 0
      %3239 = vmatpush1.bf16.xpose.msra.mxu0 0
      %3240 = vmatprep.mubr.bf16.mxu0 0
      %3241 = vmatmul.mubr.bf16.gmra.mrb[0].mxu0 %v3203
      %v3242 = vpop.f32.mrb[0].mxu0
      %v3243 = vadd.f32 0.0, %v3242
      %v3244 = vpop.f32.mrb[0].mxu0
      %v3245 = vpop.f32.mrb[0].mxu0
      %v3246 = vpop.f32.mrb[0].mxu0
      %3247 = vdwg.mxu0
      %v3249 = vsel %vm991, %v3107, 0
      %v3252 = vsel %vm991, %v3147, 0
      %3254 = vmatprep.subr.bf16.mxu0 0
      %3255 = vmatpush1.bf16.xpose.msra.mxu0 %v3252
      %3256 = vmatprep.subr.bf16.mxu0 0
      %3257 = vmatpush1.bf16.xpose.msra.mxu0 0
      %3258 = vmatprep.subr.bf16.mxu0 0
      %3259 = vmatpush1.bf16.xpose.msra.mxu0 0
      %3260 = vmatprep.subr.bf16.mxu0 0
      %3261 = vmatpush1.bf16.xpose.msra.mxu0 0
      %3262 = vmatprep.subr.bf16.mxu0 0
      %3263 = vmatpush1.bf16.xpose.msra.mxu0 0
      %3264 = vmatprep.subr.bf16.mxu0 0
      %3265 = vmatpush1.bf16.xpose.msra.mxu0 0
      %3266 = vmatprep.subr.bf16.mxu0 0
      %3267 = vmatpush1.bf16.xpose.msra.mxu0 0
      %3268 = vmatprep.subr.bf16.mxu0 0
      %3269 = vmatpush1.bf16.xpose.msra.mxu0 0
      %3270 = vmatprep.subr.bf16.mxu0 0
      %3271 = vmatpush1.bf16.xpose.msra.mxu0 0
      %3272 = vmatprep.subr.bf16.mxu0 0
      %3273 = vmatpush1.bf16.xpose.msra.mxu0 0
      %3274 = vmatprep.subr.bf16.mxu0 0
      %3275 = vmatpush1.bf16.xpose.msra.mxu0 0
      %3276 = vmatprep.subr.bf16.mxu0 0
      %3277 = vmatpush1.bf16.xpose.msra.mxu0 0
      %3278 = vmatprep.subr.bf16.mxu0 0
      %3279 = vmatpush1.bf16.xpose.msra.mxu0 0
      %3280 = vmatprep.subr.bf16.mxu0 0
      %3281 = vmatpush1.bf16.xpose.msra.mxu0 0
      %3282 = vmatprep.subr.bf16.mxu0 0
      %3283 = vmatpush1.bf16.xpose.msra.mxu0 0
      %3284 = vmatprep.subr.bf16.mxu0 0
      %3285 = vmatpush1.bf16.xpose.msra.mxu0 0
      %3286 = vmatprep.mubr.bf16.mxu0 0
      %3287 = vmatmul.mubr.bf16.gmra.mrb[0].mxu0 %v3249
      %v3288 = vpop.f32.mrb[0].mxu0
      %v3289 = vadd.f32 0.0, %v3288
      %v3290 = vpop.f32.mrb[0].mxu0
      %v3291 = vpop.f32.mrb[0].mxu0
      %v3292 = vpop.f32.mrb[0].mxu0
      %3293 = vdwg.mxu0
      %v3295 = vsel %vm991, %v3108, 0
      %v3298 = vsel %vm991, %v3148, 0
      %3300 = vmatprep.subr.bf16.mxu0 0
      %3301 = vmatpush1.bf16.xpose.msra.mxu0 %v3298
      %3302 = vmatprep.subr.bf16.mxu0 0
      %3303 = vmatpush1.bf16.xpose.msra.mxu0 0
      %3304 = vmatprep.subr.bf16.mxu0 0
      %3305 = vmatpush1.bf16.xpose.msra.mxu0 0
      %3306 = vmatprep.subr.bf16.mxu0 0
      %3307 = vmatpush1.bf16.xpose.msra.mxu0 0
      %3308 = vmatprep.subr.bf16.mxu0 0
      %3309 = vmatpush1.bf16.xpose.msra.mxu0 0
      %3310 = vmatprep.subr.bf16.mxu0 0
      %3311 = vmatpush1.bf16.xpose.msra.mxu0 0
      %3312 = vmatprep.subr.bf16.mxu0 0
      %3313 = vmatpush1.bf16.xpose.msra.mxu0 0
      %3314 = vmatprep.subr.bf16.mxu0 0
      %3315 = vmatpush1.bf16.xpose.msra.mxu0 0
      %3316 = vmatprep.subr.bf16.mxu0 0
      %3317 = vmatpush1.bf16.xpose.msra.mxu0 0
      %3318 = vmatprep.subr.bf16.mxu0 0
      %3319 = vmatpush1.bf16.xpose.msra.mxu0 0
      %3320 = vmatprep.subr.bf16.mxu0 0
      %3321 = vmatpush1.bf16.xpose.msra.mxu0 0
      %3322 = vmatprep.subr.bf16.mxu0 0
      %3323 = vmatpush1.bf16.xpose.msra.mxu0 0
      %3324 = vmatprep.subr.bf16.mxu0 0
      %3325 = vmatpush1.bf16.xpose.msra.mxu0 0
      %3326 = vmatprep.subr.bf16.mxu0 0
      %3327 = vmatpush1.bf16.xpose.msra.mxu0 0
      %3328 = vmatprep.subr.bf16.mxu0 0
      %3329 = vmatpush1.bf16.xpose.msra.mxu0 0
      %3330 = vmatprep.subr.bf16.mxu0 0
      %3331 = vmatpush1.bf16.xpose.msra.mxu0 0
      %3332 = vmatprep.mubr.bf16.mxu0 0
      %3333 = vmatmul.mubr.bf16.gmra.mrb[0].mxu0 %v3295
      %v3334 = vpop.f32.mrb[0].mxu0
      %v3335 = vadd.f32 0.0, %v3334
      %v3336 = vpop.f32.mrb[0].mxu0
      %v3337 = vpop.f32.mrb[0].mxu0
      %v3338 = vpop.f32.mrb[0].mxu0
      %3339 = vdwg.mxu0
      %v3341 = vsel %vm991, %v3109, 0
      %v3344 = vsel %vm991, %v3149, 0
      %3346 = vmatprep.subr.bf16.mxu0 0
      %3347 = vmatpush1.bf16.xpose.msra.mxu0 %v3344
      %3348 = vmatprep.subr.bf16.mxu0 0
      %3349 = vmatpush1.bf16.xpose.msra.mxu0 0
      %3350 = vmatprep.subr.bf16.mxu0 0
      %3351 = vmatpush1.bf16.xpose.msra.mxu0 0
      %3352 = vmatprep.subr.bf16.mxu0 0
      %3353 = vmatpush1.bf16.xpose.msra.mxu0 0
      %3354 = vmatprep.subr.bf16.mxu0 0
      %3355 = vmatpush1.bf16.xpose.msra.mxu0 0
      %3356 = vmatprep.subr.bf16.mxu0 0
      %3357 = vmatpush1.bf16.xpose.msra.mxu0 0
      %3358 = vmatprep.subr.bf16.mxu0 0
      %3359 = vmatpush1.bf16.xpose.msra.mxu0 0
      %3360 = vmatprep.subr.bf16.mxu0 0
      %3361 = vmatpush1.bf16.xpose.msra.mxu0 0
      %3362 = vmatprep.subr.bf16.mxu0 0
      %3363 = vmatpush1.bf16.xpose.msra.mxu0 0
      %3364 = vmatprep.subr.bf16.mxu0 0
      %3365 = vmatpush1.bf16.xpose.msra.mxu0 0
      %3366 = vmatprep.subr.bf16.mxu0 0
      %3367 = vmatpush1.bf16.xpose.msra.mxu0 0
      %3368 = vmatprep.subr.bf16.mxu0 0
      %3369 = vmatpush1.bf16.xpose.msra.mxu0 0
      %3370 = vmatprep.subr.bf16.mxu0 0
      %3371 = vmatpush1.bf16.xpose.msra.mxu0 0
      %3372 = vmatprep.subr.bf16.mxu0 0
      %3373 = vmatpush1.bf16.xpose.msra.mxu0 0
      %3374 = vmatprep.subr.bf16.mxu0 0
      %3375 = vmatpush1.bf16.xpose.msra.mxu0 0
      %3376 = vmatprep.subr.bf16.mxu0 0
      %3377 = vmatpush1.bf16.xpose.msra.mxu0 0
      %3378 = vmatprep.mubr.bf16.mxu0 0
      %3379 = vmatmul.mubr.bf16.gmra.mrb[0].mxu0 %v3341
      %v3380 = vpop.f32.mrb[0].mxu0
      %v3381 = vadd.f32 0.0, %v3380
      %v3382 = vpop.f32.mrb[0].mxu0
      %v3383 = vpop.f32.mrb[0].mxu0
      %v3384 = vpop.f32.mrb[0].mxu0
      %3385 = vdwg.mxu0
      %v3387 = vsel %vm991, %v3110, 0
      %v3390 = vsel %vm991, %v3150, 0
      %3392 = vmatprep.subr.bf16.mxu0 0
      %3393 = vmatpush1.bf16.xpose.msra.mxu0 %v3390
      %3394 = vmatprep.subr.bf16.mxu0 0
      %3395 = vmatpush1.bf16.xpose.msra.mxu0 0
      %3396 = vmatprep.subr.bf16.mxu0 0
      %3397 = vmatpush1.bf16.xpose.msra.mxu0 0
      %3398 = vmatprep.subr.bf16.mxu0 0
      %3399 = vmatpush1.bf16.xpose.msra.mxu0 0
      %3400 = vmatprep.subr.bf16.mxu0 0
      %3401 = vmatpush1.bf16.xpose.msra.mxu0 0
      %3402 = vmatprep.subr.bf16.mxu0 0
      %3403 = vmatpush1.bf16.xpose.msra.mxu0 0
      %3404 = vmatprep.subr.bf16.mxu0 0
      %3405 = vmatpush1.bf16.xpose.msra.mxu0 0
      %3406 = vmatprep.subr.bf16.mxu0 0
      %3407 = vmatpush1.bf16.xpose.msra.mxu0 0
      %3408 = vmatprep.subr.bf16.mxu0 0
      %3409 = vmatpush1.bf16.xpose.msra.mxu0 0
      %3410 = vmatprep.subr.bf16.mxu0 0
      %3411 = vmatpush1.bf16.xpose.msra.mxu0 0
      %3412 = vmatprep.subr.bf16.mxu0 0
      %3413 = vmatpush1.bf16.xpose.msra.mxu0 0
      %3414 = vmatprep.subr.bf16.mxu0 0
      %3415 = vmatpush1.bf16.xpose.msra.mxu0 0
      %3416 = vmatprep.subr.bf16.mxu0 0
      %3417 = vmatpush1.bf16.xpose.msra.mxu0 0
      %3418 = vmatprep.subr.bf16.mxu0 0
      %3419 = vmatpush1.bf16.xpose.msra.mxu0 0
      %3420 = vmatprep.subr.bf16.mxu0 0
      %3421 = vmatpush1.bf16.xpose.msra.mxu0 0
      %3422 = vmatprep.subr.bf16.mxu0 0
      %3423 = vmatpush1.bf16.xpose.msra.mxu0 0
      %3424 = vmatprep.mubr.bf16.mxu0 0
      %3425 = vmatmul.mubr.bf16.gmra.mrb[0].mxu0 %v3387
      %v3426 = vpop.f32.mrb[0].mxu0
      %v3427 = vadd.f32 0.0, %v3426
      %v3428 = vpop.f32.mrb[0].mxu0
      %v3429 = vpop.f32.mrb[0].mxu0
      %v3430 = vpop.f32.mrb[0].mxu0
      %3431 = vdwg.mxu0
      %v3433 = vsel %vm991, %v3111, 0
      %v3436 = vsel %vm991, %v3151, 0
      %3438 = vmatprep.subr.bf16.mxu0 0
      %3439 = vmatpush1.bf16.xpose.msra.mxu0 %v3436
      %3440 = vmatprep.subr.bf16.mxu0 0
      %3441 = vmatpush1.bf16.xpose.msra.mxu0 0
      %3442 = vmatprep.subr.bf16.mxu0 0
      %3443 = vmatpush1.bf16.xpose.msra.mxu0 0
      %3444 = vmatprep.subr.bf16.mxu0 0
      %3445 = vmatpush1.bf16.xpose.msra.mxu0 0
      %3446 = vmatprep.subr.bf16.mxu0 0
      %3447 = vmatpush1.bf16.xpose.msra.mxu0 0
      %3448 = vmatprep.subr.bf16.mxu0 0
      %3449 = vmatpush1.bf16.xpose.msra.mxu0 0
      %3450 = vmatprep.subr.bf16.mxu0 0
      %3451 = vmatpush1.bf16.xpose.msra.mxu0 0
      %3452 = vmatprep.subr.bf16.mxu0 0
      %3453 = vmatpush1.bf16.xpose.msra.mxu0 0
      %3454 = vmatprep.subr.bf16.mxu0 0
      %3455 = vmatpush1.bf16.xpose.msra.mxu0 0
      %3456 = vmatprep.subr.bf16.mxu0 0
      %3457 = vmatpush1.bf16.xpose.msra.mxu0 0
      %3458 = vmatprep.subr.bf16.mxu0 0
      %3459 = vmatpush1.bf16.xpose.msra.mxu0 0
      %3460 = vmatprep.subr.bf16.mxu0 0
      %3461 = vmatpush1.bf16.xpose.msra.mxu0 0
      %3462 = vmatprep.subr.bf16.mxu0 0
      %3463 = vmatpush1.bf16.xpose.msra.mxu0 0
      %3464 = vmatprep.subr.bf16.mxu0 0
      %3465 = vmatpush1.bf16.xpose.msra.mxu0 0
      %3466 = vmatprep.subr.bf16.mxu0 0
      %3467 = vmatpush1.bf16.xpose.msra.mxu0 0
      %3468 = vmatprep.subr.bf16.mxu0 0
      %3469 = vmatpush1.bf16.xpose.msra.mxu0 0
      %3470 = vmatprep.mubr.bf16.mxu0 0
      %3471 = vmatmul.mubr.bf16.gmra.mrb[0].mxu0 %v3433
      %v3472 = vpop.f32.mrb[0].mxu0
      %v3473 = vadd.f32 0.0, %v3472
      %v3474 = vpop.f32.mrb[0].mxu0
      %v3475 = vpop.f32.mrb[0].mxu0
      %v3476 = vpop.f32.mrb[0].mxu0
      %3477 = vdwg.mxu0
      %v3479 = vsel %vm991, %v3112, 0
      %v3482 = vsel %vm991, %v3152, 0
      %3484 = vmatprep.subr.bf16.mxu0 0
      %3485 = vmatpush1.bf16.xpose.msra.mxu0 %v3482
      %3486 = vmatprep.subr.bf16.mxu0 0
      %3487 = vmatpush1.bf16.xpose.msra.mxu0 0
      %3488 = vmatprep.subr.bf16.mxu0 0
      %3489 = vmatpush1.bf16.xpose.msra.mxu0 0
      %3490 = vmatprep.subr.bf16.mxu0 0
      %3491 = vmatpush1.bf16.xpose.msra.mxu0 0
      %3492 = vmatprep.subr.bf16.mxu0 0
      %3493 = vmatpush1.bf16.xpose.msra.mxu0 0
      %3494 = vmatprep.subr.bf16.mxu0 0
      %3495 = vmatpush1.bf16.xpose.msra.mxu0 0
      %3496 = vmatprep.subr.bf16.mxu0 0
      %3497 = vmatpush1.bf16.xpose.msra.mxu0 0
      %3498 = vmatprep.subr.bf16.mxu0 0
      %3499 = vmatpush1.bf16.xpose.msra.mxu0 0
      %3500 = vmatprep.subr.bf16.mxu0 0
      %3501 = vmatpush1.bf16.xpose.msra.mxu0 0
      %3502 = vmatprep.subr.bf16.mxu0 0
      %3503 = vmatpush1.bf16.xpose.msra.mxu0 0
      %3504 = vmatprep.subr.bf16.mxu0 0
      %3505 = vmatpush1.bf16.xpose.msra.mxu0 0
      %3506 = vmatprep.subr.bf16.mxu0 0
      %3507 = vmatpush1.bf16.xpose.msra.mxu0 0
      %3508 = vmatprep.subr.bf16.mxu0 0
      %3509 = vmatpush1.bf16.xpose.msra.mxu0 0
      %3510 = vmatprep.subr.bf16.mxu0 0
      %3511 = vmatpush1.bf16.xpose.msra.mxu0 0
      %3512 = vmatprep.subr.bf16.mxu0 0
      %3513 = vmatpush1.bf16.xpose.msra.mxu0 0
      %3514 = vmatprep.subr.bf16.mxu0 0
      %3515 = vmatpush1.bf16.xpose.msra.mxu0 0
      %3516 = vmatprep.mubr.bf16.mxu0 0
      %3517 = vmatmul.mubr.bf16.gmra.mrb[0].mxu0 %v3479
      %v3518 = vpop.f32.mrb[0].mxu0
      %v3519 = vadd.f32 0.0, %v3518
      %v3520 = vpop.f32.mrb[0].mxu0
      %v3521 = vpop.f32.mrb[0].mxu0
      %v3522 = vpop.f32.mrb[0].mxu0
      %3523 = vdwg.mxu0
      %v3525 = vsel %vm991, %v3113, 0
      %v3528 = vsel %vm991, %v3153, 0
      %3530 = vmatprep.subr.bf16.mxu0 0
      %3531 = vmatpush1.bf16.xpose.msra.mxu0 %v3528
      %3532 = vmatprep.subr.bf16.mxu0 0
      %3533 = vmatpush1.bf16.xpose.msra.mxu0 0
      %3534 = vmatprep.subr.bf16.mxu0 0
      %3535 = vmatpush1.bf16.xpose.msra.mxu0 0
      %3536 = vmatprep.subr.bf16.mxu0 0
      %3537 = vmatpush1.bf16.xpose.msra.mxu0 0
      %3538 = vmatprep.subr.bf16.mxu0 0
      %3539 = vmatpush1.bf16.xpose.msra.mxu0 0
      %3540 = vmatprep.subr.bf16.mxu0 0
      %3541 = vmatpush1.bf16.xpose.msra.mxu0 0
      %3542 = vmatprep.subr.bf16.mxu0 0
      %3543 = vmatpush1.bf16.xpose.msra.mxu0 0
      %3544 = vmatprep.subr.bf16.mxu0 0
      %3545 = vmatpush1.bf16.xpose.msra.mxu0 0
      %3546 = vmatprep.subr.bf16.mxu0 0
      %3547 = vmatpush1.bf16.xpose.msra.mxu0 0
      %3548 = vmatprep.subr.bf16.mxu0 0
      %3549 = vmatpush1.bf16.xpose.msra.mxu0 0
      %3550 = vmatprep.subr.bf16.mxu0 0
      %3551 = vmatpush1.bf16.xpose.msra.mxu0 0
      %3552 = vmatprep.subr.bf16.mxu0 0
      %3553 = vmatpush1.bf16.xpose.msra.mxu0 0
      %3554 = vmatprep.subr.bf16.mxu0 0
      %3555 = vmatpush1.bf16.xpose.msra.mxu0 0
      %3556 = vmatprep.subr.bf16.mxu0 0
      %3557 = vmatpush1.bf16.xpose.msra.mxu0 0
      %3558 = vmatprep.subr.bf16.mxu0 0
      %3559 = vmatpush1.bf16.xpose.msra.mxu0 0
      %3560 = vmatprep.subr.bf16.mxu0 0
      %3561 = vmatpush1.bf16.xpose.msra.mxu0 0
      %3562 = vmatprep.mubr.bf16.mxu0 0
      %3563 = vmatmul.mubr.bf16.gmra.mrb[0].mxu0 %v3525
      %v3564 = vpop.f32.mrb[0].mxu0
      %v3565 = vadd.f32 0.0, %v3564
      %v3566 = vpop.f32.mrb[0].mxu0
      %v3567 = vpop.f32.mrb[0].mxu0
      %v3568 = vpop.f32.mrb[0].mxu0
      %3569 = vdwg.mxu0
      %v3571 = vsel %vm991, %v3114, 0
      %v3574 = vsel %vm991, %v3154, 0
      %3576 = vmatprep.subr.bf16.mxu0 0
      %3577 = vmatpush1.bf16.xpose.msra.mxu0 %v3574
      %3578 = vmatprep.subr.bf16.mxu0 0
      %3579 = vmatpush1.bf16.xpose.msra.mxu0 0
      %3580 = vmatprep.subr.bf16.mxu0 0
      %3581 = vmatpush1.bf16.xpose.msra.mxu0 0
      %3582 = vmatprep.subr.bf16.mxu0 0
      %3583 = vmatpush1.bf16.xpose.msra.mxu0 0
      %3584 = vmatprep.subr.bf16.mxu0 0
      %3585 = vmatpush1.bf16.xpose.msra.mxu0 0
      %3586 = vmatprep.subr.bf16.mxu0 0
      %3587 = vmatpush1.bf16.xpose.msra.mxu0 0
      %3588 = vmatprep.subr.bf16.mxu0 0
      %3589 = vmatpush1.bf16.xpose.msra.mxu0 0
      %3590 = vmatprep.subr.bf16.mxu0 0
      %3591 = vmatpush1.bf16.xpose.msra.mxu0 0
      %3592 = vmatprep.subr.bf16.mxu0 0
      %3593 = vmatpush1.bf16.xpose.msra.mxu0 0
      %3594 = vmatprep.subr.bf16.mxu0 0
      %3595 = vmatpush1.bf16.xpose.msra.mxu0 0
      %3596 = vmatprep.subr.bf16.mxu0 0
      %3597 = vmatpush1.bf16.xpose.msra.mxu0 0
      %3598 = vmatprep.subr.bf16.mxu0 0
      %3599 = vmatpush1.bf16.xpose.msra.mxu0 0
      %3600 = vmatprep.subr.bf16.mxu0 0
      %3601 = vmatpush1.bf16.xpose.msra.mxu0 0
      %3602 = vmatprep.subr.bf16.mxu0 0
      %3603 = vmatpush1.bf16.xpose.msra.mxu0 0
      %3604 = vmatprep.subr.bf16.mxu0 0
      %3605 = vmatpush1.bf16.xpose.msra.mxu0 0
      %3606 = vmatprep.subr.bf16.mxu0 0
      %3607 = vmatpush1.bf16.xpose.msra.mxu0 0
      %3608 = vmatprep.mubr.bf16.mxu0 0
      %3609 = vmatmul.mubr.bf16.gmra.mrb[0].mxu0 %v3571
      %v3610 = vpop.f32.mrb[0].mxu0
      %v3611 = vadd.f32 0.0, %v3610
      %v3612 = vpop.f32.mrb[0].mxu0
      %v3613 = vpop.f32.mrb[0].mxu0
      %v3614 = vpop.f32.mrb[0].mxu0
      %3615 = vdwg.mxu0
      %v3617 = vsel %vm991, %v3115, 0
      %v3620 = vsel %vm991, %v3155, 0
      %3622 = vmatprep.subr.bf16.mxu0 0
      %3623 = vmatpush1.bf16.xpose.msra.mxu0 %v3620
      %3624 = vmatprep.subr.bf16.mxu0 0
      %3625 = vmatpush1.bf16.xpose.msra.mxu0 0
      %3626 = vmatprep.subr.bf16.mxu0 0
      %3627 = vmatpush1.bf16.xpose.msra.mxu0 0
      %3628 = vmatprep.subr.bf16.mxu0 0
      %3629 = vmatpush1.bf16.xpose.msra.mxu0 0
      %3630 = vmatprep.subr.bf16.mxu0 0
      %3631 = vmatpush1.bf16.xpose.msra.mxu0 0
      %3632 = vmatprep.subr.bf16.mxu0 0
      %3633 = vmatpush1.bf16.xpose.msra.mxu0 0
      %3634 = vmatprep.subr.bf16.mxu0 0
      %3635 = vmatpush1.bf16.xpose.msra.mxu0 0
      %3636 = vmatprep.subr.bf16.mxu0 0
      %3637 = vmatpush1.bf16.xpose.msra.mxu0 0
      %3638 = vmatprep.subr.bf16.mxu0 0
      %3639 = vmatpush1.bf16.xpose.msra.mxu0 0
      %3640 = vmatprep.subr.bf16.mxu0 0
      %3641 = vmatpush1.bf16.xpose.msra.mxu0 0
      %3642 = vmatprep.subr.bf16.mxu0 0
      %3643 = vmatpush1.bf16.xpose.msra.mxu0 0
      %3644 = vmatprep.subr.bf16.mxu0 0
      %3645 = vmatpush1.bf16.xpose.msra.mxu0 0
      %3646 = vmatprep.subr.bf16.mxu0 0
      %3647 = vmatpush1.bf16.xpose.msra.mxu0 0
      %3648 = vmatprep.subr.bf16.mxu0 0
      %3649 = vmatpush1.bf16.xpose.msra.mxu0 0
      %3650 = vmatprep.subr.bf16.mxu0 0
      %3651 = vmatpush1.bf16.xpose.msra.mxu0 0
      %3652 = vmatprep.subr.bf16.mxu0 0
      %3653 = vmatpush1.bf16.xpose.msra.mxu0 0
      %3654 = vmatprep.mubr.bf16.mxu0 0
      %3655 = vmatmul.mubr.bf16.gmra.mrb[0].mxu0 %v3617
      %v3656 = vpop.f32.mrb[0].mxu0
      %v3657 = vadd.f32 0.0, %v3656
      %v3658 = vpop.f32.mrb[0].mxu0
      %v3659 = vpop.f32.mrb[0].mxu0
      %v3660 = vpop.f32.mrb[0].mxu0
      %3661 = vdwg.mxu0
      %v3663 = vsel %vm991, %v3116, 0
      %v3666 = vsel %vm991, %v3156, 0
      %3668 = vmatprep.subr.bf16.mxu0 0
      %3669 = vmatpush1.bf16.xpose.msra.mxu0 %v3666
      %3670 = vmatprep.subr.bf16.mxu0 0
      %3671 = vmatpush1.bf16.xpose.msra.mxu0 0
      %3672 = vmatprep.subr.bf16.mxu0 0
      %3673 = vmatpush1.bf16.xpose.msra.mxu0 0
      %3674 = vmatprep.subr.bf16.mxu0 0
      %3675 = vmatpush1.bf16.xpose.msra.mxu0 0
      %3676 = vmatprep.subr.bf16.mxu0 0
      %3677 = vmatpush1.bf16.xpose.msra.mxu0 0
      %3678 = vmatprep.subr.bf16.mxu0 0
      %3679 = vmatpush1.bf16.xpose.msra.mxu0 0
      %3680 = vmatprep.subr.bf16.mxu0 0
      %3681 = vmatpush1.bf16.xpose.msra.mxu0 0
      %3682 = vmatprep.subr.bf16.mxu0 0
      %3683 = vmatpush1.bf16.xpose.msra.mxu0 0
      %3684 = vmatprep.subr.bf16.mxu0 0
      %3685 = vmatpush1.bf16.xpose.msra.mxu0 0
      %3686 = vmatprep.subr.bf16.mxu0 0
      %3687 = vmatpush1.bf16.xpose.msra.mxu0 0
      %3688 = vmatprep.subr.bf16.mxu0 0
      %3689 = vmatpush1.bf16.xpose.msra.mxu0 0
      %3690 = vmatprep.subr.bf16.mxu0 0
      %3691 = vmatpush1.bf16.xpose.msra.mxu0 0
      %3692 = vmatprep.subr.bf16.mxu0 0
      %3693 = vmatpush1.bf16.xpose.msra.mxu0 0
      %3694 = vmatprep.subr.bf16.mxu0 0
      %3695 = vmatpush1.bf16.xpose.msra.mxu0 0
      %3696 = vmatprep.subr.bf16.mxu0 0
      %3697 = vmatpush1.bf16.xpose.msra.mxu0 0
      %3698 = vmatprep.subr.bf16.mxu0 0
      %3699 = vmatpush1.bf16.xpose.msra.mxu0 0
      %3700 = vmatprep.mubr.bf16.mxu0 0
      %3701 = vmatmul.mubr.bf16.gmra.mrb[0].mxu0 %v3663
      %v3702 = vpop.f32.mrb[0].mxu0
      %v3703 = vadd.f32 0.0, %v3702
      %v3704 = vpop.f32.mrb[0].mxu0
      %v3705 = vpop.f32.mrb[0].mxu0
      %v3706 = vpop.f32.mrb[0].mxu0
      %3707 = vdwg.mxu0
      %v3709 = vsel %vm991, %v3117, 0
      %v3712 = vsel %vm991, %v3157, 0
      %3714 = vmatprep.subr.bf16.mxu0 0
      %3715 = vmatpush1.bf16.xpose.msra.mxu0 %v3712
      %3716 = vmatprep.subr.bf16.mxu0 0
      %3717 = vmatpush1.bf16.xpose.msra.mxu0 0
      %3718 = vmatprep.subr.bf16.mxu0 0
      %3719 = vmatpush1.bf16.xpose.msra.mxu0 0
      %3720 = vmatprep.subr.bf16.mxu0 0
      %3721 = vmatpush1.bf16.xpose.msra.mxu0 0
      %3722 = vmatprep.subr.bf16.mxu0 0
      %3723 = vmatpush1.bf16.xpose.msra.mxu0 0
      %3724 = vmatprep.subr.bf16.mxu0 0
      %3725 = vmatpush1.bf16.xpose.msra.mxu0 0
      %3726 = vmatprep.subr.bf16.mxu0 0
      %3727 = vmatpush1.bf16.xpose.msra.mxu0 0
      %3728 = vmatprep.subr.bf16.mxu0 0
      %3729 = vmatpush1.bf16.xpose.msra.mxu0 0
      %3730 = vmatprep.subr.bf16.mxu0 0
      %3731 = vmatpush1.bf16.xpose.msra.mxu0 0
      %3732 = vmatprep.subr.bf16.mxu0 0
      %3733 = vmatpush1.bf16.xpose.msra.mxu0 0
      %3734 = vmatprep.subr.bf16.mxu0 0
      %3735 = vmatpush1.bf16.xpose.msra.mxu0 0
      %3736 = vmatprep.subr.bf16.mxu0 0
      %3737 = vmatpush1.bf16.xpose.msra.mxu0 0
      %3738 = vmatprep.subr.bf16.mxu0 0
      %3739 = vmatpush1.bf16.xpose.msra.mxu0 0
      %3740 = vmatprep.subr.bf16.mxu0 0
      %3741 = vmatpush1.bf16.xpose.msra.mxu0 0
      %3742 = vmatprep.subr.bf16.mxu0 0
      %3743 = vmatpush1.bf16.xpose.msra.mxu0 0
      %3744 = vmatprep.subr.bf16.mxu0 0
      %3745 = vmatpush1.bf16.xpose.msra.mxu0 0
      %3746 = vmatprep.mubr.bf16.mxu0 0
      %3747 = vmatmul.mubr.bf16.gmra.mrb[0].mxu0 %v3709
      %v3748 = vpop.f32.mrb[0].mxu0
      %v3749 = vadd.f32 0.0, %v3748
      %v3750 = vpop.f32.mrb[0].mxu0
      %v3751 = vpop.f32.mrb[0].mxu0
      %v3752 = vpop.f32.mrb[0].mxu0
      %3753 = vdwg.mxu0
      %v3755 = vsel %vm991, %v3118, 0
      %v3758 = vsel %vm991, %v3158, 0
      %3760 = vmatprep.subr.bf16.mxu0 0
      %3761 = vmatpush1.bf16.xpose.msra.mxu0 %v3758
      %3762 = vmatprep.subr.bf16.mxu0 0
      %3763 = vmatpush1.bf16.xpose.msra.mxu0 0
      %3764 = vmatprep.subr.bf16.mxu0 0
      %3765 = vmatpush1.bf16.xpose.msra.mxu0 0
      %3766 = vmatprep.subr.bf16.mxu0 0
      %3767 = vmatpush1.bf16.xpose.msra.mxu0 0
      %3768 = vmatprep.subr.bf16.mxu0 0
      %3769 = vmatpush1.bf16.xpose.msra.mxu0 0
      %3770 = vmatprep.subr.bf16.mxu0 0
      %3771 = vmatpush1.bf16.xpose.msra.mxu0 0
      %3772 = vmatprep.subr.bf16.mxu0 0
      %3773 = vmatpush1.bf16.xpose.msra.mxu0 0
      %3774 = vmatprep.subr.bf16.mxu0 0
      %3775 = vmatpush1.bf16.xpose.msra.mxu0 0
      %3776 = vmatprep.subr.bf16.mxu0 0
      %3777 = vmatpush1.bf16.xpose.msra.mxu0 0
      %3778 = vmatprep.subr.bf16.mxu0 0
      %3779 = vmatpush1.bf16.xpose.msra.mxu0 0
      %3780 = vmatprep.subr.bf16.mxu0 0
      %3781 = vmatpush1.bf16.xpose.msra.mxu0 0
      %3782 = vmatprep.subr.bf16.mxu0 0
      %3783 = vmatpush1.bf16.xpose.msra.mxu0 0
      %3784 = vmatprep.subr.bf16.mxu0 0
      %3785 = vmatpush1.bf16.xpose.msra.mxu0 0
      %3786 = vmatprep.subr.bf16.mxu0 0
      %3787 = vmatpush1.bf16.xpose.msra.mxu0 0
      %3788 = vmatprep.subr.bf16.mxu0 0
      %3789 = vmatpush1.bf16.xpose.msra.mxu0 0
      %3790 = vmatprep.subr.bf16.mxu0 0
      %3791 = vmatpush1.bf16.xpose.msra.mxu0 0
      %3792 = vmatprep.mubr.bf16.mxu0 0
      %3793 = vmatmul.mubr.bf16.gmra.mrb[0].mxu0 %v3755
      %v3794 = vpop.f32.mrb[0].mxu0
      %v3795 = vadd.f32 0.0, %v3794
      %v3796 = vpop.f32.mrb[0].mxu0
      %v3797 = vpop.f32.mrb[0].mxu0
      %v3798 = vpop.f32.mrb[0].mxu0
      %3799 = vdwg.mxu0
      %v3801 = vsel %vm991, %v3119, 0
      %v3804 = vsel %vm991, %v3159, 0
      %3806 = vmatprep.subr.bf16.mxu0 0
      %3807 = vmatpush1.bf16.xpose.msra.mxu0 %v3804
      %3808 = vmatprep.subr.bf16.mxu0 0
      %3809 = vmatpush1.bf16.xpose.msra.mxu0 0
      %3810 = vmatprep.subr.bf16.mxu0 0
      %3811 = vmatpush1.bf16.xpose.msra.mxu0 0
      %3812 = vmatprep.subr.bf16.mxu0 0
      %3813 = vmatpush1.bf16.xpose.msra.mxu0 0
      %3814 = vmatprep.subr.bf16.mxu0 0
      %3815 = vmatpush1.bf16.xpose.msra.mxu0 0
      %3816 = vmatprep.subr.bf16.mxu0 0
      %3817 = vmatpush1.bf16.xpose.msra.mxu0 0
      %3818 = vmatprep.subr.bf16.mxu0 0
      %3819 = vmatpush1.bf16.xpose.msra.mxu0 0
      %3820 = vmatprep.subr.bf16.mxu0 0
      %3821 = vmatpush1.bf16.xpose.msra.mxu0 0
      %3822 = vmatprep.subr.bf16.mxu0 0
      %3823 = vmatpush1.bf16.xpose.msra.mxu0 0
      %3824 = vmatprep.subr.bf16.mxu0 0
      %3825 = vmatpush1.bf16.xpose.msra.mxu0 0
      %3826 = vmatprep.subr.bf16.mxu0 0
      %3827 = vmatpush1.bf16.xpose.msra.mxu0 0
      %3828 = vmatprep.subr.bf16.mxu0 0
      %3829 = vmatpush1.bf16.xpose.msra.mxu0 0
      %3830 = vmatprep.subr.bf16.mxu0 0
      %3831 = vmatpush1.bf16.xpose.msra.mxu0 0
      %3832 = vmatprep.subr.bf16.mxu0 0
      %3833 = vmatpush1.bf16.xpose.msra.mxu0 0
      %3834 = vmatprep.subr.bf16.mxu0 0
      %3835 = vmatpush1.bf16.xpose.msra.mxu0 0
      %3836 = vmatprep.subr.bf16.mxu0 0
      %3837 = vmatpush1.bf16.xpose.msra.mxu0 0
      %3838 = vmatprep.mubr.bf16.mxu0 0
      %3839 = vmatmul.mubr.bf16.gmra.mrb[0].mxu0 %v3801
      %v3840 = vpop.f32.mrb[0].mxu0
      %v3841 = vadd.f32 0.0, %v3840
      %v3842 = vpop.f32.mrb[0].mxu0
      %v3843 = vpop.f32.mrb[0].mxu0
      %v3844 = vpop.f32.mrb[0].mxu0
      %3845 = vdwg.mxu0
      %v3847 = vsel %vm991, %v3120, 0
      %v3850 = vsel %vm991, %v3160, 0
      %3852 = vmatprep.subr.bf16.mxu0 0
      %3853 = vmatpush1.bf16.xpose.msra.mxu0 %v3850
      %3854 = vmatprep.subr.bf16.mxu0 0
      %3855 = vmatpush1.bf16.xpose.msra.mxu0 0
      %3856 = vmatprep.subr.bf16.mxu0 0
      %3857 = vmatpush1.bf16.xpose.msra.mxu0 0
      %3858 = vmatprep.subr.bf16.mxu0 0
      %3859 = vmatpush1.bf16.xpose.msra.mxu0 0
      %3860 = vmatprep.subr.bf16.mxu0 0
      %3861 = vmatpush1.bf16.xpose.msra.mxu0 0
      %3862 = vmatprep.subr.bf16.mxu0 0
      %3863 = vmatpush1.bf16.xpose.msra.mxu0 0
      %3864 = vmatprep.subr.bf16.mxu0 0
      %3865 = vmatpush1.bf16.xpose.msra.mxu0 0
      %3866 = vmatprep.subr.bf16.mxu0 0
      %3867 = vmatpush1.bf16.xpose.msra.mxu0 0
      %3868 = vmatprep.subr.bf16.mxu0 0
      %3869 = vmatpush1.bf16.xpose.msra.mxu0 0
      %3870 = vmatprep.subr.bf16.mxu0 0
      %3871 = vmatpush1.bf16.xpose.msra.mxu0 0
      %3872 = vmatprep.subr.bf16.mxu0 0
      %3873 = vmatpush1.bf16.xpose.msra.mxu0 0
      %3874 = vmatprep.subr.bf16.mxu0 0
      %3875 = vmatpush1.bf16.xpose.msra.mxu0 0
      %3876 = vmatprep.subr.bf16.mxu0 0
      %3877 = vmatpush1.bf16.xpose.msra.mxu0 0
      %3878 = vmatprep.subr.bf16.mxu0 0
      %3879 = vmatpush1.bf16.xpose.msra.mxu0 0
      %3880 = vmatprep.subr.bf16.mxu0 0
      %3881 = vmatpush1.bf16.xpose.msra.mxu0 0
      %3882 = vmatprep.subr.bf16.mxu0 0
      %3883 = vmatpush1.bf16.xpose.msra.mxu0 0
      %3884 = vmatprep.mubr.bf16.mxu0 0
      %3885 = vmatmul.mubr.bf16.gmra.mrb[0].mxu0 %v3847
      %v3886 = vpop.f32.mrb[0].mxu0
      %v3887 = vadd.f32 0.0, %v3886
      %v3888 = vpop.f32.mrb[0].mxu0
      %v3889 = vpop.f32.mrb[0].mxu0
      %v3890 = vpop.f32.mrb[0].mxu0
      %3891 = vdwg.mxu0
      %v3893 = vsel %vm991, %v3121, 0
      %v3896 = vsel %vm991, %v3161, 0
      %3898 = vmatprep.subr.bf16.mxu0 0
      %3899 = vmatpush1.bf16.xpose.msra.mxu0 %v3896
      %3900 = vmatprep.subr.bf16.mxu0 0
      %3901 = vmatpush1.bf16.xpose.msra.mxu0 0
      %3902 = vmatprep.subr.bf16.mxu0 0
      %3903 = vmatpush1.bf16.xpose.msra.mxu0 0
      %3904 = vmatprep.subr.bf16.mxu0 0
      %3905 = vmatpush1.bf16.xpose.msra.mxu0 0
      %3906 = vmatprep.subr.bf16.mxu0 0
      %3907 = vmatpush1.bf16.xpose.msra.mxu0 0
      %3908 = vmatprep.subr.bf16.mxu0 0
      %3909 = vmatpush1.bf16.xpose.msra.mxu0 0
      %3910 = vmatprep.subr.bf16.mxu0 0
      %3911 = vmatpush1.bf16.xpose.msra.mxu0 0
      %3912 = vmatprep.subr.bf16.mxu0 0
      %3913 = vmatpush1.bf16.xpose.msra.mxu0 0
      %3914 = vmatprep.subr.bf16.mxu0 0
      %3915 = vmatpush1.bf16.xpose.msra.mxu0 0
      %3916 = vmatprep.subr.bf16.mxu0 0
      %3917 = vmatpush1.bf16.xpose.msra.mxu0 0
      %3918 = vmatprep.subr.bf16.mxu0 0
      %3919 = vmatpush1.bf16.xpose.msra.mxu0 0
      %3920 = vmatprep.subr.bf16.mxu0 0
      %3921 = vmatpush1.bf16.xpose.msra.mxu0 0
      %3922 = vmatprep.subr.bf16.mxu0 0
      %3923 = vmatpush1.bf16.xpose.msra.mxu0 0
      %3924 = vmatprep.subr.bf16.mxu0 0
      %3925 = vmatpush1.bf16.xpose.msra.mxu0 0
      %3926 = vmatprep.subr.bf16.mxu0 0
      %3927 = vmatpush1.bf16.xpose.msra.mxu0 0
      %3928 = vmatprep.subr.bf16.mxu0 0
      %3929 = vmatpush1.bf16.xpose.msra.mxu0 0
      %3930 = vmatprep.mubr.bf16.mxu0 0
      %3931 = vmatmul.mubr.bf16.gmra.mrb[0].mxu0 %v3893
      %v3932 = vpop.f32.mrb[0].mxu0
      %v3933 = vadd.f32 0.0, %v3932
      %v3934 = vpop.f32.mrb[0].mxu0
      %v3935 = vpop.f32.mrb[0].mxu0
      %v3936 = vpop.f32.mrb[0].mxu0
      %3937 = vdwg.mxu0
      %v3938 = vsel %vm1728, %v3243, -inf
      %3939 = vmax.xlane.f32.xlu0 %v3938
      %v3940 = vpop.xlane.xlu0 %3939
      %v3941 = vsel %vm1728, %v3289, -inf
      %3942 = vmax.xlane.f32.xlu0 %v3941
      %v3943 = vpop.xlane.xlu0 %3942
      %v3944 = vsel %vm1728, %v3335, -inf
      %3945 = vmax.xlane.f32.xlu0 %v3944
      %v3946 = vpop.xlane.xlu0 %3945
      %v3947 = vsel %vm1728, %v3381, -inf
      %3948 = vmax.xlane.f32.xlu0 %v3947
      %v3949 = vpop.xlane.xlu0 %3948
      %v3950 = vsel %vm1728, %v3427, -inf
      %3951 = vmax.xlane.f32.xlu0 %v3950
      %v3952 = vpop.xlane.xlu0 %3951
      %v3953 = vsel %vm1728, %v3473, -inf
      %3954 = vmax.xlane.f32.xlu0 %v3953
      %v3955 = vpop.xlane.xlu0 %3954
      %v3956 = vsel %vm1728, %v3519, -inf
      %3957 = vmax.xlane.f32.xlu0 %v3956
      %v3958 = vpop.xlane.xlu0 %3957
      %v3959 = vsel %vm1728, %v3565, -inf
      %3960 = vmax.xlane.f32.xlu0 %v3959
      %v3961 = vpop.xlane.xlu0 %3960
      %v3962 = vsel %vm1728, %v3611, -inf
      %3963 = vmax.xlane.f32.xlu0 %v3962
      %v3964 = vpop.xlane.xlu0 %3963
      %v3965 = vsel %vm1728, %v3657, -inf
      %3966 = vmax.xlane.f32.xlu0 %v3965
      %v3967 = vpop.xlane.xlu0 %3966
      %v3968 = vsel %vm1728, %v3703, -inf
      %3969 = vmax.xlane.f32.xlu0 %v3968
      %v3970 = vpop.xlane.xlu0 %3969
      %v3971 = vsel %vm1728, %v3749, -inf
      %3972 = vmax.xlane.f32.xlu0 %v3971
      %v3973 = vpop.xlane.xlu0 %3972
      %v3974 = vsel %vm1728, %v3795, -inf
      %3975 = vmax.xlane.f32.xlu0 %v3974
      %v3976 = vpop.xlane.xlu0 %3975
      %v3977 = vsel %vm1728, %v3841, -inf
      %3978 = vmax.xlane.f32.xlu0 %v3977
      %v3979 = vpop.xlane.xlu0 %3978
      %v3980 = vsel %vm1728, %v3887, -inf
      %3981 = vmax.xlane.f32.xlu0 %v3980
      %v3982 = vpop.xlane.xlu0 %3981
      %v3983 = vsel %vm1728, %v3933, -inf
      %3984 = vmax.xlane.f32.xlu0 %v3983
      %v3985 = vpop.xlane.xlu0 %3984
      %v3986 = vsub.f32 %v3243, %v3940
      %v3987 = vsub.f32 %v3289, %v3943
      %v3988 = vsub.f32 %v3335, %v3946
      %v3989 = vsub.f32 %v3381, %v3949
      %v3990 = vsub.f32 %v3427, %v3952
      %v3991 = vsub.f32 %v3473, %v3955
      %v3992 = vsub.f32 %v3519, %v3958
      %v3993 = vsub.f32 %v3565, %v3961
      %v3994 = vsub.f32 %v3611, %v3964
      %v3995 = vsub.f32 %v3657, %v3967
      %v3996 = vsub.f32 %v3703, %v3970
      %v3997 = vsub.f32 %v3749, %v3973
      %v3998 = vsub.f32 %v3795, %v3976
      %v3999 = vsub.f32 %v3841, %v3979
      %v4000 = vsub.f32 %v3887, %v3982
      %v4001 = vsub.f32 %v3933, %v3985
      %v4002 = vmul.f32 %v3986, 1.442695
      %v4003 = vpow.pop %v4002
      %v4004 = vmul.f32 %v3987, 1.442695
      %v4005 = vpow.pop %v4004
      %v4006 = vmul.f32 %v3988, 1.442695
      %v4007 = vpow.pop %v4006
      %v4008 = vmul.f32 %v3989, 1.442695
      %v4009 = vpow.pop %v4008
      %v4010 = vmul.f32 %v3990, 1.442695
      %v4011 = vpow.pop %v4010
      %v4012 = vmul.f32 %v3991, 1.442695
      %v4013 = vpow.pop %v4012
      %v4014 = vmul.f32 %v3992, 1.442695
      %v4015 = vpow.pop %v4014
      %v4016 = vmul.f32 %v3993, 1.442695
      %v4017 = vpow.pop %v4016
      %v4018 = vmul.f32 %v3994, 1.442695
      %v4019 = vpow.pop %v4018
      %v4020 = vmul.f32 %v3995, 1.442695
      %v4021 = vpow.pop %v4020
      %v4022 = vmul.f32 %v3996, 1.442695
      %v4023 = vpow.pop %v4022
      %v4024 = vmul.f32 %v3997, 1.442695
      %v4025 = vpow.pop %v4024
      %v4026 = vmul.f32 %v3998, 1.442695
      %v4027 = vpow.pop %v4026
      %v4028 = vmul.f32 %v3999, 1.442695
      %v4029 = vpow.pop %v4028
      %v4030 = vmul.f32 %v4000, 1.442695
      %v4031 = vpow.pop %v4030
      %v4032 = vmul.f32 %v4001, 1.442695
      %v4033 = vpow.pop %v4032
      %v4034 = vsel %vm1728, %v4003, 0.0
      %4035 = vadd.xlane.f32.xlu0 %v4034
      %v4036 = vpop.xlane.xlu0 %4035
      %v4037 = vsel %vm1728, %v4005, 0.0
      %4038 = vadd.xlane.f32.xlu0 %v4037
      %v4039 = vpop.xlane.xlu0 %4038
      %v4040 = vsel %vm1728, %v4007, 0.0
      %4041 = vadd.xlane.f32.xlu0 %v4040
      %v4042 = vpop.xlane.xlu0 %4041
      %v4043 = vsel %vm1728, %v4009, 0.0
      %4044 = vadd.xlane.f32.xlu0 %v4043
      %v4045 = vpop.xlane.xlu0 %4044
      %v4046 = vsel %vm1728, %v4011, 0.0
      %4047 = vadd.xlane.f32.xlu0 %v4046
      %v4048 = vpop.xlane.xlu0 %4047
      %v4049 = vsel %vm1728, %v4013, 0.0
      %4050 = vadd.xlane.f32.xlu0 %v4049
      %v4051 = vpop.xlane.xlu0 %4050
      %v4052 = vsel %vm1728, %v4015, 0.0
      %4053 = vadd.xlane.f32.xlu0 %v4052
      %v4054 = vpop.xlane.xlu0 %4053
      %v4055 = vsel %vm1728, %v4017, 0.0
      %4056 = vadd.xlane.f32.xlu0 %v4055
      %v4057 = vpop.xlane.xlu0 %4056
      %v4058 = vsel %vm1728, %v4019, 0.0
      %4059 = vadd.xlane.f32.xlu0 %v4058
      %v4060 = vpop.xlane.xlu0 %4059
      %v4061 = vsel %vm1728, %v4021, 0.0
      %4062 = vadd.xlane.f32.xlu0 %v4061
      %v4063 = vpop.xlane.xlu0 %4062
      %v4064 = vsel %vm1728, %v4023, 0.0
      %4065 = vadd.xlane.f32.xlu0 %v4064
      %v4066 = vpop.xlane.xlu0 %4065
      %v4067 = vsel %vm1728, %v4025, 0.0
      %4068 = vadd.xlane.f32.xlu0 %v4067
      %v4069 = vpop.xlane.xlu0 %4068
      %v4070 = vsel %vm1728, %v4027, 0.0
      %4071 = vadd.xlane.f32.xlu0 %v4070
      %v4072 = vpop.xlane.xlu0 %4071
      %v4073 = vsel %vm1728, %v4029, 0.0
      %4074 = vadd.xlane.f32.xlu0 %v4073
      %v4075 = vpop.xlane.xlu0 %4074
      %v4076 = vsel %vm1728, %v4031, 0.0
      %4077 = vadd.xlane.f32.xlu0 %v4076
      %v4078 = vpop.xlane.xlu0 %4077
      %v4079 = vsel %vm1728, %v4033, 0.0
      %4080 = vadd.xlane.f32.xlu0 %v4079
      %v4081 = vpop.xlane.xlu0 %4080
      %v4082 = vrcp.pop %v4036
      %v4083 = vrcp.pop %v4039
      %v4084 = vrcp.pop %v4042
      %v4085 = vrcp.pop %v4045
      %v4086 = vrcp.pop %v4048
      %v4087 = vrcp.pop %v4051
      %v4088 = vrcp.pop %v4054
      %v4089 = vrcp.pop %v4057
      %v4090 = vrcp.pop %v4060
      %v4091 = vrcp.pop %v4063
      %v4092 = vrcp.pop %v4066
      %v4093 = vrcp.pop %v4069
      %v4094 = vrcp.pop %v4072
      %v4095 = vrcp.pop %v4075
      %v4096 = vrcp.pop %v4078
      %v4097 = vrcp.pop %v4081
      %v4098 = vmul.f32 %v4003, %v4082
      %v4099 = vmul.f32 %v4005, %v4083
      %v4100 = vmul.f32 %v4007, %v4084
      %v4101 = vmul.f32 %v4009, %v4085
      %v4102 = vmul.f32 %v4011, %v4086
      %v4103 = vmul.f32 %v4013, %v4087
      %v4104 = vmul.f32 %v4015, %v4088
      %v4105 = vmul.f32 %v4017, %v4089
      %v4106 = vmul.f32 %v4019, %v4090
      %v4107 = vmul.f32 %v4021, %v4091
      %v4108 = vmul.f32 %v4023, %v4092
      %v4109 = vmul.f32 %v4025, %v4093
      %v4110 = vmul.f32 %v4027, %v4094
      %v4111 = vmul.f32 %v4029, %v4095
      %v4112 = vmul.f32 %v4031, %v4096
      %v4113 = vmul.f32 %v4033, %v4097
      %v4114 = vpack.c.bf16 %v4098, %v4098
      %v4115 = vpack.c.bf16 %v4099, %v4099
      %v4116 = vpack.c.bf16 %v4100, %v4100
      %v4117 = vpack.c.bf16 %v4101, %v4101
      %v4118 = vpack.c.bf16 %v4102, %v4102
      %v4119 = vpack.c.bf16 %v4103, %v4103
      %v4120 = vpack.c.bf16 %v4104, %v4104
      %v4121 = vpack.c.bf16 %v4105, %v4105
      %v4122 = vpack.c.bf16 %v4106, %v4106
      %v4123 = vpack.c.bf16 %v4107, %v4107
      %v4124 = vpack.c.bf16 %v4108, %v4108
      %v4125 = vpack.c.bf16 %v4109, %v4109
      %v4126 = vpack.c.bf16 %v4110, %v4110
      %v4127 = vpack.c.bf16 %v4111, %v4111
      %v4128 = vpack.c.bf16 %v4112, %v4112
      %v4129 = vpack.c.bf16 %v4113, %v4113
      %v4131 = vsel %vm1921, %v4114, 0
      %v4134 = vsel %vm1925, %v3186, 0
      %4136 = vmatprep.subr.bf16.mxu0 0
      %4137 = vmatpush1.bf16.msra.mxu0 %v4134
      %4138 = vmatprep.subr.bf16.mxu0 0
      %4139 = vmatpush1.bf16.msra.mxu0 0
      %4140 = vmatprep.subr.bf16.mxu0 0
      %4141 = vmatpush1.bf16.msra.mxu0 0
      %4142 = vmatprep.subr.bf16.mxu0 0
      %4143 = vmatpush1.bf16.msra.mxu0 0
      %4144 = vmatprep.subr.bf16.mxu0 0
      %4145 = vmatpush1.bf16.msra.mxu0 0
      %4146 = vmatprep.subr.bf16.mxu0 0
      %4147 = vmatpush1.bf16.msra.mxu0 0
      %4148 = vmatprep.subr.bf16.mxu0 0
      %4149 = vmatpush1.bf16.msra.mxu0 0
      %4150 = vmatprep.subr.bf16.mxu0 0
      %4151 = vmatpush1.bf16.msra.mxu0 0
      %4152 = vmatprep.subr.bf16.mxu0 0
      %4153 = vmatpush1.bf16.msra.mxu0 0
      %4154 = vmatprep.subr.bf16.mxu0 0
      %4155 = vmatpush1.bf16.msra.mxu0 0
      %4156 = vmatprep.subr.bf16.mxu0 0
      %4157 = vmatpush1.bf16.msra.mxu0 0
      %4158 = vmatprep.subr.bf16.mxu0 0
      %4159 = vmatpush1.bf16.msra.mxu0 0
      %4160 = vmatprep.subr.bf16.mxu0 0
      %4161 = vmatpush1.bf16.msra.mxu0 0
      %4162 = vmatprep.subr.bf16.mxu0 0
      %4163 = vmatpush1.bf16.msra.mxu0 0
      %4164 = vmatprep.subr.bf16.mxu0 0
      %4165 = vmatpush1.bf16.msra.mxu0 0
      %4166 = vmatprep.subr.bf16.mxu0 0
      %4167 = vmatpush1.bf16.msra.mxu0 0
      %4168 = vmatprep.mubr.bf16.mxu0 0
      %4169 = vmatmul.mubr.bf16.gmra.mrb[0].mxu0 %v4131
      %v4170 = vpop.f32.mrb[0].mxu0
      %v4171 = vadd.f32 0.0, %v4170
      %v4172 = vpop.f32.mrb[0].mxu0
      %v4173 = vpop.f32.mrb[0].mxu0
      %v4174 = vpop.f32.mrb[0].mxu0
      %4175 = vdwg.mxu0
      %v4177 = vsel %vm1921, %v4115, 0
      %v4180 = vsel %vm1925, %v3187, 0
      %4182 = vmatprep.subr.bf16.mxu0 0
      %4183 = vmatpush1.bf16.msra.mxu0 %v4180
      %4184 = vmatprep.subr.bf16.mxu0 0
      %4185 = vmatpush1.bf16.msra.mxu0 0
      %4186 = vmatprep.subr.bf16.mxu0 0
      %4187 = vmatpush1.bf16.msra.mxu0 0
      %4188 = vmatprep.subr.bf16.mxu0 0
      %4189 = vmatpush1.bf16.msra.mxu0 0
      %4190 = vmatprep.subr.bf16.mxu0 0
      %4191 = vmatpush1.bf16.msra.mxu0 0
      %4192 = vmatprep.subr.bf16.mxu0 0
      %4193 = vmatpush1.bf16.msra.mxu0 0
      %4194 = vmatprep.subr.bf16.mxu0 0
      %4195 = vmatpush1.bf16.msra.mxu0 0
      %4196 = vmatprep.subr.bf16.mxu0 0
      %4197 = vmatpush1.bf16.msra.mxu0 0
      %4198 = vmatprep.subr.bf16.mxu0 0
      %4199 = vmatpush1.bf16.msra.mxu0 0
      %4200 = vmatprep.subr.bf16.mxu0 0
      %4201 = vmatpush1.bf16.msra.mxu0 0
      %4202 = vmatprep.subr.bf16.mxu0 0
      %4203 = vmatpush1.bf16.msra.mxu0 0
      %4204 = vmatprep.subr.bf16.mxu0 0
      %4205 = vmatpush1.bf16.msra.mxu0 0
      %4206 = vmatprep.subr.bf16.mxu0 0
      %4207 = vmatpush1.bf16.msra.mxu0 0
      %4208 = vmatprep.subr.bf16.mxu0 0
      %4209 = vmatpush1.bf16.msra.mxu0 0
      %4210 = vmatprep.subr.bf16.mxu0 0
      %4211 = vmatpush1.bf16.msra.mxu0 0
      %4212 = vmatprep.subr.bf16.mxu0 0
      %4213 = vmatpush1.bf16.msra.mxu0 0
      %4214 = vmatprep.mubr.bf16.mxu0 0
      %4215 = vmatmul.mubr.bf16.gmra.mrb[0].mxu0 %v4177
      %v4216 = vpop.f32.mrb[0].mxu0
      %v4217 = vadd.f32 0.0, %v4216
      %v4218 = vpop.f32.mrb[0].mxu0
      %v4219 = vpop.f32.mrb[0].mxu0
      %v4220 = vpop.f32.mrb[0].mxu0
      %4221 = vdwg.mxu0
      %v4223 = vsel %vm1921, %v4116, 0
      %v4226 = vsel %vm1925, %v3188, 0
      %4228 = vmatprep.subr.bf16.mxu0 0
      %4229 = vmatpush1.bf16.msra.mxu0 %v4226
      %4230 = vmatprep.subr.bf16.mxu0 0
      %4231 = vmatpush1.bf16.msra.mxu0 0
      %4232 = vmatprep.subr.bf16.mxu0 0
      %4233 = vmatpush1.bf16.msra.mxu0 0
      %4234 = vmatprep.subr.bf16.mxu0 0
      %4235 = vmatpush1.bf16.msra.mxu0 0
      %4236 = vmatprep.subr.bf16.mxu0 0
      %4237 = vmatpush1.bf16.msra.mxu0 0
      %4238 = vmatprep.subr.bf16.mxu0 0
      %4239 = vmatpush1.bf16.msra.mxu0 0
      %4240 = vmatprep.subr.bf16.mxu0 0
      %4241 = vmatpush1.bf16.msra.mxu0 0
      %4242 = vmatprep.subr.bf16.mxu0 0
      %4243 = vmatpush1.bf16.msra.mxu0 0
      %4244 = vmatprep.subr.bf16.mxu0 0
      %4245 = vmatpush1.bf16.msra.mxu0 0
      %4246 = vmatprep.subr.bf16.mxu0 0
      %4247 = vmatpush1.bf16.msra.mxu0 0
      %4248 = vmatprep.subr.bf16.mxu0 0
      %4249 = vmatpush1.bf16.msra.mxu0 0
      %4250 = vmatprep.subr.bf16.mxu0 0
      %4251 = vmatpush1.bf16.msra.mxu0 0
      %4252 = vmatprep.subr.bf16.mxu0 0
      %4253 = vmatpush1.bf16.msra.mxu0 0
      %4254 = vmatprep.subr.bf16.mxu0 0
      %4255 = vmatpush1.bf16.msra.mxu0 0
      %4256 = vmatprep.subr.bf16.mxu0 0
      %4257 = vmatpush1.bf16.msra.mxu0 0
      %4258 = vmatprep.subr.bf16.mxu0 0
      %4259 = vmatpush1.bf16.msra.mxu0 0
      %4260 = vmatprep.mubr.bf16.mxu0 0
      %4261 = vmatmul.mubr.bf16.gmra.mrb[0].mxu0 %v4223
      %v4262 = vpop.f32.mrb[0].mxu0
      %v4263 = vadd.f32 0.0, %v4262
      %v4264 = vpop.f32.mrb[0].mxu0
      %v4265 = vpop.f32.mrb[0].mxu0
      %v4266 = vpop.f32.mrb[0].mxu0
      %4267 = vdwg.mxu0
      %v4269 = vsel %vm1921, %v4117, 0
      %v4272 = vsel %vm1925, %v3189, 0
      %4274 = vmatprep.subr.bf16.mxu0 0
      %4275 = vmatpush1.bf16.msra.mxu0 %v4272
      %4276 = vmatprep.subr.bf16.mxu0 0
      %4277 = vmatpush1.bf16.msra.mxu0 0
      %4278 = vmatprep.subr.bf16.mxu0 0
      %4279 = vmatpush1.bf16.msra.mxu0 0
      %4280 = vmatprep.subr.bf16.mxu0 0
      %4281 = vmatpush1.bf16.msra.mxu0 0
      %4282 = vmatprep.subr.bf16.mxu0 0
      %4283 = vmatpush1.bf16.msra.mxu0 0
      %4284 = vmatprep.subr.bf16.mxu0 0
      %4285 = vmatpush1.bf16.msra.mxu0 0
      %4286 = vmatprep.subr.bf16.mxu0 0
      %4287 = vmatpush1.bf16.msra.mxu0 0
      %4288 = vmatprep.subr.bf16.mxu0 0
      %4289 = vmatpush1.bf16.msra.mxu0 0
      %4290 = vmatprep.subr.bf16.mxu0 0
      %4291 = vmatpush1.bf16.msra.mxu0 0
      %4292 = vmatprep.subr.bf16.mxu0 0
      %4293 = vmatpush1.bf16.msra.mxu0 0
      %4294 = vmatprep.subr.bf16.mxu0 0
      %4295 = vmatpush1.bf16.msra.mxu0 0
      %4296 = vmatprep.subr.bf16.mxu0 0
      %4297 = vmatpush1.bf16.msra.mxu0 0
      %4298 = vmatprep.subr.bf16.mxu0 0
      %4299 = vmatpush1.bf16.msra.mxu0 0
      %4300 = vmatprep.subr.bf16.mxu0 0
      %4301 = vmatpush1.bf16.msra.mxu0 0
      %4302 = vmatprep.subr.bf16.mxu0 0
      %4303 = vmatpush1.bf16.msra.mxu0 0
      %4304 = vmatprep.subr.bf16.mxu0 0
      %4305 = vmatpush1.bf16.msra.mxu0 0
      %4306 = vmatprep.mubr.bf16.mxu0 0
      %4307 = vmatmul.mubr.bf16.gmra.mrb[0].mxu0 %v4269
      %v4308 = vpop.f32.mrb[0].mxu0
      %v4309 = vadd.f32 0.0, %v4308
      %v4310 = vpop.f32.mrb[0].mxu0
      %v4311 = vpop.f32.mrb[0].mxu0
      %v4312 = vpop.f32.mrb[0].mxu0
      %4313 = vdwg.mxu0
      %v4315 = vsel %vm1921, %v4118, 0
      %v4318 = vsel %vm1925, %v3190, 0
      %4320 = vmatprep.subr.bf16.mxu0 0
      %4321 = vmatpush1.bf16.msra.mxu0 %v4318
      %4322 = vmatprep.subr.bf16.mxu0 0
      %4323 = vmatpush1.bf16.msra.mxu0 0
      %4324 = vmatprep.subr.bf16.mxu0 0
      %4325 = vmatpush1.bf16.msra.mxu0 0
      %4326 = vmatprep.subr.bf16.mxu0 0
      %4327 = vmatpush1.bf16.msra.mxu0 0
      %4328 = vmatprep.subr.bf16.mxu0 0
      %4329 = vmatpush1.bf16.msra.mxu0 0
      %4330 = vmatprep.subr.bf16.mxu0 0
      %4331 = vmatpush1.bf16.msra.mxu0 0
      %4332 = vmatprep.subr.bf16.mxu0 0
      %4333 = vmatpush1.bf16.msra.mxu0 0
      %4334 = vmatprep.subr.bf16.mxu0 0
      %4335 = vmatpush1.bf16.msra.mxu0 0
      %4336 = vmatprep.subr.bf16.mxu0 0
      %4337 = vmatpush1.bf16.msra.mxu0 0
      %4338 = vmatprep.subr.bf16.mxu0 0
      %4339 = vmatpush1.bf16.msra.mxu0 0
      %4340 = vmatprep.subr.bf16.mxu0 0
      %4341 = vmatpush1.bf16.msra.mxu0 0
      %4342 = vmatprep.subr.bf16.mxu0 0
      %4343 = vmatpush1.bf16.msra.mxu0 0
      %4344 = vmatprep.subr.bf16.mxu0 0
      %4345 = vmatpush1.bf16.msra.mxu0 0
      %4346 = vmatprep.subr.bf16.mxu0 0
      %4347 = vmatpush1.bf16.msra.mxu0 0
      %4348 = vmatprep.subr.bf16.mxu0 0
      %4349 = vmatpush1.bf16.msra.mxu0 0
      %4350 = vmatprep.subr.bf16.mxu0 0
      %4351 = vmatpush1.bf16.msra.mxu0 0
      %4352 = vmatprep.mubr.bf16.mxu0 0
      %4353 = vmatmul.mubr.bf16.gmra.mrb[0].mxu0 %v4315
      %v4354 = vpop.f32.mrb[0].mxu0
      %v4355 = vadd.f32 0.0, %v4354
      %v4356 = vpop.f32.mrb[0].mxu0
      %v4357 = vpop.f32.mrb[0].mxu0
      %v4358 = vpop.f32.mrb[0].mxu0
      %4359 = vdwg.mxu0
      %v4361 = vsel %vm1921, %v4119, 0
      %v4364 = vsel %vm1925, %v3191, 0
      %4366 = vmatprep.subr.bf16.mxu0 0
      %4367 = vmatpush1.bf16.msra.mxu0 %v4364
      %4368 = vmatprep.subr.bf16.mxu0 0
      %4369 = vmatpush1.bf16.msra.mxu0 0
      %4370 = vmatprep.subr.bf16.mxu0 0
      %4371 = vmatpush1.bf16.msra.mxu0 0
      %4372 = vmatprep.subr.bf16.mxu0 0
      %4373 = vmatpush1.bf16.msra.mxu0 0
      %4374 = vmatprep.subr.bf16.mxu0 0
      %4375 = vmatpush1.bf16.msra.mxu0 0
      %4376 = vmatprep.subr.bf16.mxu0 0
      %4377 = vmatpush1.bf16.msra.mxu0 0
      %4378 = vmatprep.subr.bf16.mxu0 0
      %4379 = vmatpush1.bf16.msra.mxu0 0
      %4380 = vmatprep.subr.bf16.mxu0 0
      %4381 = vmatpush1.bf16.msra.mxu0 0
      %4382 = vmatprep.subr.bf16.mxu0 0
      %4383 = vmatpush1.bf16.msra.mxu0 0
      %4384 = vmatprep.subr.bf16.mxu0 0
      %4385 = vmatpush1.bf16.msra.mxu0 0
      %4386 = vmatprep.subr.bf16.mxu0 0
      %4387 = vmatpush1.bf16.msra.mxu0 0
      %4388 = vmatprep.subr.bf16.mxu0 0
      %4389 = vmatpush1.bf16.msra.mxu0 0
      %4390 = vmatprep.subr.bf16.mxu0 0
      %4391 = vmatpush1.bf16.msra.mxu0 0
      %4392 = vmatprep.subr.bf16.mxu0 0
      %4393 = vmatpush1.bf16.msra.mxu0 0
      %4394 = vmatprep.subr.bf16.mxu0 0
      %4395 = vmatpush1.bf16.msra.mxu0 0
      %4396 = vmatprep.subr.bf16.mxu0 0
      %4397 = vmatpush1.bf16.msra.mxu0 0
      %4398 = vmatprep.mubr.bf16.mxu0 0
      %4399 = vmatmul.mubr.bf16.gmra.mrb[0].mxu0 %v4361
      %v4400 = vpop.f32.mrb[0].mxu0
      %v4401 = vadd.f32 0.0, %v4400
      %v4402 = vpop.f32.mrb[0].mxu0
      %v4403 = vpop.f32.mrb[0].mxu0
      %v4404 = vpop.f32.mrb[0].mxu0
      %4405 = vdwg.mxu0
      %v4407 = vsel %vm1921, %v4120, 0
      %v4410 = vsel %vm1925, %v3192, 0
      %4412 = vmatprep.subr.bf16.mxu0 0
      %4413 = vmatpush1.bf16.msra.mxu0 %v4410
      %4414 = vmatprep.subr.bf16.mxu0 0
      %4415 = vmatpush1.bf16.msra.mxu0 0
      %4416 = vmatprep.subr.bf16.mxu0 0
      %4417 = vmatpush1.bf16.msra.mxu0 0
      %4418 = vmatprep.subr.bf16.mxu0 0
      %4419 = vmatpush1.bf16.msra.mxu0 0
      %4420 = vmatprep.subr.bf16.mxu0 0
      %4421 = vmatpush1.bf16.msra.mxu0 0
      %4422 = vmatprep.subr.bf16.mxu0 0
      %4423 = vmatpush1.bf16.msra.mxu0 0
      %4424 = vmatprep.subr.bf16.mxu0 0
      %4425 = vmatpush1.bf16.msra.mxu0 0
      %4426 = vmatprep.subr.bf16.mxu0 0
      %4427 = vmatpush1.bf16.msra.mxu0 0
      %4428 = vmatprep.subr.bf16.mxu0 0
      %4429 = vmatpush1.bf16.msra.mxu0 0
      %4430 = vmatprep.subr.bf16.mxu0 0
      %4431 = vmatpush1.bf16.msra.mxu0 0
      %4432 = vmatprep.subr.bf16.mxu0 0
      %4433 = vmatpush1.bf16.msra.mxu0 0
      %4434 = vmatprep.subr.bf16.mxu0 0
      %4435 = vmatpush1.bf16.msra.mxu0 0
      %4436 = vmatprep.subr.bf16.mxu0 0
      %4437 = vmatpush1.bf16.msra.mxu0 0
      %4438 = vmatprep.subr.bf16.mxu0 0
      %4439 = vmatpush1.bf16.msra.mxu0 0
      %4440 = vmatprep.subr.bf16.mxu0 0
      %4441 = vmatpush1.bf16.msra.mxu0 0
      %4442 = vmatprep.subr.bf16.mxu0 0
      %4443 = vmatpush1.bf16.msra.mxu0 0
      %4444 = vmatprep.mubr.bf16.mxu0 0
      %4445 = vmatmul.mubr.bf16.gmra.mrb[0].mxu0 %v4407
      %v4446 = vpop.f32.mrb[0].mxu0
      %v4447 = vadd.f32 0.0, %v4446
      %v4448 = vpop.f32.mrb[0].mxu0
      %v4449 = vpop.f32.mrb[0].mxu0
      %v4450 = vpop.f32.mrb[0].mxu0
      %4451 = vdwg.mxu0
      %v4453 = vsel %vm1921, %v4121, 0
      %v4456 = vsel %vm1925, %v3193, 0
      %4458 = vmatprep.subr.bf16.mxu0 0
      %4459 = vmatpush1.bf16.msra.mxu0 %v4456
      %4460 = vmatprep.subr.bf16.mxu0 0
      %4461 = vmatpush1.bf16.msra.mxu0 0
      %4462 = vmatprep.subr.bf16.mxu0 0
      %4463 = vmatpush1.bf16.msra.mxu0 0
      %4464 = vmatprep.subr.bf16.mxu0 0
      %4465 = vmatpush1.bf16.msra.mxu0 0
      %4466 = vmatprep.subr.bf16.mxu0 0
      %4467 = vmatpush1.bf16.msra.mxu0 0
      %4468 = vmatprep.subr.bf16.mxu0 0
      %4469 = vmatpush1.bf16.msra.mxu0 0
      %4470 = vmatprep.subr.bf16.mxu0 0
      %4471 = vmatpush1.bf16.msra.mxu0 0
      %4472 = vmatprep.subr.bf16.mxu0 0
      %4473 = vmatpush1.bf16.msra.mxu0 0
      %4474 = vmatprep.subr.bf16.mxu0 0
      %4475 = vmatpush1.bf16.msra.mxu0 0
      %4476 = vmatprep.subr.bf16.mxu0 0
      %4477 = vmatpush1.bf16.msra.mxu0 0
      %4478 = vmatprep.subr.bf16.mxu0 0
      %4479 = vmatpush1.bf16.msra.mxu0 0
      %4480 = vmatprep.subr.bf16.mxu0 0
      %4481 = vmatpush1.bf16.msra.mxu0 0
      %4482 = vmatprep.subr.bf16.mxu0 0
      %4483 = vmatpush1.bf16.msra.mxu0 0
      %4484 = vmatprep.subr.bf16.mxu0 0
      %4485 = vmatpush1.bf16.msra.mxu0 0
      %4486 = vmatprep.subr.bf16.mxu0 0
      %4487 = vmatpush1.bf16.msra.mxu0 0
      %4488 = vmatprep.subr.bf16.mxu0 0
      %4489 = vmatpush1.bf16.msra.mxu0 0
      %4490 = vmatprep.mubr.bf16.mxu0 0
      %4491 = vmatmul.mubr.bf16.gmra.mrb[0].mxu0 %v4453
      %v4492 = vpop.f32.mrb[0].mxu0
      %v4493 = vadd.f32 0.0, %v4492
      %v4494 = vpop.f32.mrb[0].mxu0
      %v4495 = vpop.f32.mrb[0].mxu0
      %v4496 = vpop.f32.mrb[0].mxu0
      %4497 = vdwg.mxu0
      %v4499 = vsel %vm1921, %v4122, 0
      %v4502 = vsel %vm1925, %v3194, 0
      %4504 = vmatprep.subr.bf16.mxu0 0
      %4505 = vmatpush1.bf16.msra.mxu0 %v4502
      %4506 = vmatprep.subr.bf16.mxu0 0
      %4507 = vmatpush1.bf16.msra.mxu0 0
      %4508 = vmatprep.subr.bf16.mxu0 0
      %4509 = vmatpush1.bf16.msra.mxu0 0
      %4510 = vmatprep.subr.bf16.mxu0 0
      %4511 = vmatpush1.bf16.msra.mxu0 0
      %4512 = vmatprep.subr.bf16.mxu0 0
      %4513 = vmatpush1.bf16.msra.mxu0 0
      %4514 = vmatprep.subr.bf16.mxu0 0
      %4515 = vmatpush1.bf16.msra.mxu0 0
      %4516 = vmatprep.subr.bf16.mxu0 0
      %4517 = vmatpush1.bf16.msra.mxu0 0
      %4518 = vmatprep.subr.bf16.mxu0 0
      %4519 = vmatpush1.bf16.msra.mxu0 0
      %4520 = vmatprep.subr.bf16.mxu0 0
      %4521 = vmatpush1.bf16.msra.mxu0 0
      %4522 = vmatprep.subr.bf16.mxu0 0
      %4523 = vmatpush1.bf16.msra.mxu0 0
      %4524 = vmatprep.subr.bf16.mxu0 0
      %4525 = vmatpush1.bf16.msra.mxu0 0
      %4526 = vmatprep.subr.bf16.mxu0 0
      %4527 = vmatpush1.bf16.msra.mxu0 0
      %4528 = vmatprep.subr.bf16.mxu0 0
      %4529 = vmatpush1.bf16.msra.mxu0 0
      %4530 = vmatprep.subr.bf16.mxu0 0
      %4531 = vmatpush1.bf16.msra.mxu0 0
      %4532 = vmatprep.subr.bf16.mxu0 0
      %4533 = vmatpush1.bf16.msra.mxu0 0
      %4534 = vmatprep.subr.bf16.mxu0 0
      %4535 = vmatpush1.bf16.msra.mxu0 0
      %4536 = vmatprep.mubr.bf16.mxu0 0
      %4537 = vmatmul.mubr.bf16.gmra.mrb[0].mxu0 %v4499
      %v4538 = vpop.f32.mrb[0].mxu0
      %v4539 = vadd.f32 0.0, %v4538
      %v4540 = vpop.f32.mrb[0].mxu0
      %v4541 = vpop.f32.mrb[0].mxu0
      %v4542 = vpop.f32.mrb[0].mxu0
      %4543 = vdwg.mxu0
      %v4545 = vsel %vm1921, %v4123, 0
      %v4548 = vsel %vm1925, %v3195, 0
      %4550 = vmatprep.subr.bf16.mxu0 0
      %4551 = vmatpush1.bf16.msra.mxu0 %v4548
      %4552 = vmatprep.subr.bf16.mxu0 0
      %4553 = vmatpush1.bf16.msra.mxu0 0
      %4554 = vmatprep.subr.bf16.mxu0 0
      %4555 = vmatpush1.bf16.msra.mxu0 0
      %4556 = vmatprep.subr.bf16.mxu0 0
      %4557 = vmatpush1.bf16.msra.mxu0 0
      %4558 = vmatprep.subr.bf16.mxu0 0
      %4559 = vmatpush1.bf16.msra.mxu0 0
      %4560 = vmatprep.subr.bf16.mxu0 0
      %4561 = vmatpush1.bf16.msra.mxu0 0
      %4562 = vmatprep.subr.bf16.mxu0 0
      %4563 = vmatpush1.bf16.msra.mxu0 0
      %4564 = vmatprep.subr.bf16.mxu0 0
      %4565 = vmatpush1.bf16.msra.mxu0 0
      %4566 = vmatprep.subr.bf16.mxu0 0
      %4567 = vmatpush1.bf16.msra.mxu0 0
      %4568 = vmatprep.subr.bf16.mxu0 0
      %4569 = vmatpush1.bf16.msra.mxu0 0
      %4570 = vmatprep.subr.bf16.mxu0 0
      %4571 = vmatpush1.bf16.msra.mxu0 0
      %4572 = vmatprep.subr.bf16.mxu0 0
      %4573 = vmatpush1.bf16.msra.mxu0 0
      %4574 = vmatprep.subr.bf16.mxu0 0
      %4575 = vmatpush1.bf16.msra.mxu0 0
      %4576 = vmatprep.subr.bf16.mxu0 0
      %4577 = vmatpush1.bf16.msra.mxu0 0
      %4578 = vmatprep.subr.bf16.mxu0 0
      %4579 = vmatpush1.bf16.msra.mxu0 0
      %4580 = vmatprep.subr.bf16.mxu0 0
      %4581 = vmatpush1.bf16.msra.mxu0 0
      %4582 = vmatprep.mubr.bf16.mxu0 0
      %4583 = vmatmul.mubr.bf16.gmra.mrb[0].mxu0 %v4545
      %v4584 = vpop.f32.mrb[0].mxu0
      %v4585 = vadd.f32 0.0, %v4584
      %v4586 = vpop.f32.mrb[0].mxu0
      %v4587 = vpop.f32.mrb[0].mxu0
      %v4588 = vpop.f32.mrb[0].mxu0
      %4589 = vdwg.mxu0
      %v4591 = vsel %vm1921, %v4124, 0
      %v4594 = vsel %vm1925, %v3196, 0
      %4596 = vmatprep.subr.bf16.mxu0 0
      %4597 = vmatpush1.bf16.msra.mxu0 %v4594
      %4598 = vmatprep.subr.bf16.mxu0 0
      %4599 = vmatpush1.bf16.msra.mxu0 0
      %4600 = vmatprep.subr.bf16.mxu0 0
      %4601 = vmatpush1.bf16.msra.mxu0 0
      %4602 = vmatprep.subr.bf16.mxu0 0
      %4603 = vmatpush1.bf16.msra.mxu0 0
      %4604 = vmatprep.subr.bf16.mxu0 0
      %4605 = vmatpush1.bf16.msra.mxu0 0
      %4606 = vmatprep.subr.bf16.mxu0 0
      %4607 = vmatpush1.bf16.msra.mxu0 0
      %4608 = vmatprep.subr.bf16.mxu0 0
      %4609 = vmatpush1.bf16.msra.mxu0 0
      %4610 = vmatprep.subr.bf16.mxu0 0
      %4611 = vmatpush1.bf16.msra.mxu0 0
      %4612 = vmatprep.subr.bf16.mxu0 0
      %4613 = vmatpush1.bf16.msra.mxu0 0
      %4614 = vmatprep.subr.bf16.mxu0 0
      %4615 = vmatpush1.bf16.msra.mxu0 0
      %4616 = vmatprep.subr.bf16.mxu0 0
      %4617 = vmatpush1.bf16.msra.mxu0 0
      %4618 = vmatprep.subr.bf16.mxu0 0
      %4619 = vmatpush1.bf16.msra.mxu0 0
      %4620 = vmatprep.subr.bf16.mxu0 0
      %4621 = vmatpush1.bf16.msra.mxu0 0
      %4622 = vmatprep.subr.bf16.mxu0 0
      %4623 = vmatpush1.bf16.msra.mxu0 0
      %4624 = vmatprep.subr.bf16.mxu0 0
      %4625 = vmatpush1.bf16.msra.mxu0 0
      %4626 = vmatprep.subr.bf16.mxu0 0
      %4627 = vmatpush1.bf16.msra.mxu0 0
      %4628 = vmatprep.mubr.bf16.mxu0 0
      %4629 = vmatmul.mubr.bf16.gmra.mrb[0].mxu0 %v4591
      %v4630 = vpop.f32.mrb[0].mxu0
      %v4631 = vadd.f32 0.0, %v4630
      %v4632 = vpop.f32.mrb[0].mxu0
      %v4633 = vpop.f32.mrb[0].mxu0
      %v4634 = vpop.f32.mrb[0].mxu0
      %4635 = vdwg.mxu0
      %v4637 = vsel %vm1921, %v4125, 0
      %v4640 = vsel %vm1925, %v3197, 0
      %4642 = vmatprep.subr.bf16.mxu0 0
      %4643 = vmatpush1.bf16.msra.mxu0 %v4640
      %4644 = vmatprep.subr.bf16.mxu0 0
      %4645 = vmatpush1.bf16.msra.mxu0 0
      %4646 = vmatprep.subr.bf16.mxu0 0
      %4647 = vmatpush1.bf16.msra.mxu0 0
      %4648 = vmatprep.subr.bf16.mxu0 0
      %4649 = vmatpush1.bf16.msra.mxu0 0
      %4650 = vmatprep.subr.bf16.mxu0 0
      %4651 = vmatpush1.bf16.msra.mxu0 0
      %4652 = vmatprep.subr.bf16.mxu0 0
      %4653 = vmatpush1.bf16.msra.mxu0 0
      %4654 = vmatprep.subr.bf16.mxu0 0
      %4655 = vmatpush1.bf16.msra.mxu0 0
      %4656 = vmatprep.subr.bf16.mxu0 0
      %4657 = vmatpush1.bf16.msra.mxu0 0
      %4658 = vmatprep.subr.bf16.mxu0 0
      %4659 = vmatpush1.bf16.msra.mxu0 0
      %4660 = vmatprep.subr.bf16.mxu0 0
      %4661 = vmatpush1.bf16.msra.mxu0 0
      %4662 = vmatprep.subr.bf16.mxu0 0
      %4663 = vmatpush1.bf16.msra.mxu0 0
      %4664 = vmatprep.subr.bf16.mxu0 0
      %4665 = vmatpush1.bf16.msra.mxu0 0
      %4666 = vmatprep.subr.bf16.mxu0 0
      %4667 = vmatpush1.bf16.msra.mxu0 0
      %4668 = vmatprep.subr.bf16.mxu0 0
      %4669 = vmatpush1.bf16.msra.mxu0 0
      %4670 = vmatprep.subr.bf16.mxu0 0
      %4671 = vmatpush1.bf16.msra.mxu0 0
      %4672 = vmatprep.subr.bf16.mxu0 0
      %4673 = vmatpush1.bf16.msra.mxu0 0
      %4674 = vmatprep.mubr.bf16.mxu0 0
      %4675 = vmatmul.mubr.bf16.gmra.mrb[0].mxu0 %v4637
      %v4676 = vpop.f32.mrb[0].mxu0
      %v4677 = vadd.f32 0.0, %v4676
      %v4678 = vpop.f32.mrb[0].mxu0
      %v4679 = vpop.f32.mrb[0].mxu0
      %v4680 = vpop.f32.mrb[0].mxu0
      %4681 = vdwg.mxu0
      %v4683 = vsel %vm1921, %v4126, 0
      %v4686 = vsel %vm1925, %v3198, 0
      %4688 = vmatprep.subr.bf16.mxu0 0
      %4689 = vmatpush1.bf16.msra.mxu0 %v4686
      %4690 = vmatprep.subr.bf16.mxu0 0
      %4691 = vmatpush1.bf16.msra.mxu0 0
      %4692 = vmatprep.subr.bf16.mxu0 0
      %4693 = vmatpush1.bf16.msra.mxu0 0
      %4694 = vmatprep.subr.bf16.mxu0 0
      %4695 = vmatpush1.bf16.msra.mxu0 0
      %4696 = vmatprep.subr.bf16.mxu0 0
      %4697 = vmatpush1.bf16.msra.mxu0 0
      %4698 = vmatprep.subr.bf16.mxu0 0
      %4699 = vmatpush1.bf16.msra.mxu0 0
      %4700 = vmatprep.subr.bf16.mxu0 0
      %4701 = vmatpush1.bf16.msra.mxu0 0
      %4702 = vmatprep.subr.bf16.mxu0 0
      %4703 = vmatpush1.bf16.msra.mxu0 0
      %4704 = vmatprep.subr.bf16.mxu0 0
      %4705 = vmatpush1.bf16.msra.mxu0 0
      %4706 = vmatprep.subr.bf16.mxu0 0
      %4707 = vmatpush1.bf16.msra.mxu0 0
      %4708 = vmatprep.subr.bf16.mxu0 0
      %4709 = vmatpush1.bf16.msra.mxu0 0
      %4710 = vmatprep.subr.bf16.mxu0 0
      %4711 = vmatpush1.bf16.msra.mxu0 0
      %4712 = vmatprep.subr.bf16.mxu0 0
      %4713 = vmatpush1.bf16.msra.mxu0 0
      %4714 = vmatprep.subr.bf16.mxu0 0
      %4715 = vmatpush1.bf16.msra.mxu0 0
      %4716 = vmatprep.subr.bf16.mxu0 0
      %4717 = vmatpush1.bf16.msra.mxu0 0
      %4718 = vmatprep.subr.bf16.mxu0 0
      %4719 = vmatpush1.bf16.msra.mxu0 0
      %4720 = vmatprep.mubr.bf16.mxu0 0
      %4721 = vmatmul.mubr.bf16.gmra.mrb[0].mxu0 %v4683
      %v4722 = vpop.f32.mrb[0].mxu0
      %v4723 = vadd.f32 0.0, %v4722
      %v4724 = vpop.f32.mrb[0].mxu0
      %v4725 = vpop.f32.mrb[0].mxu0
      %v4726 = vpop.f32.mrb[0].mxu0
      %4727 = vdwg.mxu0
      %v4729 = vsel %vm1921, %v4127, 0
      %v4732 = vsel %vm1925, %v3199, 0
      %4734 = vmatprep.subr.bf16.mxu0 0
      %4735 = vmatpush1.bf16.msra.mxu0 %v4732
      %4736 = vmatprep.subr.bf16.mxu0 0
      %4737 = vmatpush1.bf16.msra.mxu0 0
      %4738 = vmatprep.subr.bf16.mxu0 0
      %4739 = vmatpush1.bf16.msra.mxu0 0
      %4740 = vmatprep.subr.bf16.mxu0 0
      %4741 = vmatpush1.bf16.msra.mxu0 0
      %4742 = vmatprep.subr.bf16.mxu0 0
      %4743 = vmatpush1.bf16.msra.mxu0 0
      %4744 = vmatprep.subr.bf16.mxu0 0
      %4745 = vmatpush1.bf16.msra.mxu0 0
      %4746 = vmatprep.subr.bf16.mxu0 0
      %4747 = vmatpush1.bf16.msra.mxu0 0
      %4748 = vmatprep.subr.bf16.mxu0 0
      %4749 = vmatpush1.bf16.msra.mxu0 0
      %4750 = vmatprep.subr.bf16.mxu0 0
      %4751 = vmatpush1.bf16.msra.mxu0 0
      %4752 = vmatprep.subr.bf16.mxu0 0
      %4753 = vmatpush1.bf16.msra.mxu0 0
      %4754 = vmatprep.subr.bf16.mxu0 0
      %4755 = vmatpush1.bf16.msra.mxu0 0
      %4756 = vmatprep.subr.bf16.mxu0 0
      %4757 = vmatpush1.bf16.msra.mxu0 0
      %4758 = vmatprep.subr.bf16.mxu0 0
      %4759 = vmatpush1.bf16.msra.mxu0 0
      %4760 = vmatprep.subr.bf16.mxu0 0
      %4761 = vmatpush1.bf16.msra.mxu0 0
      %4762 = vmatprep.subr.bf16.mxu0 0
      %4763 = vmatpush1.bf16.msra.mxu0 0
      %4764 = vmatprep.subr.bf16.mxu0 0
      %4765 = vmatpush1.bf16.msra.mxu0 0
      %4766 = vmatprep.mubr.bf16.mxu0 0
      %4767 = vmatmul.mubr.bf16.gmra.mrb[0].mxu0 %v4729
      %v4768 = vpop.f32.mrb[0].mxu0
      %v4769 = vadd.f32 0.0, %v4768
      %v4770 = vpop.f32.mrb[0].mxu0
      %v4771 = vpop.f32.mrb[0].mxu0
      %v4772 = vpop.f32.mrb[0].mxu0
      %4773 = vdwg.mxu0
      %v4775 = vsel %vm1921, %v4128, 0
      %v4778 = vsel %vm1925, %v3200, 0
      %4780 = vmatprep.subr.bf16.mxu0 0
      %4781 = vmatpush1.bf16.msra.mxu0 %v4778
      %4782 = vmatprep.subr.bf16.mxu0 0
      %4783 = vmatpush1.bf16.msra.mxu0 0
      %4784 = vmatprep.subr.bf16.mxu0 0
      %4785 = vmatpush1.bf16.msra.mxu0 0
      %4786 = vmatprep.subr.bf16.mxu0 0
      %4787 = vmatpush1.bf16.msra.mxu0 0
      %4788 = vmatprep.subr.bf16.mxu0 0
      %4789 = vmatpush1.bf16.msra.mxu0 0
      %4790 = vmatprep.subr.bf16.mxu0 0
      %4791 = vmatpush1.bf16.msra.mxu0 0
      %4792 = vmatprep.subr.bf16.mxu0 0
      %4793 = vmatpush1.bf16.msra.mxu0 0
      %4794 = vmatprep.subr.bf16.mxu0 0
      %4795 = vmatpush1.bf16.msra.mxu0 0
      %4796 = vmatprep.subr.bf16.mxu0 0
      %4797 = vmatpush1.bf16.msra.mxu0 0
      %4798 = vmatprep.subr.bf16.mxu0 0
      %4799 = vmatpush1.bf16.msra.mxu0 0
      %4800 = vmatprep.subr.bf16.mxu0 0
      %4801 = vmatpush1.bf16.msra.mxu0 0
      %4802 = vmatprep.subr.bf16.mxu0 0
      %4803 = vmatpush1.bf16.msra.mxu0 0
      %4804 = vmatprep.subr.bf16.mxu0 0
      %4805 = vmatpush1.bf16.msra.mxu0 0
      %4806 = vmatprep.subr.bf16.mxu0 0
      %4807 = vmatpush1.bf16.msra.mxu0 0
      %4808 = vmatprep.subr.bf16.mxu0 0
      %4809 = vmatpush1.bf16.msra.mxu0 0
      %4810 = vmatprep.subr.bf16.mxu0 0
      %4811 = vmatpush1.bf16.msra.mxu0 0
      %4812 = vmatprep.mubr.bf16.mxu0 0
      %4813 = vmatmul.mubr.bf16.gmra.mrb[0].mxu0 %v4775
      %v4814 = vpop.f32.mrb[0].mxu0
      %v4815 = vadd.f32 0.0, %v4814
      %v4816 = vpop.f32.mrb[0].mxu0
      %v4817 = vpop.f32.mrb[0].mxu0
      %v4818 = vpop.f32.mrb[0].mxu0
      %4819 = vdwg.mxu0
      %v4821 = vsel %vm1921, %v4129, 0
      %v4824 = vsel %vm1925, %v3201, 0
      %4826 = vmatprep.subr.bf16.mxu0 0
      %4827 = vmatpush1.bf16.msra.mxu0 %v4824
      %4828 = vmatprep.subr.bf16.mxu0 0
      %4829 = vmatpush1.bf16.msra.mxu0 0
      %4830 = vmatprep.subr.bf16.mxu0 0
      %4831 = vmatpush1.bf16.msra.mxu0 0
      %4832 = vmatprep.subr.bf16.mxu0 0
      %4833 = vmatpush1.bf16.msra.mxu0 0
      %4834 = vmatprep.subr.bf16.mxu0 0
      %4835 = vmatpush1.bf16.msra.mxu0 0
      %4836 = vmatprep.subr.bf16.mxu0 0
      %4837 = vmatpush1.bf16.msra.mxu0 0
      %4838 = vmatprep.subr.bf16.mxu0 0
      %4839 = vmatpush1.bf16.msra.mxu0 0
      %4840 = vmatprep.subr.bf16.mxu0 0
      %4841 = vmatpush1.bf16.msra.mxu0 0
      %4842 = vmatprep.subr.bf16.mxu0 0
      %4843 = vmatpush1.bf16.msra.mxu0 0
      %4844 = vmatprep.subr.bf16.mxu0 0
      %4845 = vmatpush1.bf16.msra.mxu0 0
      %4846 = vmatprep.subr.bf16.mxu0 0
      %4847 = vmatpush1.bf16.msra.mxu0 0
      %4848 = vmatprep.subr.bf16.mxu0 0
      %4849 = vmatpush1.bf16.msra.mxu0 0
      %4850 = vmatprep.subr.bf16.mxu0 0
      %4851 = vmatpush1.bf16.msra.mxu0 0
      %4852 = vmatprep.subr.bf16.mxu0 0
      %4853 = vmatpush1.bf16.msra.mxu0 0
      %4854 = vmatprep.subr.bf16.mxu0 0
      %4855 = vmatpush1.bf16.msra.mxu0 0
      %4856 = vmatprep.subr.bf16.mxu0 0
      %4857 = vmatpush1.bf16.msra.mxu0 0
      %4858 = vmatprep.mubr.bf16.mxu0 0
      %4859 = vmatmul.mubr.bf16.gmra.mrb[0].mxu0 %v4821
      %v4860 = vpop.f32.mrb[0].mxu0
      %v4861 = vadd.f32 0.0, %v4860
      %v4862 = vpop.f32.mrb[0].mxu0
      %v4863 = vpop.f32.mrb[0].mxu0
      %v4864 = vpop.f32.mrb[0].mxu0
      %4865 = vdwg.mxu0
      %v4866 = vcombine.low %v4171, %v4263
      %v4868 = vunpack.c.l.s4 1983009808
      %v4869 = vunpack.c.0.s8 %v4868
      %v4870 = vlaneseq
      %v4871 = vshrl.u32 %v4870, 7
      %v4872 = vsub.s32 %v4869, %v4871
      %v4873 = vrot.slane %v4866, %v4872
      %v4874 = vcombine.low %v4217, %v4309
      %v4876 = vunpack.c.l.s4 1983009808
      %v4877 = vunpack.c.0.s8 %v4876
      %v4878 = vlaneseq
      %v4879 = vshrl.u32 %v4878, 7
      %v4880 = vsub.s32 %v4877, %v4879
      %v4881 = vrot.slane %v4874, %v4880
      %v4882 = vcombine.low %v4355, %v4447
      %v4884 = vunpack.c.l.s4 1983009808
      %v4885 = vunpack.c.0.s8 %v4884
      %v4886 = vlaneseq
      %v4887 = vshrl.u32 %v4886, 7
      %v4888 = vsub.s32 %v4885, %v4887
      %v4889 = vrot.slane %v4882, %v4888
      %v4890 = vcombine.low %v4401, %v4493
      %v4892 = vunpack.c.l.s4 1983009808
      %v4893 = vunpack.c.0.s8 %v4892
      %v4894 = vlaneseq
      %v4895 = vshrl.u32 %v4894, 7
      %v4896 = vsub.s32 %v4893, %v4895
      %v4897 = vrot.slane %v4890, %v4896
      %v4898 = vcombine.low %v4873, %v4881
      %v4899 = vcombine.high %v4873, %v4881
      %v4901 = vunpack.c.l.s4 1934713408
      %v4902 = vunpack.c.0.s8 %v4901
      %v4903 = vlaneseq
      %v4904 = vshrl.u32 %v4903, 7
      %v4905 = vsub.s32 %v4902, %v4904
      %v4906 = vrot.slane %v4898, %v4905
      %v4908 = vunpack.c.l.s4 1934713408
      %v4909 = vunpack.c.0.s8 %v4908
      %v4910 = vlaneseq
      %v4911 = vshrl.u32 %v4910, 7
      %v4912 = vsub.s32 %v4909, %v4911
      %v4913 = vrot.slane %v4899, %v4912
      %v4914 = vcombine.low %v4889, %v4897
      %v4915 = vcombine.high %v4889, %v4897
      %v4917 = vunpack.c.l.s4 1934713408
      %v4918 = vunpack.c.0.s8 %v4917
      %v4919 = vlaneseq
      %v4920 = vshrl.u32 %v4919, 7
      %v4921 = vsub.s32 %v4918, %v4920
      %v4922 = vrot.slane %v4914, %v4921
      %v4924 = vunpack.c.l.s4 1934713408
      %v4925 = vunpack.c.0.s8 %v4924
      %v4926 = vlaneseq
      %v4927 = vshrl.u32 %v4926, 7
      %v4928 = vsub.s32 %v4925, %v4927
      %v4929 = vrot.slane %v4915, %v4928
      %v4930 = vcombine.low %v4906, %v4922
      %v4931 = vcombine.high %v4906, %v4922
      %v4932 = vcombine.low %v4913, %v4929
      %v4933 = vcombine.high %v4913, %v4929
      %v4934 = vcombine.low %v4539, %v4631
      %v4936 = vunpack.c.l.s4 1983009808
      %v4937 = vunpack.c.0.s8 %v4936
      %v4938 = vlaneseq
      %v4939 = vshrl.u32 %v4938, 7
      %v4940 = vsub.s32 %v4937, %v4939
      %v4941 = vrot.slane %v4934, %v4940
      %v4942 = vcombine.low %v4585, %v4677
      %v4944 = vunpack.c.l.s4 1983009808
      %v4945 = vunpack.c.0.s8 %v4944
      %v4946 = vlaneseq
      %v4947 = vshrl.u32 %v4946, 7
      %v4948 = vsub.s32 %v4945, %v4947
      %v4949 = vrot.slane %v4942, %v4948
      %v4950 = vcombine.low %v4723, %v4815
      %v4952 = vunpack.c.l.s4 1983009808
      %v4953 = vunpack.c.0.s8 %v4952
      %v4954 = vlaneseq
      %v4955 = vshrl.u32 %v4954, 7
      %v4956 = vsub.s32 %v4953, %v4955
      %v4957 = vrot.slane %v4950, %v4956
      %v4958 = vcombine.low %v4769, %v4861
      %v4960 = vunpack.c.l.s4 1983009808
      %v4961 = vunpack.c.0.s8 %v4960
      %v4962 = vlaneseq
      %v4963 = vshrl.u32 %v4962, 7
      %v4964 = vsub.s32 %v4961, %v4963
      %v4965 = vrot.slane %v4958, %v4964
      %v4966 = vcombine.low %v4941, %v4949
      %v4967 = vcombine.high %v4941, %v4949
      %v4969 = vunpack.c.l.s4 1934713408
      %v4970 = vunpack.c.0.s8 %v4969
      %v4971 = vlaneseq
      %v4972 = vshrl.u32 %v4971, 7
      %v4973 = vsub.s32 %v4970, %v4972
      %v4974 = vrot.slane %v4966, %v4973
      %v4976 = vunpack.c.l.s4 1934713408
      %v4977 = vunpack.c.0.s8 %v4976
      %v4978 = vlaneseq
      %v4979 = vshrl.u32 %v4978, 7
      %v4980 = vsub.s32 %v4977, %v4979
      %v4981 = vrot.slane %v4967, %v4980
      %v4982 = vcombine.low %v4957, %v4965
      %v4983 = vcombine.high %v4957, %v4965
      %v4985 = vunpack.c.l.s4 1934713408
      %v4986 = vunpack.c.0.s8 %v4985
      %v4987 = vlaneseq
      %v4988 = vshrl.u32 %v4987, 7
      %v4989 = vsub.s32 %v4986, %v4988
      %v4990 = vrot.slane %v4982, %v4989
      %v4992 = vunpack.c.l.s4 1934713408
      %v4993 = vunpack.c.0.s8 %v4992
      %v4994 = vlaneseq
      %v4995 = vshrl.u32 %v4994, 7
      %v4996 = vsub.s32 %v4993, %v4995
      %v4997 = vrot.slane %v4983, %v4996
      %v4998 = vcombine.low %v4974, %v4990
      %v4999 = vcombine.high %v4974, %v4990
      %v5000 = vcombine.low %v4981, %v4997
      %v5001 = vcombine.high %v4981, %v4997
      %v5002 = vpack.c.bf16 %v4998, %v4930
      %v5003 = vpack.c.bf16 %v4999, %v4931
      %v5004 = vpack.c.bf16 %v5000, %v4932
      %v5005 = vpack.c.bf16 %v5001, %v4933
      %v5010 = vunpack.c.l.b16 %v5002
      %v5011 = vunpack.c.h.b16 %v5002
      %v5012 = vunpack.c.l.b16 %v5003
      %v5013 = vunpack.c.h.b16 %v5003
      %v5014 = vunpack.c.l.b16 %v5004
      %v5015 = vunpack.c.h.b16 %v5004
      %v5016 = vunpack.c.l.b16 %v5005
      %v5017 = vunpack.c.h.b16 %v5005
      %v5018 = vpack.c.b16 %v5010, %v5010
      %v5019 = vpack.c.b16 %v5011, %v5011
      %v5020 = vpack.c.b16 %v5012, %v5012
      %v5021 = vpack.c.b16 %v5013, %v5013
      %v5022 = vpack.c.b16 %v5014, %v5014
      %v5023 = vpack.c.b16 %v5015, %v5015
      %v5024 = vpack.c.b16 %v5016, %v5016
      %v5025 = vpack.c.b16 %v5017, %v5017
      %5026 = vrot.lane.b32.xlu0 %v5018, 16
      %v5027 = vpop.permute.xlu0 %5026
      %5028 = vrot.lane.b32.xlu0 %v5019, 16
      %v5029 = vpop.permute.xlu0 %5028
      %5030 = vrot.lane.b32.xlu0 %v5020, 16
      %v5031 = vpop.permute.xlu0 %5030
      %5032 = vrot.lane.b32.xlu0 %v5021, 16
      %v5033 = vpop.permute.xlu0 %5032
      %5034 = vrot.lane.b32.xlu0 %v5022, 16
      %v5035 = vpop.permute.xlu0 %5034
      %5036 = vrot.lane.b32.xlu0 %v5023, 16
      %v5037 = vpop.permute.xlu0 %5036
      %5038 = vrot.lane.b32.xlu0 %v5024, 16
      %v5039 = vpop.permute.xlu0 %5038
      %5040 = vrot.lane.b32.xlu0 %v5025, 16
      %v5041 = vpop.permute.xlu0 %5040
      %vm5050 = vcmask 257152
      %5051 = vst.msk [vmem:[%s289] sm:$0xf] %vm5050, %v5027
      %5052 = vst.msk [vmem:[%s289 + $0x4] sm:$0xf] %vm5050, %v5029
      %5053 = vst.msk [vmem:[%s289 + $0x8] sm:$0xf] %vm5050, %v5031
      %5054 = vst.msk [vmem:[%s289 + $0xc] sm:$0xf] %vm5050, %v5033
      %5055 = vst.msk [vmem:[%s289 + $0x10] sm:$0xf] %vm5050, %v5035
      %5056 = vst.msk [vmem:[%s289 + $0x14] sm:$0xf] %vm5050, %v5037
      %5057 = vst.msk [vmem:[%s289 + $0x18] sm:$0xf] %vm5050, %v5039
      %5058 = vst.msk [vmem:[%s289 + $0x1c] sm:$0xf] %vm5050, %v5041
      %s5059 = smul.u32 2, %s22
      %p5060 = scmp.lt.s32.totalorder %s21, 1
      %s5061 = scalar_select %p5060, %s21, 1
      %p5062 = scmp.lt.s32.totalorder %s5059, 1
      %s5063 = scalar_select %p5062, %s5059, 1
      %s5064 = smul.addr %s5061, 8
      %s5065 = sadd.s32 %s5063, %s5064
      %s5066 = smul.addr %s5065, 4
      %s5067 = scalar_lea.vmem %s6, %s5066
      // Predicated region
      $region45: #{vivit_forward.10} parent=43 // pred_check
        %p5068 = pneg %p182
      $region46: #{vivit_forward.10} parent=43 // pred_check_branch
        %5070 = sbr.rel (%p5068) target = $region48
      $region47: #{vivit_forward.10} parent=43 // pred_region
        %s5071 = smul.u32 2, %s22
      $region48: #{vivit_forward.10} parent=43 // pred_fallthru
        _
    $region44: #{vivit_forward.10} parent=5 // pred_fallthru
      _
    %p5072 = scmp.le.s32.totalorder 2, %s12
    // Predicated region
    $region49: #{vivit_forward.10} parent=5 // pred_check
      %p5073 = pneg %p5072
    $region50: #{vivit_forward.10} parent=5 // pred_check_branch
      %5075 = sbr.rel (%p5073) target = $region52
    $region51: #{vivit_forward.10} parent=5 // pred_region
      %s5076 = ssub.s32 %s12, 2
      // Predicated region
      $region53: #{vivit_forward.10} parent=51 // pred_check
        %p5077 = pneg %p188
      $region54: #{vivit_forward.10} parent=51 // pred_check_branch
        %5079 = sbr.rel (%p5077) target = $region56
      $region55: #{vivit_forward.10} parent=51 // pred_region
        %s5080 = smul.u32 2, %s24
        %p5081 = scmp.lt.s32.totalorder %s23, 1
        %s5082 = scalar_select %p5081, %s23, 1
        %p5083 = scmp.lt.s32.totalorder %s5080, 1
        %s5084 = scalar_select %p5083, %s5080, 1
        %s5085 = smul.addr %s5082, 8
        %s5086 = sadd.s32 %s5084, %s5085
        %s5087 = smul.addr %s5086, 4
        %s5088 = scalar_lea.vmem %s6, %s5087
      $region56: #{vivit_forward.10} parent=51 // pred_fallthru
        _
    $region52: #{vivit_forward.10} parent=5 // pred_fallthru
      _
  $region6: #{vivit_forward.10} parent=0 // loop_footer
    %s16 = sadd.s32 1, %s12
  $region7: #{vivit_forward.10} parent=0 // loop_footer_branch
    %11 = sbr.rel target = $region3
  $region8: #{vivit_forward.10} parent=0 // loop_exit
    _

// kernel: vivit_forward.15
$region0: #{vivit_forward.15}
  #allocation0 [shape = 'u32[]', space=smem, size = 0x4, offset = 0x4, fixed_abs, tag = 'smem constant byte address 0x4 - core index']
  #allocation1 [shape = 'u32[144,128]{1,0:T(1,128)}', space=vmem, size = 0x12000, scoped, tag = 'internal scratch']
  #allocation2 [shape = 'f32[2,32]{1,0:T(2,128)}', space=vmem, size = 0x400, scoped, tag = 'scratch operand']
  %s0 = inlined_call_operand.vmem [shape: bf16[2,64,32], index: 0, kind: input, shape index: {}]
  %s1 = inlined_call_operand.vmem [shape: f32[1,32], index: 1, kind: input, shape index: {}]
  %s2 = inlined_call_operand.vmem [shape: f32[1,32], index: 2, kind: input, shape index: {}]
  %s3 = inlined_call_operand.vmem [shape: bf16[32,2], index: 3, kind: input, shape index: {}]
  %s4 = inlined_call_operand.hbm [shape: f32[1,2], index: 4, kind: input, shape index: {}]
  %s5 = inlined_call_operand.hbm [shape: f32[2,2], index: 5, kind: output, shape index: {}]
  %s6 = sld [smem:[#allocation0]]
  $region42: #{vivit_forward.15} parent=0
    _
  %s8 = ssub.s32 1, %s6
  %s9 = scalar_select 0, %s8, %s6
  $region1: #{vivit_forward.15} parent=0
    #allocation3 [shape = 'u8[512]{0}', space=vmem, size = 0x400, scoped, tag = 'input window, operand 4, single buffered']
    #allocation4 [shape = 's32[1]{0}', space=sflag, size = 0x4, scoped, tag = 'scoped memory for vivit_forward.15']
    #allocation5 [shape = 's32[1]{0}', space=sflag, size = 0x4, scoped, tag = 'scoped memory for vivit_forward.15']
    #allocation6 [shape = 'u8[1024]{0}', space=vmem, size = 0x400, scoped, tag = 'output window, operand 0, single buffered']
    %10 = vsyncpa [#allocation4], 0
    %11 = vsyncpa [#allocation5], 0
    // Predicated region
    $region2: #{vivit_forward.15} parent=1 // pred_check
      _
    $region3: #{vivit_forward.15} parent=1 // pred_check_branch
      %13 = sbr.rel (0) target = $region5
    $region4: #{vivit_forward.15} parent=1 // pred_region
      _
    $region5: #{vivit_forward.15} parent=1 // pred_fallthru
      _
    // Predicated region
    $region6: #{vivit_forward.15} parent=1 // pred_check
      _
    $region7: #{vivit_forward.15} parent=1 // pred_check_branch
      %15 = sbr.rel (0) target = $region9
    $region8: #{vivit_forward.15} parent=1 // pred_region
      _
    $region9: #{vivit_forward.15} parent=1 // pred_fallthru
      _
    // Predicated region
    $region10: #{vivit_forward.15} parent=1 // pred_check
      _
    $region11: #{vivit_forward.15} parent=1 // pred_check_branch
      %17 = sbr.rel (0) target = $region13
    $region12: #{vivit_forward.15} parent=1 // pred_region
      _
    $region13: #{vivit_forward.15} parent=1 // pred_fallthru
      _
    // Predicated region
    $region14: #{vivit_forward.15} parent=1 // pred_check
      _
    $region15: #{vivit_forward.15} parent=1 // pred_check_branch
      %19 = sbr.rel (0) target = $region17
    $region16: #{vivit_forward.15} parent=1 // pred_region
      _
    $region17: #{vivit_forward.15} parent=1 // pred_fallthru
      _
    // Predicated region
    $region18: #{vivit_forward.15} parent=1 // pred_check
      _
    $region19: #{vivit_forward.15} parent=1 // pred_check_branch
      %21 = sbr.rel (0) target = $region21
    $region20: #{vivit_forward.15} parent=1 // pred_region
      %s23 = ssub.s32 16, 16
      %24 = vsyncadd [#allocation4], %s23
      %s26 = sshll.u32 [#allocation3], 4
      %s27 = int_to_ptr.vmem [resolvable:$true] %s26
      %29 = dma.hbm_to_vmem [thread:$0]  %s4, 16, %s27, [#allocation4]
    $region21: #{vivit_forward.15} parent=1 // pred_fallthru
      _
    // Predicated region
    $region22: #{vivit_forward.15} parent=1 // pred_check
      _
    $region23: #{vivit_forward.15} parent=1 // pred_check_branch
      %31 = sbr.rel (0) target = $region25
    $region24: #{vivit_forward.15} parent=1 // pred_region
      %32 = dma.done [#allocation4], 16
    $region25: #{vivit_forward.15} parent=1 // pred_fallthru
      _
    %p34 = scmp.eq.s32.totalorder 0, 0
    // Predicated region
    $region26: #{vivit_forward.15} parent=1 // pred_check
      %p35 = pneg %p34
    $region27: #{vivit_forward.15} parent=1 // pred_check_branch
      %37 = sbr.rel (%p35) target = $region29
    $region28: #{vivit_forward.15} parent=1 // pred_region
      %vm38 = vcmask 254976
      %39 = vst.msk [vmem:[#allocation2] sm:$0x3] %vm38, 0.0
    $region29: #{vivit_forward.15} parent=1 // pred_fallthru
      _
    %v40 = vld [vmem:[#allocation2] sm:$0x3]
    %v41 = vld [vmem:[%s0] sm:$0xf]
    %v42 = vld [vmem:[%s0 + $0x4] sm:$0xf]
    %v43 = vld [vmem:[%s0 + $0x8] sm:$0xf]
    %v44 = vld [vmem:[%s0 + $0xc] sm:$0xf]
    %v45 = vld [vmem:[%s0 + $0x10] sm:$0xf]
    %v46 = vld [vmem:[%s0 + $0x14] sm:$0xf]
    %v47 = vld [vmem:[%s0 + $0x18] sm:$0xf]
    %v48 = vld [vmem:[%s0 + $0x1c] sm:$0xf]
    %v49 = vld [vmem:[%s0 + $0x20] sm:$0xf]
    %v50 = vld [vmem:[%s0 + $0x24] sm:$0xf]
    %v51 = vld [vmem:[%s0 + $0x28] sm:$0xf]
    %v52 = vld [vmem:[%s0 + $0x2c] sm:$0xf]
    %v53 = vld [vmem:[%s0 + $0x30] sm:$0xf]
    %v54 = vld [vmem:[%s0 + $0x34] sm:$0xf]
    %v55 = vld [vmem:[%s0 + $0x38] sm:$0xf]
    %v56 = vld [vmem:[%s0 + $0x3c] sm:$0xf]
    %v57 = vunpack.c.l.bf16 %v41
    %v58 = vunpack.c.l.bf16 %v42
    %v59 = vunpack.c.l.bf16 %v43
    %v60 = vunpack.c.l.bf16 %v44
    %v61 = vunpack.c.l.bf16 %v45
    %v62 = vunpack.c.l.bf16 %v46
    %v63 = vunpack.c.l.bf16 %v47
    %v64 = vunpack.c.l.bf16 %v48
    %v65 = vunpack.c.l.bf16 %v49
    %v66 = vunpack.c.l.bf16 %v50
    %v67 = vunpack.c.l.bf16 %v51
    %v68 = vunpack.c.l.bf16 %v52
    %v69 = vunpack.c.l.bf16 %v53
    %v70 = vunpack.c.l.bf16 %v54
    %v71 = vunpack.c.l.bf16 %v55
    %v72 = vunpack.c.l.bf16 %v56
    %vm73 = vcmask 261120
    %v74 = vsel %vm73, %v57, 0.0
    %v75 = vsel %vm73, %v58, 0.0
    %v76 = vadd.f32 %v74, %v75
    %v77 = vsel %vm73, %v59, 0.0
    %v78 = vadd.f32 %v76, %v77
    %v79 = vsel %vm73, %v60, 0.0
    %v80 = vadd.f32 %v78, %v79
    %v81 = vsel %vm73, %v61, 0.0
    %v82 = vadd.f32 %v80, %v81
    %v83 = vsel %vm73, %v62, 0.0
    %v84 = vadd.f32 %v82, %v83
    %v85 = vsel %vm73, %v63, 0.0
    %v86 = vadd.f32 %v84, %v85
    %v87 = vsel %vm73, %v64, 0.0
    %v88 = vadd.f32 %v86, %v87
    %v89 = vrot.slane %v88, 4
    %v90 = vadd.f32 %v88, %v89
    %v91 = vrot.slane %v90, 2
    %v92 = vadd.f32 %v90, %v91
    %v93 = vrot.slane %v92, 1
    %v94 = vadd.f32 %v92, %v93
    %v95 = vsel %vm73, %v65, 0.0
    %v96 = vsel %vm73, %v66, 0.0
    %v97 = vadd.f32 %v95, %v96
    %v98 = vsel %vm73, %v67, 0.0
    %v99 = vadd.f32 %v97, %v98
    %v100 = vsel %vm73, %v68, 0.0
    %v101 = vadd.f32 %v99, %v100
    %v102 = vsel %vm73, %v69, 0.0
    %v103 = vadd.f32 %v101, %v102
    %v104 = vsel %vm73, %v70, 0.0
    %v105 = vadd.f32 %v103, %v104
    %v106 = vsel %vm73, %v71, 0.0
    %v107 = vadd.f32 %v105, %v106
    %v108 = vsel %vm73, %v72, 0.0
    %v109 = vadd.f32 %v107, %v108
    %v110 = vrot.slane %v109, 4
    %v111 = vadd.f32 %v109, %v110
    %v112 = vrot.slane %v111, 2
    %v113 = vadd.f32 %v111, %v112
    %v114 = vrot.slane %v113, 1
    %v115 = vadd.f32 %v113, %v114
    %vm118 = vcmask 1041409
    %v119 = vsel %vm118, %v115, %v94
    %v121 = vadd.f32 %v40, %v119
    %vm122 = vcmask 254976
    %123 = vst.msk [vmem:[#allocation2] sm:$0x3] %vm122, %v121
    // Predicated region
    $region30: #{vivit_forward.15} parent=1 // pred_check
      %p124 = pneg %p34
    $region31: #{vivit_forward.15} parent=1 // pred_check_branch
      %126 = sbr.rel (%p124) target = $region33
    $region32: #{vivit_forward.15} parent=1 // pred_region
      %v127 = vld [vmem:[#allocation2] sm:$0x3]
      %v128 = vmul.f32 %v127, 0.015625
      %v129 = vsel %vm122, %v128, 0.0
      %130 = vadd.xlane.f32.xlu0 %v129
      %v131 = vpop.xlane.xlu0 %130
      %v132 = vrcp.pop 32.0
      %v133 = vmul.f32 %v131, %v132
      %v134 = vsub.f32 %v128, %v133
      %v135 = vmul.f32 %v134, %v134
      %v136 = vsel %vm122, %v135, 0.0
      %137 = vadd.xlane.f32.xlu0 %v136
      %v138 = vpop.xlane.xlu0 %137
      %v139 = vmul.f32 %v138, %v132
      %v140 = vadd.f32 %v139, 1e-05
      %v141 = vrsqrt.pop %v140
      %v142 = vmul.f32 %v134, %v141
      %v143 = vld [vmem:[%s1] sm:$0x1]
      %v145 = vlaneseq
      %v146 = vshrl.u32 %v145, 7
      %v147 = vsub.s32 0, %v146
      %v148 = vrot.slane %v143, %v147
      %v150 = vmul.f32 %v142, %v148
      %v151 = vld [vmem:[%s2] sm:$0x1]
      %v153 = vlaneseq
      %v154 = vshrl.u32 %v153, 7
      %v155 = vsub.s32 0, %v154
      %v156 = vrot.slane %v151, %v155
      %v158 = vadd.f32 %v150, %v156
      %v159 = vpack.c.bf16 %v158, %v158
      %v160 = vld [vmem:[%s3] sm:$0xf]
      %v161 = vld [vmem:[%s3 + $0x4] sm:$0xf]
      %v162 = vld [vmem:[%s3 + $0x8] sm:$0xf]
      %v163 = vld [vmem:[%s3 + $0xc] sm:$0xf]
      %v164 = vld [vmem:[#allocation3] sm:$0x1]
      %v166 = vlaneseq
      %v167 = vshrl.u32 %v166, 7
      %v168 = vsub.s32 0, %v167
      %v169 = vrot.slane %v164, %v168
      %v175 = vunpack.c.l.b16 %v160
      %v176 = vunpack.c.l.b16 %v161
      %v177 = vunpack.c.l.b16 %v162
      %v178 = vunpack.c.l.b16 %v163
      %v179 = vpack.c.b16 %v176, %v175
      %v180 = vpack.c.b16 %v178, %v177
      %v184 = vsel %vm73, %v159, 0
      %186 = vmatprep.subr.bf16.mxu0 0
      %187 = vmatpush1.bf16.msra.mxu0 %v179
      %188 = vmatprep.subr.bf16.mxu0 0
      %189 = vmatpush1.bf16.msra.mxu0 %v180
      %190 = vmatprep.subr.bf16.mxu0 0
      %191 = vmatpush1.bf16.msra.mxu0 0
      %192 = vmatprep.subr.bf16.mxu0 0
      %193 = vmatpush1.bf16.msra.mxu0 0
      %194 = vmatprep.subr.bf16.mxu0 0
      %195 = vmatpush1.bf16.msra.mxu0 0
      %196 = vmatprep.subr.bf16.mxu0 0
      %197 = vmatpush1.bf16.msra.mxu0 0
      %198 = vmatprep.subr.bf16.mxu0 0
      %199 = vmatpush1.bf16.msra.mxu0 0
      %200 = vmatprep.subr.bf16.mxu0 0
      %201 = vmatpush1.bf16.msra.mxu0 0
      %202 = vmatprep.subr.bf16.mxu0 0
      %203 = vmatpush1.bf16.msra.mxu0 0
      %204 = vmatprep.subr.bf16.mxu0 0
      %205 = vmatpush1.bf16.msra.mxu0 0
      %206 = vmatprep.subr.bf16.mxu0 0
      %207 = vmatpush1.bf16.msra.mxu0 0
      %208 = vmatprep.subr.bf16.mxu0 0
      %209 = vmatpush1.bf16.msra.mxu0 0
      %210 = vmatprep.subr.bf16.mxu0 0
      %211 = vmatpush1.bf16.msra.mxu0 0
      %212 = vmatprep.subr.bf16.mxu0 0
      %213 = vmatpush1.bf16.msra.mxu0 0
      %214 = vmatprep.subr.bf16.mxu0 0
      %215 = vmatpush1.bf16.msra.mxu0 0
      %216 = vmatprep.subr.bf16.mxu0 0
      %217 = vmatpush1.bf16.msra.mxu0 0
      %218 = vmatprep.mubr.bf16.mxu0 0
      %219 = vmatmul.mubr.bf16.gmra.mrb[0].mxu0 %v184
      %v220 = vpop.f32.mrb[0].mxu0
      %v221 = vadd.f32 %v169, %v220
      %v222 = vpop.f32.mrb[0].mxu0
      %v223 = vpop.f32.mrb[0].mxu0
      %v224 = vpop.f32.mrb[0].mxu0
      %225 = vdwg.mxu0
      %vm226 = vcmask 9216
      %v227 = vsel %vm226, %v221, -inf
      %228 = vmax.xlane.f32.xlu0 %v227
      %v229 = vpop.xlane.xlu0 %228
      %v230 = vsub.f32 %v221, %v229
      %v231 = vmul.f32 %v230, 1.442695
      %v232 = vpow.pop %v231
      %v233 = vsel %vm226, %v232, 0.0
      %234 = vadd.xlane.f32.xlu0 %v233
      %v235 = vpop.xlane.xlu0 %234
      %v236 = vrcp.pop %v235
      %v237 = vmul.f32 %v232, %v236
      %238 = vst.msk [vmem:[#allocation6] sm:$0x3] %vm226, %v237
    $region33: #{vivit_forward.15} parent=1 // pred_fallthru
      _
    // Predicated region
    $region34: #{vivit_forward.15} parent=1 // pred_check
      _
    $region35: #{vivit_forward.15} parent=1 // pred_check_branch
      %240 = sbr.rel (0) target = $region37
    $region36: #{vivit_forward.15} parent=1 // pred_region
      %s242 = ssub.s32 32, 32
      %243 = vsyncadd [#allocation5], %s242
      %s245 = sshll.u32 [#allocation6], 4
      %s246 = int_to_ptr.vmem [resolvable:$true] %s245
      %248 = dma.vmem_to_hbm [thread:$0]  %s246, 32, %s5, [#allocation5]
    $region37: #{vivit_forward.15} parent=1 // pred_fallthru
      _
    // Predicated region
    $region38: #{vivit_forward.15} parent=1 // pred_check
      _
    $region39: #{vivit_forward.15} parent=1 // pred_check_branch
      %250 = sbr.rel (0) target = $region41
    $region40: #{vivit_forward.15} parent=1 // pred_region
      %251 = dma.done [#allocation5], 32
    $region41: #{vivit_forward.15} parent=1 // pred_fallthru
      _
    %252 = vsyncpa [#allocation4], 1
    %253 = vsyncpa [#allocation5], 1

</llo_original>
